<compile_context>
chip_gen: v5e
topology: v5e:2x2
jax: 0.10.0
libtpu: 0.0.40
codegen_flags: <defaults>
</compile_context>

<pallas_src>
import functools

import jax
import jax.numpy as jnp
from jax import lax
from jax.experimental import pallas as pl
from jax.experimental.pallas import tpu as pltpu

EPS = 1e-5                      # PyTorch GroupNorm default eps
_VMEM_LIMIT = 32 * 1024 * 1024  # explicit scoped-VMEM limit (safe on v5e/v6e/v7x)


# ------------- MaxPool3d(2) fused with pad + lane-fuse layout change ------------

def _pool_pad_kernel(x_ref, sh_ref, sw_ref, o_ref, *, Dp, Hp, Wp, C):
    """x_ref: [1, 1, 2, H, W*C] raw activation (one pooled-D row, both D halves)
       sh:    [2, Hp, H]     0/1 selection for the two H halves of the window
       sw:    [2, W*C, Wp*C] 0/1 selection for the two W halves (channel-aligned)
       o_ref: [1, 1, Hp+2, (Wp+2)*C] zero-padded, lane-fused pooled output."""
    dpad = pl.program_id(1)
    Lp = (Wp + 2) * C

    @pl.when((dpad == 0) | (dpad == Dp + 1))
    def _():                                            # D halo rows: all zeros
        o_ref[...] = jnp.zeros(o_ref.shape, o_ref.dtype)

    @pl.when((dpad >= 1) & (dpad <= Dp))
    def _():
        # 2x2x2 max pool: D via outer-dim max, H/W via exact selection matmuls.
        m = jnp.maximum(x_ref[0, 0, 0], x_ref[0, 0, 1])                 # [H, W*C]
        mh = jnp.maximum(
            jnp.dot(sh_ref[0], m, preferred_element_type=jnp.float32),
            jnp.dot(sh_ref[1], m, preferred_element_type=jnp.float32))  # [Hp, W*C]
        mw = jnp.maximum(
            jnp.dot(mh, sw_ref[0], preferred_element_type=jnp.float32),
            jnp.dot(mh, sw_ref[1], preferred_element_type=jnp.float32))  # [Hp, Wp*C]
        # zero halo in H and W (lane) directions, so the GN-stats trick stays valid.
        zc = jnp.zeros((Hp, C), jnp.float32)
        rows = jnp.concatenate([zc, mw, zc], axis=1)                     # [Hp, Lp]
        zr = jnp.zeros((1, Lp), jnp.float32)
        o_ref[0, 0] = jnp.concatenate([zr, rows, zr], axis=0)            # [Hp+2, Lp]


def max_pool3d_2_padded(x_ndhwc):
    """MaxPool3d(kernel=2) fused with the zero-pad + lane-fuse layout change:
    [N, D, H, W, C] f32 -> [N, D/2+2, H/2+2, (W/2+2)*C] f32 (zero halo) -- exactly
    the layout the fused GN->conv->ReLU kernel consumes.  One HBM read of the
    input, one write of the (1/8-size) pooled output."""
    N, D, H, W, C = x_ndhwc.shape
    # TODO(synk): odd spatial sizes (PyTorch MaxPool3d floors) are unsupported.
    assert D % 2 == 0 and H % 2 == 0 and W % 2 == 0
    Dp, Hp, Wp = D // 2, H // 2, W // 2
    Lp = (Wp + 2) * C
    xv = x_ndhwc.reshape(N, Dp, 2, H, W * C).astype(jnp.float32)   # free view

    # 0/1 selection matrices (exact max-pair selection through the MXU).
    hh = jnp.arange(H)
    hp = jnp.arange(Hp)
    sh = jnp.stack([(hh[None, :] == 2 * hp[:, None] + k).astype(jnp.float32)
                    for k in (0, 1)])                                   # [2, Hp, H]
    wl = jnp.arange(W * C)
    wo = jnp.arange(Wp * C)
    sw = jnp.stack([((wl[:, None] // C == 2 * (wo[None, :] // C) + k)
                     & (wl[:, None] % C == wo[None, :] % C)).astype(jnp.float32)
                    for k in (0, 1)])                                   # [2, W*C, Wp*C]

    def x_idx(n, d):
        # halo grid rows never use their block; clamp so the fetch stays in bounds.
        return (n, jnp.maximum(jnp.minimum(d - 1, Dp - 1), 0), 0, 0, 0)

    kernel = functools.partial(_pool_pad_kernel, Dp=Dp, Hp=Hp, Wp=Wp, C=C)
    return pl.pallas_call(
        kernel,
        out_shape=jax.ShapeDtypeStruct((N, Dp + 2, Hp + 2, Lp), jnp.float32),
        grid=(N, Dp + 2),
        in_specs=[
            pl.BlockSpec((1, 1, 2, H, W * C), x_idx),
            pl.BlockSpec((2, Hp, H), lambda n, d: (0, 0, 0)),
            pl.BlockSpec((2, W * C, Wp * C), lambda n, d: (0, 0, 0)),
        ],
        out_specs=pl.BlockSpec((1, 1, Hp + 2, Lp), lambda n, d: (n, d, 0, 0)),
        compiler_params=pltpu.CompilerParams(
            dimension_semantics=("parallel", "arbitrary"),
            vmem_limit_bytes=_VMEM_LIMIT),
    )(xv, sh, sw)


# ---------------- fused GroupNorm -> Conv3d(3x3x3) -> ReLU kernel ---------------

def _gn_conv_relu_kernel(x_ref, gam_ref, bet_ref, lmask_ref, pb_ref, w_ref, o_ref,
                         *, Dp, Hp, Wp, Cin, Cout, out_padded):
    """x_ref:   [1, Dp+2, Hp+2, (Wp+2)*Cin] zero-padded activation (f32 or bf16)
       gam/bet: [1, Lf] gamma/beta pre-tiled onto the fused lane layout
       lmask:   [1, Lf] 1.0 on interior lanes, 0.0 on the W halo lanes
       pb:      [Lf, Lf] lane -> group-mean broadcast matrix (1/count folded in)
       w_ref:   [3, 3*Lf, Wp*Cout] bf16 banded weights (kh, kw, Cin folded into K)
       o_ref:   padded bf16 [1, Dp+2, Hp+2, (Wp+2)*Cout]  if out_padded
                dense  f32  [1, Dp*Hp, Wp*Cout]           otherwise."""
    Lf = (Wp + 2) * Cin
    Lo = Wp * Cout
    xp = x_ref[0].astype(jnp.float32)                       # [Dp+2, Hp+2, Lf]

    # Factorized validity mask: (Dp+2, Hp+2, 1) spatial x (1, Lf) lane.
    di = lax.broadcasted_iota(jnp.int32, (Dp + 2, Hp + 2, 1), 0)
    hi = lax.broadcasted_iota(jnp.int32, (Dp + 2, Hp + 2, 1), 1)
    smask = ((di >= 1) & (di <= Dp) & (hi >= 1) & (hi <= Hp)).astype(jnp.float32)
    mask = smask * lmask_ref[...]                            # [Dp+2, Hp+2, Lf]

    # GroupNorm statistics, two-pass in f32.  The halo is exactly zero, so the
    # whole-block sum projected through pb gives the interior group means.
    s1 = jnp.sum(jnp.sum(xp, axis=0), axis=0, keepdims=True)            # [1, Lf]
    mean_f = jnp.dot(s1, pb_ref[...], preferred_element_type=jnp.float32)
    cen = (xp - mean_f) * mask                               # centered, halo re-zeroed
    s2 = jnp.sum(jnp.sum(cen * cen, axis=0), axis=0, keepdims=True)     # [1, Lf]
    var_f = jnp.dot(s2, pb_ref[...], preferred_element_type=jnp.float32)
    ginv_f = gam_ref[...] * lax.rsqrt(var_f + EPS)           # [1, Lf]
    xg = (cen * ginv_f + bet_ref[...] * mask).astype(jnp.bfloat16)

    # 3x3x3 conv: kh, kw and the channel contraction folded into K -> 3 bf16 MXU
    # matmuls.  The kh sublane shifts are hoisted out of the kd loop.
    xg_kh = [xg[:, kh:kh + Hp, :] for kh in range(3)]        # [Dp+2, Hp, Lf] each
    acc = jnp.zeros((Dp * Hp, Lo), jnp.float32)
    for kd in range(3):
        big = jnp.concatenate(
            [s[kd:kd + Dp].reshape(Dp * Hp, Lf) for s in xg_kh], axis=1)
        acc = acc + jnp.dot(big, w_ref[kd], preferred_element_type=jnp.float32)
    y = jnp.maximum(acc, 0.0)                                # fused ReLU

    if out_padded:
        # Emit directly in the zero-padded, lane-fused layout the next SingleConv
        # consumes -- no XLA pad/reshape pass between the two conv layers.
        Lop = (Wp + 2) * Cout
        y3 = y.reshape(Dp, Hp, Lo)
        zc = jnp.zeros((Dp, Hp, Cout), jnp.float32)
        y3 = jnp.concatenate([zc, y3, zc], axis=2)           # [Dp, Hp, Lop]
        zh = jnp.zeros((Dp, 1, Lop), jnp.float32)
        y3 = jnp.concatenate([zh, y3, zh], axis=1)           # [Dp, Hp+2, Lop]
        zd = jnp.zeros((1, Hp + 2, Lop), jnp.float32)
        y3 = jnp.concatenate([zd, y3, zd], axis=0)           # [Dp+2, Hp+2, Lop]
        o_ref[0] = y3.astype(o_ref.dtype)
    else:
        o_ref[0] = y.astype(o_ref.dtype)                     # lane-dense [Dp*Hp, Lo]


def _banded_conv_weights(w, Wp):
    """w: [3, 3, 3, Cin, Cout] -> [3, 3*(Wp+2)*Cin, Wp*Cout] block-banded weights
    folding kh, kw and the channel contraction into K:
      B[kd, kh*Lf + w'*Cin + c, wi*Cout + o] = w[kd, kh, w'-wi, c, o], w'-wi in {0,1,2}."""
    _, _, _, Cin, Cout = w.shape
    Lf = (Wp + 2) * Cin
    B = jnp.zeros((3, 3, Lf, Wp * Cout), w.dtype)
    for kw in range(3):
        for wi in range(Wp):
            B = B.at[:, :, (wi + kw) * Cin:(wi + kw + 1) * Cin,
                     wi * Cout:(wi + 1) * Cout].set(w[:, :, kw])
    return B.reshape(3, 3 * Lf, Wp * Cout)


def gn_conv_relu(x_pad, gamma, beta, w, num_groups, *, out_padded, out_dtype):
    """Fused GroupNorm -> Conv3d(3x3x3, padding=1, bias=False) -> ReLU.
    x_pad: [N, Dp+2, Hp+2, (Wp+2)*Cin] zero-padded, lane-fused activation."""
    N, Dpad, Hpad, Lf = x_pad.shape
    Dp, Hp = Dpad - 2, Hpad - 2
    Cin = gamma.shape[0]
    Wp = Lf // Cin - 2
    Cout = w.shape[-1]
    G = num_groups if Cin >= num_groups else 1       # PyTorch create_conv fallback
    assert Cin % G == 0
    Lo = Wp * Cout
    count = float(Dp * Hp * Wp * (Cin // G))

    # Host-side prep (tiny constants, folded by XLA under jit).
    wb = _banded_conv_weights(w, Wp).astype(jnp.bfloat16)             # [3, 3*Lf, Lo]
    gid = jnp.arange(Cin) // (Cin // G)
    same = (gid[:, None] == gid[None, :]).astype(jnp.float32) / count  # [Cin, Cin]
    pb = jnp.tile(same, (Wp + 2, Wp + 2))                              # [Lf, Lf]
    gamma_f = jnp.tile(gamma.astype(jnp.float32), Wp + 2)[None, :]     # [1, Lf]
    beta_f = jnp.tile(beta.astype(jnp.float32), Wp + 2)[None, :]       # [1, Lf]
    lane = jnp.arange(Lf)
    lmask = ((lane >= Cin) & (lane < (Wp + 1) * Cin)).astype(jnp.float32)[None, :]

    if out_padded:
        out_shape = jax.ShapeDtypeStruct((N, Dpad, Hpad, (Wp + 2) * Cout), out_dtype)
        out_spec = pl.BlockSpec((1, Dpad, Hpad, (Wp + 2) * Cout), lambda n: (n, 0, 0, 0))
    else:
        out_shape = jax.ShapeDtypeStruct((N, Dp * Hp, Lo), out_dtype)
        out_spec = pl.BlockSpec((1, Dp * Hp, Lo), lambda n: (n, 0, 0))

    kernel = functools.partial(_gn_conv_relu_kernel, Dp=Dp, Hp=Hp, Wp=Wp,
                               Cin=Cin, Cout=Cout, out_padded=out_padded)
    return pl.pallas_call(
        kernel,
        out_shape=out_shape,
        grid=(N,),
        in_specs=[
            pl.BlockSpec((1, Dpad, Hpad, Lf), lambda n: (n, 0, 0, 0)),
            pl.BlockSpec((1, Lf), lambda n: (0, 0)),
            pl.BlockSpec((1, Lf), lambda n: (0, 0)),
            pl.BlockSpec((1, Lf), lambda n: (0, 0)),
            pl.BlockSpec((Lf, Lf), lambda n: (0, 0)),
            pl.BlockSpec((3, 3 * Lf, Lo), lambda n: (0, 0, 0)),
        ],
        out_specs=out_spec,
        compiler_params=pltpu.CompilerParams(
            dimension_semantics=("parallel",),
            vmem_limit_bytes=_VMEM_LIMIT),
    )(x_pad, gamma_f, beta_f, lmask, pb, wb)


# --------------------------------- Encoder forward ------------------------------

def encoder_forward(x_ncdhw, params, num_groups):
    """Encoder.forward: MaxPool3d(2) -> (GN -> Conv3d(3^3) -> ReLU) x 2. NCDHW in/out."""
    N, _, D, H, W = x_ncdhw.shape
    x = jnp.transpose(x_ncdhw, (0, 2, 3, 4, 1))                  # NDHWC (XLA glue)
    xpad = max_pool3d_2_padded(x)                                # padded lane-fused f32
    h1 = gn_conv_relu(xpad, params["gn1_g"], params["gn1_b"], params["w1"],
                      num_groups, out_padded=True, out_dtype=jnp.bfloat16)
    h2 = gn_conv_relu(h1, params["gn2_g"], params["gn2_b"], params["w2"],
                      num_groups, out_padded=False, out_dtype=jnp.float32)
    Cout = params["w2"].shape[-1]
    Dp, Hp, Wp = D // 2, H // 2, W // 2
    out = h2.reshape(N, Dp, Hp, Wp, Cout)
    return jnp.transpose(out, (0, 4, 1, 2, 3))                   # NCDHW


# ------------------------------- pure-JAX reference -----------------------------

def torch_like_reference(x, params, num_groups):
    N, C, D, H, W = x.shape
    xp = x.reshape(N, C, D // 2, 2, H // 2, 2, W // 2, 2).max(axis=(3, 5, 7))

    def gn(y, g, b):
        n, c, d, h, w = y.shape
        G = num_groups if c >= num_groups else 1
        yr = y.reshape(n, G, c // G, d, h, w)
        m = yr.mean(axis=(2, 3, 4, 5), keepdims=True)
        v = yr.var(axis=(2, 3, 4, 5), keepdims=True)
        yn = ((yr - m) / jnp.sqrt(v + EPS)).reshape(n, c, d, h, w)
        return yn * g[None, :, None, None, None] + b[None, :, None, None, None]

    def conv3(y, w):                                           # w: [kd, kh, kw, I, O]
        wk = jnp.transpose(w, (4, 3, 0, 1, 2))                 # OIDHW
        return lax.conv_general_dilated(
            y, wk, window_strides=(1, 1, 1), padding=[(1, 1)] * 3,
            dimension_numbers=("NCDHW", "OIDHW", "NCDHW"))

    h1 = jax.nn.relu(conv3(gn(xp, params["gn1_g"], params["gn1_b"]), params["w1"]))
    h2 = jax.nn.relu(conv3(gn(h1, params["gn2_g"], params["gn2_b"]), params["w2"]))
    return h2


# --------------------------------------- main -----------------------------------

if __name__ == "__main__":
    # Encoder(in_channels=4, out_channels=16, is_pooling=True, order='gcr', num_groups=8)
    N, Cin, Cout, D, H, W = 2, 4, 16, 16, 16, 16
    G = 8
    C1 = max(Cout // 2, Cin)        # DoubleConvBlock encoder path: conv1 -> 8 channels

    key = jax.random.PRNGKey(0)
    ks = jax.random.split(key, 7)
    x = jax.random.normal(ks[0], (N, Cin, D, H, W), jnp.float32)
    params = dict(
        gn1_g=1.0 + 0.1 * jax.random.normal(ks[1], (Cin,), jnp.float32),
        gn1_b=0.1 * jax.random.normal(ks[2], (Cin,), jnp.float32),
        w1=jax.random.normal(ks[3], (3, 3, 3, Cin, C1), jnp.float32) * 0.1,
        gn2_g=1.0 + 0.1 * jax.random.normal(ks[4], (C1,), jnp.float32),
        gn2_b=0.1 * jax.random.normal(ks[5], (C1,), jnp.float32),
        w2=jax.random.normal(ks[6], (3, 3, 3, C1, Cout), jnp.float32) * 0.1,
    )

    fwd = jax.jit(encoder_forward, static_argnums=2)
    out = jax.block_until_ready(fwd(x, params, G))
    assert out.shape == (N, Cout, D // 2, H // 2, W // 2), out.shape
    assert out.dtype == jnp.float32

    ref = jax.block_until_ready(torch_like_reference(x, params, G))
    max_err = float(jnp.max(jnp.abs(out - ref)))
    ref_scale = float(jnp.max(jnp.abs(ref)))
    # bf16 MXU operands + bf16 inter-layer activation with f32 accumulation/stats.
    assert max_err <= 5e-2 * max(1.0, ref_scale), (max_err, ref_scale)

    print("KERNEL_OK")
</pallas_src>

<mosaic_0001>
module attributes {stable_mosaic.version = 11 : i64} {
  func.func @_pool_pad_kernel(%arg0: i32, %arg1: i32, %arg2: memref<1x1x2x16x64xf32, #tpu.memory_space<vmem>>, %arg3: memref<2x8x16xf32, #tpu.memory_space<vmem>>, %arg4: memref<2x64x32xf32, #tpu.memory_space<vmem>>, %arg5: memref<1x1x10x40xf32, #tpu.memory_space<vmem>>) attributes {dimension_semantics = [#tpu.dimension_semantics<parallel>, #tpu.dimension_semantics<arbitrary>], iteration_bounds = array<i64: 2, 10>, scalar_prefetch = 0 : i64, scratch_operands = 0 : i64, tpu.core_type = #tpu.core_type<tc>, window_params = [{transform_indices = @transform_0, window_bounds = array<i64: 1, 1, 2, 16, 64>}, {pipeline_mode = #tpu.pipeline_mode<synchronous>, transform_indices = @transform_1, window_bounds = array<i64: 2, 8, 16>}, {pipeline_mode = #tpu.pipeline_mode<synchronous>, transform_indices = @transform_2, window_bounds = array<i64: 2, 64, 32>}, {transform_indices = @transform_3, window_bounds = array<i64: 1, 1, 10, 40>}]} {
    %c0_i32 = arith.constant 0 : i32
    %0 = arith.cmpi eq, %arg1, %c0_i32 : i32
    %c9_i32 = arith.constant 9 : i32
    %1 = arith.cmpi eq, %arg1, %c9_i32 : i32
    %2 = arith.ori %0, %1 : i1
    %3 = arith.extui %2 : i1 to i32
    %c0_i32_0 = arith.constant 0 : i32
    %4 = arith.cmpi ne, %3, %c0_i32_0 : i32
    scf.if %4 {
      %cst = arith.constant 0.000000e+00 : f32
      %10 = vector.broadcast %cst : f32 to vector<1x1x10x40xf32>
      %c0 = arith.constant 0 : index
      %c0_2 = arith.constant 0 : index
      %c0_3 = arith.constant 0 : index
      %c0_4 = arith.constant 0 : index
      %11 = vector.load %arg5[%c0, %c0_2, %c0_3, %c0_4] : memref<1x1x10x40xf32, #tpu.memory_space<vmem>>, vector<1x1x10x40xf32>
      tpu.vector_store %arg5[%c0, %c0_2, %c0_3, %c0_4], %10 {strides = array<i32>} : memref<1x1x10x40xf32, #tpu.memory_space<vmem>>, vector<1x1x10x40xf32>,
    } else {
    }
    %c1_i32 = arith.constant 1 : i32
    %5 = arith.cmpi sge, %arg1, %c1_i32 : i32
    %c8_i32 = arith.constant 8 : i32
    %6 = arith.cmpi sle, %arg1, %c8_i32 : i32
    %7 = arith.andi %5, %6 : i1
    %8 = arith.extui %7 : i1 to i32
    %c0_i32_1 = arith.constant 0 : i32
    %9 = arith.cmpi ne, %8, %c0_i32_1 : i32
    scf.if %9 {
      %c0 = arith.constant 0 : index
      %c0_2 = arith.constant 0 : index
      %c0_3 = arith.constant 0 : index
      %c0_4 = arith.constant 0 : index
      %c0_5 = arith.constant 0 : index
      %10 = vector.load %arg2[%c0, %c0_2, %c0_3, %c0_4, %c0_5] : memref<1x1x2x16x64xf32, #tpu.memory_space<vmem>>, vector<1x1x1x16x64xf32>
      %11 = vector.shape_cast %10 : vector<1x1x1x16x64xf32> to vector<16x64xf32>
      %c0_6 = arith.constant 0 : index
      %c0_7 = arith.constant 0 : index
      %c1 = arith.constant 1 : index
      %c0_8 = arith.constant 0 : index
      %c0_9 = arith.constant 0 : index
      %12 = vector.load %arg2[%c0_6, %c0_7, %c1, %c0_8, %c0_9] : memref<1x1x2x16x64xf32, #tpu.memory_space<vmem>>, vector<1x1x1x16x64xf32>
      %13 = vector.shape_cast %12 : vector<1x1x1x16x64xf32> to vector<16x64xf32>
      %14 = arith.maximumf %11, %13 : vector<16x64xf32>
      %c0_10 = arith.constant 0 : index
      %c0_11 = arith.constant 0 : index
      %c0_12 = arith.constant 0 : index
      %15 = vector.load %arg3[%c0_10, %c0_11, %c0_12] : memref<2x8x16xf32, #tpu.memory_space<vmem>>, vector<1x8x16xf32>
      %16 = vector.shape_cast %15 : vector<1x8x16xf32> to vector<8x16xf32>
      %cst = arith.constant dense<0.000000e+00> : vector<8x64xf32>
      %17 = tpu.matmul %16, %14, %cst {dimension_numbers = #tpu.dot_dimension_numbers<[1], [0], [0], [1], [0, 0, 1, 1], [], []>} : vector<8x16xf32>, vector<16x64xf32>, vector<8x64xf32> -> vector<8x64xf32>
      %c1_13 = arith.constant 1 : index
      %c0_14 = arith.constant 0 : index
      %c0_15 = arith.constant 0 : index
      %18 = vector.load %arg3[%c1_13, %c0_14, %c0_15] : memref<2x8x16xf32, #tpu.memory_space<vmem>>, vector<1x8x16xf32>
      %19 = vector.shape_cast %18 : vector<1x8x16xf32> to vector<8x16xf32>
      %cst_16 = arith.constant dense<0.000000e+00> : vector<8x64xf32>
      %20 = tpu.matmul %19, %14, %cst_16 {dimension_numbers = #tpu.dot_dimension_numbers<[1], [0], [0], [1], [0, 0, 1, 1], [], []>} : vector<8x16xf32>, vector<16x64xf32>, vector<8x64xf32> -> vector<8x64xf32>
      %21 = arith.maximumf %17, %20 : vector<8x64xf32>
      %c0_17 = arith.constant 0 : index
      %c0_18 = arith.constant 0 : index
      %c0_19 = arith.constant 0 : index
      %22 = vector.load %arg4[%c0_17, %c0_18, %c0_19] : memref<2x64x32xf32, #tpu.memory_space<vmem>>, vector<1x64x32xf32>
      %23 = vector.shape_cast %22 : vector<1x64x32xf32> to vector<64x32xf32>
      %cst_20 = arith.constant dense<0.000000e+00> : vector<8x32xf32>
      %24 = tpu.matmul %21, %23, %cst_20 {dimension_numbers = #tpu.dot_dimension_numbers<[1], [0], [0], [1], [0, 0, 1, 1], [], []>} : vector<8x64xf32>, vector<64x32xf32>, vector<8x32xf32> -> vector<8x32xf32>
      %c1_21 = arith.constant 1 : index
      %c0_22 = arith.constant 0 : index
      %c0_23 = arith.constant 0 : index
      %25 = vector.load %arg4[%c1_21, %c0_22, %c0_23] : memref<2x64x32xf32, #tpu.memory_space<vmem>>, vector<1x64x32xf32>
      %26 = vector.shape_cast %25 : vector<1x64x32xf32> to vector<64x32xf32>
      %cst_24 = arith.constant dense<0.000000e+00> : vector<8x32xf32>
      %27 = tpu.matmul %21, %26, %cst_24 {dimension_numbers = #tpu.dot_dimension_numbers<[1], [0], [0], [1], [0, 0, 1, 1], [], []>} : vector<8x64xf32>, vector<64x32xf32>, vector<8x32xf32> -> vector<8x32xf32>
      %28 = arith.maximumf %24, %27 : vector<8x32xf32>
      %cst_25 = arith.constant 0.000000e+00 : f32
      %29 = vector.broadcast %cst_25 : f32 to vector<8x4xf32>
      %30 = tpu.concatenate %29, %28, %29 in 1 : vector<8x4xf32>, vector<8x32xf32>, vector<8x4xf32> -> vector<8x40xf32>
      %cst_26 = arith.constant 0.000000e+00 : f32
      %31 = vector.broadcast %cst_26 : f32 to vector<1x40xf32>
      %32 = tpu.concatenate %31, %30, %31 in 0 : vector<1x40xf32>, vector<8x40xf32>, vector<1x40xf32> -> vector<10x40xf32>
      %c0_27 = arith.constant 0 : index
      %c0_28 = arith.constant 0 : index
      %c0_29 = arith.constant 0 : index
      %c0_30 = arith.constant 0 : index
      %33 = vector.load %arg5[%c0_27, %c0_28, %c0_29, %c0_30] : memref<1x1x10x40xf32, #tpu.memory_space<vmem>>, vector<1x1x10x40xf32>
      %34 = vector.shape_cast %33 : vector<1x1x10x40xf32> to vector<10x40xf32>
      %35 = vector.shape_cast %32 : vector<10x40xf32> to vector<1x1x10x40xf32>
      tpu.vector_store %arg5[%c0_27, %c0_28, %c0_29, %c0_30], %35 {strides = array<i32>} : memref<1x1x10x40xf32, #tpu.memory_space<vmem>>, vector<1x1x10x40xf32>,
    } else {
    }
    return
  }
  func.func @transform_0(%arg0: i32, %arg1: i32) -> (i32, i32, i32, i32, i32) {
    %c1_i32 = arith.constant 1 : i32
    %0 = arith.subi %arg1, %c1_i32 : i32
    %c7_i32 = arith.constant 7 : i32
    %1 = arith.minsi %0, %c7_i32 : i32
    %c0_i32 = arith.constant 0 : i32
    %2 = arith.maxsi %1, %c0_i32 : i32
    %c0_i32_0 = arith.constant 0 : i32
    %c0_i32_1 = arith.constant 0 : i32
    %c0_i32_2 = arith.constant 0 : i32
    %c0_i32_3 = arith.constant 0 : i32
    return %arg0, %2, %c0_i32_0, %c0_i32_1, %c0_i32_2 : i32, i32, i32, i32, i32
  }
  func.func @transform_1(%arg0: i32, %arg1: i32) -> (i32, i32, i32) {
    %c0_i32 = arith.constant 0 : i32
    %c0_i32_0 = arith.constant 0 : i32
    %c0_i32_1 = arith.constant 0 : i32
    %c0_i32_2 = arith.constant 0 : i32
    return %c0_i32, %c0_i32_0, %c0_i32_1 : i32, i32, i32
  }
  func.func @transform_2(%arg0: i32, %arg1: i32) -> (i32, i32, i32) {
    %c0_i32 = arith.constant 0 : i32
    %c0_i32_0 = arith.constant 0 : i32
    %c0_i32_1 = arith.constant 0 : i32
    %c0_i32_2 = arith.constant 0 : i32
    return %c0_i32, %c0_i32_0, %c0_i32_1 : i32, i32, i32
  }
  func.func @transform_3(%arg0: i32, %arg1: i32) -> (i32, i32, i32, i32) {
    %c0_i32 = arith.constant 0 : i32
    %c0_i32_0 = arith.constant 0 : i32
    %c0_i32_1 = arith.constant 0 : i32
    return %arg0, %arg1, %c0_i32, %c0_i32_0 : i32, i32, i32, i32
  }
}

module attributes {stable_mosaic.version = 11 : i64} {
  func.func @_gn_conv_relu_kernel(%arg0: i32, %arg1: memref<1x10x10x40xf32, #tpu.memory_space<vmem>>, %arg2: memref<1x40xf32, #tpu.memory_space<vmem>>, %arg3: memref<1x40xf32, #tpu.memory_space<vmem>>, %arg4: memref<1x40xf32, #tpu.memory_space<vmem>>, %arg5: memref<40x40xf32, #tpu.memory_space<vmem>>, %arg6: memref<3x120x64xbf16, #tpu.memory_space<vmem>>, %arg7: memref<1x10x10x80xbf16, #tpu.memory_space<vmem>>) attributes {dimension_semantics = [#tpu.dimension_semantics<parallel>], iteration_bounds = array<i64: 2>, scalar_prefetch = 0 : i64, scratch_operands = 0 : i64, tpu.core_type = #tpu.core_type<tc>, window_params = [{transform_indices = @transform_0, window_bounds = array<i64: 1, 10, 10, 40>}, {pipeline_mode = #tpu.pipeline_mode<synchronous>, transform_indices = @transform_1, window_bounds = array<i64: 1, 40>}, {pipeline_mode = #tpu.pipeline_mode<synchronous>, transform_indices = @transform_2, window_bounds = array<i64: 1, 40>}, {pipeline_mode = #tpu.pipeline_mode<synchronous>, transform_indices = @transform_3, window_bounds = array<i64: 1, 40>}, {pipeline_mode = #tpu.pipeline_mode<synchronous>, transform_indices = @transform_4, window_bounds = array<i64: 40, 40>}, {pipeline_mode = #tpu.pipeline_mode<synchronous>, transform_indices = @transform_5, window_bounds = array<i64: 3, 120, 64>}, {transform_indices = @transform_6, window_bounds = array<i64: 1, 10, 10, 80>}]} {
    %c0 = arith.constant 0 : index
    %c0_0 = arith.constant 0 : index
    %c0_1 = arith.constant 0 : index
    %c0_2 = arith.constant 0 : index
    %0 = vector.load %arg1[%c0, %c0_0, %c0_1, %c0_2] : memref<1x10x10x40xf32, #tpu.memory_space<vmem>>, vector<1x10x10x40xf32>
    %1 = vector.shape_cast %0 : vector<1x10x10x40xf32> to vector<10x10x40xf32>
    %2 = tpu.iota {dimensions = array<i32: 0>} : vector<10x10x1xi32>
    %3 = tpu.iota {dimensions = array<i32: 1>} : vector<10x10x1xi32>
    %c1_i32 = arith.constant 1 : i32
    %4 = vector.broadcast %c1_i32 : i32 to vector<10x10x1xi32>
    %5 = arith.cmpi sge, %2, %4 : vector<10x10x1xi32>
    %c8_i32 = arith.constant 8 : i32
    %6 = vector.broadcast %c8_i32 : i32 to vector<10x10x1xi32>
    %7 = arith.cmpi sle, %2, %6 : vector<10x10x1xi32>
    %8 = arith.andi %5, %7 : vector<10x10x1xi1>
    %c1_i32_3 = arith.constant 1 : i32
    %9 = vector.broadcast %c1_i32_3 : i32 to vector<10x10x1xi32>
    %10 = arith.cmpi sge, %3, %9 : vector<10x10x1xi32>
    %11 = arith.andi %8, %10 : vector<10x10x1xi1>
    %c8_i32_4 = arith.constant 8 : i32
    %12 = vector.broadcast %c8_i32_4 : i32 to vector<10x10x1xi32>
    %13 = arith.cmpi sle, %3, %12 : vector<10x10x1xi32>
    %14 = arith.andi %11, %13 : vector<10x10x1xi1>
    %15 = arith.extui %14 : vector<10x10x1xi1> to vector<10x10x1xi32>
    %16 = arith.sitofp %15 : vector<10x10x1xi32> to vector<10x10x1xf32>
    %c0_5 = arith.constant 0 : index
    %c0_6 = arith.constant 0 : index
    %17 = vector.load %arg4[%c0_5, %c0_6] : memref<1x40xf32, #tpu.memory_space<vmem>>, vector<1x40xf32>
    %18 = vector.shape_cast %17 : vector<1x40xf32> to vector<1x1x40xf32>
    %19 = vector.broadcast %16 : vector<10x10x1xf32> to vector<10x10x40xf32>
    %20 = vector.broadcast %18 : vector<1x1x40xf32> to vector<10x10x40xf32>
    %21 = arith.mulf %19, %20 : vector<10x10x40xf32>
    %cst = arith.constant dense<0.000000e+00> : vector<10x40xf32>
    %22 = vector.multi_reduction <add>, %1, %cst [0] : vector<10x10x40xf32> to vector<10x40xf32>
    %cst_7 = arith.constant dense<0.000000e+00> : vector<40xf32>
    %23 = vector.multi_reduction <add>, %22, %cst_7 [0] : vector<10x40xf32> to vector<40xf32>
    %24 = vector.shape_cast %23 : vector<40xf32> to vector<1x40xf32>
    %c0_8 = arith.constant 0 : index
    %c0_9 = arith.constant 0 : index
    %25 = vector.load %arg5[%c0_8, %c0_9] : memref<40x40xf32, #tpu.memory_space<vmem>>, vector<40x40xf32>
    %cst_10 = arith.constant dense<0.000000e+00> : vector<1x40xf32>
    %26 = tpu.matmul %24, %25, %cst_10 {dimension_numbers = #tpu.dot_dimension_numbers<[1], [0], [0], [1], [0, 0, 1, 1], [], []>} : vector<1x40xf32>, vector<40x40xf32>, vector<1x40xf32> -> vector<1x40xf32>
    %27 = vector.shape_cast %26 : vector<1x40xf32> to vector<1x1x40xf32>
    %28 = vector.broadcast %27 : vector<1x1x40xf32> to vector<10x10x40xf32>
    %29 = arith.subf %1, %28 : vector<10x10x40xf32>
    %30 = arith.mulf %29, %21 : vector<10x10x40xf32>
    %31 = arith.mulf %30, %30 : vector<10x10x40xf32>
    %cst_11 = arith.constant dense<0.000000e+00> : vector<10x40xf32>
    %32 = vector.multi_reduction <add>, %31, %cst_11 [0] : vector<10x10x40xf32> to vector<10x40xf32>
    %cst_12 = arith.constant dense<0.000000e+00> : vector<40xf32>
    %33 = vector.multi_reduction <add>, %32, %cst_12 [0] : vector<10x40xf32> to vector<40xf32>
    %34 = vector.shape_cast %33 : vector<40xf32> to vector<1x40xf32>
    %c0_13 = arith.constant 0 : index
    %c0_14 = arith.constant 0 : index
    %35 = vector.load %arg5[%c0_13, %c0_14] : memref<40x40xf32, #tpu.memory_space<vmem>>, vector<40x40xf32>
    %cst_15 = arith.constant dense<0.000000e+00> : vector<1x40xf32>
    %36 = tpu.matmul %34, %35, %cst_15 {dimension_numbers = #tpu.dot_dimension_numbers<[1], [0], [0], [1], [0, 0, 1, 1], [], []>} : vector<1x40xf32>, vector<40x40xf32>, vector<1x40xf32> -> vector<1x40xf32>
    %c0_16 = arith.constant 0 : index
    %c0_17 = arith.constant 0 : index
    %37 = vector.load %arg2[%c0_16, %c0_17] : memref<1x40xf32, #tpu.memory_space<vmem>>, vector<1x40xf32>
    %cst_18 = arith.constant 9.99999974E-6 : f32
    %38 = vector.broadcast %cst_18 : f32 to vector<1x40xf32>
    %39 = arith.addf %36, %38 : vector<1x40xf32>
    %40 = math.rsqrt %39 : vector<1x40xf32>
    %41 = arith.mulf %37, %40 : vector<1x40xf32>
    %42 = vector.shape_cast %41 : vector<1x40xf32> to vector<1x1x40xf32>
    %43 = vector.broadcast %42 : vector<1x1x40xf32> to vector<10x10x40xf32>
    %44 = arith.mulf %30, %43 : vector<10x10x40xf32>
    %c0_19 = arith.constant 0 : index
    %c0_20 = arith.constant 0 : index
    %45 = vector.load %arg3[%c0_19, %c0_20] : memref<1x40xf32, #tpu.memory_space<vmem>>, vector<1x40xf32>
    %46 = vector.shape_cast %45 : vector<1x40xf32> to vector<1x1x40xf32>
    %47 = vector.broadcast %46 : vector<1x1x40xf32> to vector<10x10x40xf32>
    %48 = arith.mulf %47, %21 : vector<10x10x40xf32>
    %49 = arith.addf %44, %48 : vector<10x10x40xf32>
    %50 = arith.truncf %49 : vector<10x10x40xf32> to vector<10x10x40xbf16>
    %51 = vector.extract_strided_slice %50 {offsets = [0, 0, 0], sizes = [10, 8, 40], strides = [1, 1, 1]} : vector<10x10x40xbf16> to vector<10x8x40xbf16>
    %52 = vector.extract_strided_slice %50 {offsets = [0, 1, 0], sizes = [10, 8, 40], strides = [1, 1, 1]} : vector<10x10x40xbf16> to vector<10x8x40xbf16>
    %53 = vector.extract_strided_slice %50 {offsets = [0, 2, 0], sizes = [10, 8, 40], strides = [1, 1, 1]} : vector<10x10x40xbf16> to vector<10x8x40xbf16>
    %cst_21 = arith.constant 0.000000e+00 : f32
    %54 = vector.broadcast %cst_21 : f32 to vector<64x64xf32>
    %55 = vector.extract_strided_slice %51 {offsets = [0, 0, 0], sizes = [8, 8, 40], strides = [1, 1, 1]} : vector<10x8x40xbf16> to vector<8x8x40xbf16>
    %56 = vector.shape_cast %55 : vector<8x8x40xbf16> to vector<64x40xbf16>
    %57 = vector.extract_strided_slice %52 {offsets = [0, 0, 0], sizes = [8, 8, 40], strides = [1, 1, 1]} : vector<10x8x40xbf16> to vector<8x8x40xbf16>
    %58 = vector.shape_cast %57 : vector<8x8x40xbf16> to vector<64x40xbf16>
    %59 = vector.extract_strided_slice %53 {offsets = [0, 0, 0], sizes = [8, 8, 40], strides = [1, 1, 1]} : vector<10x8x40xbf16> to vector<8x8x40xbf16>
    %60 = vector.shape_cast %59 : vector<8x8x40xbf16> to vector<64x40xbf16>
    %61 = tpu.concatenate %56, %58, %60 in 1 : vector<64x40xbf16>, vector<64x40xbf16>, vector<64x40xbf16> -> vector<64x120xbf16>
    %c0_22 = arith.constant 0 : index
    %c0_23 = arith.constant 0 : index
    %c0_24 = arith.constant 0 : index
    %62 = vector.load %arg6[%c0_22, %c0_23, %c0_24] : memref<3x120x64xbf16, #tpu.memory_space<vmem>>, vector<1x120x64xbf16>
    %63 = vector.shape_cast %62 : vector<1x120x64xbf16> to vector<120x64xbf16>
    %cst_25 = arith.constant dense<0.000000e+00> : vector<64x64xf32>
    %64 = tpu.matmul %61, %63, %cst_25 {dimension_numbers = #tpu.dot_dimension_numbers<[1], [0], [0], [1], [0, 0, 1, 1], [], []>} : vector<64x120xbf16>, vector<120x64xbf16>, vector<64x64xf32> -> vector<64x64xf32>
    %65 = arith.addf %54, %64 : vector<64x64xf32>
    %66 = vector.extract_strided_slice %51 {offsets = [1, 0, 0], sizes = [8, 8, 40], strides = [1, 1, 1]} : vector<10x8x40xbf16> to vector<8x8x40xbf16>
    %67 = vector.shape_cast %66 : vector<8x8x40xbf16> to vector<64x40xbf16>
    %68 = vector.extract_strided_slice %52 {offsets = [1, 0, 0], sizes = [8, 8, 40], strides = [1, 1, 1]} : vector<10x8x40xbf16> to vector<8x8x40xbf16>
    %69 = vector.shape_cast %68 : vector<8x8x40xbf16> to vector<64x40xbf16>
    %70 = vector.extract_strided_slice %53 {offsets = [1, 0, 0], sizes = [8, 8, 40], strides = [1, 1, 1]} : vector<10x8x40xbf16> to vector<8x8x40xbf16>
    %71 = vector.shape_cast %70 : vector<8x8x40xbf16> to vector<64x40xbf16>
    %72 = tpu.concatenate %67, %69, %71 in 1 : vector<64x40xbf16>, vector<64x40xbf16>, vector<64x40xbf16> -> vector<64x120xbf16>
    %c1 = arith.constant 1 : index
    %c0_26 = arith.constant 0 : index
    %c0_27 = arith.constant 0 : index
    %73 = vector.load %arg6[%c1, %c0_26, %c0_27] : memref<3x120x64xbf16, #tpu.memory_space<vmem>>, vector<1x120x64xbf16>
    %74 = vector.shape_cast %73 : vector<1x120x64xbf16> to vector<120x64xbf16>
    %cst_28 = arith.constant dense<0.000000e+00> : vector<64x64xf32>
    %75 = tpu.matmul %72, %74, %cst_28 {dimension_numbers = #tpu.dot_dimension_numbers<[1], [0], [0], [1], [0, 0, 1, 1], [], []>} : vector<64x120xbf16>, vector<120x64xbf16>, vector<64x64xf32> -> vector<64x64xf32>
    %76 = arith.addf %65, %75 : vector<64x64xf32>
    %77 = vector.extract_strided_slice %51 {offsets = [2, 0, 0], sizes = [8, 8, 40], strides = [1, 1, 1]} : vector<10x8x40xbf16> to vector<8x8x40xbf16>
    %78 = vector.shape_cast %77 : vector<8x8x40xbf16> to vector<64x40xbf16>
    %79 = vector.extract_strided_slice %52 {offsets = [2, 0, 0], sizes = [8, 8, 40], strides = [1, 1, 1]} : vector<10x8x40xbf16> to vector<8x8x40xbf16>
    %80 = vector.shape_cast %79 : vector<8x8x40xbf16> to vector<64x40xbf16>
    %81 = vector.extract_strided_slice %53 {offsets = [2, 0, 0], sizes = [8, 8, 40], strides = [1, 1, 1]} : vector<10x8x40xbf16> to vector<8x8x40xbf16>
    %82 = vector.shape_cast %81 : vector<8x8x40xbf16> to vector<64x40xbf16>
    %83 = tpu.concatenate %78, %80, %82 in 1 : vector<64x40xbf16>, vector<64x40xbf16>, vector<64x40xbf16> -> vector<64x120xbf16>
    %c2 = arith.constant 2 : index
    %c0_29 = arith.constant 0 : index
    %c0_30 = arith.constant 0 : index
    %84 = vector.load %arg6[%c2, %c0_29, %c0_30] : memref<3x120x64xbf16, #tpu.memory_space<vmem>>, vector<1x120x64xbf16>
    %85 = vector.shape_cast %84 : vector<1x120x64xbf16> to vector<120x64xbf16>
    %cst_31 = arith.constant dense<0.000000e+00> : vector<64x64xf32>
    %86 = tpu.matmul %83, %85, %cst_31 {dimension_numbers = #tpu.dot_dimension_numbers<[1], [0], [0], [1], [0, 0, 1, 1], [], []>} : vector<64x120xbf16>, vector<120x64xbf16>, vector<64x64xf32> -> vector<64x64xf32>
    %87 = arith.addf %76, %86 : vector<64x64xf32>
    %cst_32 = arith.constant 0.000000e+00 : f32
    %88 = vector.broadcast %cst_32 : f32 to vector<64x64xf32>
    %89 = arith.maximumf %87, %88 : vector<64x64xf32>
    %90 = vector.shape_cast %89 : vector<64x64xf32> to vector<8x8x64xf32>
    %cst_33 = arith.constant 0.000000e+00 : f32
    %91 = vector.broadcast %cst_33 : f32 to vector<8x8x8xf32>
    %92 = tpu.concatenate %91, %90, %91 in 2 : vector<8x8x8xf32>, vector<8x8x64xf32>, vector<8x8x8xf32> -> vector<8x8x80xf32>
    %cst_34 = arith.constant 0.000000e+00 : f32
    %93 = vector.broadcast %cst_34 : f32 to vector<8x1x80xf32>
    %94 = tpu.concatenate %93, %92, %93 in 1 : vector<8x1x80xf32>, vector<8x8x80xf32>, vector<8x1x80xf32> -> vector<8x10x80xf32>
    %cst_35 = arith.constant 0.000000e+00 : f32
    %95 = vector.broadcast %cst_35 : f32 to vector<1x10x80xf32>
    %96 = tpu.concatenate %95, %94, %95 in 0 : vector<1x10x80xf32>, vector<8x10x80xf32>, vector<1x10x80xf32> -> vector<10x10x80xf32>
    %97 = arith.truncf %96 : vector<10x10x80xf32> to vector<10x10x80xbf16>
    %c0_36 = arith.constant 0 : index
    %c0_37 = arith.constant 0 : index
    %c0_38 = arith.constant 0 : index
    %c0_39 = arith.constant 0 : index
    %98 = vector.load %arg7[%c0_36, %c0_37, %c0_38, %c0_39] : memref<1x10x10x80xbf16, #tpu.memory_space<vmem>>, vector<1x10x10x80xbf16>
    %99 = vector.shape_cast %98 : vector<1x10x10x80xbf16> to vector<10x10x80xbf16>
    %100 = vector.shape_cast %97 : vector<10x10x80xbf16> to vector<1x10x10x80xbf16>
    tpu.vector_store %arg7[%c0_36, %c0_37, %c0_38, %c0_39], %100 {strides = array<i32>} : memref<1x10x10x80xbf16, #tpu.memory_space<vmem>>, vector<1x10x10x80xbf16>,
    return
  }
  func.func @transform_0(%arg0: i32) -> (i32, i32, i32, i32) {
    %c0_i32 = arith.constant 0 : i32
    %c0_i32_0 = arith.constant 0 : i32
    %c0_i32_1 = arith.constant 0 : i32
    %c0_i32_2 = arith.constant 0 : i32
    return %arg0, %c0_i32, %c0_i32_0, %c0_i32_1 : i32, i32, i32, i32
  }
  func.func @transform_1(%arg0: i32) -> (i32, i32) {
    %c0_i32 = arith.constant 0 : i32
    %c0_i32_0 = arith.constant 0 : i32
    %c0_i32_1 = arith.constant 0 : i32
    return %c0_i32, %c0_i32_0 : i32, i32
  }
  func.func @transform_2(%arg0: i32) -> (i32, i32) {
    %c0_i32 = arith.constant 0 : i32
    %c0_i32_0 = arith.constant 0 : i32
    %c0_i32_1 = arith.constant 0 : i32
    return %c0_i32, %c0_i32_0 : i32, i32
  }
  func.func @transform_3(%arg0: i32) -> (i32, i32) {
    %c0_i32 = arith.constant 0 : i32
    %c0_i32_0 = arith.constant 0 : i32
    %c0_i32_1 = arith.constant 0 : i32
    return %c0_i32, %c0_i32_0 : i32, i32
  }
  func.func @transform_4(%arg0: i32) -> (i32, i32) {
    %c0_i32 = arith.constant 0 : i32
    %c0_i32_0 = arith.constant 0 : i32
    %c0_i32_1 = arith.constant 0 : i32
    return %c0_i32, %c0_i32_0 : i32, i32
  }
  func.func @transform_5(%arg0: i32) -> (i32, i32, i32) {
    %c0_i32 = arith.constant 0 : i32
    %c0_i32_0 = arith.constant 0 : i32
    %c0_i32_1 = arith.constant 0 : i32
    %c0_i32_2 = arith.constant 0 : i32
    return %c0_i32, %c0_i32_0, %c0_i32_1 : i32, i32, i32
  }
  func.func @transform_6(%arg0: i32) -> (i32, i32, i32, i32) {
    %c0_i32 = arith.constant 0 : i32
    %c0_i32_0 = arith.constant 0 : i32
    %c0_i32_1 = arith.constant 0 : i32
    %c0_i32_2 = arith.constant 0 : i32
    return %arg0, %c0_i32, %c0_i32_0, %c0_i32_1 : i32, i32, i32, i32
  }
}

module attributes {stable_mosaic.version = 11 : i64} {
  func.func @_gn_conv_relu_kernel(%arg0: i32, %arg1: memref<1x10x10x80xbf16, #tpu.memory_space<vmem>>, %arg2: memref<1x80xf32, #tpu.memory_space<vmem>>, %arg3: memref<1x80xf32, #tpu.memory_space<vmem>>, %arg4: memref<1x80xf32, #tpu.memory_space<vmem>>, %arg5: memref<80x80xf32, #tpu.memory_space<vmem>>, %arg6: memref<3x240x128xbf16, #tpu.memory_space<vmem>>, %arg7: memref<1x64x128xf32, #tpu.memory_space<vmem>>) attributes {dimension_semantics = [#tpu.dimension_semantics<parallel>], iteration_bounds = array<i64: 2>, scalar_prefetch = 0 : i64, scratch_operands = 0 : i64, tpu.core_type = #tpu.core_type<tc>, window_params = [{transform_indices = @transform_0, window_bounds = array<i64: 1, 10, 10, 80>}, {pipeline_mode = #tpu.pipeline_mode<synchronous>, transform_indices = @transform_1, window_bounds = array<i64: 1, 80>}, {pipeline_mode = #tpu.pipeline_mode<synchronous>, transform_indices = @transform_2, window_bounds = array<i64: 1, 80>}, {pipeline_mode = #tpu.pipeline_mode<synchronous>, transform_indices = @transform_3, window_bounds = array<i64: 1, 80>}, {pipeline_mode = #tpu.pipeline_mode<synchronous>, transform_indices = @transform_4, window_bounds = array<i64: 80, 80>}, {pipeline_mode = #tpu.pipeline_mode<synchronous>, transform_indices = @transform_5, window_bounds = array<i64: 3, 240, 128>}, {transform_indices = @transform_6, window_bounds = array<i64: 1, 64, 128>}]} {
    %c0 = arith.constant 0 : index
    %c0_0 = arith.constant 0 : index
    %c0_1 = arith.constant 0 : index
    %c0_2 = arith.constant 0 : index
    %0 = vector.load %arg1[%c0, %c0_0, %c0_1, %c0_2] : memref<1x10x10x80xbf16, #tpu.memory_space<vmem>>, vector<1x10x10x80xbf16>
    %1 = vector.shape_cast %0 : vector<1x10x10x80xbf16> to vector<10x10x80xbf16>
    %2 = arith.extf %1 : vector<10x10x80xbf16> to vector<10x10x80xf32>
    %3 = tpu.iota {dimensions = array<i32: 0>} : vector<10x10x1xi32>
    %4 = tpu.iota {dimensions = array<i32: 1>} : vector<10x10x1xi32>
    %c1_i32 = arith.constant 1 : i32
    %5 = vector.broadcast %c1_i32 : i32 to vector<10x10x1xi32>
    %6 = arith.cmpi sge, %3, %5 : vector<10x10x1xi32>
    %c8_i32 = arith.constant 8 : i32
    %7 = vector.broadcast %c8_i32 : i32 to vector<10x10x1xi32>
    %8 = arith.cmpi sle, %3, %7 : vector<10x10x1xi32>
    %9 = arith.andi %6, %8 : vector<10x10x1xi1>
    %c1_i32_3 = arith.constant 1 : i32
    %10 = vector.broadcast %c1_i32_3 : i32 to vector<10x10x1xi32>
    %11 = arith.cmpi sge, %4, %10 : vector<10x10x1xi32>
    %12 = arith.andi %9, %11 : vector<10x10x1xi1>
    %c8_i32_4 = arith.constant 8 : i32
    %13 = vector.broadcast %c8_i32_4 : i32 to vector<10x10x1xi32>
    %14 = arith.cmpi sle, %4, %13 : vector<10x10x1xi32>
    %15 = arith.andi %12, %14 : vector<10x10x1xi1>
    %16 = arith.extui %15 : vector<10x10x1xi1> to vector<10x10x1xi32>
    %17 = arith.sitofp %16 : vector<10x10x1xi32> to vector<10x10x1xf32>
    %c0_5 = arith.constant 0 : index
    %c0_6 = arith.constant 0 : index
    %18 = vector.load %arg4[%c0_5, %c0_6] : memref<1x80xf32, #tpu.memory_space<vmem>>, vector<1x80xf32>
    %19 = vector.shape_cast %18 : vector<1x80xf32> to vector<1x1x80xf32>
    %20 = vector.broadcast %17 : vector<10x10x1xf32> to vector<10x10x80xf32>
    %21 = vector.broadcast %19 : vector<1x1x80xf32> to vector<10x10x80xf32>
    %22 = arith.mulf %20, %21 : vector<10x10x80xf32>
    %cst = arith.constant dense<0.000000e+00> : vector<10x80xf32>
    %23 = vector.multi_reduction <add>, %2, %cst [0] : vector<10x10x80xf32> to vector<10x80xf32>
    %cst_7 = arith.constant dense<0.000000e+00> : vector<80xf32>
    %24 = vector.multi_reduction <add>, %23, %cst_7 [0] : vector<10x80xf32> to vector<80xf32>
    %25 = vector.shape_cast %24 : vector<80xf32> to vector<1x80xf32>
    %c0_8 = arith.constant 0 : index
    %c0_9 = arith.constant 0 : index
    %26 = vector.load %arg5[%c0_8, %c0_9] : memref<80x80xf32, #tpu.memory_space<vmem>>, vector<80x80xf32>
    %cst_10 = arith.constant dense<0.000000e+00> : vector<1x80xf32>
    %27 = tpu.matmul %25, %26, %cst_10 {dimension_numbers = #tpu.dot_dimension_numbers<[1], [0], [0], [1], [0, 0, 1, 1], [], []>} : vector<1x80xf32>, vector<80x80xf32>, vector<1x80xf32> -> vector<1x80xf32>
    %28 = vector.shape_cast %27 : vector<1x80xf32> to vector<1x1x80xf32>
    %29 = vector.broadcast %28 : vector<1x1x80xf32> to vector<10x10x80xf32>
    %30 = arith.subf %2, %29 : vector<10x10x80xf32>
    %31 = arith.mulf %30, %22 : vector<10x10x80xf32>
    %32 = arith.mulf %31, %31 : vector<10x10x80xf32>
    %cst_11 = arith.constant dense<0.000000e+00> : vector<10x80xf32>
    %33 = vector.multi_reduction <add>, %32, %cst_11 [0] : vector<10x10x80xf32> to vector<10x80xf32>
    %cst_12 = arith.constant dense<0.000000e+00> : vector<80xf32>
    %34 = vector.multi_reduction <add>, %33, %cst_12 [0] : vector<10x80xf32> to vector<80xf32>
    %35 = vector.shape_cast %34 : vector<80xf32> to vector<1x80xf32>
    %c0_13 = arith.constant 0 : index
    %c0_14 = arith.constant 0 : index
    %36 = vector.load %arg5[%c0_13, %c0_14] : memref<80x80xf32, #tpu.memory_space<vmem>>, vector<80x80xf32>
    %cst_15 = arith.constant dense<0.000000e+00> : vector<1x80xf32>
    %37 = tpu.matmul %35, %36, %cst_15 {dimension_numbers = #tpu.dot_dimension_numbers<[1], [0], [0], [1], [0, 0, 1, 1], [], []>} : vector<1x80xf32>, vector<80x80xf32>, vector<1x80xf32> -> vector<1x80xf32>
    %c0_16 = arith.constant 0 : index
    %c0_17 = arith.constant 0 : index
    %38 = vector.load %arg2[%c0_16, %c0_17] : memref<1x80xf32, #tpu.memory_space<vmem>>, vector<1x80xf32>
    %cst_18 = arith.constant 9.99999974E-6 : f32
    %39 = vector.broadcast %cst_18 : f32 to vector<1x80xf32>
    %40 = arith.addf %37, %39 : vector<1x80xf32>
    %41 = math.rsqrt %40 : vector<1x80xf32>
    %42 = arith.mulf %38, %41 : vector<1x80xf32>
    %43 = vector.shape_cast %42 : vector<1x80xf32> to vector<1x1x80xf32>
    %44 = vector.broadcast %43 : vector<1x1x80xf32> to vector<10x10x80xf32>
    %45 = arith.mulf %31, %44 : vector<10x10x80xf32>
    %c0_19 = arith.constant 0 : index
    %c0_20 = arith.constant 0 : index
    %46 = vector.load %arg3[%c0_19, %c0_20] : memref<1x80xf32, #tpu.memory_space<vmem>>, vector<1x80xf32>
    %47 = vector.shape_cast %46 : vector<1x80xf32> to vector<1x1x80xf32>
    %48 = vector.broadcast %47 : vector<1x1x80xf32> to vector<10x10x80xf32>
    %49 = arith.mulf %48, %22 : vector<10x10x80xf32>
    %50 = arith.addf %45, %49 : vector<10x10x80xf32>
    %51 = arith.truncf %50 : vector<10x10x80xf32> to vector<10x10x80xbf16>
    %52 = vector.extract_strided_slice %51 {offsets = [0, 0, 0], sizes = [10, 8, 80], strides = [1, 1, 1]} : vector<10x10x80xbf16> to vector<10x8x80xbf16>
    %53 = vector.extract_strided_slice %51 {offsets = [0, 1, 0], sizes = [10, 8, 80], strides = [1, 1, 1]} : vector<10x10x80xbf16> to vector<10x8x80xbf16>
    %54 = vector.extract_strided_slice %51 {offsets = [0, 2, 0], sizes = [10, 8, 80], strides = [1, 1, 1]} : vector<10x10x80xbf16> to vector<10x8x80xbf16>
    %cst_21 = arith.constant 0.000000e+00 : f32
    %55 = vector.broadcast %cst_21 : f32 to vector<64x128xf32>
    %56 = vector.extract_strided_slice %52 {offsets = [0, 0, 0], sizes = [8, 8, 80], strides = [1, 1, 1]} : vector<10x8x80xbf16> to vector<8x8x80xbf16>
    %57 = vector.shape_cast %56 : vector<8x8x80xbf16> to vector<64x80xbf16>
    %58 = vector.extract_strided_slice %53 {offsets = [0, 0, 0], sizes = [8, 8, 80], strides = [1, 1, 1]} : vector<10x8x80xbf16> to vector<8x8x80xbf16>
    %59 = vector.shape_cast %58 : vector<8x8x80xbf16> to vector<64x80xbf16>
    %60 = vector.extract_strided_slice %54 {offsets = [0, 0, 0], sizes = [8, 8, 80], strides = [1, 1, 1]} : vector<10x8x80xbf16> to vector<8x8x80xbf16>
    %61 = vector.shape_cast %60 : vector<8x8x80xbf16> to vector<64x80xbf16>
    %62 = tpu.concatenate %57, %59, %61 in 1 : vector<64x80xbf16>, vector<64x80xbf16>, vector<64x80xbf16> -> vector<64x240xbf16>
    %c0_22 = arith.constant 0 : index
    %c0_23 = arith.constant 0 : index
    %c0_24 = arith.constant 0 : index
    %63 = vector.load %arg6[%c0_22, %c0_23, %c0_24] : memref<3x240x128xbf16, #tpu.memory_space<vmem>>, vector<1x240x128xbf16>
    %64 = vector.shape_cast %63 : vector<1x240x128xbf16> to vector<240x128xbf16>
    %cst_25 = arith.constant dense<0.000000e+00> : vector<64x128xf32>
    %65 = tpu.matmul %62, %64, %cst_25 {dimension_numbers = #tpu.dot_dimension_numbers<[1], [0], [0], [1], [0, 0, 1, 1], [], []>} : vector<64x240xbf16>, vector<240x128xbf16>, vector<64x128xf32> -> vector<64x128xf32>
    %66 = arith.addf %55, %65 : vector<64x128xf32>
    %67 = vector.extract_strided_slice %52 {offsets = [1, 0, 0], sizes = [8, 8, 80], strides = [1, 1, 1]} : vector<10x8x80xbf16> to vector<8x8x80xbf16>
    %68 = vector.shape_cast %67 : vector<8x8x80xbf16> to vector<64x80xbf16>
    %69 = vector.extract_strided_slice %53 {offsets = [1, 0, 0], sizes = [8, 8, 80], strides = [1, 1, 1]} : vector<10x8x80xbf16> to vector<8x8x80xbf16>
    %70 = vector.shape_cast %69 : vector<8x8x80xbf16> to vector<64x80xbf16>
    %71 = vector.extract_strided_slice %54 {offsets = [1, 0, 0], sizes = [8, 8, 80], strides = [1, 1, 1]} : vector<10x8x80xbf16> to vector<8x8x80xbf16>
    %72 = vector.shape_cast %71 : vector<8x8x80xbf16> to vector<64x80xbf16>
    %73 = tpu.concatenate %68, %70, %72 in 1 : vector<64x80xbf16>, vector<64x80xbf16>, vector<64x80xbf16> -> vector<64x240xbf16>
    %c1 = arith.constant 1 : index
    %c0_26 = arith.constant 0 : index
    %c0_27 = arith.constant 0 : index
    %74 = vector.load %arg6[%c1, %c0_26, %c0_27] : memref<3x240x128xbf16, #tpu.memory_space<vmem>>, vector<1x240x128xbf16>
    %75 = vector.shape_cast %74 : vector<1x240x128xbf16> to vector<240x128xbf16>
    %cst_28 = arith.constant dense<0.000000e+00> : vector<64x128xf32>
    %76 = tpu.matmul %73, %75, %cst_28 {dimension_numbers = #tpu.dot_dimension_numbers<[1], [0], [0], [1], [0, 0, 1, 1], [], []>} : vector<64x240xbf16>, vector<240x128xbf16>, vector<64x128xf32> -> vector<64x128xf32>
    %77 = arith.addf %66, %76 : vector<64x128xf32>
    %78 = vector.extract_strided_slice %52 {offsets = [2, 0, 0], sizes = [8, 8, 80], strides = [1, 1, 1]} : vector<10x8x80xbf16> to vector<8x8x80xbf16>
    %79 = vector.shape_cast %78 : vector<8x8x80xbf16> to vector<64x80xbf16>
    %80 = vector.extract_strided_slice %53 {offsets = [2, 0, 0], sizes = [8, 8, 80], strides = [1, 1, 1]} : vector<10x8x80xbf16> to vector<8x8x80xbf16>
    %81 = vector.shape_cast %80 : vector<8x8x80xbf16> to vector<64x80xbf16>
    %82 = vector.extract_strided_slice %54 {offsets = [2, 0, 0], sizes = [8, 8, 80], strides = [1, 1, 1]} : vector<10x8x80xbf16> to vector<8x8x80xbf16>
    %83 = vector.shape_cast %82 : vector<8x8x80xbf16> to vector<64x80xbf16>
    %84 = tpu.concatenate %79, %81, %83 in 1 : vector<64x80xbf16>, vector<64x80xbf16>, vector<64x80xbf16> -> vector<64x240xbf16>
    %c2 = arith.constant 2 : index
    %c0_29 = arith.constant 0 : index
    %c0_30 = arith.constant 0 : index
    %85 = vector.load %arg6[%c2, %c0_29, %c0_30] : memref<3x240x128xbf16, #tpu.memory_space<vmem>>, vector<1x240x128xbf16>
    %86 = vector.shape_cast %85 : vector<1x240x128xbf16> to vector<240x128xbf16>
    %cst_31 = arith.constant dense<0.000000e+00> : vector<64x128xf32>
    %87 = tpu.matmul %84, %86, %cst_31 {dimension_numbers = #tpu.dot_dimension_numbers<[1], [0], [0], [1], [0, 0, 1, 1], [], []>} : vector<64x240xbf16>, vector<240x128xbf16>, vector<64x128xf32> -> vector<64x128xf32>
    %88 = arith.addf %77, %87 : vector<64x128xf32>
    %cst_32 = arith.constant 0.000000e+00 : f32
    %89 = vector.broadcast %cst_32 : f32 to vector<64x128xf32>
    %90 = arith.maximumf %88, %89 : vector<64x128xf32>
    %c0_33 = arith.constant 0 : index
    %c0_34 = arith.constant 0 : index
    %c0_35 = arith.constant 0 : index
    %91 = vector.load %arg7[%c0_33, %c0_34, %c0_35] : memref<1x64x128xf32, #tpu.memory_space<vmem>>, vector<1x64x128xf32>
    %92 = vector.shape_cast %91 : vector<1x64x128xf32> to vector<64x128xf32>
    %93 = vector.shape_cast %90 : vector<64x128xf32> to vector<1x64x128xf32>
    tpu.vector_store %arg7[%c0_33, %c0_34, %c0_35], %93 {strides = array<i32>} : memref<1x64x128xf32, #tpu.memory_space<vmem>>, vector<1x64x128xf32>,
    return
  }
  func.func @transform_0(%arg0: i32) -> (i32, i32, i32, i32) {
    %c0_i32 = arith.constant 0 : i32
    %c0_i32_0 = arith.constant 0 : i32
    %c0_i32_1 = arith.constant 0 : i32
    %c0_i32_2 = arith.constant 0 : i32
    return %arg0, %c0_i32, %c0_i32_0, %c0_i32_1 : i32, i32, i32, i32
  }
  func.func @transform_1(%arg0: i32) -> (i32, i32) {
    %c0_i32 = arith.constant 0 : i32
    %c0_i32_0 = arith.constant 0 : i32
    %c0_i32_1 = arith.constant 0 : i32
    return %c0_i32, %c0_i32_0 : i32, i32
  }
  func.func @transform_2(%arg0: i32) -> (i32, i32) {
    %c0_i32 = arith.constant 0 : i32
    %c0_i32_0 = arith.constant 0 : i32
    %c0_i32_1 = arith.constant 0 : i32
    return %c0_i32, %c0_i32_0 : i32, i32
  }
  func.func @transform_3(%arg0: i32) -> (i32, i32) {
    %c0_i32 = arith.constant 0 : i32
    %c0_i32_0 = arith.constant 0 : i32
    %c0_i32_1 = arith.constant 0 : i32
    return %c0_i32, %c0_i32_0 : i32, i32
  }
  func.func @transform_4(%arg0: i32) -> (i32, i32) {
    %c0_i32 = arith.constant 0 : i32
    %c0_i32_0 = arith.constant 0 : i32
    %c0_i32_1 = arith.constant 0 : i32
    return %c0_i32, %c0_i32_0 : i32, i32
  }
  func.func @transform_5(%arg0: i32) -> (i32, i32, i32) {
    %c0_i32 = arith.constant 0 : i32
    %c0_i32_0 = arith.constant 0 : i32
    %c0_i32_1 = arith.constant 0 : i32
    %c0_i32_2 = arith.constant 0 : i32
    return %c0_i32, %c0_i32_0, %c0_i32_1 : i32, i32, i32
  }
  func.func @transform_6(%arg0: i32) -> (i32, i32, i32) {
    %c0_i32 = arith.constant 0 : i32
    %c0_i32_0 = arith.constant 0 : i32
    %c0_i32_1 = arith.constant 0 : i32
    return %arg0, %c0_i32, %c0_i32_0 : i32, i32, i32
  }
}

</mosaic_0001>

<llo_original>
// kernel: tile.38
$region0: #{tile.38}
  #allocation0 [shape = 's32[1]{0}', space=sflag, size = 0x4, scoped, tag = 'scoped memory for tile.38']
  %s0 = inlined_call_operand.vmem [shape: f32[4], index: 0, kind: input, shape index: {}]
  %s1 = inlined_call_operand.vmem [shape: f32[10,4], index: 1, kind: output, shape index: {}]
  // Predicated region
  $region2: #{tile.38} parent=0 // pred_check
    _
  $region3: #{tile.38} parent=0 // pred_check_branch
    %3 = sbr.rel (0) target = $region5
  $region4: #{tile.38} parent=0 // pred_region
    _
  $region5: #{tile.38} parent=0 // pred_fallthru
    _
  %v4 = vld [vmem:[%s0] ss:$0 sm:$0xff]
  %5 = vst [vmem:[%s1] sm:$0xff] %v4
  %s6 = scalar_lea.vmem %s1, 8
  %7 = vst [vmem:[%s6] sm:$0xff] %v4

// kernel: tile.39
$region0: #{tile.39}
  %s0 = inlined_call_operand.vmem [shape: f32[10,4], index: 0, kind: input, shape index: {}]
  %s1 = inlined_call_operand.vmem [shape: f32[1,40], index: 1, kind: output, shape index: {}]
  $region1: #{tile.39} parent=0
    #allocation0 [shape = 'u8[4096]{0}', space=vmem, size = 0x1000, scoped, tag = 'scoped mem for output reshape']
    %v2 = vld [vmem:[%s0] sm:$0x1]
    %vm3 = vcmask 31744
    %4 = vst.msk [vmem:[#allocation0] sm:$0x1] %vm3, %v2
    %s5 = scalar_lea.vmem %s0, 9
    %v6 = vld [vmem:[%s5] sm:$0x1]
    %7 = vrot.lane.b32.xlu0 %v6, 36
    %v8 = vpop.permute.xlu0 %7
    %vm9 = vcmask 326944
    %10 = vst.msk [vmem:[#allocation0] sm:$0x1] %vm9, %v8
    %s11 = scalar_lea.vmem %s0, 8
    %v12 = vld [vmem:[%s11] sm:$0x1]
    %13 = vrot.lane.b32.xlu0 %v12, 32
    %v14 = vpop.permute.xlu0 %13
    %vm15 = vcmask 294144
    %16 = vst.msk [vmem:[#allocation0] sm:$0x1] %vm15, %v14
    %s17 = scalar_lea.vmem %s0, 7
    %v18 = vld [vmem:[%s17] sm:$0x1]
    %19 = vrot.lane.b32.xlu0 %v18, 28
    %v20 = vpop.permute.xlu0 %19
    %vm21 = vcmask 261344
    %22 = vst.msk [vmem:[#allocation0] sm:$0x1] %vm21, %v20
    %s23 = scalar_lea.vmem %s0, 6
    %v24 = vld [vmem:[%s23] sm:$0x1]
    %25 = vrot.lane.b32.xlu0 %v24, 24
    %v26 = vpop.permute.xlu0 %25
    %vm27 = vcmask 228544
    %28 = vst.msk [vmem:[#allocation0] sm:$0x1] %vm27, %v26
    %s29 = scalar_lea.vmem %s0, 5
    %v30 = vld [vmem:[%s29] sm:$0x1]
    %31 = vrot.lane.b32.xlu0 %v30, 20
    %v32 = vpop.permute.xlu0 %31
    %vm33 = vcmask 195744
    %34 = vst.msk [vmem:[#allocation0] sm:$0x1] %vm33, %v32
    %s35 = scalar_lea.vmem %s0, 4
    %v36 = vld [vmem:[%s35] sm:$0x1]
    %37 = vrot.lane.b32.xlu0 %v36, 16
    %v38 = vpop.permute.xlu0 %37
    %vm39 = vcmask 162944
    %40 = vst.msk [vmem:[#allocation0] sm:$0x1] %vm39, %v38
    %s41 = scalar_lea.vmem %s0, 3
    %v42 = vld [vmem:[%s41] sm:$0x1]
    %43 = vrot.lane.b32.xlu0 %v42, 12
    %v44 = vpop.permute.xlu0 %43
    %vm45 = vcmask 130144
    %46 = vst.msk [vmem:[#allocation0] sm:$0x1] %vm45, %v44
    %s47 = scalar_lea.vmem %s0, 2
    %v48 = vld [vmem:[%s47] sm:$0x1]
    %49 = vrot.lane.b32.xlu0 %v48, 8
    %v50 = vpop.permute.xlu0 %49
    %vm51 = vcmask 97344
    %52 = vst.msk [vmem:[#allocation0] sm:$0x1] %vm51, %v50
    %s53 = scalar_lea.vmem %s0, 1
    %v54 = vld [vmem:[%s53] sm:$0x1]
    %55 = vrot.lane.b32.xlu0 %v54, 4
    %v56 = vpop.permute.xlu0 %55
    %vm57 = vcmask 64544
    %58 = vst.msk [vmem:[#allocation0] sm:$0x1] %vm57, %v56
    %s60 = ssub.s32 2, 1
    %v61 = vld [vmem:[#allocation0] sm:%s60]
    %s63 = ssub.s32 2, 1
    %64 = vst [vmem:[%s1] sm:%s63] %v61

// kernel: tile.33
$region0: #{tile.33}
  #allocation0 [shape = 's32[1]{0}', space=sflag, size = 0x4, scoped, tag = 'scoped memory for tile.33']
  %s0 = inlined_call_operand.vmem [shape: f32[4,4], index: 0, kind: input, shape index: {}]
  %s1 = inlined_call_operand.vmem [shape: f32[10,4,10,4], index: 1, kind: output, shape index: {}]
  // Predicated region
  $region2: #{tile.33} parent=0 // pred_check
    _
  $region3: #{tile.33} parent=0 // pred_check_branch
    %3 = sbr.rel (0) target = $region5
  $region4: #{tile.33} parent=0 // pred_region
    _
  $region5: #{tile.33} parent=0 // pred_fallthru
    _
  %v4 = vld [vmem:[%s0] ss:$0 sm:$0xff]
  %5 = vst [vmem:[%s1] sm:$0xff] %v4
  %s6 = scalar_lea.vmem %s1, 64
  %7 = vst [vmem:[%s6] sm:$0xff] %v4
  %s8 = scalar_lea.vmem %s1, 128
  %9 = vst [vmem:[%s8] sm:$0xff] %v4
  %s10 = scalar_lea.vmem %s1, 192
  %11 = vst [vmem:[%s10] sm:$0xff] %v4
  %s12 = scalar_lea.vmem %s1, 256
  %13 = vst [vmem:[%s12] sm:$0xff] %v4
  %s14 = scalar_lea.vmem %s1, 320
  %15 = vst [vmem:[%s14] sm:$0xff] %v4
  %s16 = scalar_lea.vmem %s1, 384
  %17 = vst [vmem:[%s16] sm:$0xff] %v4
  %s18 = scalar_lea.vmem %s1, 448
  %19 = vst [vmem:[%s18] sm:$0xff] %v4
  %s20 = scalar_lea.vmem %s1, 512
  %21 = vst [vmem:[%s20] sm:$0xff] %v4
  %s22 = scalar_lea.vmem %s1, 576
  %23 = vst [vmem:[%s22] sm:$0xff] %v4
  %s24 = scalar_lea.vmem %s0, 1
  %v25 = vld [vmem:[%s24] ss:$0 sm:$0xff]
  %s26 = scalar_lea.vmem %s1, 16
  %27 = vst [vmem:[%s26] sm:$0xff] %v25
  %s28 = scalar_lea.vmem %s1, 80
  %29 = vst [vmem:[%s28] sm:$0xff] %v25
  %s30 = scalar_lea.vmem %s1, 144
  %31 = vst [vmem:[%s30] sm:$0xff] %v25
  %s32 = scalar_lea.vmem %s1, 208
  %33 = vst [vmem:[%s32] sm:$0xff] %v25
  %s34 = scalar_lea.vmem %s1, 272
  %35 = vst [vmem:[%s34] sm:$0xff] %v25
  %s36 = scalar_lea.vmem %s1, 336
  %37 = vst [vmem:[%s36] sm:$0xff] %v25
  %s38 = scalar_lea.vmem %s1, 400
  %39 = vst [vmem:[%s38] sm:$0xff] %v25
  %s40 = scalar_lea.vmem %s1, 464
  %41 = vst [vmem:[%s40] sm:$0xff] %v25
  %s42 = scalar_lea.vmem %s1, 528
  %43 = vst [vmem:[%s42] sm:$0xff] %v25
  %s44 = scalar_lea.vmem %s1, 592
  %45 = vst [vmem:[%s44] sm:$0xff] %v25
  %s46 = scalar_lea.vmem %s0, 2
  %v47 = vld [vmem:[%s46] ss:$0 sm:$0xff]
  %s48 = scalar_lea.vmem %s1, 32
  %49 = vst [vmem:[%s48] sm:$0xff] %v47
  %s50 = scalar_lea.vmem %s1, 96
  %51 = vst [vmem:[%s50] sm:$0xff] %v47
  %s52 = scalar_lea.vmem %s1, 160
  %53 = vst [vmem:[%s52] sm:$0xff] %v47
  %s54 = scalar_lea.vmem %s1, 224
  %55 = vst [vmem:[%s54] sm:$0xff] %v47
  %s56 = scalar_lea.vmem %s1, 288
  %57 = vst [vmem:[%s56] sm:$0xff] %v47
  %s58 = scalar_lea.vmem %s1, 352
  %59 = vst [vmem:[%s58] sm:$0xff] %v47
  %s60 = scalar_lea.vmem %s1, 416
  %61 = vst [vmem:[%s60] sm:$0xff] %v47
  %s62 = scalar_lea.vmem %s1, 480
  %63 = vst [vmem:[%s62] sm:$0xff] %v47
  %s64 = scalar_lea.vmem %s1, 544
  %65 = vst [vmem:[%s64] sm:$0xff] %v47
  %s66 = scalar_lea.vmem %s1, 608
  %67 = vst [vmem:[%s66] sm:$0xff] %v47
  %s68 = scalar_lea.vmem %s0, 3
  %v69 = vld [vmem:[%s68] ss:$0 sm:$0xff]
  %s70 = scalar_lea.vmem %s1, 48
  %71 = vst [vmem:[%s70] sm:$0xff] %v69
  %s72 = scalar_lea.vmem %s1, 112
  %73 = vst [vmem:[%s72] sm:$0xff] %v69
  %s74 = scalar_lea.vmem %s1, 176
  %75 = vst [vmem:[%s74] sm:$0xff] %v69
  %s76 = scalar_lea.vmem %s1, 240
  %77 = vst [vmem:[%s76] sm:$0xff] %v69
  %s78 = scalar_lea.vmem %s1, 304
  %79 = vst [vmem:[%s78] sm:$0xff] %v69
  %s80 = scalar_lea.vmem %s1, 368
  %81 = vst [vmem:[%s80] sm:$0xff] %v69
  %s82 = scalar_lea.vmem %s1, 432
  %83 = vst [vmem:[%s82] sm:$0xff] %v69
  %s84 = scalar_lea.vmem %s1, 496
  %85 = vst [vmem:[%s84] sm:$0xff] %v69
  %s86 = scalar_lea.vmem %s1, 560
  %87 = vst [vmem:[%s86] sm:$0xff] %v69
  %s88 = scalar_lea.vmem %s1, 624
  %89 = vst [vmem:[%s88] sm:$0xff] %v69
  %s90 = scalar_lea.vmem %s1, 8
  %91 = vst [vmem:[%s90] sm:$0xff] %v4
  %s92 = scalar_lea.vmem %s1, 72
  %93 = vst [vmem:[%s92] sm:$0xff] %v4
  %s94 = scalar_lea.vmem %s1, 136
  %95 = vst [vmem:[%s94] sm:$0xff] %v4
  %s96 = scalar_lea.vmem %s1, 200
  %97 = vst [vmem:[%s96] sm:$0xff] %v4
  %s98 = scalar_lea.vmem %s1, 264
  %99 = vst [vmem:[%s98] sm:$0xff] %v4
  %s100 = scalar_lea.vmem %s1, 328
  %101 = vst [vmem:[%s100] sm:$0xff] %v4
  %s102 = scalar_lea.vmem %s1, 392
  %103 = vst [vmem:[%s102] sm:$0xff] %v4
  %s104 = scalar_lea.vmem %s1, 456
  %105 = vst [vmem:[%s104] sm:$0xff] %v4
  %s106 = scalar_lea.vmem %s1, 520
  %107 = vst [vmem:[%s106] sm:$0xff] %v4
  %s108 = scalar_lea.vmem %s1, 584
  %109 = vst [vmem:[%s108] sm:$0xff] %v4
  %s110 = scalar_lea.vmem %s1, 24
  %111 = vst [vmem:[%s110] sm:$0xff] %v25
  %s112 = scalar_lea.vmem %s1, 88
  %113 = vst [vmem:[%s112] sm:$0xff] %v25
  %s114 = scalar_lea.vmem %s1, 152
  %115 = vst [vmem:[%s114] sm:$0xff] %v25
  %s116 = scalar_lea.vmem %s1, 216
  %117 = vst [vmem:[%s116] sm:$0xff] %v25
  %s118 = scalar_lea.vmem %s1, 280
  %119 = vst [vmem:[%s118] sm:$0xff] %v25
  %s120 = scalar_lea.vmem %s1, 344
  %121 = vst [vmem:[%s120] sm:$0xff] %v25
  %s122 = scalar_lea.vmem %s1, 408
  %123 = vst [vmem:[%s122] sm:$0xff] %v25
  %s124 = scalar_lea.vmem %s1, 472
  %125 = vst [vmem:[%s124] sm:$0xff] %v25
  %s126 = scalar_lea.vmem %s1, 536
  %127 = vst [vmem:[%s126] sm:$0xff] %v25
  %s128 = scalar_lea.vmem %s1, 600
  %129 = vst [vmem:[%s128] sm:$0xff] %v25
  %s130 = scalar_lea.vmem %s1, 40
  %131 = vst [vmem:[%s130] sm:$0xff] %v47
  %s132 = scalar_lea.vmem %s1, 104
  %133 = vst [vmem:[%s132] sm:$0xff] %v47
  %s134 = scalar_lea.vmem %s1, 168
  %135 = vst [vmem:[%s134] sm:$0xff] %v47
  %s136 = scalar_lea.vmem %s1, 232
  %137 = vst [vmem:[%s136] sm:$0xff] %v47
  %s138 = scalar_lea.vmem %s1, 296
  %139 = vst [vmem:[%s138] sm:$0xff] %v47
  %s140 = scalar_lea.vmem %s1, 360
  %141 = vst [vmem:[%s140] sm:$0xff] %v47
  %s142 = scalar_lea.vmem %s1, 424
  %143 = vst [vmem:[%s142] sm:$0xff] %v47
  %s144 = scalar_lea.vmem %s1, 488
  %145 = vst [vmem:[%s144] sm:$0xff] %v47
  %s146 = scalar_lea.vmem %s1, 552
  %147 = vst [vmem:[%s146] sm:$0xff] %v47
  %s148 = scalar_lea.vmem %s1, 616
  %149 = vst [vmem:[%s148] sm:$0xff] %v47
  %s150 = scalar_lea.vmem %s1, 56
  %151 = vst [vmem:[%s150] sm:$0xff] %v69
  %s152 = scalar_lea.vmem %s1, 120
  %153 = vst [vmem:[%s152] sm:$0xff] %v69
  %s154 = scalar_lea.vmem %s1, 184
  %155 = vst [vmem:[%s154] sm:$0xff] %v69
  %s156 = scalar_lea.vmem %s1, 248
  %157 = vst [vmem:[%s156] sm:$0xff] %v69
  %s158 = scalar_lea.vmem %s1, 312
  %159 = vst [vmem:[%s158] sm:$0xff] %v69
  %s160 = scalar_lea.vmem %s1, 376
  %161 = vst [vmem:[%s160] sm:$0xff] %v69
  %s162 = scalar_lea.vmem %s1, 440
  %163 = vst [vmem:[%s162] sm:$0xff] %v69
  %s164 = scalar_lea.vmem %s1, 504
  %165 = vst [vmem:[%s164] sm:$0xff] %v69
  %s166 = scalar_lea.vmem %s1, 568
  %167 = vst [vmem:[%s166] sm:$0xff] %v69
  %s168 = scalar_lea.vmem %s1, 632
  %169 = vst [vmem:[%s168] sm:$0xff] %v69

// kernel: tile.34
$region0: #{tile.34}
  %s0 = inlined_call_operand.vmem [shape: f32[10,4,10,4], index: 0, kind: input, shape index: {}]
  %s1 = inlined_call_operand.vmem [shape: f32[40,40], index: 1, kind: output, shape index: {}]
  %s2 = smov 3
  %v3 = vld [vmem:[%s0] ss:$16 sm:%s2]
  %s4 = smov 12
  %v5 = vld [vmem:[%s0] ss:$16 sm:%s4]
  %vm6 = vcmask 1043458
  %v7 = vsel %vm6, %v5, %v3
  %s8 = smov 48
  %v9 = vld [vmem:[%s0] ss:$16 sm:%s8]
  %vm10 = vcmask 1045508
  %v11 = vsel %vm10, %v9, %v7
  %s12 = smov 192
  %v13 = vld [vmem:[%s0] ss:$16 sm:%s12]
  %vm14 = vcmask 1047558
  %v15 = vsel %vm14, %v13, %v11
  %vm16 = vcmask 31744
  %17 = vst.msk [vmem:[%s1] sm:$0xff] %vm16, %v15
  %s18 = scalar_lea.vmem %s0, 128
  %s19 = smov 3
  %v20 = vld [vmem:[%s18] ss:$16 sm:%s19]
  %s21 = scalar_lea.vmem %s0, 128
  %s22 = smov 12
  %v23 = vld [vmem:[%s21] ss:$16 sm:%s22]
  %vm24 = vcmask 1043458
  %v25 = vsel %vm24, %v23, %v20
  %s26 = scalar_lea.vmem %s0, 128
  %s27 = smov 48
  %v28 = vld [vmem:[%s26] ss:$16 sm:%s27]
  %vm29 = vcmask 1045508
  %v30 = vsel %vm29, %v28, %v25
  %s31 = scalar_lea.vmem %s0, 128
  %s32 = smov 192
  %v33 = vld [vmem:[%s31] ss:$16 sm:%s32]
  %vm34 = vcmask 1047558
  %v35 = vsel %vm34, %v33, %v30
  %vm36 = vcmask 31744
  %s37 = scalar_lea.vmem %s1, 8
  %38 = vst.msk [vmem:[%s37] sm:$0xff] %vm36, %v35
  %s39 = scalar_lea.vmem %s0, 256
  %s40 = smov 3
  %v41 = vld [vmem:[%s39] ss:$16 sm:%s40]
  %s42 = scalar_lea.vmem %s0, 256
  %s43 = smov 12
  %v44 = vld [vmem:[%s42] ss:$16 sm:%s43]
  %vm45 = vcmask 1043458
  %v46 = vsel %vm45, %v44, %v41
  %s47 = scalar_lea.vmem %s0, 256
  %s48 = smov 48
  %v49 = vld [vmem:[%s47] ss:$16 sm:%s48]
  %vm50 = vcmask 1045508
  %v51 = vsel %vm50, %v49, %v46
  %s52 = scalar_lea.vmem %s0, 256
  %s53 = smov 192
  %v54 = vld [vmem:[%s52] ss:$16 sm:%s53]
  %vm55 = vcmask 1047558
  %v56 = vsel %vm55, %v54, %v51
  %vm57 = vcmask 31744
  %s58 = scalar_lea.vmem %s1, 16
  %59 = vst.msk [vmem:[%s58] sm:$0xff] %vm57, %v56
  %s60 = scalar_lea.vmem %s0, 384
  %s61 = smov 3
  %v62 = vld [vmem:[%s60] ss:$16 sm:%s61]
  %s63 = scalar_lea.vmem %s0, 384
  %s64 = smov 12
  %v65 = vld [vmem:[%s63] ss:$16 sm:%s64]
  %vm66 = vcmask 1043458
  %v67 = vsel %vm66, %v65, %v62
  %s68 = scalar_lea.vmem %s0, 384
  %s69 = smov 48
  %v70 = vld [vmem:[%s68] ss:$16 sm:%s69]
  %vm71 = vcmask 1045508
  %v72 = vsel %vm71, %v70, %v67
  %s73 = scalar_lea.vmem %s0, 384
  %s74 = smov 192
  %v75 = vld [vmem:[%s73] ss:$16 sm:%s74]
  %vm76 = vcmask 1047558
  %v77 = vsel %vm76, %v75, %v72
  %vm78 = vcmask 31744
  %s79 = scalar_lea.vmem %s1, 24
  %80 = vst.msk [vmem:[%s79] sm:$0xff] %vm78, %v77
  %s81 = scalar_lea.vmem %s0, 512
  %s82 = smov 3
  %v83 = vld [vmem:[%s81] ss:$16 sm:%s82]
  %s84 = scalar_lea.vmem %s0, 512
  %s85 = smov 12
  %v86 = vld [vmem:[%s84] ss:$16 sm:%s85]
  %vm87 = vcmask 1043458
  %v88 = vsel %vm87, %v86, %v83
  %s89 = scalar_lea.vmem %s0, 512
  %s90 = smov 48
  %v91 = vld [vmem:[%s89] ss:$16 sm:%s90]
  %vm92 = vcmask 1045508
  %v93 = vsel %vm92, %v91, %v88
  %s94 = scalar_lea.vmem %s0, 512
  %s95 = smov 192
  %v96 = vld [vmem:[%s94] ss:$16 sm:%s95]
  %vm97 = vcmask 1047558
  %v98 = vsel %vm97, %v96, %v93
  %vm99 = vcmask 31744
  %s100 = scalar_lea.vmem %s1, 32
  %101 = vst.msk [vmem:[%s100] sm:$0xff] %vm99, %v98
  %s102 = scalar_lea.vmem %s0, 9
  %s103 = smov 3
  %v104 = vld [vmem:[%s102] ss:$16 sm:%s103]
  %s105 = scalar_lea.vmem %s0, 9
  %s106 = smov 12
  %v107 = vld [vmem:[%s105] ss:$16 sm:%s106]
  %vm108 = vcmask 1043458
  %v109 = vsel %vm108, %v107, %v104
  %s110 = scalar_lea.vmem %s0, 9
  %s111 = smov 48
  %v112 = vld [vmem:[%s110] ss:$16 sm:%s111]
  %vm113 = vcmask 1045508
  %v114 = vsel %vm113, %v112, %v109
  %s115 = scalar_lea.vmem %s0, 9
  %s116 = smov 192
  %v117 = vld [vmem:[%s115] ss:$16 sm:%s116]
  %vm118 = vcmask 1047558
  %v119 = vsel %vm118, %v117, %v114
  %120 = vrot.lane.b32.xlu0 %v119, 36
  %v121 = vpop.permute.xlu0 %120
  %vm122 = vcmask 326944
  %123 = vst.msk [vmem:[%s1] sm:$0xff] %vm122, %v121
  %s124 = scalar_lea.vmem %s0, 521
  %s125 = smov 3
  %v126 = vld [vmem:[%s124] ss:$16 sm:%s125]
  %s127 = scalar_lea.vmem %s0, 521
  %s128 = smov 12
  %v129 = vld [vmem:[%s127] ss:$16 sm:%s128]
  %vm130 = vcmask 1043458
  %v131 = vsel %vm130, %v129, %v126
  %s132 = scalar_lea.vmem %s0, 521
  %s133 = smov 48
  %v134 = vld [vmem:[%s132] ss:$16 sm:%s133]
  %vm135 = vcmask 1045508
  %v136 = vsel %vm135, %v134, %v131
  %s137 = scalar_lea.vmem %s0, 521
  %s138 = smov 192
  %v139 = vld [vmem:[%s137] ss:$16 sm:%s138]
  %vm140 = vcmask 1047558
  %v141 = vsel %vm140, %v139, %v136
  %142 = vrot.lane.b32.xlu0 %v141, 36
  %v143 = vpop.permute.xlu0 %142
  %vm144 = vcmask 326944
  %s145 = scalar_lea.vmem %s1, 32
  %146 = vst.msk [vmem:[%s145] sm:$0xff] %vm144, %v143
  %s147 = scalar_lea.vmem %s0, 137
  %s148 = smov 3
  %v149 = vld [vmem:[%s147] ss:$16 sm:%s148]
  %s150 = scalar_lea.vmem %s0, 137
  %s151 = smov 12
  %v152 = vld [vmem:[%s150] ss:$16 sm:%s151]
  %vm153 = vcmask 1043458
  %v154 = vsel %vm153, %v152, %v149
  %s155 = scalar_lea.vmem %s0, 137
  %s156 = smov 48
  %v157 = vld [vmem:[%s155] ss:$16 sm:%s156]
  %vm158 = vcmask 1045508
  %v159 = vsel %vm158, %v157, %v154
  %s160 = scalar_lea.vmem %s0, 137
  %s161 = smov 192
  %v162 = vld [vmem:[%s160] ss:$16 sm:%s161]
  %vm163 = vcmask 1047558
  %v164 = vsel %vm163, %v162, %v159
  %165 = vrot.lane.b32.xlu0 %v164, 36
  %v166 = vpop.permute.xlu0 %165
  %vm167 = vcmask 326944
  %s168 = scalar_lea.vmem %s1, 8
  %169 = vst.msk [vmem:[%s168] sm:$0xff] %vm167, %v166
  %s170 = scalar_lea.vmem %s0, 265
  %s171 = smov 3
  %v172 = vld [vmem:[%s170] ss:$16 sm:%s171]
  %s173 = scalar_lea.vmem %s0, 265
  %s174 = smov 12
  %v175 = vld [vmem:[%s173] ss:$16 sm:%s174]
  %vm176 = vcmask 1043458
  %v177 = vsel %vm176, %v175, %v172
  %s178 = scalar_lea.vmem %s0, 265
  %s179 = smov 48
  %v180 = vld [vmem:[%s178] ss:$16 sm:%s179]
  %vm181 = vcmask 1045508
  %v182 = vsel %vm181, %v180, %v177
  %s183 = scalar_lea.vmem %s0, 265
  %s184 = smov 192
  %v185 = vld [vmem:[%s183] ss:$16 sm:%s184]
  %vm186 = vcmask 1047558
  %v187 = vsel %vm186, %v185, %v182
  %188 = vrot.lane.b32.xlu0 %v187, 36
  %v189 = vpop.permute.xlu0 %188
  %vm190 = vcmask 326944
  %s191 = scalar_lea.vmem %s1, 16
  %192 = vst.msk [vmem:[%s191] sm:$0xff] %vm190, %v189
  %s193 = scalar_lea.vmem %s0, 393
  %s194 = smov 3
  %v195 = vld [vmem:[%s193] ss:$16 sm:%s194]
  %s196 = scalar_lea.vmem %s0, 393
  %s197 = smov 12
  %v198 = vld [vmem:[%s196] ss:$16 sm:%s197]
  %vm199 = vcmask 1043458
  %v200 = vsel %vm199, %v198, %v195
  %s201 = scalar_lea.vmem %s0, 393
  %s202 = smov 48
  %v203 = vld [vmem:[%s201] ss:$16 sm:%s202]
  %vm204 = vcmask 1045508
  %v205 = vsel %vm204, %v203, %v200
  %s206 = scalar_lea.vmem %s0, 393
  %s207 = smov 192
  %v208 = vld [vmem:[%s206] ss:$16 sm:%s207]
  %vm209 = vcmask 1047558
  %v210 = vsel %vm209, %v208, %v205
  %211 = vrot.lane.b32.xlu0 %v210, 36
  %v212 = vpop.permute.xlu0 %211
  %vm213 = vcmask 326944
  %s214 = scalar_lea.vmem %s1, 24
  %215 = vst.msk [vmem:[%s214] sm:$0xff] %vm213, %v212
  %s216 = scalar_lea.vmem %s0, 8
  %s217 = smov 3
  %v218 = vld [vmem:[%s216] ss:$16 sm:%s217]
  %s219 = scalar_lea.vmem %s0, 8
  %s220 = smov 12
  %v221 = vld [vmem:[%s219] ss:$16 sm:%s220]
  %vm222 = vcmask 1043458
  %v223 = vsel %vm222, %v221, %v218
  %s224 = scalar_lea.vmem %s0, 8
  %s225 = smov 48
  %v226 = vld [vmem:[%s224] ss:$16 sm:%s225]
  %vm227 = vcmask 1045508
  %v228 = vsel %vm227, %v226, %v223
  %s229 = scalar_lea.vmem %s0, 8
  %s230 = smov 192
  %v231 = vld [vmem:[%s229] ss:$16 sm:%s230]
  %vm232 = vcmask 1047558
  %v233 = vsel %vm232, %v231, %v228
  %234 = vrot.lane.b32.xlu0 %v233, 32
  %v235 = vpop.permute.xlu0 %234
  %vm236 = vcmask 294144
  %237 = vst.msk [vmem:[%s1] sm:$0xff] %vm236, %v235
  %s238 = scalar_lea.vmem %s0, 520
  %s239 = smov 3
  %v240 = vld [vmem:[%s238] ss:$16 sm:%s239]
  %s241 = scalar_lea.vmem %s0, 520
  %s242 = smov 12
  %v243 = vld [vmem:[%s241] ss:$16 sm:%s242]
  %vm244 = vcmask 1043458
  %v245 = vsel %vm244, %v243, %v240
  %s246 = scalar_lea.vmem %s0, 520
  %s247 = smov 48
  %v248 = vld [vmem:[%s246] ss:$16 sm:%s247]
  %vm249 = vcmask 1045508
  %v250 = vsel %vm249, %v248, %v245
  %s251 = scalar_lea.vmem %s0, 520
  %s252 = smov 192
  %v253 = vld [vmem:[%s251] ss:$16 sm:%s252]
  %vm254 = vcmask 1047558
  %v255 = vsel %vm254, %v253, %v250
  %256 = vrot.lane.b32.xlu0 %v255, 32
  %v257 = vpop.permute.xlu0 %256
  %vm258 = vcmask 294144
  %s259 = scalar_lea.vmem %s1, 32
  %260 = vst.msk [vmem:[%s259] sm:$0xff] %vm258, %v257
  %s261 = scalar_lea.vmem %s0, 136
  %s262 = smov 3
  %v263 = vld [vmem:[%s261] ss:$16 sm:%s262]
  %s264 = scalar_lea.vmem %s0, 136
  %s265 = smov 12
  %v266 = vld [vmem:[%s264] ss:$16 sm:%s265]
  %vm267 = vcmask 1043458
  %v268 = vsel %vm267, %v266, %v263
  %s269 = scalar_lea.vmem %s0, 136
  %s270 = smov 48
  %v271 = vld [vmem:[%s269] ss:$16 sm:%s270]
  %vm272 = vcmask 1045508
  %v273 = vsel %vm272, %v271, %v268
  %s274 = scalar_lea.vmem %s0, 136
  %s275 = smov 192
  %v276 = vld [vmem:[%s274] ss:$16 sm:%s275]
  %vm277 = vcmask 1047558
  %v278 = vsel %vm277, %v276, %v273
  %279 = vrot.lane.b32.xlu0 %v278, 32
  %v280 = vpop.permute.xlu0 %279
  %vm281 = vcmask 294144
  %s282 = scalar_lea.vmem %s1, 8
  %283 = vst.msk [vmem:[%s282] sm:$0xff] %vm281, %v280
  %s284 = scalar_lea.vmem %s0, 264
  %s285 = smov 3
  %v286 = vld [vmem:[%s284] ss:$16 sm:%s285]
  %s287 = scalar_lea.vmem %s0, 264
  %s288 = smov 12
  %v289 = vld [vmem:[%s287] ss:$16 sm:%s288]
  %vm290 = vcmask 1043458
  %v291 = vsel %vm290, %v289, %v286
  %s292 = scalar_lea.vmem %s0, 264
  %s293 = smov 48
  %v294 = vld [vmem:[%s292] ss:$16 sm:%s293]
  %vm295 = vcmask 1045508
  %v296 = vsel %vm295, %v294, %v291
  %s297 = scalar_lea.vmem %s0, 264
  %s298 = smov 192
  %v299 = vld [vmem:[%s297] ss:$16 sm:%s298]
  %vm300 = vcmask 1047558
  %v301 = vsel %vm300, %v299, %v296
  %302 = vrot.lane.b32.xlu0 %v301, 32
  %v303 = vpop.permute.xlu0 %302
  %vm304 = vcmask 294144
  %s305 = scalar_lea.vmem %s1, 16
  %306 = vst.msk [vmem:[%s305] sm:$0xff] %vm304, %v303
  %s307 = scalar_lea.vmem %s0, 392
  %s308 = smov 3
  %v309 = vld [vmem:[%s307] ss:$16 sm:%s308]
  %s310 = scalar_lea.vmem %s0, 392
  %s311 = smov 12
  %v312 = vld [vmem:[%s310] ss:$16 sm:%s311]
  %vm313 = vcmask 1043458
  %v314 = vsel %vm313, %v312, %v309
  %s315 = scalar_lea.vmem %s0, 392
  %s316 = smov 48
  %v317 = vld [vmem:[%s315] ss:$16 sm:%s316]
  %vm318 = vcmask 1045508
  %v319 = vsel %vm318, %v317, %v314
  %s320 = scalar_lea.vmem %s0, 392
  %s321 = smov 192
  %v322 = vld [vmem:[%s320] ss:$16 sm:%s321]
  %vm323 = vcmask 1047558
  %v324 = vsel %vm323, %v322, %v319
  %325 = vrot.lane.b32.xlu0 %v324, 32
  %v326 = vpop.permute.xlu0 %325
  %vm327 = vcmask 294144
  %s328 = scalar_lea.vmem %s1, 24
  %329 = vst.msk [vmem:[%s328] sm:$0xff] %vm327, %v326
  %s330 = scalar_lea.vmem %s0, 7
  %s331 = smov 3
  %v332 = vld [vmem:[%s330] ss:$16 sm:%s331]
  %s333 = scalar_lea.vmem %s0, 7
  %s334 = smov 12
  %v335 = vld [vmem:[%s333] ss:$16 sm:%s334]
  %vm336 = vcmask 1043458
  %v337 = vsel %vm336, %v335, %v332
  %s338 = scalar_lea.vmem %s0, 7
  %s339 = smov 48
  %v340 = vld [vmem:[%s338] ss:$16 sm:%s339]
  %vm341 = vcmask 1045508
  %v342 = vsel %vm341, %v340, %v337
  %s343 = scalar_lea.vmem %s0, 7
  %s344 = smov 192
  %v345 = vld [vmem:[%s343] ss:$16 sm:%s344]
  %vm346 = vcmask 1047558
  %v347 = vsel %vm346, %v345, %v342
  %348 = vrot.lane.b32.xlu0 %v347, 28
  %v349 = vpop.permute.xlu0 %348
  %vm350 = vcmask 261344
  %351 = vst.msk [vmem:[%s1] sm:$0xff] %vm350, %v349
  %s352 = scalar_lea.vmem %s0, 519
  %s353 = smov 3
  %v354 = vld [vmem:[%s352] ss:$16 sm:%s353]
  %s355 = scalar_lea.vmem %s0, 519
  %s356 = smov 12
  %v357 = vld [vmem:[%s355] ss:$16 sm:%s356]
  %vm358 = vcmask 1043458
  %v359 = vsel %vm358, %v357, %v354
  %s360 = scalar_lea.vmem %s0, 519
  %s361 = smov 48
  %v362 = vld [vmem:[%s360] ss:$16 sm:%s361]
  %vm363 = vcmask 1045508
  %v364 = vsel %vm363, %v362, %v359
  %s365 = scalar_lea.vmem %s0, 519
  %s366 = smov 192
  %v367 = vld [vmem:[%s365] ss:$16 sm:%s366]
  %vm368 = vcmask 1047558
  %v369 = vsel %vm368, %v367, %v364
  %370 = vrot.lane.b32.xlu0 %v369, 28
  %v371 = vpop.permute.xlu0 %370
  %vm372 = vcmask 261344
  %s373 = scalar_lea.vmem %s1, 32
  %374 = vst.msk [vmem:[%s373] sm:$0xff] %vm372, %v371
  %s375 = scalar_lea.vmem %s0, 135
  %s376 = smov 3
  %v377 = vld [vmem:[%s375] ss:$16 sm:%s376]
  %s378 = scalar_lea.vmem %s0, 135
  %s379 = smov 12
  %v380 = vld [vmem:[%s378] ss:$16 sm:%s379]
  %vm381 = vcmask 1043458
  %v382 = vsel %vm381, %v380, %v377
  %s383 = scalar_lea.vmem %s0, 135
  %s384 = smov 48
  %v385 = vld [vmem:[%s383] ss:$16 sm:%s384]
  %vm386 = vcmask 1045508
  %v387 = vsel %vm386, %v385, %v382
  %s388 = scalar_lea.vmem %s0, 135
  %s389 = smov 192
  %v390 = vld [vmem:[%s388] ss:$16 sm:%s389]
  %vm391 = vcmask 1047558
  %v392 = vsel %vm391, %v390, %v387
  %393 = vrot.lane.b32.xlu0 %v392, 28
  %v394 = vpop.permute.xlu0 %393
  %vm395 = vcmask 261344
  %s396 = scalar_lea.vmem %s1, 8
  %397 = vst.msk [vmem:[%s396] sm:$0xff] %vm395, %v394
  %s398 = scalar_lea.vmem %s0, 263
  %s399 = smov 3
  %v400 = vld [vmem:[%s398] ss:$16 sm:%s399]
  %s401 = scalar_lea.vmem %s0, 263
  %s402 = smov 12
  %v403 = vld [vmem:[%s401] ss:$16 sm:%s402]
  %vm404 = vcmask 1043458
  %v405 = vsel %vm404, %v403, %v400
  %s406 = scalar_lea.vmem %s0, 263
  %s407 = smov 48
  %v408 = vld [vmem:[%s406] ss:$16 sm:%s407]
  %vm409 = vcmask 1045508
  %v410 = vsel %vm409, %v408, %v405
  %s411 = scalar_lea.vmem %s0, 263
  %s412 = smov 192
  %v413 = vld [vmem:[%s411] ss:$16 sm:%s412]
  %vm414 = vcmask 1047558
  %v415 = vsel %vm414, %v413, %v410
  %416 = vrot.lane.b32.xlu0 %v415, 28
  %v417 = vpop.permute.xlu0 %416
  %vm418 = vcmask 261344
  %s419 = scalar_lea.vmem %s1, 16
  %420 = vst.msk [vmem:[%s419] sm:$0xff] %vm418, %v417
  %s421 = scalar_lea.vmem %s0, 391
  %s422 = smov 3
  %v423 = vld [vmem:[%s421] ss:$16 sm:%s422]
  %s424 = scalar_lea.vmem %s0, 391
  %s425 = smov 12
  %v426 = vld [vmem:[%s424] ss:$16 sm:%s425]
  %vm427 = vcmask 1043458
  %v428 = vsel %vm427, %v426, %v423
  %s429 = scalar_lea.vmem %s0, 391
  %s430 = smov 48
  %v431 = vld [vmem:[%s429] ss:$16 sm:%s430]
  %vm432 = vcmask 1045508
  %v433 = vsel %vm432, %v431, %v428
  %s434 = scalar_lea.vmem %s0, 391
  %s435 = smov 192
  %v436 = vld [vmem:[%s434] ss:$16 sm:%s435]
  %vm437 = vcmask 1047558
  %v438 = vsel %vm437, %v436, %v433
  %439 = vrot.lane.b32.xlu0 %v438, 28
  %v440 = vpop.permute.xlu0 %439
  %vm441 = vcmask 261344
  %s442 = scalar_lea.vmem %s1, 24
  %443 = vst.msk [vmem:[%s442] sm:$0xff] %vm441, %v440
  %s444 = scalar_lea.vmem %s0, 6
  %s445 = smov 3
  %v446 = vld [vmem:[%s444] ss:$16 sm:%s445]
  %s447 = scalar_lea.vmem %s0, 6
  %s448 = smov 12
  %v449 = vld [vmem:[%s447] ss:$16 sm:%s448]
  %vm450 = vcmask 1043458
  %v451 = vsel %vm450, %v449, %v446
  %s452 = scalar_lea.vmem %s0, 6
  %s453 = smov 48
  %v454 = vld [vmem:[%s452] ss:$16 sm:%s453]
  %vm455 = vcmask 1045508
  %v456 = vsel %vm455, %v454, %v451
  %s457 = scalar_lea.vmem %s0, 6
  %s458 = smov 192
  %v459 = vld [vmem:[%s457] ss:$16 sm:%s458]
  %vm460 = vcmask 1047558
  %v461 = vsel %vm460, %v459, %v456
  %462 = vrot.lane.b32.xlu0 %v461, 24
  %v463 = vpop.permute.xlu0 %462
  %vm464 = vcmask 228544
  %465 = vst.msk [vmem:[%s1] sm:$0xff] %vm464, %v463
  %s466 = scalar_lea.vmem %s0, 518
  %s467 = smov 3
  %v468 = vld [vmem:[%s466] ss:$16 sm:%s467]
  %s469 = scalar_lea.vmem %s0, 518
  %s470 = smov 12
  %v471 = vld [vmem:[%s469] ss:$16 sm:%s470]
  %vm472 = vcmask 1043458
  %v473 = vsel %vm472, %v471, %v468
  %s474 = scalar_lea.vmem %s0, 518
  %s475 = smov 48
  %v476 = vld [vmem:[%s474] ss:$16 sm:%s475]
  %vm477 = vcmask 1045508
  %v478 = vsel %vm477, %v476, %v473
  %s479 = scalar_lea.vmem %s0, 518
  %s480 = smov 192
  %v481 = vld [vmem:[%s479] ss:$16 sm:%s480]
  %vm482 = vcmask 1047558
  %v483 = vsel %vm482, %v481, %v478
  %484 = vrot.lane.b32.xlu0 %v483, 24
  %v485 = vpop.permute.xlu0 %484
  %vm486 = vcmask 228544
  %s487 = scalar_lea.vmem %s1, 32
  %488 = vst.msk [vmem:[%s487] sm:$0xff] %vm486, %v485
  %s489 = scalar_lea.vmem %s0, 134
  %s490 = smov 3
  %v491 = vld [vmem:[%s489] ss:$16 sm:%s490]
  %s492 = scalar_lea.vmem %s0, 134
  %s493 = smov 12
  %v494 = vld [vmem:[%s492] ss:$16 sm:%s493]
  %vm495 = vcmask 1043458
  %v496 = vsel %vm495, %v494, %v491
  %s497 = scalar_lea.vmem %s0, 134
  %s498 = smov 48
  %v499 = vld [vmem:[%s497] ss:$16 sm:%s498]
  %vm500 = vcmask 1045508
  %v501 = vsel %vm500, %v499, %v496
  %s502 = scalar_lea.vmem %s0, 134
  %s503 = smov 192
  %v504 = vld [vmem:[%s502] ss:$16 sm:%s503]
  %vm505 = vcmask 1047558
  %v506 = vsel %vm505, %v504, %v501
  %507 = vrot.lane.b32.xlu0 %v506, 24
  %v508 = vpop.permute.xlu0 %507
  %vm509 = vcmask 228544
  %s510 = scalar_lea.vmem %s1, 8
  %511 = vst.msk [vmem:[%s510] sm:$0xff] %vm509, %v508
  %s512 = scalar_lea.vmem %s0, 262
  %s513 = smov 3
  %v514 = vld [vmem:[%s512] ss:$16 sm:%s513]
  %s515 = scalar_lea.vmem %s0, 262
  %s516 = smov 12
  %v517 = vld [vmem:[%s515] ss:$16 sm:%s516]
  %vm518 = vcmask 1043458
  %v519 = vsel %vm518, %v517, %v514
  %s520 = scalar_lea.vmem %s0, 262
  %s521 = smov 48
  %v522 = vld [vmem:[%s520] ss:$16 sm:%s521]
  %vm523 = vcmask 1045508
  %v524 = vsel %vm523, %v522, %v519
  %s525 = scalar_lea.vmem %s0, 262
  %s526 = smov 192
  %v527 = vld [vmem:[%s525] ss:$16 sm:%s526]
  %vm528 = vcmask 1047558
  %v529 = vsel %vm528, %v527, %v524
  %530 = vrot.lane.b32.xlu0 %v529, 24
  %v531 = vpop.permute.xlu0 %530
  %vm532 = vcmask 228544
  %s533 = scalar_lea.vmem %s1, 16
  %534 = vst.msk [vmem:[%s533] sm:$0xff] %vm532, %v531
  %s535 = scalar_lea.vmem %s0, 390
  %s536 = smov 3
  %v537 = vld [vmem:[%s535] ss:$16 sm:%s536]
  %s538 = scalar_lea.vmem %s0, 390
  %s539 = smov 12
  %v540 = vld [vmem:[%s538] ss:$16 sm:%s539]
  %vm541 = vcmask 1043458
  %v542 = vsel %vm541, %v540, %v537
  %s543 = scalar_lea.vmem %s0, 390
  %s544 = smov 48
  %v545 = vld [vmem:[%s543] ss:$16 sm:%s544]
  %vm546 = vcmask 1045508
  %v547 = vsel %vm546, %v545, %v542
  %s548 = scalar_lea.vmem %s0, 390
  %s549 = smov 192
  %v550 = vld [vmem:[%s548] ss:$16 sm:%s549]
  %vm551 = vcmask 1047558
  %v552 = vsel %vm551, %v550, %v547
  %553 = vrot.lane.b32.xlu0 %v552, 24
  %v554 = vpop.permute.xlu0 %553
  %vm555 = vcmask 228544
  %s556 = scalar_lea.vmem %s1, 24
  %557 = vst.msk [vmem:[%s556] sm:$0xff] %vm555, %v554
  %s558 = scalar_lea.vmem %s0, 5
  %s559 = smov 3
  %v560 = vld [vmem:[%s558] ss:$16 sm:%s559]
  %s561 = scalar_lea.vmem %s0, 5
  %s562 = smov 12
  %v563 = vld [vmem:[%s561] ss:$16 sm:%s562]
  %vm564 = vcmask 1043458
  %v565 = vsel %vm564, %v563, %v560
  %s566 = scalar_lea.vmem %s0, 5
  %s567 = smov 48
  %v568 = vld [vmem:[%s566] ss:$16 sm:%s567]
  %vm569 = vcmask 1045508
  %v570 = vsel %vm569, %v568, %v565
  %s571 = scalar_lea.vmem %s0, 5
  %s572 = smov 192
  %v573 = vld [vmem:[%s571] ss:$16 sm:%s572]
  %vm574 = vcmask 1047558
  %v575 = vsel %vm574, %v573, %v570
  %576 = vrot.lane.b32.xlu0 %v575, 20
  %v577 = vpop.permute.xlu0 %576
  %vm578 = vcmask 195744
  %579 = vst.msk [vmem:[%s1] sm:$0xff] %vm578, %v577
  %s580 = scalar_lea.vmem %s0, 517
  %s581 = smov 3
  %v582 = vld [vmem:[%s580] ss:$16 sm:%s581]
  %s583 = scalar_lea.vmem %s0, 517
  %s584 = smov 12
  %v585 = vld [vmem:[%s583] ss:$16 sm:%s584]
  %vm586 = vcmask 1043458
  %v587 = vsel %vm586, %v585, %v582
  %s588 = scalar_lea.vmem %s0, 517
  %s589 = smov 48
  %v590 = vld [vmem:[%s588] ss:$16 sm:%s589]
  %vm591 = vcmask 1045508
  %v592 = vsel %vm591, %v590, %v587
  %s593 = scalar_lea.vmem %s0, 517
  %s594 = smov 192
  %v595 = vld [vmem:[%s593] ss:$16 sm:%s594]
  %vm596 = vcmask 1047558
  %v597 = vsel %vm596, %v595, %v592
  %598 = vrot.lane.b32.xlu0 %v597, 20
  %v599 = vpop.permute.xlu0 %598
  %vm600 = vcmask 195744
  %s601 = scalar_lea.vmem %s1, 32
  %602 = vst.msk [vmem:[%s601] sm:$0xff] %vm600, %v599
  %s603 = scalar_lea.vmem %s0, 133
  %s604 = smov 3
  %v605 = vld [vmem:[%s603] ss:$16 sm:%s604]
  %s606 = scalar_lea.vmem %s0, 133
  %s607 = smov 12
  %v608 = vld [vmem:[%s606] ss:$16 sm:%s607]
  %vm609 = vcmask 1043458
  %v610 = vsel %vm609, %v608, %v605
  %s611 = scalar_lea.vmem %s0, 133
  %s612 = smov 48
  %v613 = vld [vmem:[%s611] ss:$16 sm:%s612]
  %vm614 = vcmask 1045508
  %v615 = vsel %vm614, %v613, %v610
  %s616 = scalar_lea.vmem %s0, 133
  %s617 = smov 192
  %v618 = vld [vmem:[%s616] ss:$16 sm:%s617]
  %vm619 = vcmask 1047558
  %v620 = vsel %vm619, %v618, %v615
  %621 = vrot.lane.b32.xlu0 %v620, 20
  %v622 = vpop.permute.xlu0 %621
  %vm623 = vcmask 195744
  %s624 = scalar_lea.vmem %s1, 8
  %625 = vst.msk [vmem:[%s624] sm:$0xff] %vm623, %v622
  %s626 = scalar_lea.vmem %s0, 261
  %s627 = smov 3
  %v628 = vld [vmem:[%s626] ss:$16 sm:%s627]
  %s629 = scalar_lea.vmem %s0, 261
  %s630 = smov 12
  %v631 = vld [vmem:[%s629] ss:$16 sm:%s630]
  %vm632 = vcmask 1043458
  %v633 = vsel %vm632, %v631, %v628
  %s634 = scalar_lea.vmem %s0, 261
  %s635 = smov 48
  %v636 = vld [vmem:[%s634] ss:$16 sm:%s635]
  %vm637 = vcmask 1045508
  %v638 = vsel %vm637, %v636, %v633
  %s639 = scalar_lea.vmem %s0, 261
  %s640 = smov 192
  %v641 = vld [vmem:[%s639] ss:$16 sm:%s640]
  %vm642 = vcmask 1047558
  %v643 = vsel %vm642, %v641, %v638
  %644 = vrot.lane.b32.xlu0 %v643, 20
  %v645 = vpop.permute.xlu0 %644
  %vm646 = vcmask 195744
  %s647 = scalar_lea.vmem %s1, 16
  %648 = vst.msk [vmem:[%s647] sm:$0xff] %vm646, %v645
  %s649 = scalar_lea.vmem %s0, 389
  %s650 = smov 3
  %v651 = vld [vmem:[%s649] ss:$16 sm:%s650]
  %s652 = scalar_lea.vmem %s0, 389
  %s653 = smov 12
  %v654 = vld [vmem:[%s652] ss:$16 sm:%s653]
  %vm655 = vcmask 1043458
  %v656 = vsel %vm655, %v654, %v651
  %s657 = scalar_lea.vmem %s0, 389
  %s658 = smov 48
  %v659 = vld [vmem:[%s657] ss:$16 sm:%s658]
  %vm660 = vcmask 1045508
  %v661 = vsel %vm660, %v659, %v656
  %s662 = scalar_lea.vmem %s0, 389
  %s663 = smov 192
  %v664 = vld [vmem:[%s662] ss:$16 sm:%s663]
  %vm665 = vcmask 1047558
  %v666 = vsel %vm665, %v664, %v661
  %667 = vrot.lane.b32.xlu0 %v666, 20
  %v668 = vpop.permute.xlu0 %667
  %vm669 = vcmask 195744
  %s670 = scalar_lea.vmem %s1, 24
  %671 = vst.msk [vmem:[%s670] sm:$0xff] %vm669, %v668
  %s672 = scalar_lea.vmem %s0, 4
  %s673 = smov 3
  %v674 = vld [vmem:[%s672] ss:$16 sm:%s673]
  %s675 = scalar_lea.vmem %s0, 4
  %s676 = smov 12
  %v677 = vld [vmem:[%s675] ss:$16 sm:%s676]
  %vm678 = vcmask 1043458
  %v679 = vsel %vm678, %v677, %v674
  %s680 = scalar_lea.vmem %s0, 4
  %s681 = smov 48
  %v682 = vld [vmem:[%s680] ss:$16 sm:%s681]
  %vm683 = vcmask 1045508
  %v684 = vsel %vm683, %v682, %v679
  %s685 = scalar_lea.vmem %s0, 4
  %s686 = smov 192
  %v687 = vld [vmem:[%s685] ss:$16 sm:%s686]
  %vm688 = vcmask 1047558
  %v689 = vsel %vm688, %v687, %v684
  %690 = vrot.lane.b32.xlu0 %v689, 16
  %v691 = vpop.permute.xlu0 %690
  %vm692 = vcmask 162944
  %693 = vst.msk [vmem:[%s1] sm:$0xff] %vm692, %v691
  %s694 = scalar_lea.vmem %s0, 516
  %s695 = smov 3
  %v696 = vld [vmem:[%s694] ss:$16 sm:%s695]
  %s697 = scalar_lea.vmem %s0, 516
  %s698 = smov 12
  %v699 = vld [vmem:[%s697] ss:$16 sm:%s698]
  %vm700 = vcmask 1043458
  %v701 = vsel %vm700, %v699, %v696
  %s702 = scalar_lea.vmem %s0, 516
  %s703 = smov 48
  %v704 = vld [vmem:[%s702] ss:$16 sm:%s703]
  %vm705 = vcmask 1045508
  %v706 = vsel %vm705, %v704, %v701
  %s707 = scalar_lea.vmem %s0, 516
  %s708 = smov 192
  %v709 = vld [vmem:[%s707] ss:$16 sm:%s708]
  %vm710 = vcmask 1047558
  %v711 = vsel %vm710, %v709, %v706
  %712 = vrot.lane.b32.xlu0 %v711, 16
  %v713 = vpop.permute.xlu0 %712
  %vm714 = vcmask 162944
  %s715 = scalar_lea.vmem %s1, 32
  %716 = vst.msk [vmem:[%s715] sm:$0xff] %vm714, %v713
  %s717 = scalar_lea.vmem %s0, 132
  %s718 = smov 3
  %v719 = vld [vmem:[%s717] ss:$16 sm:%s718]
  %s720 = scalar_lea.vmem %s0, 132
  %s721 = smov 12
  %v722 = vld [vmem:[%s720] ss:$16 sm:%s721]
  %vm723 = vcmask 1043458
  %v724 = vsel %vm723, %v722, %v719
  %s725 = scalar_lea.vmem %s0, 132
  %s726 = smov 48
  %v727 = vld [vmem:[%s725] ss:$16 sm:%s726]
  %vm728 = vcmask 1045508
  %v729 = vsel %vm728, %v727, %v724
  %s730 = scalar_lea.vmem %s0, 132
  %s731 = smov 192
  %v732 = vld [vmem:[%s730] ss:$16 sm:%s731]
  %vm733 = vcmask 1047558
  %v734 = vsel %vm733, %v732, %v729
  %735 = vrot.lane.b32.xlu0 %v734, 16
  %v736 = vpop.permute.xlu0 %735
  %vm737 = vcmask 162944
  %s738 = scalar_lea.vmem %s1, 8
  %739 = vst.msk [vmem:[%s738] sm:$0xff] %vm737, %v736
  %s740 = scalar_lea.vmem %s0, 260
  %s741 = smov 3
  %v742 = vld [vmem:[%s740] ss:$16 sm:%s741]
  %s743 = scalar_lea.vmem %s0, 260
  %s744 = smov 12
  %v745 = vld [vmem:[%s743] ss:$16 sm:%s744]
  %vm746 = vcmask 1043458
  %v747 = vsel %vm746, %v745, %v742
  %s748 = scalar_lea.vmem %s0, 260
  %s749 = smov 48
  %v750 = vld [vmem:[%s748] ss:$16 sm:%s749]
  %vm751 = vcmask 1045508
  %v752 = vsel %vm751, %v750, %v747
  %s753 = scalar_lea.vmem %s0, 260
  %s754 = smov 192
  %v755 = vld [vmem:[%s753] ss:$16 sm:%s754]
  %vm756 = vcmask 1047558
  %v757 = vsel %vm756, %v755, %v752
  %758 = vrot.lane.b32.xlu0 %v757, 16
  %v759 = vpop.permute.xlu0 %758
  %vm760 = vcmask 162944
  %s761 = scalar_lea.vmem %s1, 16
  %762 = vst.msk [vmem:[%s761] sm:$0xff] %vm760, %v759
  %s763 = scalar_lea.vmem %s0, 388
  %s764 = smov 3
  %v765 = vld [vmem:[%s763] ss:$16 sm:%s764]
  %s766 = scalar_lea.vmem %s0, 388
  %s767 = smov 12
  %v768 = vld [vmem:[%s766] ss:$16 sm:%s767]
  %vm769 = vcmask 1043458
  %v770 = vsel %vm769, %v768, %v765
  %s771 = scalar_lea.vmem %s0, 388
  %s772 = smov 48
  %v773 = vld [vmem:[%s771] ss:$16 sm:%s772]
  %vm774 = vcmask 1045508
  %v775 = vsel %vm774, %v773, %v770
  %s776 = scalar_lea.vmem %s0, 388
  %s777 = smov 192
  %v778 = vld [vmem:[%s776] ss:$16 sm:%s777]
  %vm779 = vcmask 1047558
  %v780 = vsel %vm779, %v778, %v775
  %781 = vrot.lane.b32.xlu0 %v780, 16
  %v782 = vpop.permute.xlu0 %781
  %vm783 = vcmask 162944
  %s784 = scalar_lea.vmem %s1, 24
  %785 = vst.msk [vmem:[%s784] sm:$0xff] %vm783, %v782
  %s786 = scalar_lea.vmem %s0, 3
  %s787 = smov 3
  %v788 = vld [vmem:[%s786] ss:$16 sm:%s787]
  %s789 = scalar_lea.vmem %s0, 3
  %s790 = smov 12
  %v791 = vld [vmem:[%s789] ss:$16 sm:%s790]
  %vm792 = vcmask 1043458
  %v793 = vsel %vm792, %v791, %v788
  %s794 = scalar_lea.vmem %s0, 3
  %s795 = smov 48
  %v796 = vld [vmem:[%s794] ss:$16 sm:%s795]
  %vm797 = vcmask 1045508
  %v798 = vsel %vm797, %v796, %v793
  %s799 = scalar_lea.vmem %s0, 3
  %s800 = smov 192
  %v801 = vld [vmem:[%s799] ss:$16 sm:%s800]
  %vm802 = vcmask 1047558
  %v803 = vsel %vm802, %v801, %v798
  %804 = vrot.lane.b32.xlu0 %v803, 12
  %v805 = vpop.permute.xlu0 %804
  %vm806 = vcmask 130144
  %807 = vst.msk [vmem:[%s1] sm:$0xff] %vm806, %v805
  %s808 = scalar_lea.vmem %s0, 515
  %s809 = smov 3
  %v810 = vld [vmem:[%s808] ss:$16 sm:%s809]
  %s811 = scalar_lea.vmem %s0, 515
  %s812 = smov 12
  %v813 = vld [vmem:[%s811] ss:$16 sm:%s812]
  %vm814 = vcmask 1043458
  %v815 = vsel %vm814, %v813, %v810
  %s816 = scalar_lea.vmem %s0, 515
  %s817 = smov 48
  %v818 = vld [vmem:[%s816] ss:$16 sm:%s817]
  %vm819 = vcmask 1045508
  %v820 = vsel %vm819, %v818, %v815
  %s821 = scalar_lea.vmem %s0, 515
  %s822 = smov 192
  %v823 = vld [vmem:[%s821] ss:$16 sm:%s822]
  %vm824 = vcmask 1047558
  %v825 = vsel %vm824, %v823, %v820
  %826 = vrot.lane.b32.xlu0 %v825, 12
  %v827 = vpop.permute.xlu0 %826
  %vm828 = vcmask 130144
  %s829 = scalar_lea.vmem %s1, 32
  %830 = vst.msk [vmem:[%s829] sm:$0xff] %vm828, %v827
  %s831 = scalar_lea.vmem %s0, 131
  %s832 = smov 3
  %v833 = vld [vmem:[%s831] ss:$16 sm:%s832]
  %s834 = scalar_lea.vmem %s0, 131
  %s835 = smov 12
  %v836 = vld [vmem:[%s834] ss:$16 sm:%s835]
  %vm837 = vcmask 1043458
  %v838 = vsel %vm837, %v836, %v833
  %s839 = scalar_lea.vmem %s0, 131
  %s840 = smov 48
  %v841 = vld [vmem:[%s839] ss:$16 sm:%s840]
  %vm842 = vcmask 1045508
  %v843 = vsel %vm842, %v841, %v838
  %s844 = scalar_lea.vmem %s0, 131
  %s845 = smov 192
  %v846 = vld [vmem:[%s844] ss:$16 sm:%s845]
  %vm847 = vcmask 1047558
  %v848 = vsel %vm847, %v846, %v843
  %849 = vrot.lane.b32.xlu0 %v848, 12
  %v850 = vpop.permute.xlu0 %849
  %vm851 = vcmask 130144
  %s852 = scalar_lea.vmem %s1, 8
  %853 = vst.msk [vmem:[%s852] sm:$0xff] %vm851, %v850
  %s854 = scalar_lea.vmem %s0, 259
  %s855 = smov 3
  %v856 = vld [vmem:[%s854] ss:$16 sm:%s855]
  %s857 = scalar_lea.vmem %s0, 259
  %s858 = smov 12
  %v859 = vld [vmem:[%s857] ss:$16 sm:%s858]
  %vm860 = vcmask 1043458
  %v861 = vsel %vm860, %v859, %v856
  %s862 = scalar_lea.vmem %s0, 259
  %s863 = smov 48
  %v864 = vld [vmem:[%s862] ss:$16 sm:%s863]
  %vm865 = vcmask 1045508
  %v866 = vsel %vm865, %v864, %v861
  %s867 = scalar_lea.vmem %s0, 259
  %s868 = smov 192
  %v869 = vld [vmem:[%s867] ss:$16 sm:%s868]
  %vm870 = vcmask 1047558
  %v871 = vsel %vm870, %v869, %v866
  %872 = vrot.lane.b32.xlu0 %v871, 12
  %v873 = vpop.permute.xlu0 %872
  %vm874 = vcmask 130144
  %s875 = scalar_lea.vmem %s1, 16
  %876 = vst.msk [vmem:[%s875] sm:$0xff] %vm874, %v873
  %s877 = scalar_lea.vmem %s0, 387
  %s878 = smov 3
  %v879 = vld [vmem:[%s877] ss:$16 sm:%s878]
  %s880 = scalar_lea.vmem %s0, 387
  %s881 = smov 12
  %v882 = vld [vmem:[%s880] ss:$16 sm:%s881]
  %vm883 = vcmask 1043458
  %v884 = vsel %vm883, %v882, %v879
  %s885 = scalar_lea.vmem %s0, 387
  %s886 = smov 48
  %v887 = vld [vmem:[%s885] ss:$16 sm:%s886]
  %vm888 = vcmask 1045508
  %v889 = vsel %vm888, %v887, %v884
  %s890 = scalar_lea.vmem %s0, 387
  %s891 = smov 192
  %v892 = vld [vmem:[%s890] ss:$16 sm:%s891]
  %vm893 = vcmask 1047558
  %v894 = vsel %vm893, %v892, %v889
  %895 = vrot.lane.b32.xlu0 %v894, 12
  %v896 = vpop.permute.xlu0 %895
  %vm897 = vcmask 130144
  %s898 = scalar_lea.vmem %s1, 24
  %899 = vst.msk [vmem:[%s898] sm:$0xff] %vm897, %v896
  %s900 = scalar_lea.vmem %s0, 2
  %s901 = smov 3
  %v902 = vld [vmem:[%s900] ss:$16 sm:%s901]
  %s903 = scalar_lea.vmem %s0, 2
  %s904 = smov 12
  %v905 = vld [vmem:[%s903] ss:$16 sm:%s904]
  %vm906 = vcmask 1043458
  %v907 = vsel %vm906, %v905, %v902
  %s908 = scalar_lea.vmem %s0, 2
  %s909 = smov 48
  %v910 = vld [vmem:[%s908] ss:$16 sm:%s909]
  %vm911 = vcmask 1045508
  %v912 = vsel %vm911, %v910, %v907
  %s913 = scalar_lea.vmem %s0, 2
  %s914 = smov 192
  %v915 = vld [vmem:[%s913] ss:$16 sm:%s914]
  %vm916 = vcmask 1047558
  %v917 = vsel %vm916, %v915, %v912
  %918 = vrot.lane.b32.xlu0 %v917, 8
  %v919 = vpop.permute.xlu0 %918
  %vm920 = vcmask 97344
  %921 = vst.msk [vmem:[%s1] sm:$0xff] %vm920, %v919
  %s922 = scalar_lea.vmem %s0, 514
  %s923 = smov 3
  %v924 = vld [vmem:[%s922] ss:$16 sm:%s923]
  %s925 = scalar_lea.vmem %s0, 514
  %s926 = smov 12
  %v927 = vld [vmem:[%s925] ss:$16 sm:%s926]
  %vm928 = vcmask 1043458
  %v929 = vsel %vm928, %v927, %v924
  %s930 = scalar_lea.vmem %s0, 514
  %s931 = smov 48
  %v932 = vld [vmem:[%s930] ss:$16 sm:%s931]
  %vm933 = vcmask 1045508
  %v934 = vsel %vm933, %v932, %v929
  %s935 = scalar_lea.vmem %s0, 514
  %s936 = smov 192
  %v937 = vld [vmem:[%s935] ss:$16 sm:%s936]
  %vm938 = vcmask 1047558
  %v939 = vsel %vm938, %v937, %v934
  %940 = vrot.lane.b32.xlu0 %v939, 8
  %v941 = vpop.permute.xlu0 %940
  %vm942 = vcmask 97344
  %s943 = scalar_lea.vmem %s1, 32
  %944 = vst.msk [vmem:[%s943] sm:$0xff] %vm942, %v941
  %s945 = scalar_lea.vmem %s0, 130
  %s946 = smov 3
  %v947 = vld [vmem:[%s945] ss:$16 sm:%s946]
  %s948 = scalar_lea.vmem %s0, 130
  %s949 = smov 12
  %v950 = vld [vmem:[%s948] ss:$16 sm:%s949]
  %vm951 = vcmask 1043458
  %v952 = vsel %vm951, %v950, %v947
  %s953 = scalar_lea.vmem %s0, 130
  %s954 = smov 48
  %v955 = vld [vmem:[%s953] ss:$16 sm:%s954]
  %vm956 = vcmask 1045508
  %v957 = vsel %vm956, %v955, %v952
  %s958 = scalar_lea.vmem %s0, 130
  %s959 = smov 192
  %v960 = vld [vmem:[%s958] ss:$16 sm:%s959]
  %vm961 = vcmask 1047558
  %v962 = vsel %vm961, %v960, %v957
  %963 = vrot.lane.b32.xlu0 %v962, 8
  %v964 = vpop.permute.xlu0 %963
  %vm965 = vcmask 97344
  %s966 = scalar_lea.vmem %s1, 8
  %967 = vst.msk [vmem:[%s966] sm:$0xff] %vm965, %v964
  %s968 = scalar_lea.vmem %s0, 258
  %s969 = smov 3
  %v970 = vld [vmem:[%s968] ss:$16 sm:%s969]
  %s971 = scalar_lea.vmem %s0, 258
  %s972 = smov 12
  %v973 = vld [vmem:[%s971] ss:$16 sm:%s972]
  %vm974 = vcmask 1043458
  %v975 = vsel %vm974, %v973, %v970
  %s976 = scalar_lea.vmem %s0, 258
  %s977 = smov 48
  %v978 = vld [vmem:[%s976] ss:$16 sm:%s977]
  %vm979 = vcmask 1045508
  %v980 = vsel %vm979, %v978, %v975
  %s981 = scalar_lea.vmem %s0, 258
  %s982 = smov 192
  %v983 = vld [vmem:[%s981] ss:$16 sm:%s982]
  %vm984 = vcmask 1047558
  %v985 = vsel %vm984, %v983, %v980
  %986 = vrot.lane.b32.xlu0 %v985, 8
  %v987 = vpop.permute.xlu0 %986
  %vm988 = vcmask 97344
  %s989 = scalar_lea.vmem %s1, 16
  %990 = vst.msk [vmem:[%s989] sm:$0xff] %vm988, %v987
  %s991 = scalar_lea.vmem %s0, 386
  %s992 = smov 3
  %v993 = vld [vmem:[%s991] ss:$16 sm:%s992]
  %s994 = scalar_lea.vmem %s0, 386
  %s995 = smov 12
  %v996 = vld [vmem:[%s994] ss:$16 sm:%s995]
  %vm997 = vcmask 1043458
  %v998 = vsel %vm997, %v996, %v993
  %s999 = scalar_lea.vmem %s0, 386
  %s1000 = smov 48
  %v1001 = vld [vmem:[%s999] ss:$16 sm:%s1000]
  %vm1002 = vcmask 1045508
  %v1003 = vsel %vm1002, %v1001, %v998
  %s1004 = scalar_lea.vmem %s0, 386
  %s1005 = smov 192
  %v1006 = vld [vmem:[%s1004] ss:$16 sm:%s1005]
  %vm1007 = vcmask 1047558
  %v1008 = vsel %vm1007, %v1006, %v1003
  %1009 = vrot.lane.b32.xlu0 %v1008, 8
  %v1010 = vpop.permute.xlu0 %1009
  %vm1011 = vcmask 97344
  %s1012 = scalar_lea.vmem %s1, 24
  %1013 = vst.msk [vmem:[%s1012] sm:$0xff] %vm1011, %v1010
  %s1014 = scalar_lea.vmem %s0, 1
  %s1015 = smov 3
  %v1016 = vld [vmem:[%s1014] ss:$16 sm:%s1015]
  %s1017 = scalar_lea.vmem %s0, 1
  %s1018 = smov 12
  %v1019 = vld [vmem:[%s1017] ss:$16 sm:%s1018]
  %vm1020 = vcmask 1043458
  %v1021 = vsel %vm1020, %v1019, %v1016
  %s1022 = scalar_lea.vmem %s0, 1
  %s1023 = smov 48
  %v1024 = vld [vmem:[%s1022] ss:$16 sm:%s1023]
  %vm1025 = vcmask 1045508
  %v1026 = vsel %vm1025, %v1024, %v1021
  %s1027 = scalar_lea.vmem %s0, 1
  %s1028 = smov 192
  %v1029 = vld [vmem:[%s1027] ss:$16 sm:%s1028]
  %vm1030 = vcmask 1047558
  %v1031 = vsel %vm1030, %v1029, %v1026
  %1032 = vrot.lane.b32.xlu0 %v1031, 4
  %v1033 = vpop.permute.xlu0 %1032
  %vm1034 = vcmask 64544
  %1035 = vst.msk [vmem:[%s1] sm:$0xff] %vm1034, %v1033
  %s1036 = scalar_lea.vmem %s0, 513
  %s1037 = smov 3
  %v1038 = vld [vmem:[%s1036] ss:$16 sm:%s1037]
  %s1039 = scalar_lea.vmem %s0, 513
  %s1040 = smov 12
  %v1041 = vld [vmem:[%s1039] ss:$16 sm:%s1040]
  %vm1042 = vcmask 1043458
  %v1043 = vsel %vm1042, %v1041, %v1038
  %s1044 = scalar_lea.vmem %s0, 513
  %s1045 = smov 48
  %v1046 = vld [vmem:[%s1044] ss:$16 sm:%s1045]
  %vm1047 = vcmask 1045508
  %v1048 = vsel %vm1047, %v1046, %v1043
  %s1049 = scalar_lea.vmem %s0, 513
  %s1050 = smov 192
  %v1051 = vld [vmem:[%s1049] ss:$16 sm:%s1050]
  %vm1052 = vcmask 1047558
  %v1053 = vsel %vm1052, %v1051, %v1048
  %1054 = vrot.lane.b32.xlu0 %v1053, 4
  %v1055 = vpop.permute.xlu0 %1054
  %vm1056 = vcmask 64544
  %s1057 = scalar_lea.vmem %s1, 32
  %1058 = vst.msk [vmem:[%s1057] sm:$0xff] %vm1056, %v1055
  %s1059 = scalar_lea.vmem %s0, 129
  %s1060 = smov 3
  %v1061 = vld [vmem:[%s1059] ss:$16 sm:%s1060]
  %s1062 = scalar_lea.vmem %s0, 129
  %s1063 = smov 12
  %v1064 = vld [vmem:[%s1062] ss:$16 sm:%s1063]
  %vm1065 = vcmask 1043458
  %v1066 = vsel %vm1065, %v1064, %v1061
  %s1067 = scalar_lea.vmem %s0, 129
  %s1068 = smov 48
  %v1069 = vld [vmem:[%s1067] ss:$16 sm:%s1068]
  %vm1070 = vcmask 1045508
  %v1071 = vsel %vm1070, %v1069, %v1066
  %s1072 = scalar_lea.vmem %s0, 129
  %s1073 = smov 192
  %v1074 = vld [vmem:[%s1072] ss:$16 sm:%s1073]
  %vm1075 = vcmask 1047558
  %v1076 = vsel %vm1075, %v1074, %v1071
  %1077 = vrot.lane.b32.xlu0 %v1076, 4
  %v1078 = vpop.permute.xlu0 %1077
  %vm1079 = vcmask 64544
  %s1080 = scalar_lea.vmem %s1, 8
  %1081 = vst.msk [vmem:[%s1080] sm:$0xff] %vm1079, %v1078
  %s1082 = scalar_lea.vmem %s0, 257
  %s1083 = smov 3
  %v1084 = vld [vmem:[%s1082] ss:$16 sm:%s1083]
  %s1085 = scalar_lea.vmem %s0, 257
  %s1086 = smov 12
  %v1087 = vld [vmem:[%s1085] ss:$16 sm:%s1086]
  %vm1088 = vcmask 1043458
  %v1089 = vsel %vm1088, %v1087, %v1084
  %s1090 = scalar_lea.vmem %s0, 257
  %s1091 = smov 48
  %v1092 = vld [vmem:[%s1090] ss:$16 sm:%s1091]
  %vm1093 = vcmask 1045508
  %v1094 = vsel %vm1093, %v1092, %v1089
  %s1095 = scalar_lea.vmem %s0, 257
  %s1096 = smov 192
  %v1097 = vld [vmem:[%s1095] ss:$16 sm:%s1096]
  %vm1098 = vcmask 1047558
  %v1099 = vsel %vm1098, %v1097, %v1094
  %1100 = vrot.lane.b32.xlu0 %v1099, 4
  %v1101 = vpop.permute.xlu0 %1100
  %vm1102 = vcmask 64544
  %s1103 = scalar_lea.vmem %s1, 16
  %1104 = vst.msk [vmem:[%s1103] sm:$0xff] %vm1102, %v1101
  %s1105 = scalar_lea.vmem %s0, 385
  %s1106 = smov 3
  %v1107 = vld [vmem:[%s1105] ss:$16 sm:%s1106]
  %s1108 = scalar_lea.vmem %s0, 385
  %s1109 = smov 12
  %v1110 = vld [vmem:[%s1108] ss:$16 sm:%s1109]
  %vm1111 = vcmask 1043458
  %v1112 = vsel %vm1111, %v1110, %v1107
  %s1113 = scalar_lea.vmem %s0, 385
  %s1114 = smov 48
  %v1115 = vld [vmem:[%s1113] ss:$16 sm:%s1114]
  %vm1116 = vcmask 1045508
  %v1117 = vsel %vm1116, %v1115, %v1112
  %s1118 = scalar_lea.vmem %s0, 385
  %s1119 = smov 192
  %v1120 = vld [vmem:[%s1118] ss:$16 sm:%s1119]
  %vm1121 = vcmask 1047558
  %v1122 = vsel %vm1121, %v1120, %v1117
  %1123 = vrot.lane.b32.xlu0 %v1122, 4
  %v1124 = vpop.permute.xlu0 %1123
  %vm1125 = vcmask 64544
  %s1126 = scalar_lea.vmem %s1, 24
  %1127 = vst.msk [vmem:[%s1126] sm:$0xff] %vm1125, %v1124

// kernel: encoder_forward.3
$region0: #{encoder_forward.3}
  #allocation0 [shape = 'u32[]', space=smem, size = 0x4, offset = 0x4, fixed_abs, tag = 'smem constant byte address 0x4 - core index']
  #allocation1 [shape = 'u32[72,128]{1,0:T(1,128)}', space=vmem, size = 0x9000, scoped, tag = 'internal scratch']
  %s0 = inlined_call_operand.vmem [shape: f32[2,8,2,16,64], index: 0, kind: input, shape index: {}]
  %s1 = inlined_call_operand.vmem [shape: f32[2,8,16], index: 1, kind: input, shape index: {}]
  %s2 = inlined_call_operand.vmem [shape: f32[2,64,32], index: 2, kind: input, shape index: {}]
  %s3 = inlined_call_operand.vmem [shape: f32[2,10,10,40], index: 3, kind: output, shape index: {}]
  %s4 = sld [smem:[#allocation0]]
  $region53: #{encoder_forward.3} parent=0
    _
  %s6 = ssub.s32 1, %s4
  %s7 = scalar_select 0, %s6, %s4
  loop: start=0, step=1, limit=22
  $region2: #{encoder_forward.3} parent=0 // loop_pre_header
    _
  $region3: #{encoder_forward.3} parent=0 // loop_header
    %s9 = sphi 0, %s13
    %p10 = scmp.ge.s32.totalorder %s9, 22
    %s16 = sphi 0, %s28
    %s17 = sphi 0, %s24
    %s18 = sphi 0, %s16
    %s19 = sphi 0, %s17
    %s20 = sphi 0, %s18
    %s21 = sphi 0, %s19
    %s43 = sphi 0, %s45
    %s46 = sphi 0, %s43
    %s47 = sphi 0, %s46
    %s63 = sphi 0, %s47
    %s67 = sphi 0, %s67
    %s69 = sphi 0, %s67
    %s70 = sphi 0, %s69
    %s84 = sphi 0, %s70
    %s88 = sphi 0, %s88
    %s90 = sphi 0, %s88
    %s91 = sphi 0, %s90
    %s105 = sphi 0, %s91
    %s113 = sphi 0, %s115
    %s116 = sphi 0, %s113
    %s117 = sphi 0, %s116
    %s133 = sphi 0, %s117
  $region4: #{encoder_forward.3} parent=0 // loop_header_branch
    %12 = sbr.rel (%p10) target = $region8
  $region5: #{encoder_forward.3} parent=0 // loop_body
    %s14 = ssub.s32 %s9, 1
    %s15 = ssub.s32 %s9, 2
    %s22 = sadd.s32 1, %s17
    %p23 = scmp.ge.s32.totalorder %s22, 10
    %s24 = scalar_select %p23, 0, %s22
    %s25 = sadd.s32 1, %s16
    %s26 = scalar_select %p23, %s25, %s16
    %p27 = scmp.ge.s32.totalorder %s26, 2
    %s28 = scalar_select %p27, 0, %s26
    %s29 = ssub.s32 %s17, 1
    %p30 = scmp.lt.s32.totalorder %s29, 7
    %s31 = scalar_select %p30, %s29, 7
    %p32 = scmp.gt.s32.totalorder %s31, 0
    %s33 = scalar_select %p32, %s31, 0
    %s34 = ssub.s32 %s24, 1
    %p35 = scmp.lt.s32.totalorder %s34, 7
    %s36 = scalar_select %p35, %s34, 7
    %p37 = scmp.gt.s32.totalorder %s36, 0
    %s38 = scalar_select %p37, %s36, 0
    %s39 = ssub.s32 %s16, %s28
    %s40 = ssub.s32 %s33, %s38
    %s41 = sor.u32 %s39, %s40
    %p42 = scmp.eq.s32.totalorder %s41, 0
    %s44 = sadd.s32 %s43, 1
    %s45 = scalar_select %p42, %s43, %s44
    %p48 = pneg %p42
    %p49 = scmp.eq.s32.totalorder %s9, 19
    %p50 = por %p48, %p49
    %p51 = scmp.ne.s32.totalorder %s43, %s46
    %p52 = scmp.eq.s32.totalorder %s9, 0
    %p53 = por %p51, %p52
    %p54 = scmp.ne.s32.totalorder %s43, %s46
    %p55 = scmp.eq.s32.totalorder %s14, 19
    %p56 = por %p54, %p55
    %p57 = scmp.ne.s32.totalorder %s46, %s47
    %p58 = scmp.eq.s32.totalorder %s14, 0
    %p59 = por %p57, %p58
    %p60 = scmp.ne.s32.totalorder %s46, %s47
    %p61 = scmp.eq.s32.totalorder %s15, 19
    %p62 = por %p60, %p61
    %p64 = scmp.ne.s32.totalorder %s47, %s63
    %p65 = scmp.eq.s32.totalorder %s15, 0
    %p66 = por %p64, %p65
    %s68 = sadd.s32 %s67, 1
    %p71 = scmp.eq.s32.totalorder %s9, 19
    %p72 = scmp.ne.s32.totalorder %s67, %s69
    %p73 = scmp.eq.s32.totalorder %s9, 0
    %p74 = por %p72, %p73
    %p75 = scmp.ne.s32.totalorder %s67, %s69
    %p76 = scmp.eq.s32.totalorder %s14, 19
    %p77 = por %p75, %p76
    %p78 = scmp.ne.s32.totalorder %s69, %s70
    %p79 = scmp.eq.s32.totalorder %s14, 0
    %p80 = por %p78, %p79
    %p81 = scmp.ne.s32.totalorder %s69, %s70
    %p82 = scmp.eq.s32.totalorder %s15, 19
    %p83 = por %p81, %p82
    %p85 = scmp.ne.s32.totalorder %s70, %s84
    %p86 = scmp.eq.s32.totalorder %s15, 0
    %p87 = por %p85, %p86
    %s89 = sadd.s32 %s88, 1
    %p92 = scmp.eq.s32.totalorder %s9, 19
    %p93 = scmp.ne.s32.totalorder %s88, %s90
    %p94 = scmp.eq.s32.totalorder %s9, 0
    %p95 = por %p93, %p94
    %p96 = scmp.ne.s32.totalorder %s88, %s90
    %p97 = scmp.eq.s32.totalorder %s14, 19
    %p98 = por %p96, %p97
    %p99 = scmp.ne.s32.totalorder %s90, %s91
    %p100 = scmp.eq.s32.totalorder %s14, 0
    %p101 = por %p99, %p100
    %p102 = scmp.ne.s32.totalorder %s90, %s91
    %p103 = scmp.eq.s32.totalorder %s15, 19
    %p104 = por %p102, %p103
    %p106 = scmp.ne.s32.totalorder %s91, %s105
    %p107 = scmp.eq.s32.totalorder %s15, 0
    %p108 = por %p106, %p107
    %s109 = ssub.s32 %s16, %s28
    %s110 = ssub.s32 %s17, %s24
    %s111 = sor.u32 %s109, %s110
    %p112 = scmp.eq.s32.totalorder %s111, 0
    %s114 = sadd.s32 %s113, 1
    %s115 = scalar_select %p112, %s113, %s114
    %p118 = pneg %p112
    %p119 = scmp.eq.s32.totalorder %s9, 19
    %p120 = por %p118, %p119
    %p121 = scmp.ne.s32.totalorder %s113, %s116
    %p122 = scmp.eq.s32.totalorder %s9, 0
    %p123 = por %p121, %p122
    %p124 = scmp.ne.s32.totalorder %s113, %s116
    %p125 = scmp.eq.s32.totalorder %s14, 19
    %p126 = por %p124, %p125
    %p127 = scmp.ne.s32.totalorder %s116, %s117
    %p128 = scmp.eq.s32.totalorder %s14, 0
    %p129 = por %p127, %p128
    %p130 = scmp.ne.s32.totalorder %s116, %s117
    %p131 = scmp.eq.s32.totalorder %s15, 19
    %p132 = por %p130, %p131
    %p134 = scmp.ne.s32.totalorder %s117, %s133
    %p135 = scmp.eq.s32.totalorder %s15, 0
    %p136 = por %p134, %p135
    %p137 = scmp.le.s32.totalorder 1, %s9
    %p138 = scmp.lt.s32.totalorder %s9, 21
    %p139 = pnand %p137, %p138
    %p140 = pneg %p139
    // Predicated region
    $region9: #{encoder_forward.3} parent=5 // pred_check
      _
    $region10: #{encoder_forward.3} parent=5 // pred_check_branch
      %142 = sbr.rel (%p139) target = $region12
    $region11: #{encoder_forward.3} parent=5 // pred_region
      %s143 = ssub.s32 %s9, 1
      // Predicated region
      $region13: #{encoder_forward.3} parent=11 // pred_check
        %p144 = pneg %p80
      $region14: #{encoder_forward.3} parent=11 // pred_check_branch
        %146 = sbr.rel (%p144) target = $region16
      $region15: #{encoder_forward.3} parent=11 // pred_region
        _
      $region16: #{encoder_forward.3} parent=11 // pred_fallthru
        _
      // Predicated region
      $region17: #{encoder_forward.3} parent=11 // pred_check
        %p147 = pneg %p101
      $region18: #{encoder_forward.3} parent=11 // pred_check_branch
        %149 = sbr.rel (%p147) target = $region20
      $region19: #{encoder_forward.3} parent=11 // pred_region
        _
      $region20: #{encoder_forward.3} parent=11 // pred_fallthru
        _
    $region12: #{encoder_forward.3} parent=5 // pred_fallthru
      _
    %p150 = scmp.lt.s32.totalorder %s9, 20
    // Predicated region
    $region21: #{encoder_forward.3} parent=5 // pred_check
      %p151 = pneg %p150
    $region22: #{encoder_forward.3} parent=5 // pred_check_branch
      %153 = sbr.rel (%p151) target = $region24
    $region23: #{encoder_forward.3} parent=5 // pred_region
      // Predicated region
      $region25: #{encoder_forward.3} parent=23 // pred_check
        %p154 = pneg %p53
      $region26: #{encoder_forward.3} parent=23 // pred_check_branch
        %156 = sbr.rel (%p154) target = $region28
      $region27: #{encoder_forward.3} parent=23 // pred_region
        %s157 = ssub.s32 %s17, 1
        %p158 = scmp.lt.s32.totalorder %s157, 7
        %s159 = scalar_select %p158, %s157, 7
        %p160 = scmp.gt.s32.totalorder %s159, 0
        %s161 = scalar_select %p160, %s159, 0
        %p162 = scmp.lt.s32.totalorder %s16, 1
        %s163 = scalar_select %p162, %s16, 1
        %p164 = scmp.lt.s32.totalorder %s161, 7
        %s165 = scalar_select %p164, %s161, 7
        %s166 = smul.addr %s165, 4
        %s167 = smul.addr %s163, 32
        %s168 = sadd.s32 %s166, %s167
        %s169 = smul.addr %s168, 8
        %s170 = scalar_lea.vmem %s0, %s169
        %s171 = ssub.s32 %s17, 1
        %p172 = scmp.lt.s32.totalorder %s171, 7
        %s173 = scalar_select %p172, %s171, 7
        %p174 = scmp.gt.s32.totalorder %s173, 0
        %s175 = scalar_select %p174, %s173, 0
      $region28: #{encoder_forward.3} parent=23 // pred_fallthru
        _
    $region24: #{encoder_forward.3} parent=5 // pred_fallthru
      _
    %p176 = scmp.le.s32.totalorder 1, %s9
    %p177 = scmp.lt.s32.totalorder %s9, 21
    %p178 = pnand %p176, %p177
    %p179 = pneg %p178
    // Predicated region
    $region29: #{encoder_forward.3} parent=5 // pred_check
      _
    $region30: #{encoder_forward.3} parent=5 // pred_check_branch
      %181 = sbr.rel (%p178) target = $region32
    $region31: #{encoder_forward.3} parent=5 // pred_region
      %s182 = ssub.s32 %s9, 1
      %s183 = ssub.s32 %s19, 1
      %p184 = scmp.lt.s32.totalorder %s183, 7
      %s185 = scalar_select %p184, %s183, 7
      %p186 = scmp.gt.s32.totalorder %s185, 0
      %s187 = scalar_select %p186, %s185, 0
      %p188 = scmp.lt.s32.totalorder %s18, 1
      %s189 = scalar_select %p188, %s18, 1
      %p190 = scmp.lt.s32.totalorder %s187, 7
      %s191 = scalar_select %p190, %s187, 7
      %s192 = smul.addr %s191, 4
      %s193 = smul.addr %s189, 32
      %s194 = sadd.s32 %s192, %s193
      %s195 = smul.addr %s194, 8
      %s196 = scalar_lea.vmem %s0, %s195
      %p197 = pneg %p59
      %p198 = pneg %p56
      %p199 = pneg %p80
      %p200 = pneg %p77
      %p201 = pneg %p101
      %p202 = pneg %p98
      %p203 = pneg %p129
      %p204 = pneg %p126
      %p205 = scmp.lt.s32.totalorder %s18, 1
      %s206 = scalar_select %p205, %s18, 1
      %p207 = scmp.lt.s32.totalorder %s19, 9
      %s208 = scalar_select %p207, %s19, 9
      %s209 = smul.addr %s208, 2
      %s210 = smul.addr %s206, 20
      %s211 = sadd.s32 %s209, %s210
      %s212 = smul.addr %s211, 8
      %s213 = scalar_lea.vmem %s3, %s212
      %s214 = ssub.s32 %s19, 1
      %p215 = scmp.lt.s32.totalorder %s214, 7
      %s216 = scalar_select %p215, %s214, 7
      %p217 = scmp.gt.s32.totalorder %s216, 0
      %s218 = scalar_select %p217, %s216, 0
      %p219 = scmp.lt.s32.totalorder %s18, 1
      %s220 = scalar_select %p219, %s18, 1
      %p221 = scmp.lt.s32.totalorder %s218, 7
      %s222 = scalar_select %p221, %s218, 7
      %s223 = smul.addr %s222, 4
      %s224 = smul.addr %s220, 32
      %s225 = sadd.s32 %s223, %s224
      %s226 = smul.addr %s225, 8
      %s227 = scalar_lea.vmem %s0, %s226
      %s228 = ssub.s32 %s19, 1
      %p229 = scmp.lt.s32.totalorder %s228, 7
      %s230 = scalar_select %p229, %s228, 7
      %p231 = scmp.gt.s32.totalorder %s230, 0
      %s232 = scalar_select %p231, %s230, 0
      %p233 = scmp.lt.s32.totalorder %s18, 1
      %s234 = scalar_select %p233, %s18, 1
      %p235 = scmp.lt.s32.totalorder %s19, 9
      %s236 = scalar_select %p235, %s19, 9
      %s237 = smul.addr %s236, 2
      %s238 = smul.addr %s234, 20
      %s239 = sadd.s32 %s237, %s238
      %s240 = smul.addr %s239, 8
      %s241 = scalar_lea.vmem %s3, %s240
      %p242 = scmp.eq.s32.totalorder %s19, 0
      %p243 = scmp.eq.s32.totalorder %s19, 9
      %p244 = por %p242, %p243
      // Predicated region
      $region33: #{encoder_forward.3} parent=31 // pred_check
        %p245 = pneg %p244
      $region34: #{encoder_forward.3} parent=31 // pred_check_branch
        %247 = sbr.rel (%p245) target = $region36
      $region35: #{encoder_forward.3} parent=31 // pred_region
        %vm248 = vcmask 326656
        %249 = vst.msk [vmem:[%s241] sm:$0xff] %vm248, 0.0
        %vm250 = vcmask 320512
        %251 = vst.msk [vmem:[%s241 + $0x8] sm:$0x3] %vm250, 0.0
      $region36: #{encoder_forward.3} parent=31 // pred_fallthru
        _
      %p252 = scmp.ge.s32.totalorder %s19, 1
      %p253 = scmp.le.s32.totalorder %s19, 8
      %p254 = pnand %p252, %p253
      %p255 = pneg %p254
      // Predicated region
      $region37: #{encoder_forward.3} parent=31 // pred_check
        _
      $region38: #{encoder_forward.3} parent=31 // pred_check_branch
        %257 = sbr.rel (%p254) target = $region40
      $region39: #{encoder_forward.3} parent=31 // pred_region
        %v258 = vld [vmem:[%s227] sm:$0xff]
        %v259 = vld [vmem:[%s227 + $0x8] sm:$0xff]
        %s260 = scalar_lea.vmem %s227, 16
        %v261 = vld [vmem:[%s260] sm:$0xff]
        %v262 = vld [vmem:[%s260 + $0x8] sm:$0xff]
        %v263 = vmax.f32 %v258, %v261
        %v264 = vmax.f32 %v259, %v262
        %v265 = vld [vmem:[%s1] sm:$0xff]
        %vm266 = vcmask 130048
        %v268 = vsel %vm266, %v265, 0
        %270 = vmatpush.msra.mxu0 0.0
        %271 = vmatpush.msra.mxu0 0.0
        %272 = vmatpush.msra.mxu0 0.0
        %273 = vmatpush.msra.mxu0 0.0
        %274 = vmatpush.msra.mxu0 0.0
        %275 = vmatpush.msra.mxu0 0.0
        %276 = vmatpush.msra.mxu0 0.0
        %277 = vmatpush.msra.mxu0 0.0
        %278 = vmatpush.msra.mxu0 0.0
        %279 = vmatpush.msra.mxu0 0.0
        %280 = vmatpush.msra.mxu0 0.0
        %281 = vmatpush.msra.mxu0 0.0
        %282 = vmatpush.msra.mxu0 0.0
        %283 = vmatpush.msra.mxu0 0.0
        %284 = vmatpush.msra.mxu0 %v264
        %285 = vmatpush.msra.mxu0 %v263
        %286 = vmatmul.f32.gmra.mxu0 %v268
        %v287 = vpop.f32.mrf.mxu0
        %v288 = vadd.f32 0.0, %v287
        %289 = vdwg.mxu0
        %s290 = scalar_lea.vmem %s1, 8
        %v291 = vld [vmem:[%s290] sm:$0xff]
        %v293 = vsel %vm266, %v291, 0
        %295 = vmatpush.msra.mxu0 0.0
        %296 = vmatpush.msra.mxu0 0.0
        %297 = vmatpush.msra.mxu0 0.0
        %298 = vmatpush.msra.mxu0 0.0
        %299 = vmatpush.msra.mxu0 0.0
        %300 = vmatpush.msra.mxu0 0.0
        %301 = vmatpush.msra.mxu0 0.0
        %302 = vmatpush.msra.mxu0 0.0
        %303 = vmatpush.msra.mxu0 0.0
        %304 = vmatpush.msra.mxu0 0.0
        %305 = vmatpush.msra.mxu0 0.0
        %306 = vmatpush.msra.mxu0 0.0
        %307 = vmatpush.msra.mxu0 0.0
        %308 = vmatpush.msra.mxu0 0.0
        %309 = vmatpush.msra.mxu0 %v264
        %310 = vmatpush.msra.mxu0 %v263
        %311 = vmatmul.f32.gmra.mxu0 %v293
        %v312 = vpop.f32.mrf.mxu0
        %v313 = vadd.f32 0.0, %v312
        %314 = vdwg.mxu0
        %v315 = vmax.f32 %v288, %v313
        %v316 = vld [vmem:[%s2] sm:$0xff]
        %v317 = vld [vmem:[%s2 + $0x8] sm:$0xff]
        %v318 = vld [vmem:[%s2 + $0x10] sm:$0xff]
        %v319 = vld [vmem:[%s2 + $0x18] sm:$0xff]
        %v320 = vld [vmem:[%s2 + $0x20] sm:$0xff]
        %v321 = vld [vmem:[%s2 + $0x28] sm:$0xff]
        %v322 = vld [vmem:[%s2 + $0x30] sm:$0xff]
        %v323 = vld [vmem:[%s2 + $0x38] sm:$0xff]
        %vm324 = vcmask 523264
        %v326 = vsel %vm324, %v315, 0
        %328 = vmatpush.msra.mxu0 0.0
        %329 = vmatpush.msra.mxu0 0.0
        %330 = vmatpush.msra.mxu0 0.0
        %331 = vmatpush.msra.mxu0 0.0
        %332 = vmatpush.msra.mxu0 0.0
        %333 = vmatpush.msra.mxu0 0.0
        %334 = vmatpush.msra.mxu0 0.0
        %335 = vmatpush.msra.mxu0 0.0
        %336 = vmatpush.msra.mxu0 %v323
        %337 = vmatpush.msra.mxu0 %v322
        %338 = vmatpush.msra.mxu0 %v321
        %339 = vmatpush.msra.mxu0 %v320
        %340 = vmatpush.msra.mxu0 %v319
        %341 = vmatpush.msra.mxu0 %v318
        %342 = vmatpush.msra.mxu0 %v317
        %343 = vmatpush.msra.mxu0 %v316
        %344 = vmatmul.f32.gmra.mxu0 %v326
        %v345 = vpop.f32.mrf.mxu0
        %v346 = vadd.f32 0.0, %v345
        %347 = vdwg.mxu0
        %s348 = scalar_lea.vmem %s2, 64
        %v349 = vld [vmem:[%s348] sm:$0xff]
        %v350 = vld [vmem:[%s348 + $0x8] sm:$0xff]
        %v351 = vld [vmem:[%s348 + $0x10] sm:$0xff]
        %v352 = vld [vmem:[%s348 + $0x18] sm:$0xff]
        %v353 = vld [vmem:[%s348 + $0x20] sm:$0xff]
        %v354 = vld [vmem:[%s348 + $0x28] sm:$0xff]
        %v355 = vld [vmem:[%s348 + $0x30] sm:$0xff]
        %v356 = vld [vmem:[%s348 + $0x38] sm:$0xff]
        %357 = vmatpush.msra.mxu0 0.0
        %358 = vmatpush.msra.mxu0 0.0
        %359 = vmatpush.msra.mxu0 0.0
        %360 = vmatpush.msra.mxu0 0.0
        %361 = vmatpush.msra.mxu0 0.0
        %362 = vmatpush.msra.mxu0 0.0
        %363 = vmatpush.msra.mxu0 0.0
        %364 = vmatpush.msra.mxu0 0.0
        %365 = vmatpush.msra.mxu0 %v356
        %366 = vmatpush.msra.mxu0 %v355
        %367 = vmatpush.msra.mxu0 %v354
        %368 = vmatpush.msra.mxu0 %v353
        %369 = vmatpush.msra.mxu0 %v352
        %370 = vmatpush.msra.mxu0 %v351
        %371 = vmatpush.msra.mxu0 %v350
        %372 = vmatpush.msra.mxu0 %v349
        %373 = vmatmul.f32.gmra.mxu0 %v326
        %v374 = vpop.f32.mrf.mxu0
        %v375 = vadd.f32 0.0, %v374
        %376 = vdwg.mxu0
        %v377 = vmax.f32 %v346, %v375
        %379 = vrot.lane.b32.xlu0 %v377, 4
        %v380 = vpop.permute.xlu0 %379
        %vm382 = vcmask 31744
        %v383 = vsel %vm382, 0.0, %v380
        %vm384 = vcmask 293888
        %v385 = vsel %vm384, %v383, 0.0
        %v387 = vrot.slane %v385, 7
        %vm389 = vcmask 1040384
        %v390 = vsel %vm389, 0.0, %v387
        %v391 = vsel %vm389, %v387, 0.0
        %vm392 = vcmask 326656
        %393 = vst.msk [vmem:[%s241] sm:$0xff] %vm392, %v390
        %vm394 = vcmask 320512
        %395 = vst.msk [vmem:[%s241 + $0x8] sm:$0x3] %vm394, %v391
      $region40: #{encoder_forward.3} parent=31 // pred_fallthru
        _
      %p396 = scmp.lt.s32.totalorder %s18, 1
      %s397 = scalar_select %p396, %s18, 1
      %p398 = scmp.lt.s32.totalorder %s19, 9
      %s399 = scalar_select %p398, %s19, 9
      %s400 = smul.addr %s399, 2
      %s401 = smul.addr %s397, 20
      %s402 = sadd.s32 %s400, %s401
      %s403 = smul.addr %s402, 8
      %s404 = scalar_lea.vmem %s3, %s403
      // Predicated region
      $region41: #{encoder_forward.3} parent=31 // pred_check
        %p405 = pneg %p126
      $region42: #{encoder_forward.3} parent=31 // pred_check_branch
        %407 = sbr.rel (%p405) target = $region44
      $region43: #{encoder_forward.3} parent=31 // pred_region
        _
      $region44: #{encoder_forward.3} parent=31 // pred_fallthru
        _
    $region32: #{encoder_forward.3} parent=5 // pred_fallthru
      _
    %p408 = scmp.le.s32.totalorder 2, %s9
    // Predicated region
    $region45: #{encoder_forward.3} parent=5 // pred_check
      %p409 = pneg %p408
    $region46: #{encoder_forward.3} parent=5 // pred_check_branch
      %411 = sbr.rel (%p409) target = $region48
    $region47: #{encoder_forward.3} parent=5 // pred_region
      %s412 = ssub.s32 %s9, 2
      // Predicated region
      $region49: #{encoder_forward.3} parent=47 // pred_check
        %p413 = pneg %p132
      $region50: #{encoder_forward.3} parent=47 // pred_check_branch
        %415 = sbr.rel (%p413) target = $region52
      $region51: #{encoder_forward.3} parent=47 // pred_region
        %p416 = scmp.lt.s32.totalorder %s20, 1
        %s417 = scalar_select %p416, %s20, 1
        %p418 = scmp.lt.s32.totalorder %s21, 9
        %s419 = scalar_select %p418, %s21, 9
        %s420 = smul.addr %s419, 2
        %s421 = smul.addr %s417, 20
        %s422 = sadd.s32 %s420, %s421
        %s423 = smul.addr %s422, 8
        %s424 = scalar_lea.vmem %s3, %s423
      $region52: #{encoder_forward.3} parent=47 // pred_fallthru
        _
    $region48: #{encoder_forward.3} parent=5 // pred_fallthru
      _
  $region6: #{encoder_forward.3} parent=0 // loop_footer
    %s13 = sadd.s32 1, %s9
  $region7: #{encoder_forward.3} parent=0 // loop_footer_branch
    %8 = sbr.rel target = $region3
  $region8: #{encoder_forward.3} parent=0 // loop_exit
    _

// kernel: tile.53
$region0: #{tile.53}
  #allocation0 [shape = 's32[1]{0}', space=sflag, size = 0x4, scoped, tag = 'scoped memory for tile.53']
  %s0 = inlined_call_operand.vmem [shape: f32[8], index: 0, kind: input, shape index: {}]
  %s1 = inlined_call_operand.vmem [shape: f32[10,8], index: 1, kind: output, shape index: {}]
  // Predicated region
  $region2: #{tile.53} parent=0 // pred_check
    _
  $region3: #{tile.53} parent=0 // pred_check_branch
    %3 = sbr.rel (0) target = $region5
  $region4: #{tile.53} parent=0 // pred_region
    _
  $region5: #{tile.53} parent=0 // pred_fallthru
    _
  %v4 = vld [vmem:[%s0] ss:$0 sm:$0xff]
  %5 = vst [vmem:[%s1] sm:$0xff] %v4
  %s6 = scalar_lea.vmem %s1, 8
  %7 = vst [vmem:[%s6] sm:$0xff] %v4

// kernel: tile.54
$region0: #{tile.54}
  %s0 = inlined_call_operand.vmem [shape: f32[10,8], index: 0, kind: input, shape index: {}]
  %s1 = inlined_call_operand.vmem [shape: f32[1,80], index: 1, kind: output, shape index: {}]
  $region1: #{tile.54} parent=0
    #allocation0 [shape = 'u8[4096]{0}', space=vmem, size = 0x1000, scoped, tag = 'scoped mem for output reshape']
    %v2 = vld [vmem:[%s0] sm:$0x1]
    %vm3 = vcmask 64512
    %4 = vst.msk [vmem:[#allocation0] sm:$0x1] %vm3, %v2
    %s5 = scalar_lea.vmem %s0, 9
    %v6 = vld [vmem:[%s5] sm:$0x1]
    %7 = vrot.lane.b32.xlu0 %v6, 72
    %v8 = vpop.permute.xlu0 %7
    %vm9 = vcmask 654912
    %10 = vst.msk [vmem:[#allocation0] sm:$0x1] %vm9, %v8
    %s11 = scalar_lea.vmem %s0, 8
    %v12 = vld [vmem:[%s11] sm:$0x1]
    %13 = vrot.lane.b32.xlu0 %v12, 64
    %v14 = vpop.permute.xlu0 %13
    %vm15 = vcmask 589312
    %16 = vst.msk [vmem:[#allocation0] sm:$0x1] %vm15, %v14
    %s17 = scalar_lea.vmem %s0, 7
    %v18 = vld [vmem:[%s17] sm:$0x1]
    %19 = vrot.lane.b32.xlu0 %v18, 56
    %v20 = vpop.permute.xlu0 %19
    %vm21 = vcmask 523712
    %22 = vst.msk [vmem:[#allocation0] sm:$0x1] %vm21, %v20
    %s23 = scalar_lea.vmem %s0, 6
    %v24 = vld [vmem:[%s23] sm:$0x1]
    %25 = vrot.lane.b32.xlu0 %v24, 48
    %v26 = vpop.permute.xlu0 %25
    %vm27 = vcmask 458112
    %28 = vst.msk [vmem:[#allocation0] sm:$0x1] %vm27, %v26
    %s29 = scalar_lea.vmem %s0, 5
    %v30 = vld [vmem:[%s29] sm:$0x1]
    %31 = vrot.lane.b32.xlu0 %v30, 40
    %v32 = vpop.permute.xlu0 %31
    %vm33 = vcmask 392512
    %34 = vst.msk [vmem:[#allocation0] sm:$0x1] %vm33, %v32
    %s35 = scalar_lea.vmem %s0, 4
    %v36 = vld [vmem:[%s35] sm:$0x1]
    %37 = vrot.lane.b32.xlu0 %v36, 32
    %v38 = vpop.permute.xlu0 %37
    %vm39 = vcmask 326912
    %40 = vst.msk [vmem:[#allocation0] sm:$0x1] %vm39, %v38
    %s41 = scalar_lea.vmem %s0, 3
    %v42 = vld [vmem:[%s41] sm:$0x1]
    %43 = vrot.lane.b32.xlu0 %v42, 24
    %v44 = vpop.permute.xlu0 %43
    %vm45 = vcmask 261312
    %46 = vst.msk [vmem:[#allocation0] sm:$0x1] %vm45, %v44
    %s47 = scalar_lea.vmem %s0, 2
    %v48 = vld [vmem:[%s47] sm:$0x1]
    %49 = vrot.lane.b32.xlu0 %v48, 16
    %v50 = vpop.permute.xlu0 %49
    %vm51 = vcmask 195712
    %52 = vst.msk [vmem:[#allocation0] sm:$0x1] %vm51, %v50
    %s53 = scalar_lea.vmem %s0, 1
    %v54 = vld [vmem:[%s53] sm:$0x1]
    %55 = vrot.lane.b32.xlu0 %v54, 8
    %v56 = vpop.permute.xlu0 %55
    %vm57 = vcmask 130112
    %58 = vst.msk [vmem:[#allocation0] sm:$0x1] %vm57, %v56
    %s60 = ssub.s32 2, 1
    %v61 = vld [vmem:[#allocation0] sm:%s60]
    %s63 = ssub.s32 2, 1
    %64 = vst [vmem:[%s1] sm:%s63] %v61

// kernel: tile.48
$region0: #{tile.48}
  #allocation0 [shape = 's32[1]{0}', space=sflag, size = 0x4, scoped, tag = 'scoped memory for tile.48']
  %s0 = inlined_call_operand.vmem [shape: f32[8,8], index: 0, kind: input, shape index: {}]
  %s1 = inlined_call_operand.vmem [shape: f32[10,8,10,8], index: 1, kind: output, shape index: {}]
  // Predicated region
  $region2: #{tile.48} parent=0 // pred_check
    _
  $region3: #{tile.48} parent=0 // pred_check_branch
    %3 = sbr.rel (0) target = $region5
  $region4: #{tile.48} parent=0 // pred_region
    _
  $region5: #{tile.48} parent=0 // pred_fallthru
    _
  %v4 = vld [vmem:[%s0] ss:$0 sm:$0xff]
  %5 = vst [vmem:[%s1] sm:$0xff] %v4
  %s6 = scalar_lea.vmem %s1, 128
  %7 = vst [vmem:[%s6] sm:$0xff] %v4
  %s8 = scalar_lea.vmem %s1, 256
  %9 = vst [vmem:[%s8] sm:$0xff] %v4
  %s10 = scalar_lea.vmem %s1, 384
  %11 = vst [vmem:[%s10] sm:$0xff] %v4
  %s12 = scalar_lea.vmem %s1, 512
  %13 = vst [vmem:[%s12] sm:$0xff] %v4
  %s14 = scalar_lea.vmem %s1, 640
  %15 = vst [vmem:[%s14] sm:$0xff] %v4
  %s16 = scalar_lea.vmem %s1, 768
  %17 = vst [vmem:[%s16] sm:$0xff] %v4
  %s18 = scalar_lea.vmem %s1, 896
  %19 = vst [vmem:[%s18] sm:$0xff] %v4
  %s20 = scalar_lea.vmem %s1, 1024
  %21 = vst [vmem:[%s20] sm:$0xff] %v4
  %s22 = scalar_lea.vmem %s1, 1152
  %23 = vst [vmem:[%s22] sm:$0xff] %v4
  %s24 = scalar_lea.vmem %s0, 1
  %v25 = vld [vmem:[%s24] ss:$0 sm:$0xff]
  %s26 = scalar_lea.vmem %s1, 16
  %27 = vst [vmem:[%s26] sm:$0xff] %v25
  %s28 = scalar_lea.vmem %s1, 144
  %29 = vst [vmem:[%s28] sm:$0xff] %v25
  %s30 = scalar_lea.vmem %s1, 272
  %31 = vst [vmem:[%s30] sm:$0xff] %v25
  %s32 = scalar_lea.vmem %s1, 400
  %33 = vst [vmem:[%s32] sm:$0xff] %v25
  %s34 = scalar_lea.vmem %s1, 528
  %35 = vst [vmem:[%s34] sm:$0xff] %v25
  %s36 = scalar_lea.vmem %s1, 656
  %37 = vst [vmem:[%s36] sm:$0xff] %v25
  %s38 = scalar_lea.vmem %s1, 784
  %39 = vst [vmem:[%s38] sm:$0xff] %v25
  %s40 = scalar_lea.vmem %s1, 912
  %41 = vst [vmem:[%s40] sm:$0xff] %v25
  %s42 = scalar_lea.vmem %s1, 1040
  %43 = vst [vmem:[%s42] sm:$0xff] %v25
  %s44 = scalar_lea.vmem %s1, 1168
  %45 = vst [vmem:[%s44] sm:$0xff] %v25
  %s46 = scalar_lea.vmem %s0, 2
  %v47 = vld [vmem:[%s46] ss:$0 sm:$0xff]
  %s48 = scalar_lea.vmem %s1, 32
  %49 = vst [vmem:[%s48] sm:$0xff] %v47
  %s50 = scalar_lea.vmem %s1, 160
  %51 = vst [vmem:[%s50] sm:$0xff] %v47
  %s52 = scalar_lea.vmem %s1, 288
  %53 = vst [vmem:[%s52] sm:$0xff] %v47
  %s54 = scalar_lea.vmem %s1, 416
  %55 = vst [vmem:[%s54] sm:$0xff] %v47
  %s56 = scalar_lea.vmem %s1, 544
  %57 = vst [vmem:[%s56] sm:$0xff] %v47
  %s58 = scalar_lea.vmem %s1, 672
  %59 = vst [vmem:[%s58] sm:$0xff] %v47
  %s60 = scalar_lea.vmem %s1, 800
  %61 = vst [vmem:[%s60] sm:$0xff] %v47
  %s62 = scalar_lea.vmem %s1, 928
  %63 = vst [vmem:[%s62] sm:$0xff] %v47
  %s64 = scalar_lea.vmem %s1, 1056
  %65 = vst [vmem:[%s64] sm:$0xff] %v47
  %s66 = scalar_lea.vmem %s1, 1184
  %67 = vst [vmem:[%s66] sm:$0xff] %v47
  %s68 = scalar_lea.vmem %s0, 3
  %v69 = vld [vmem:[%s68] ss:$0 sm:$0xff]
  %s70 = scalar_lea.vmem %s1, 48
  %71 = vst [vmem:[%s70] sm:$0xff] %v69
  %s72 = scalar_lea.vmem %s1, 176
  %73 = vst [vmem:[%s72] sm:$0xff] %v69
  %s74 = scalar_lea.vmem %s1, 304
  %75 = vst [vmem:[%s74] sm:$0xff] %v69
  %s76 = scalar_lea.vmem %s1, 432
  %77 = vst [vmem:[%s76] sm:$0xff] %v69
  %s78 = scalar_lea.vmem %s1, 560
  %79 = vst [vmem:[%s78] sm:$0xff] %v69
  %s80 = scalar_lea.vmem %s1, 688
  %81 = vst [vmem:[%s80] sm:$0xff] %v69
  %s82 = scalar_lea.vmem %s1, 816
  %83 = vst [vmem:[%s82] sm:$0xff] %v69
  %s84 = scalar_lea.vmem %s1, 944
  %85 = vst [vmem:[%s84] sm:$0xff] %v69
  %s86 = scalar_lea.vmem %s1, 1072
  %87 = vst [vmem:[%s86] sm:$0xff] %v69
  %s88 = scalar_lea.vmem %s1, 1200
  %89 = vst [vmem:[%s88] sm:$0xff] %v69
  %s90 = scalar_lea.vmem %s0, 4
  %v91 = vld [vmem:[%s90] ss:$0 sm:$0xff]
  %s92 = scalar_lea.vmem %s1, 64
  %93 = vst [vmem:[%s92] sm:$0xff] %v91
  %s94 = scalar_lea.vmem %s1, 192
  %95 = vst [vmem:[%s94] sm:$0xff] %v91
  %s96 = scalar_lea.vmem %s1, 320
  %97 = vst [vmem:[%s96] sm:$0xff] %v91
  %s98 = scalar_lea.vmem %s1, 448
  %99 = vst [vmem:[%s98] sm:$0xff] %v91
  %s100 = scalar_lea.vmem %s1, 576
  %101 = vst [vmem:[%s100] sm:$0xff] %v91
  %s102 = scalar_lea.vmem %s1, 704
  %103 = vst [vmem:[%s102] sm:$0xff] %v91
  %s104 = scalar_lea.vmem %s1, 832
  %105 = vst [vmem:[%s104] sm:$0xff] %v91
  %s106 = scalar_lea.vmem %s1, 960
  %107 = vst [vmem:[%s106] sm:$0xff] %v91
  %s108 = scalar_lea.vmem %s1, 1088
  %109 = vst [vmem:[%s108] sm:$0xff] %v91
  %s110 = scalar_lea.vmem %s1, 1216
  %111 = vst [vmem:[%s110] sm:$0xff] %v91
  %s112 = scalar_lea.vmem %s0, 5
  %v113 = vld [vmem:[%s112] ss:$0 sm:$0xff]
  %s114 = scalar_lea.vmem %s1, 80
  %115 = vst [vmem:[%s114] sm:$0xff] %v113
  %s116 = scalar_lea.vmem %s1, 208
  %117 = vst [vmem:[%s116] sm:$0xff] %v113
  %s118 = scalar_lea.vmem %s1, 336
  %119 = vst [vmem:[%s118] sm:$0xff] %v113
  %s120 = scalar_lea.vmem %s1, 464
  %121 = vst [vmem:[%s120] sm:$0xff] %v113
  %s122 = scalar_lea.vmem %s1, 592
  %123 = vst [vmem:[%s122] sm:$0xff] %v113
  %s124 = scalar_lea.vmem %s1, 720
  %125 = vst [vmem:[%s124] sm:$0xff] %v113
  %s126 = scalar_lea.vmem %s1, 848
  %127 = vst [vmem:[%s126] sm:$0xff] %v113
  %s128 = scalar_lea.vmem %s1, 976
  %129 = vst [vmem:[%s128] sm:$0xff] %v113
  %s130 = scalar_lea.vmem %s1, 1104
  %131 = vst [vmem:[%s130] sm:$0xff] %v113
  %s132 = scalar_lea.vmem %s1, 1232
  %133 = vst [vmem:[%s132] sm:$0xff] %v113
  %s134 = scalar_lea.vmem %s0, 6
  %v135 = vld [vmem:[%s134] ss:$0 sm:$0xff]
  %s136 = scalar_lea.vmem %s1, 96
  %137 = vst [vmem:[%s136] sm:$0xff] %v135
  %s138 = scalar_lea.vmem %s1, 224
  %139 = vst [vmem:[%s138] sm:$0xff] %v135
  %s140 = scalar_lea.vmem %s1, 352
  %141 = vst [vmem:[%s140] sm:$0xff] %v135
  %s142 = scalar_lea.vmem %s1, 480
  %143 = vst [vmem:[%s142] sm:$0xff] %v135
  %s144 = scalar_lea.vmem %s1, 608
  %145 = vst [vmem:[%s144] sm:$0xff] %v135
  %s146 = scalar_lea.vmem %s1, 736
  %147 = vst [vmem:[%s146] sm:$0xff] %v135
  %s148 = scalar_lea.vmem %s1, 864
  %149 = vst [vmem:[%s148] sm:$0xff] %v135
  %s150 = scalar_lea.vmem %s1, 992
  %151 = vst [vmem:[%s150] sm:$0xff] %v135
  %s152 = scalar_lea.vmem %s1, 1120
  %153 = vst [vmem:[%s152] sm:$0xff] %v135
  %s154 = scalar_lea.vmem %s1, 1248
  %155 = vst [vmem:[%s154] sm:$0xff] %v135
  %s156 = scalar_lea.vmem %s0, 7
  %v157 = vld [vmem:[%s156] ss:$0 sm:$0xff]
  %s158 = scalar_lea.vmem %s1, 112
  %159 = vst [vmem:[%s158] sm:$0xff] %v157
  %s160 = scalar_lea.vmem %s1, 240
  %161 = vst [vmem:[%s160] sm:$0xff] %v157
  %s162 = scalar_lea.vmem %s1, 368
  %163 = vst [vmem:[%s162] sm:$0xff] %v157
  %s164 = scalar_lea.vmem %s1, 496
  %165 = vst [vmem:[%s164] sm:$0xff] %v157
  %s166 = scalar_lea.vmem %s1, 624
  %167 = vst [vmem:[%s166] sm:$0xff] %v157
  %s168 = scalar_lea.vmem %s1, 752
  %169 = vst [vmem:[%s168] sm:$0xff] %v157
  %s170 = scalar_lea.vmem %s1, 880
  %171 = vst [vmem:[%s170] sm:$0xff] %v157
  %s172 = scalar_lea.vmem %s1, 1008
  %173 = vst [vmem:[%s172] sm:$0xff] %v157
  %s174 = scalar_lea.vmem %s1, 1136
  %175 = vst [vmem:[%s174] sm:$0xff] %v157
  %s176 = scalar_lea.vmem %s1, 1264
  %177 = vst [vmem:[%s176] sm:$0xff] %v157
  %s178 = scalar_lea.vmem %s1, 8
  %179 = vst [vmem:[%s178] sm:$0xff] %v4
  %s180 = scalar_lea.vmem %s1, 136
  %181 = vst [vmem:[%s180] sm:$0xff] %v4
  %s182 = scalar_lea.vmem %s1, 264
  %183 = vst [vmem:[%s182] sm:$0xff] %v4
  %s184 = scalar_lea.vmem %s1, 392
  %185 = vst [vmem:[%s184] sm:$0xff] %v4
  %s186 = scalar_lea.vmem %s1, 520
  %187 = vst [vmem:[%s186] sm:$0xff] %v4
  %s188 = scalar_lea.vmem %s1, 648
  %189 = vst [vmem:[%s188] sm:$0xff] %v4
  %s190 = scalar_lea.vmem %s1, 776
  %191 = vst [vmem:[%s190] sm:$0xff] %v4
  %s192 = scalar_lea.vmem %s1, 904
  %193 = vst [vmem:[%s192] sm:$0xff] %v4
  %s194 = scalar_lea.vmem %s1, 1032
  %195 = vst [vmem:[%s194] sm:$0xff] %v4
  %s196 = scalar_lea.vmem %s1, 1160
  %197 = vst [vmem:[%s196] sm:$0xff] %v4
  %s198 = scalar_lea.vmem %s1, 24
  %199 = vst [vmem:[%s198] sm:$0xff] %v25
  %s200 = scalar_lea.vmem %s1, 152
  %201 = vst [vmem:[%s200] sm:$0xff] %v25
  %s202 = scalar_lea.vmem %s1, 280
  %203 = vst [vmem:[%s202] sm:$0xff] %v25
  %s204 = scalar_lea.vmem %s1, 408
  %205 = vst [vmem:[%s204] sm:$0xff] %v25
  %s206 = scalar_lea.vmem %s1, 536
  %207 = vst [vmem:[%s206] sm:$0xff] %v25
  %s208 = scalar_lea.vmem %s1, 664
  %209 = vst [vmem:[%s208] sm:$0xff] %v25
  %s210 = scalar_lea.vmem %s1, 792
  %211 = vst [vmem:[%s210] sm:$0xff] %v25
  %s212 = scalar_lea.vmem %s1, 920
  %213 = vst [vmem:[%s212] sm:$0xff] %v25
  %s214 = scalar_lea.vmem %s1, 1048
  %215 = vst [vmem:[%s214] sm:$0xff] %v25
  %s216 = scalar_lea.vmem %s1, 1176
  %217 = vst [vmem:[%s216] sm:$0xff] %v25
  %s218 = scalar_lea.vmem %s1, 40
  %219 = vst [vmem:[%s218] sm:$0xff] %v47
  %s220 = scalar_lea.vmem %s1, 168
  %221 = vst [vmem:[%s220] sm:$0xff] %v47
  %s222 = scalar_lea.vmem %s1, 296
  %223 = vst [vmem:[%s222] sm:$0xff] %v47
  %s224 = scalar_lea.vmem %s1, 424
  %225 = vst [vmem:[%s224] sm:$0xff] %v47
  %s226 = scalar_lea.vmem %s1, 552
  %227 = vst [vmem:[%s226] sm:$0xff] %v47
  %s228 = scalar_lea.vmem %s1, 680
  %229 = vst [vmem:[%s228] sm:$0xff] %v47
  %s230 = scalar_lea.vmem %s1, 808
  %231 = vst [vmem:[%s230] sm:$0xff] %v47
  %s232 = scalar_lea.vmem %s1, 936
  %233 = vst [vmem:[%s232] sm:$0xff] %v47
  %s234 = scalar_lea.vmem %s1, 1064
  %235 = vst [vmem:[%s234] sm:$0xff] %v47
  %s236 = scalar_lea.vmem %s1, 1192
  %237 = vst [vmem:[%s236] sm:$0xff] %v47
  %s238 = scalar_lea.vmem %s1, 56
  %239 = vst [vmem:[%s238] sm:$0xff] %v69
  %s240 = scalar_lea.vmem %s1, 184
  %241 = vst [vmem:[%s240] sm:$0xff] %v69
  %s242 = scalar_lea.vmem %s1, 312
  %243 = vst [vmem:[%s242] sm:$0xff] %v69
  %s244 = scalar_lea.vmem %s1, 440
  %245 = vst [vmem:[%s244] sm:$0xff] %v69
  %s246 = scalar_lea.vmem %s1, 568
  %247 = vst [vmem:[%s246] sm:$0xff] %v69
  %s248 = scalar_lea.vmem %s1, 696
  %249 = vst [vmem:[%s248] sm:$0xff] %v69
  %s250 = scalar_lea.vmem %s1, 824
  %251 = vst [vmem:[%s250] sm:$0xff] %v69
  %s252 = scalar_lea.vmem %s1, 952
  %253 = vst [vmem:[%s252] sm:$0xff] %v69
  %s254 = scalar_lea.vmem %s1, 1080
  %255 = vst [vmem:[%s254] sm:$0xff] %v69
  %s256 = scalar_lea.vmem %s1, 1208
  %257 = vst [vmem:[%s256] sm:$0xff] %v69
  %s258 = scalar_lea.vmem %s1, 72
  %259 = vst [vmem:[%s258] sm:$0xff] %v91
  %s260 = scalar_lea.vmem %s1, 200
  %261 = vst [vmem:[%s260] sm:$0xff] %v91
  %s262 = scalar_lea.vmem %s1, 328
  %263 = vst [vmem:[%s262] sm:$0xff] %v91
  %s264 = scalar_lea.vmem %s1, 456
  %265 = vst [vmem:[%s264] sm:$0xff] %v91
  %s266 = scalar_lea.vmem %s1, 584
  %267 = vst [vmem:[%s266] sm:$0xff] %v91
  %s268 = scalar_lea.vmem %s1, 712
  %269 = vst [vmem:[%s268] sm:$0xff] %v91
  %s270 = scalar_lea.vmem %s1, 840
  %271 = vst [vmem:[%s270] sm:$0xff] %v91
  %s272 = scalar_lea.vmem %s1, 968
  %273 = vst [vmem:[%s272] sm:$0xff] %v91
  %s274 = scalar_lea.vmem %s1, 1096
  %275 = vst [vmem:[%s274] sm:$0xff] %v91
  %s276 = scalar_lea.vmem %s1, 1224
  %277 = vst [vmem:[%s276] sm:$0xff] %v91
  %s278 = scalar_lea.vmem %s1, 88
  %279 = vst [vmem:[%s278] sm:$0xff] %v113
  %s280 = scalar_lea.vmem %s1, 216
  %281 = vst [vmem:[%s280] sm:$0xff] %v113
  %s282 = scalar_lea.vmem %s1, 344
  %283 = vst [vmem:[%s282] sm:$0xff] %v113
  %s284 = scalar_lea.vmem %s1, 472
  %285 = vst [vmem:[%s284] sm:$0xff] %v113
  %s286 = scalar_lea.vmem %s1, 600
  %287 = vst [vmem:[%s286] sm:$0xff] %v113
  %s288 = scalar_lea.vmem %s1, 728
  %289 = vst [vmem:[%s288] sm:$0xff] %v113
  %s290 = scalar_lea.vmem %s1, 856
  %291 = vst [vmem:[%s290] sm:$0xff] %v113
  %s292 = scalar_lea.vmem %s1, 984
  %293 = vst [vmem:[%s292] sm:$0xff] %v113
  %s294 = scalar_lea.vmem %s1, 1112
  %295 = vst [vmem:[%s294] sm:$0xff] %v113
  %s296 = scalar_lea.vmem %s1, 1240
  %297 = vst [vmem:[%s296] sm:$0xff] %v113
  %s298 = scalar_lea.vmem %s1, 104
  %299 = vst [vmem:[%s298] sm:$0xff] %v135
  %s300 = scalar_lea.vmem %s1, 232
  %301 = vst [vmem:[%s300] sm:$0xff] %v135
  %s302 = scalar_lea.vmem %s1, 360
  %303 = vst [vmem:[%s302] sm:$0xff] %v135
  %s304 = scalar_lea.vmem %s1, 488
  %305 = vst [vmem:[%s304] sm:$0xff] %v135
  %s306 = scalar_lea.vmem %s1, 616
  %307 = vst [vmem:[%s306] sm:$0xff] %v135
  %s308 = scalar_lea.vmem %s1, 744
  %309 = vst [vmem:[%s308] sm:$0xff] %v135
  %s310 = scalar_lea.vmem %s1, 872
  %311 = vst [vmem:[%s310] sm:$0xff] %v135
  %s312 = scalar_lea.vmem %s1, 1000
  %313 = vst [vmem:[%s312] sm:$0xff] %v135
  %s314 = scalar_lea.vmem %s1, 1128
  %315 = vst [vmem:[%s314] sm:$0xff] %v135
  %s316 = scalar_lea.vmem %s1, 1256
  %317 = vst [vmem:[%s316] sm:$0xff] %v135
  %s318 = scalar_lea.vmem %s1, 120
  %319 = vst [vmem:[%s318] sm:$0xff] %v157
  %s320 = scalar_lea.vmem %s1, 248
  %321 = vst [vmem:[%s320] sm:$0xff] %v157
  %s322 = scalar_lea.vmem %s1, 376
  %323 = vst [vmem:[%s322] sm:$0xff] %v157
  %s324 = scalar_lea.vmem %s1, 504
  %325 = vst [vmem:[%s324] sm:$0xff] %v157
  %s326 = scalar_lea.vmem %s1, 632
  %327 = vst [vmem:[%s326] sm:$0xff] %v157
  %s328 = scalar_lea.vmem %s1, 760
  %329 = vst [vmem:[%s328] sm:$0xff] %v157
  %s330 = scalar_lea.vmem %s1, 888
  %331 = vst [vmem:[%s330] sm:$0xff] %v157
  %s332 = scalar_lea.vmem %s1, 1016
  %333 = vst [vmem:[%s332] sm:$0xff] %v157
  %s334 = scalar_lea.vmem %s1, 1144
  %335 = vst [vmem:[%s334] sm:$0xff] %v157
  %s336 = scalar_lea.vmem %s1, 1272
  %337 = vst [vmem:[%s336] sm:$0xff] %v157

// kernel: tile.49
$region0: #{tile.49}
  %s0 = inlined_call_operand.vmem [shape: f32[10,8,10,8], index: 0, kind: input, shape index: {}]
  %s1 = inlined_call_operand.vmem [shape: f32[80,80], index: 1, kind: output, shape index: {}]
  %s2 = smov 3
  %v3 = vld [vmem:[%s0] ss:$16 sm:%s2]
  %s4 = smov 12
  %v5 = vld [vmem:[%s0] ss:$16 sm:%s4]
  %vm6 = vcmask 1043458
  %v7 = vsel %vm6, %v5, %v3
  %s8 = smov 48
  %v9 = vld [vmem:[%s0] ss:$16 sm:%s8]
  %vm10 = vcmask 1045508
  %v11 = vsel %vm10, %v9, %v7
  %s12 = smov 192
  %v13 = vld [vmem:[%s0] ss:$16 sm:%s12]
  %vm14 = vcmask 1047558
  %v15 = vsel %vm14, %v13, %v11
  %vm16 = vcmask 64512
  %17 = vst.msk [vmem:[%s1] sm:$0xff] %vm16, %v15
  %s18 = scalar_lea.vmem %s0, 128
  %s19 = smov 3
  %v20 = vld [vmem:[%s18] ss:$16 sm:%s19]
  %s21 = scalar_lea.vmem %s0, 128
  %s22 = smov 12
  %v23 = vld [vmem:[%s21] ss:$16 sm:%s22]
  %vm24 = vcmask 1043458
  %v25 = vsel %vm24, %v23, %v20
  %s26 = scalar_lea.vmem %s0, 128
  %s27 = smov 48
  %v28 = vld [vmem:[%s26] ss:$16 sm:%s27]
  %vm29 = vcmask 1045508
  %v30 = vsel %vm29, %v28, %v25
  %s31 = scalar_lea.vmem %s0, 128
  %s32 = smov 192
  %v33 = vld [vmem:[%s31] ss:$16 sm:%s32]
  %vm34 = vcmask 1047558
  %v35 = vsel %vm34, %v33, %v30
  %vm36 = vcmask 64512
  %s37 = scalar_lea.vmem %s1, 8
  %38 = vst.msk [vmem:[%s37] sm:$0xff] %vm36, %v35
  %s39 = scalar_lea.vmem %s0, 256
  %s40 = smov 3
  %v41 = vld [vmem:[%s39] ss:$16 sm:%s40]
  %s42 = scalar_lea.vmem %s0, 256
  %s43 = smov 12
  %v44 = vld [vmem:[%s42] ss:$16 sm:%s43]
  %vm45 = vcmask 1043458
  %v46 = vsel %vm45, %v44, %v41
  %s47 = scalar_lea.vmem %s0, 256
  %s48 = smov 48
  %v49 = vld [vmem:[%s47] ss:$16 sm:%s48]
  %vm50 = vcmask 1045508
  %v51 = vsel %vm50, %v49, %v46
  %s52 = scalar_lea.vmem %s0, 256
  %s53 = smov 192
  %v54 = vld [vmem:[%s52] ss:$16 sm:%s53]
  %vm55 = vcmask 1047558
  %v56 = vsel %vm55, %v54, %v51
  %vm57 = vcmask 64512
  %s58 = scalar_lea.vmem %s1, 16
  %59 = vst.msk [vmem:[%s58] sm:$0xff] %vm57, %v56
  %s60 = scalar_lea.vmem %s0, 384
  %s61 = smov 3
  %v62 = vld [vmem:[%s60] ss:$16 sm:%s61]
  %s63 = scalar_lea.vmem %s0, 384
  %s64 = smov 12
  %v65 = vld [vmem:[%s63] ss:$16 sm:%s64]
  %vm66 = vcmask 1043458
  %v67 = vsel %vm66, %v65, %v62
  %s68 = scalar_lea.vmem %s0, 384
  %s69 = smov 48
  %v70 = vld [vmem:[%s68] ss:$16 sm:%s69]
  %vm71 = vcmask 1045508
  %v72 = vsel %vm71, %v70, %v67
  %s73 = scalar_lea.vmem %s0, 384
  %s74 = smov 192
  %v75 = vld [vmem:[%s73] ss:$16 sm:%s74]
  %vm76 = vcmask 1047558
  %v77 = vsel %vm76, %v75, %v72
  %vm78 = vcmask 64512
  %s79 = scalar_lea.vmem %s1, 24
  %80 = vst.msk [vmem:[%s79] sm:$0xff] %vm78, %v77
  %s81 = scalar_lea.vmem %s0, 512
  %s82 = smov 3
  %v83 = vld [vmem:[%s81] ss:$16 sm:%s82]
  %s84 = scalar_lea.vmem %s0, 512
  %s85 = smov 12
  %v86 = vld [vmem:[%s84] ss:$16 sm:%s85]
  %vm87 = vcmask 1043458
  %v88 = vsel %vm87, %v86, %v83
  %s89 = scalar_lea.vmem %s0, 512
  %s90 = smov 48
  %v91 = vld [vmem:[%s89] ss:$16 sm:%s90]
  %vm92 = vcmask 1045508
  %v93 = vsel %vm92, %v91, %v88
  %s94 = scalar_lea.vmem %s0, 512
  %s95 = smov 192
  %v96 = vld [vmem:[%s94] ss:$16 sm:%s95]
  %vm97 = vcmask 1047558
  %v98 = vsel %vm97, %v96, %v93
  %vm99 = vcmask 64512
  %s100 = scalar_lea.vmem %s1, 32
  %101 = vst.msk [vmem:[%s100] sm:$0xff] %vm99, %v98
  %s102 = scalar_lea.vmem %s0, 640
  %s103 = smov 3
  %v104 = vld [vmem:[%s102] ss:$16 sm:%s103]
  %s105 = scalar_lea.vmem %s0, 640
  %s106 = smov 12
  %v107 = vld [vmem:[%s105] ss:$16 sm:%s106]
  %vm108 = vcmask 1043458
  %v109 = vsel %vm108, %v107, %v104
  %s110 = scalar_lea.vmem %s0, 640
  %s111 = smov 48
  %v112 = vld [vmem:[%s110] ss:$16 sm:%s111]
  %vm113 = vcmask 1045508
  %v114 = vsel %vm113, %v112, %v109
  %s115 = scalar_lea.vmem %s0, 640
  %s116 = smov 192
  %v117 = vld [vmem:[%s115] ss:$16 sm:%s116]
  %vm118 = vcmask 1047558
  %v119 = vsel %vm118, %v117, %v114
  %vm120 = vcmask 64512
  %s121 = scalar_lea.vmem %s1, 40
  %122 = vst.msk [vmem:[%s121] sm:$0xff] %vm120, %v119
  %s123 = scalar_lea.vmem %s0, 768
  %s124 = smov 3
  %v125 = vld [vmem:[%s123] ss:$16 sm:%s124]
  %s126 = scalar_lea.vmem %s0, 768
  %s127 = smov 12
  %v128 = vld [vmem:[%s126] ss:$16 sm:%s127]
  %vm129 = vcmask 1043458
  %v130 = vsel %vm129, %v128, %v125
  %s131 = scalar_lea.vmem %s0, 768
  %s132 = smov 48
  %v133 = vld [vmem:[%s131] ss:$16 sm:%s132]
  %vm134 = vcmask 1045508
  %v135 = vsel %vm134, %v133, %v130
  %s136 = scalar_lea.vmem %s0, 768
  %s137 = smov 192
  %v138 = vld [vmem:[%s136] ss:$16 sm:%s137]
  %vm139 = vcmask 1047558
  %v140 = vsel %vm139, %v138, %v135
  %vm141 = vcmask 64512
  %s142 = scalar_lea.vmem %s1, 48
  %143 = vst.msk [vmem:[%s142] sm:$0xff] %vm141, %v140
  %s144 = scalar_lea.vmem %s0, 896
  %s145 = smov 3
  %v146 = vld [vmem:[%s144] ss:$16 sm:%s145]
  %s147 = scalar_lea.vmem %s0, 896
  %s148 = smov 12
  %v149 = vld [vmem:[%s147] ss:$16 sm:%s148]
  %vm150 = vcmask 1043458
  %v151 = vsel %vm150, %v149, %v146
  %s152 = scalar_lea.vmem %s0, 896
  %s153 = smov 48
  %v154 = vld [vmem:[%s152] ss:$16 sm:%s153]
  %vm155 = vcmask 1045508
  %v156 = vsel %vm155, %v154, %v151
  %s157 = scalar_lea.vmem %s0, 896
  %s158 = smov 192
  %v159 = vld [vmem:[%s157] ss:$16 sm:%s158]
  %vm160 = vcmask 1047558
  %v161 = vsel %vm160, %v159, %v156
  %vm162 = vcmask 64512
  %s163 = scalar_lea.vmem %s1, 56
  %164 = vst.msk [vmem:[%s163] sm:$0xff] %vm162, %v161
  %s165 = scalar_lea.vmem %s0, 1024
  %s166 = smov 3
  %v167 = vld [vmem:[%s165] ss:$16 sm:%s166]
  %s168 = scalar_lea.vmem %s0, 1024
  %s169 = smov 12
  %v170 = vld [vmem:[%s168] ss:$16 sm:%s169]
  %vm171 = vcmask 1043458
  %v172 = vsel %vm171, %v170, %v167
  %s173 = scalar_lea.vmem %s0, 1024
  %s174 = smov 48
  %v175 = vld [vmem:[%s173] ss:$16 sm:%s174]
  %vm176 = vcmask 1045508
  %v177 = vsel %vm176, %v175, %v172
  %s178 = scalar_lea.vmem %s0, 1024
  %s179 = smov 192
  %v180 = vld [vmem:[%s178] ss:$16 sm:%s179]
  %vm181 = vcmask 1047558
  %v182 = vsel %vm181, %v180, %v177
  %vm183 = vcmask 64512
  %s184 = scalar_lea.vmem %s1, 64
  %185 = vst.msk [vmem:[%s184] sm:$0xff] %vm183, %v182
  %s186 = scalar_lea.vmem %s0, 1152
  %s187 = smov 3
  %v188 = vld [vmem:[%s186] ss:$16 sm:%s187]
  %s189 = scalar_lea.vmem %s0, 1152
  %s190 = smov 12
  %v191 = vld [vmem:[%s189] ss:$16 sm:%s190]
  %vm192 = vcmask 1043458
  %v193 = vsel %vm192, %v191, %v188
  %s194 = scalar_lea.vmem %s0, 1152
  %s195 = smov 48
  %v196 = vld [vmem:[%s194] ss:$16 sm:%s195]
  %vm197 = vcmask 1045508
  %v198 = vsel %vm197, %v196, %v193
  %s199 = scalar_lea.vmem %s0, 1152
  %s200 = smov 192
  %v201 = vld [vmem:[%s199] ss:$16 sm:%s200]
  %vm202 = vcmask 1047558
  %v203 = vsel %vm202, %v201, %v198
  %vm204 = vcmask 64512
  %s205 = scalar_lea.vmem %s1, 72
  %206 = vst.msk [vmem:[%s205] sm:$0xff] %vm204, %v203
  %s207 = scalar_lea.vmem %s0, 9
  %s208 = smov 3
  %v209 = vld [vmem:[%s207] ss:$16 sm:%s208]
  %s210 = scalar_lea.vmem %s0, 9
  %s211 = smov 12
  %v212 = vld [vmem:[%s210] ss:$16 sm:%s211]
  %vm213 = vcmask 1043458
  %v214 = vsel %vm213, %v212, %v209
  %s215 = scalar_lea.vmem %s0, 9
  %s216 = smov 48
  %v217 = vld [vmem:[%s215] ss:$16 sm:%s216]
  %vm218 = vcmask 1045508
  %v219 = vsel %vm218, %v217, %v214
  %s220 = scalar_lea.vmem %s0, 9
  %s221 = smov 192
  %v222 = vld [vmem:[%s220] ss:$16 sm:%s221]
  %vm223 = vcmask 1047558
  %v224 = vsel %vm223, %v222, %v219
  %225 = vrot.lane.b32.xlu0 %v224, 72
  %v226 = vpop.permute.xlu0 %225
  %vm227 = vcmask 654912
  %228 = vst.msk [vmem:[%s1] sm:$0xff] %vm227, %v226
  %s229 = scalar_lea.vmem %s0, 521
  %s230 = smov 3
  %v231 = vld [vmem:[%s229] ss:$16 sm:%s230]
  %s232 = scalar_lea.vmem %s0, 521
  %s233 = smov 12
  %v234 = vld [vmem:[%s232] ss:$16 sm:%s233]
  %vm235 = vcmask 1043458
  %v236 = vsel %vm235, %v234, %v231
  %s237 = scalar_lea.vmem %s0, 521
  %s238 = smov 48
  %v239 = vld [vmem:[%s237] ss:$16 sm:%s238]
  %vm240 = vcmask 1045508
  %v241 = vsel %vm240, %v239, %v236
  %s242 = scalar_lea.vmem %s0, 521
  %s243 = smov 192
  %v244 = vld [vmem:[%s242] ss:$16 sm:%s243]
  %vm245 = vcmask 1047558
  %v246 = vsel %vm245, %v244, %v241
  %247 = vrot.lane.b32.xlu0 %v246, 72
  %v248 = vpop.permute.xlu0 %247
  %vm249 = vcmask 654912
  %s250 = scalar_lea.vmem %s1, 32
  %251 = vst.msk [vmem:[%s250] sm:$0xff] %vm249, %v248
  %s252 = scalar_lea.vmem %s0, 1033
  %s253 = smov 3
  %v254 = vld [vmem:[%s252] ss:$16 sm:%s253]
  %s255 = scalar_lea.vmem %s0, 1033
  %s256 = smov 12
  %v257 = vld [vmem:[%s255] ss:$16 sm:%s256]
  %vm258 = vcmask 1043458
  %v259 = vsel %vm258, %v257, %v254
  %s260 = scalar_lea.vmem %s0, 1033
  %s261 = smov 48
  %v262 = vld [vmem:[%s260] ss:$16 sm:%s261]
  %vm263 = vcmask 1045508
  %v264 = vsel %vm263, %v262, %v259
  %s265 = scalar_lea.vmem %s0, 1033
  %s266 = smov 192
  %v267 = vld [vmem:[%s265] ss:$16 sm:%s266]
  %vm268 = vcmask 1047558
  %v269 = vsel %vm268, %v267, %v264
  %270 = vrot.lane.b32.xlu0 %v269, 72
  %v271 = vpop.permute.xlu0 %270
  %vm272 = vcmask 654912
  %s273 = scalar_lea.vmem %s1, 64
  %274 = vst.msk [vmem:[%s273] sm:$0xff] %vm272, %v271
  %s275 = scalar_lea.vmem %s0, 137
  %s276 = smov 3
  %v277 = vld [vmem:[%s275] ss:$16 sm:%s276]
  %s278 = scalar_lea.vmem %s0, 137
  %s279 = smov 12
  %v280 = vld [vmem:[%s278] ss:$16 sm:%s279]
  %vm281 = vcmask 1043458
  %v282 = vsel %vm281, %v280, %v277
  %s283 = scalar_lea.vmem %s0, 137
  %s284 = smov 48
  %v285 = vld [vmem:[%s283] ss:$16 sm:%s284]
  %vm286 = vcmask 1045508
  %v287 = vsel %vm286, %v285, %v282
  %s288 = scalar_lea.vmem %s0, 137
  %s289 = smov 192
  %v290 = vld [vmem:[%s288] ss:$16 sm:%s289]
  %vm291 = vcmask 1047558
  %v292 = vsel %vm291, %v290, %v287
  %293 = vrot.lane.b32.xlu0 %v292, 72
  %v294 = vpop.permute.xlu0 %293
  %vm295 = vcmask 654912
  %s296 = scalar_lea.vmem %s1, 8
  %297 = vst.msk [vmem:[%s296] sm:$0xff] %vm295, %v294
  %s298 = scalar_lea.vmem %s0, 649
  %s299 = smov 3
  %v300 = vld [vmem:[%s298] ss:$16 sm:%s299]
  %s301 = scalar_lea.vmem %s0, 649
  %s302 = smov 12
  %v303 = vld [vmem:[%s301] ss:$16 sm:%s302]
  %vm304 = vcmask 1043458
  %v305 = vsel %vm304, %v303, %v300
  %s306 = scalar_lea.vmem %s0, 649
  %s307 = smov 48
  %v308 = vld [vmem:[%s306] ss:$16 sm:%s307]
  %vm309 = vcmask 1045508
  %v310 = vsel %vm309, %v308, %v305
  %s311 = scalar_lea.vmem %s0, 649
  %s312 = smov 192
  %v313 = vld [vmem:[%s311] ss:$16 sm:%s312]
  %vm314 = vcmask 1047558
  %v315 = vsel %vm314, %v313, %v310
  %316 = vrot.lane.b32.xlu0 %v315, 72
  %v317 = vpop.permute.xlu0 %316
  %vm318 = vcmask 654912
  %s319 = scalar_lea.vmem %s1, 40
  %320 = vst.msk [vmem:[%s319] sm:$0xff] %vm318, %v317
  %s321 = scalar_lea.vmem %s0, 1161
  %s322 = smov 3
  %v323 = vld [vmem:[%s321] ss:$16 sm:%s322]
  %s324 = scalar_lea.vmem %s0, 1161
  %s325 = smov 12
  %v326 = vld [vmem:[%s324] ss:$16 sm:%s325]
  %vm327 = vcmask 1043458
  %v328 = vsel %vm327, %v326, %v323
  %s329 = scalar_lea.vmem %s0, 1161
  %s330 = smov 48
  %v331 = vld [vmem:[%s329] ss:$16 sm:%s330]
  %vm332 = vcmask 1045508
  %v333 = vsel %vm332, %v331, %v328
  %s334 = scalar_lea.vmem %s0, 1161
  %s335 = smov 192
  %v336 = vld [vmem:[%s334] ss:$16 sm:%s335]
  %vm337 = vcmask 1047558
  %v338 = vsel %vm337, %v336, %v333
  %339 = vrot.lane.b32.xlu0 %v338, 72
  %v340 = vpop.permute.xlu0 %339
  %vm341 = vcmask 654912
  %s342 = scalar_lea.vmem %s1, 72
  %343 = vst.msk [vmem:[%s342] sm:$0xff] %vm341, %v340
  %s344 = scalar_lea.vmem %s0, 265
  %s345 = smov 3
  %v346 = vld [vmem:[%s344] ss:$16 sm:%s345]
  %s347 = scalar_lea.vmem %s0, 265
  %s348 = smov 12
  %v349 = vld [vmem:[%s347] ss:$16 sm:%s348]
  %vm350 = vcmask 1043458
  %v351 = vsel %vm350, %v349, %v346
  %s352 = scalar_lea.vmem %s0, 265
  %s353 = smov 48
  %v354 = vld [vmem:[%s352] ss:$16 sm:%s353]
  %vm355 = vcmask 1045508
  %v356 = vsel %vm355, %v354, %v351
  %s357 = scalar_lea.vmem %s0, 265
  %s358 = smov 192
  %v359 = vld [vmem:[%s357] ss:$16 sm:%s358]
  %vm360 = vcmask 1047558
  %v361 = vsel %vm360, %v359, %v356
  %362 = vrot.lane.b32.xlu0 %v361, 72
  %v363 = vpop.permute.xlu0 %362
  %vm364 = vcmask 654912
  %s365 = scalar_lea.vmem %s1, 16
  %366 = vst.msk [vmem:[%s365] sm:$0xff] %vm364, %v363
  %s367 = scalar_lea.vmem %s0, 777
  %s368 = smov 3
  %v369 = vld [vmem:[%s367] ss:$16 sm:%s368]
  %s370 = scalar_lea.vmem %s0, 777
  %s371 = smov 12
  %v372 = vld [vmem:[%s370] ss:$16 sm:%s371]
  %vm373 = vcmask 1043458
  %v374 = vsel %vm373, %v372, %v369
  %s375 = scalar_lea.vmem %s0, 777
  %s376 = smov 48
  %v377 = vld [vmem:[%s375] ss:$16 sm:%s376]
  %vm378 = vcmask 1045508
  %v379 = vsel %vm378, %v377, %v374
  %s380 = scalar_lea.vmem %s0, 777
  %s381 = smov 192
  %v382 = vld [vmem:[%s380] ss:$16 sm:%s381]
  %vm383 = vcmask 1047558
  %v384 = vsel %vm383, %v382, %v379
  %385 = vrot.lane.b32.xlu0 %v384, 72
  %v386 = vpop.permute.xlu0 %385
  %vm387 = vcmask 654912
  %s388 = scalar_lea.vmem %s1, 48
  %389 = vst.msk [vmem:[%s388] sm:$0xff] %vm387, %v386
  %s390 = scalar_lea.vmem %s0, 393
  %s391 = smov 3
  %v392 = vld [vmem:[%s390] ss:$16 sm:%s391]
  %s393 = scalar_lea.vmem %s0, 393
  %s394 = smov 12
  %v395 = vld [vmem:[%s393] ss:$16 sm:%s394]
  %vm396 = vcmask 1043458
  %v397 = vsel %vm396, %v395, %v392
  %s398 = scalar_lea.vmem %s0, 393
  %s399 = smov 48
  %v400 = vld [vmem:[%s398] ss:$16 sm:%s399]
  %vm401 = vcmask 1045508
  %v402 = vsel %vm401, %v400, %v397
  %s403 = scalar_lea.vmem %s0, 393
  %s404 = smov 192
  %v405 = vld [vmem:[%s403] ss:$16 sm:%s404]
  %vm406 = vcmask 1047558
  %v407 = vsel %vm406, %v405, %v402
  %408 = vrot.lane.b32.xlu0 %v407, 72
  %v409 = vpop.permute.xlu0 %408
  %vm410 = vcmask 654912
  %s411 = scalar_lea.vmem %s1, 24
  %412 = vst.msk [vmem:[%s411] sm:$0xff] %vm410, %v409
  %s413 = scalar_lea.vmem %s0, 905
  %s414 = smov 3
  %v415 = vld [vmem:[%s413] ss:$16 sm:%s414]
  %s416 = scalar_lea.vmem %s0, 905
  %s417 = smov 12
  %v418 = vld [vmem:[%s416] ss:$16 sm:%s417]
  %vm419 = vcmask 1043458
  %v420 = vsel %vm419, %v418, %v415
  %s421 = scalar_lea.vmem %s0, 905
  %s422 = smov 48
  %v423 = vld [vmem:[%s421] ss:$16 sm:%s422]
  %vm424 = vcmask 1045508
  %v425 = vsel %vm424, %v423, %v420
  %s426 = scalar_lea.vmem %s0, 905
  %s427 = smov 192
  %v428 = vld [vmem:[%s426] ss:$16 sm:%s427]
  %vm429 = vcmask 1047558
  %v430 = vsel %vm429, %v428, %v425
  %431 = vrot.lane.b32.xlu0 %v430, 72
  %v432 = vpop.permute.xlu0 %431
  %vm433 = vcmask 654912
  %s434 = scalar_lea.vmem %s1, 56
  %435 = vst.msk [vmem:[%s434] sm:$0xff] %vm433, %v432
  %s436 = scalar_lea.vmem %s0, 8
  %s437 = smov 3
  %v438 = vld [vmem:[%s436] ss:$16 sm:%s437]
  %s439 = scalar_lea.vmem %s0, 8
  %s440 = smov 12
  %v441 = vld [vmem:[%s439] ss:$16 sm:%s440]
  %vm442 = vcmask 1043458
  %v443 = vsel %vm442, %v441, %v438
  %s444 = scalar_lea.vmem %s0, 8
  %s445 = smov 48
  %v446 = vld [vmem:[%s444] ss:$16 sm:%s445]
  %vm447 = vcmask 1045508
  %v448 = vsel %vm447, %v446, %v443
  %s449 = scalar_lea.vmem %s0, 8
  %s450 = smov 192
  %v451 = vld [vmem:[%s449] ss:$16 sm:%s450]
  %vm452 = vcmask 1047558
  %v453 = vsel %vm452, %v451, %v448
  %454 = vrot.lane.b32.xlu0 %v453, 64
  %v455 = vpop.permute.xlu0 %454
  %vm456 = vcmask 589312
  %457 = vst.msk [vmem:[%s1] sm:$0xff] %vm456, %v455
  %s458 = scalar_lea.vmem %s0, 520
  %s459 = smov 3
  %v460 = vld [vmem:[%s458] ss:$16 sm:%s459]
  %s461 = scalar_lea.vmem %s0, 520
  %s462 = smov 12
  %v463 = vld [vmem:[%s461] ss:$16 sm:%s462]
  %vm464 = vcmask 1043458
  %v465 = vsel %vm464, %v463, %v460
  %s466 = scalar_lea.vmem %s0, 520
  %s467 = smov 48
  %v468 = vld [vmem:[%s466] ss:$16 sm:%s467]
  %vm469 = vcmask 1045508
  %v470 = vsel %vm469, %v468, %v465
  %s471 = scalar_lea.vmem %s0, 520
  %s472 = smov 192
  %v473 = vld [vmem:[%s471] ss:$16 sm:%s472]
  %vm474 = vcmask 1047558
  %v475 = vsel %vm474, %v473, %v470
  %476 = vrot.lane.b32.xlu0 %v475, 64
  %v477 = vpop.permute.xlu0 %476
  %vm478 = vcmask 589312
  %s479 = scalar_lea.vmem %s1, 32
  %480 = vst.msk [vmem:[%s479] sm:$0xff] %vm478, %v477
  %s481 = scalar_lea.vmem %s0, 1032
  %s482 = smov 3
  %v483 = vld [vmem:[%s481] ss:$16 sm:%s482]
  %s484 = scalar_lea.vmem %s0, 1032
  %s485 = smov 12
  %v486 = vld [vmem:[%s484] ss:$16 sm:%s485]
  %vm487 = vcmask 1043458
  %v488 = vsel %vm487, %v486, %v483
  %s489 = scalar_lea.vmem %s0, 1032
  %s490 = smov 48
  %v491 = vld [vmem:[%s489] ss:$16 sm:%s490]
  %vm492 = vcmask 1045508
  %v493 = vsel %vm492, %v491, %v488
  %s494 = scalar_lea.vmem %s0, 1032
  %s495 = smov 192
  %v496 = vld [vmem:[%s494] ss:$16 sm:%s495]
  %vm497 = vcmask 1047558
  %v498 = vsel %vm497, %v496, %v493
  %499 = vrot.lane.b32.xlu0 %v498, 64
  %v500 = vpop.permute.xlu0 %499
  %vm501 = vcmask 589312
  %s502 = scalar_lea.vmem %s1, 64
  %503 = vst.msk [vmem:[%s502] sm:$0xff] %vm501, %v500
  %s504 = scalar_lea.vmem %s0, 136
  %s505 = smov 3
  %v506 = vld [vmem:[%s504] ss:$16 sm:%s505]
  %s507 = scalar_lea.vmem %s0, 136
  %s508 = smov 12
  %v509 = vld [vmem:[%s507] ss:$16 sm:%s508]
  %vm510 = vcmask 1043458
  %v511 = vsel %vm510, %v509, %v506
  %s512 = scalar_lea.vmem %s0, 136
  %s513 = smov 48
  %v514 = vld [vmem:[%s512] ss:$16 sm:%s513]
  %vm515 = vcmask 1045508
  %v516 = vsel %vm515, %v514, %v511
  %s517 = scalar_lea.vmem %s0, 136
  %s518 = smov 192
  %v519 = vld [vmem:[%s517] ss:$16 sm:%s518]
  %vm520 = vcmask 1047558
  %v521 = vsel %vm520, %v519, %v516
  %522 = vrot.lane.b32.xlu0 %v521, 64
  %v523 = vpop.permute.xlu0 %522
  %vm524 = vcmask 589312
  %s525 = scalar_lea.vmem %s1, 8
  %526 = vst.msk [vmem:[%s525] sm:$0xff] %vm524, %v523
  %s527 = scalar_lea.vmem %s0, 648
  %s528 = smov 3
  %v529 = vld [vmem:[%s527] ss:$16 sm:%s528]
  %s530 = scalar_lea.vmem %s0, 648
  %s531 = smov 12
  %v532 = vld [vmem:[%s530] ss:$16 sm:%s531]
  %vm533 = vcmask 1043458
  %v534 = vsel %vm533, %v532, %v529
  %s535 = scalar_lea.vmem %s0, 648
  %s536 = smov 48
  %v537 = vld [vmem:[%s535] ss:$16 sm:%s536]
  %vm538 = vcmask 1045508
  %v539 = vsel %vm538, %v537, %v534
  %s540 = scalar_lea.vmem %s0, 648
  %s541 = smov 192
  %v542 = vld [vmem:[%s540] ss:$16 sm:%s541]
  %vm543 = vcmask 1047558
  %v544 = vsel %vm543, %v542, %v539
  %545 = vrot.lane.b32.xlu0 %v544, 64
  %v546 = vpop.permute.xlu0 %545
  %vm547 = vcmask 589312
  %s548 = scalar_lea.vmem %s1, 40
  %549 = vst.msk [vmem:[%s548] sm:$0xff] %vm547, %v546
  %s550 = scalar_lea.vmem %s0, 1160
  %s551 = smov 3
  %v552 = vld [vmem:[%s550] ss:$16 sm:%s551]
  %s553 = scalar_lea.vmem %s0, 1160
  %s554 = smov 12
  %v555 = vld [vmem:[%s553] ss:$16 sm:%s554]
  %vm556 = vcmask 1043458
  %v557 = vsel %vm556, %v555, %v552
  %s558 = scalar_lea.vmem %s0, 1160
  %s559 = smov 48
  %v560 = vld [vmem:[%s558] ss:$16 sm:%s559]
  %vm561 = vcmask 1045508
  %v562 = vsel %vm561, %v560, %v557
  %s563 = scalar_lea.vmem %s0, 1160
  %s564 = smov 192
  %v565 = vld [vmem:[%s563] ss:$16 sm:%s564]
  %vm566 = vcmask 1047558
  %v567 = vsel %vm566, %v565, %v562
  %568 = vrot.lane.b32.xlu0 %v567, 64
  %v569 = vpop.permute.xlu0 %568
  %vm570 = vcmask 589312
  %s571 = scalar_lea.vmem %s1, 72
  %572 = vst.msk [vmem:[%s571] sm:$0xff] %vm570, %v569
  %s573 = scalar_lea.vmem %s0, 264
  %s574 = smov 3
  %v575 = vld [vmem:[%s573] ss:$16 sm:%s574]
  %s576 = scalar_lea.vmem %s0, 264
  %s577 = smov 12
  %v578 = vld [vmem:[%s576] ss:$16 sm:%s577]
  %vm579 = vcmask 1043458
  %v580 = vsel %vm579, %v578, %v575
  %s581 = scalar_lea.vmem %s0, 264
  %s582 = smov 48
  %v583 = vld [vmem:[%s581] ss:$16 sm:%s582]
  %vm584 = vcmask 1045508
  %v585 = vsel %vm584, %v583, %v580
  %s586 = scalar_lea.vmem %s0, 264
  %s587 = smov 192
  %v588 = vld [vmem:[%s586] ss:$16 sm:%s587]
  %vm589 = vcmask 1047558
  %v590 = vsel %vm589, %v588, %v585
  %591 = vrot.lane.b32.xlu0 %v590, 64
  %v592 = vpop.permute.xlu0 %591
  %vm593 = vcmask 589312
  %s594 = scalar_lea.vmem %s1, 16
  %595 = vst.msk [vmem:[%s594] sm:$0xff] %vm593, %v592
  %s596 = scalar_lea.vmem %s0, 776
  %s597 = smov 3
  %v598 = vld [vmem:[%s596] ss:$16 sm:%s597]
  %s599 = scalar_lea.vmem %s0, 776
  %s600 = smov 12
  %v601 = vld [vmem:[%s599] ss:$16 sm:%s600]
  %vm602 = vcmask 1043458
  %v603 = vsel %vm602, %v601, %v598
  %s604 = scalar_lea.vmem %s0, 776
  %s605 = smov 48
  %v606 = vld [vmem:[%s604] ss:$16 sm:%s605]
  %vm607 = vcmask 1045508
  %v608 = vsel %vm607, %v606, %v603
  %s609 = scalar_lea.vmem %s0, 776
  %s610 = smov 192
  %v611 = vld [vmem:[%s609] ss:$16 sm:%s610]
  %vm612 = vcmask 1047558
  %v613 = vsel %vm612, %v611, %v608
  %614 = vrot.lane.b32.xlu0 %v613, 64
  %v615 = vpop.permute.xlu0 %614
  %vm616 = vcmask 589312
  %s617 = scalar_lea.vmem %s1, 48
  %618 = vst.msk [vmem:[%s617] sm:$0xff] %vm616, %v615
  %s619 = scalar_lea.vmem %s0, 392
  %s620 = smov 3
  %v621 = vld [vmem:[%s619] ss:$16 sm:%s620]
  %s622 = scalar_lea.vmem %s0, 392
  %s623 = smov 12
  %v624 = vld [vmem:[%s622] ss:$16 sm:%s623]
  %vm625 = vcmask 1043458
  %v626 = vsel %vm625, %v624, %v621
  %s627 = scalar_lea.vmem %s0, 392
  %s628 = smov 48
  %v629 = vld [vmem:[%s627] ss:$16 sm:%s628]
  %vm630 = vcmask 1045508
  %v631 = vsel %vm630, %v629, %v626
  %s632 = scalar_lea.vmem %s0, 392
  %s633 = smov 192
  %v634 = vld [vmem:[%s632] ss:$16 sm:%s633]
  %vm635 = vcmask 1047558
  %v636 = vsel %vm635, %v634, %v631
  %637 = vrot.lane.b32.xlu0 %v636, 64
  %v638 = vpop.permute.xlu0 %637
  %vm639 = vcmask 589312
  %s640 = scalar_lea.vmem %s1, 24
  %641 = vst.msk [vmem:[%s640] sm:$0xff] %vm639, %v638
  %s642 = scalar_lea.vmem %s0, 904
  %s643 = smov 3
  %v644 = vld [vmem:[%s642] ss:$16 sm:%s643]
  %s645 = scalar_lea.vmem %s0, 904
  %s646 = smov 12
  %v647 = vld [vmem:[%s645] ss:$16 sm:%s646]
  %vm648 = vcmask 1043458
  %v649 = vsel %vm648, %v647, %v644
  %s650 = scalar_lea.vmem %s0, 904
  %s651 = smov 48
  %v652 = vld [vmem:[%s650] ss:$16 sm:%s651]
  %vm653 = vcmask 1045508
  %v654 = vsel %vm653, %v652, %v649
  %s655 = scalar_lea.vmem %s0, 904
  %s656 = smov 192
  %v657 = vld [vmem:[%s655] ss:$16 sm:%s656]
  %vm658 = vcmask 1047558
  %v659 = vsel %vm658, %v657, %v654
  %660 = vrot.lane.b32.xlu0 %v659, 64
  %v661 = vpop.permute.xlu0 %660
  %vm662 = vcmask 589312
  %s663 = scalar_lea.vmem %s1, 56
  %664 = vst.msk [vmem:[%s663] sm:$0xff] %vm662, %v661
  %s665 = scalar_lea.vmem %s0, 7
  %s666 = smov 3
  %v667 = vld [vmem:[%s665] ss:$16 sm:%s666]
  %s668 = scalar_lea.vmem %s0, 7
  %s669 = smov 12
  %v670 = vld [vmem:[%s668] ss:$16 sm:%s669]
  %vm671 = vcmask 1043458
  %v672 = vsel %vm671, %v670, %v667
  %s673 = scalar_lea.vmem %s0, 7
  %s674 = smov 48
  %v675 = vld [vmem:[%s673] ss:$16 sm:%s674]
  %vm676 = vcmask 1045508
  %v677 = vsel %vm676, %v675, %v672
  %s678 = scalar_lea.vmem %s0, 7
  %s679 = smov 192
  %v680 = vld [vmem:[%s678] ss:$16 sm:%s679]
  %vm681 = vcmask 1047558
  %v682 = vsel %vm681, %v680, %v677
  %683 = vrot.lane.b32.xlu0 %v682, 56
  %v684 = vpop.permute.xlu0 %683
  %vm685 = vcmask 523712
  %686 = vst.msk [vmem:[%s1] sm:$0xff] %vm685, %v684
  %s687 = scalar_lea.vmem %s0, 519
  %s688 = smov 3
  %v689 = vld [vmem:[%s687] ss:$16 sm:%s688]
  %s690 = scalar_lea.vmem %s0, 519
  %s691 = smov 12
  %v692 = vld [vmem:[%s690] ss:$16 sm:%s691]
  %vm693 = vcmask 1043458
  %v694 = vsel %vm693, %v692, %v689
  %s695 = scalar_lea.vmem %s0, 519
  %s696 = smov 48
  %v697 = vld [vmem:[%s695] ss:$16 sm:%s696]
  %vm698 = vcmask 1045508
  %v699 = vsel %vm698, %v697, %v694
  %s700 = scalar_lea.vmem %s0, 519
  %s701 = smov 192
  %v702 = vld [vmem:[%s700] ss:$16 sm:%s701]
  %vm703 = vcmask 1047558
  %v704 = vsel %vm703, %v702, %v699
  %705 = vrot.lane.b32.xlu0 %v704, 56
  %v706 = vpop.permute.xlu0 %705
  %vm707 = vcmask 523712
  %s708 = scalar_lea.vmem %s1, 32
  %709 = vst.msk [vmem:[%s708] sm:$0xff] %vm707, %v706
  %s710 = scalar_lea.vmem %s0, 1031
  %s711 = smov 3
  %v712 = vld [vmem:[%s710] ss:$16 sm:%s711]
  %s713 = scalar_lea.vmem %s0, 1031
  %s714 = smov 12
  %v715 = vld [vmem:[%s713] ss:$16 sm:%s714]
  %vm716 = vcmask 1043458
  %v717 = vsel %vm716, %v715, %v712
  %s718 = scalar_lea.vmem %s0, 1031
  %s719 = smov 48
  %v720 = vld [vmem:[%s718] ss:$16 sm:%s719]
  %vm721 = vcmask 1045508
  %v722 = vsel %vm721, %v720, %v717
  %s723 = scalar_lea.vmem %s0, 1031
  %s724 = smov 192
  %v725 = vld [vmem:[%s723] ss:$16 sm:%s724]
  %vm726 = vcmask 1047558
  %v727 = vsel %vm726, %v725, %v722
  %728 = vrot.lane.b32.xlu0 %v727, 56
  %v729 = vpop.permute.xlu0 %728
  %vm730 = vcmask 523712
  %s731 = scalar_lea.vmem %s1, 64
  %732 = vst.msk [vmem:[%s731] sm:$0xff] %vm730, %v729
  %s733 = scalar_lea.vmem %s0, 135
  %s734 = smov 3
  %v735 = vld [vmem:[%s733] ss:$16 sm:%s734]
  %s736 = scalar_lea.vmem %s0, 135
  %s737 = smov 12
  %v738 = vld [vmem:[%s736] ss:$16 sm:%s737]
  %vm739 = vcmask 1043458
  %v740 = vsel %vm739, %v738, %v735
  %s741 = scalar_lea.vmem %s0, 135
  %s742 = smov 48
  %v743 = vld [vmem:[%s741] ss:$16 sm:%s742]
  %vm744 = vcmask 1045508
  %v745 = vsel %vm744, %v743, %v740
  %s746 = scalar_lea.vmem %s0, 135
  %s747 = smov 192
  %v748 = vld [vmem:[%s746] ss:$16 sm:%s747]
  %vm749 = vcmask 1047558
  %v750 = vsel %vm749, %v748, %v745
  %751 = vrot.lane.b32.xlu0 %v750, 56
  %v752 = vpop.permute.xlu0 %751
  %vm753 = vcmask 523712
  %s754 = scalar_lea.vmem %s1, 8
  %755 = vst.msk [vmem:[%s754] sm:$0xff] %vm753, %v752
  %s756 = scalar_lea.vmem %s0, 647
  %s757 = smov 3
  %v758 = vld [vmem:[%s756] ss:$16 sm:%s757]
  %s759 = scalar_lea.vmem %s0, 647
  %s760 = smov 12
  %v761 = vld [vmem:[%s759] ss:$16 sm:%s760]
  %vm762 = vcmask 1043458
  %v763 = vsel %vm762, %v761, %v758
  %s764 = scalar_lea.vmem %s0, 647
  %s765 = smov 48
  %v766 = vld [vmem:[%s764] ss:$16 sm:%s765]
  %vm767 = vcmask 1045508
  %v768 = vsel %vm767, %v766, %v763
  %s769 = scalar_lea.vmem %s0, 647
  %s770 = smov 192
  %v771 = vld [vmem:[%s769] ss:$16 sm:%s770]
  %vm772 = vcmask 1047558
  %v773 = vsel %vm772, %v771, %v768
  %774 = vrot.lane.b32.xlu0 %v773, 56
  %v775 = vpop.permute.xlu0 %774
  %vm776 = vcmask 523712
  %s777 = scalar_lea.vmem %s1, 40
  %778 = vst.msk [vmem:[%s777] sm:$0xff] %vm776, %v775
  %s779 = scalar_lea.vmem %s0, 1159
  %s780 = smov 3
  %v781 = vld [vmem:[%s779] ss:$16 sm:%s780]
  %s782 = scalar_lea.vmem %s0, 1159
  %s783 = smov 12
  %v784 = vld [vmem:[%s782] ss:$16 sm:%s783]
  %vm785 = vcmask 1043458
  %v786 = vsel %vm785, %v784, %v781
  %s787 = scalar_lea.vmem %s0, 1159
  %s788 = smov 48
  %v789 = vld [vmem:[%s787] ss:$16 sm:%s788]
  %vm790 = vcmask 1045508
  %v791 = vsel %vm790, %v789, %v786
  %s792 = scalar_lea.vmem %s0, 1159
  %s793 = smov 192
  %v794 = vld [vmem:[%s792] ss:$16 sm:%s793]
  %vm795 = vcmask 1047558
  %v796 = vsel %vm795, %v794, %v791
  %797 = vrot.lane.b32.xlu0 %v796, 56
  %v798 = vpop.permute.xlu0 %797
  %vm799 = vcmask 523712
  %s800 = scalar_lea.vmem %s1, 72
  %801 = vst.msk [vmem:[%s800] sm:$0xff] %vm799, %v798
  %s802 = scalar_lea.vmem %s0, 263
  %s803 = smov 3
  %v804 = vld [vmem:[%s802] ss:$16 sm:%s803]
  %s805 = scalar_lea.vmem %s0, 263
  %s806 = smov 12
  %v807 = vld [vmem:[%s805] ss:$16 sm:%s806]
  %vm808 = vcmask 1043458
  %v809 = vsel %vm808, %v807, %v804
  %s810 = scalar_lea.vmem %s0, 263
  %s811 = smov 48
  %v812 = vld [vmem:[%s810] ss:$16 sm:%s811]
  %vm813 = vcmask 1045508
  %v814 = vsel %vm813, %v812, %v809
  %s815 = scalar_lea.vmem %s0, 263
  %s816 = smov 192
  %v817 = vld [vmem:[%s815] ss:$16 sm:%s816]
  %vm818 = vcmask 1047558
  %v819 = vsel %vm818, %v817, %v814
  %820 = vrot.lane.b32.xlu0 %v819, 56
  %v821 = vpop.permute.xlu0 %820
  %vm822 = vcmask 523712
  %s823 = scalar_lea.vmem %s1, 16
  %824 = vst.msk [vmem:[%s823] sm:$0xff] %vm822, %v821
  %s825 = scalar_lea.vmem %s0, 775
  %s826 = smov 3
  %v827 = vld [vmem:[%s825] ss:$16 sm:%s826]
  %s828 = scalar_lea.vmem %s0, 775
  %s829 = smov 12
  %v830 = vld [vmem:[%s828] ss:$16 sm:%s829]
  %vm831 = vcmask 1043458
  %v832 = vsel %vm831, %v830, %v827
  %s833 = scalar_lea.vmem %s0, 775
  %s834 = smov 48
  %v835 = vld [vmem:[%s833] ss:$16 sm:%s834]
  %vm836 = vcmask 1045508
  %v837 = vsel %vm836, %v835, %v832
  %s838 = scalar_lea.vmem %s0, 775
  %s839 = smov 192
  %v840 = vld [vmem:[%s838] ss:$16 sm:%s839]
  %vm841 = vcmask 1047558
  %v842 = vsel %vm841, %v840, %v837
  %843 = vrot.lane.b32.xlu0 %v842, 56
  %v844 = vpop.permute.xlu0 %843
  %vm845 = vcmask 523712
  %s846 = scalar_lea.vmem %s1, 48
  %847 = vst.msk [vmem:[%s846] sm:$0xff] %vm845, %v844
  %s848 = scalar_lea.vmem %s0, 391
  %s849 = smov 3
  %v850 = vld [vmem:[%s848] ss:$16 sm:%s849]
  %s851 = scalar_lea.vmem %s0, 391
  %s852 = smov 12
  %v853 = vld [vmem:[%s851] ss:$16 sm:%s852]
  %vm854 = vcmask 1043458
  %v855 = vsel %vm854, %v853, %v850
  %s856 = scalar_lea.vmem %s0, 391
  %s857 = smov 48
  %v858 = vld [vmem:[%s856] ss:$16 sm:%s857]
  %vm859 = vcmask 1045508
  %v860 = vsel %vm859, %v858, %v855
  %s861 = scalar_lea.vmem %s0, 391
  %s862 = smov 192
  %v863 = vld [vmem:[%s861] ss:$16 sm:%s862]
  %vm864 = vcmask 1047558
  %v865 = vsel %vm864, %v863, %v860
  %866 = vrot.lane.b32.xlu0 %v865, 56
  %v867 = vpop.permute.xlu0 %866
  %vm868 = vcmask 523712
  %s869 = scalar_lea.vmem %s1, 24
  %870 = vst.msk [vmem:[%s869] sm:$0xff] %vm868, %v867
  %s871 = scalar_lea.vmem %s0, 903
  %s872 = smov 3
  %v873 = vld [vmem:[%s871] ss:$16 sm:%s872]
  %s874 = scalar_lea.vmem %s0, 903
  %s875 = smov 12
  %v876 = vld [vmem:[%s874] ss:$16 sm:%s875]
  %vm877 = vcmask 1043458
  %v878 = vsel %vm877, %v876, %v873
  %s879 = scalar_lea.vmem %s0, 903
  %s880 = smov 48
  %v881 = vld [vmem:[%s879] ss:$16 sm:%s880]
  %vm882 = vcmask 1045508
  %v883 = vsel %vm882, %v881, %v878
  %s884 = scalar_lea.vmem %s0, 903
  %s885 = smov 192
  %v886 = vld [vmem:[%s884] ss:$16 sm:%s885]
  %vm887 = vcmask 1047558
  %v888 = vsel %vm887, %v886, %v883
  %889 = vrot.lane.b32.xlu0 %v888, 56
  %v890 = vpop.permute.xlu0 %889
  %vm891 = vcmask 523712
  %s892 = scalar_lea.vmem %s1, 56
  %893 = vst.msk [vmem:[%s892] sm:$0xff] %vm891, %v890
  %s894 = scalar_lea.vmem %s0, 6
  %s895 = smov 3
  %v896 = vld [vmem:[%s894] ss:$16 sm:%s895]
  %s897 = scalar_lea.vmem %s0, 6
  %s898 = smov 12
  %v899 = vld [vmem:[%s897] ss:$16 sm:%s898]
  %vm900 = vcmask 1043458
  %v901 = vsel %vm900, %v899, %v896
  %s902 = scalar_lea.vmem %s0, 6
  %s903 = smov 48
  %v904 = vld [vmem:[%s902] ss:$16 sm:%s903]
  %vm905 = vcmask 1045508
  %v906 = vsel %vm905, %v904, %v901
  %s907 = scalar_lea.vmem %s0, 6
  %s908 = smov 192
  %v909 = vld [vmem:[%s907] ss:$16 sm:%s908]
  %vm910 = vcmask 1047558
  %v911 = vsel %vm910, %v909, %v906
  %912 = vrot.lane.b32.xlu0 %v911, 48
  %v913 = vpop.permute.xlu0 %912
  %vm914 = vcmask 458112
  %915 = vst.msk [vmem:[%s1] sm:$0xff] %vm914, %v913
  %s916 = scalar_lea.vmem %s0, 518
  %s917 = smov 3
  %v918 = vld [vmem:[%s916] ss:$16 sm:%s917]
  %s919 = scalar_lea.vmem %s0, 518
  %s920 = smov 12
  %v921 = vld [vmem:[%s919] ss:$16 sm:%s920]
  %vm922 = vcmask 1043458
  %v923 = vsel %vm922, %v921, %v918
  %s924 = scalar_lea.vmem %s0, 518
  %s925 = smov 48
  %v926 = vld [vmem:[%s924] ss:$16 sm:%s925]
  %vm927 = vcmask 1045508
  %v928 = vsel %vm927, %v926, %v923
  %s929 = scalar_lea.vmem %s0, 518
  %s930 = smov 192
  %v931 = vld [vmem:[%s929] ss:$16 sm:%s930]
  %vm932 = vcmask 1047558
  %v933 = vsel %vm932, %v931, %v928
  %934 = vrot.lane.b32.xlu0 %v933, 48
  %v935 = vpop.permute.xlu0 %934
  %vm936 = vcmask 458112
  %s937 = scalar_lea.vmem %s1, 32
  %938 = vst.msk [vmem:[%s937] sm:$0xff] %vm936, %v935
  %s939 = scalar_lea.vmem %s0, 1030
  %s940 = smov 3
  %v941 = vld [vmem:[%s939] ss:$16 sm:%s940]
  %s942 = scalar_lea.vmem %s0, 1030
  %s943 = smov 12
  %v944 = vld [vmem:[%s942] ss:$16 sm:%s943]
  %vm945 = vcmask 1043458
  %v946 = vsel %vm945, %v944, %v941
  %s947 = scalar_lea.vmem %s0, 1030
  %s948 = smov 48
  %v949 = vld [vmem:[%s947] ss:$16 sm:%s948]
  %vm950 = vcmask 1045508
  %v951 = vsel %vm950, %v949, %v946
  %s952 = scalar_lea.vmem %s0, 1030
  %s953 = smov 192
  %v954 = vld [vmem:[%s952] ss:$16 sm:%s953]
  %vm955 = vcmask 1047558
  %v956 = vsel %vm955, %v954, %v951
  %957 = vrot.lane.b32.xlu0 %v956, 48
  %v958 = vpop.permute.xlu0 %957
  %vm959 = vcmask 458112
  %s960 = scalar_lea.vmem %s1, 64
  %961 = vst.msk [vmem:[%s960] sm:$0xff] %vm959, %v958
  %s962 = scalar_lea.vmem %s0, 134
  %s963 = smov 3
  %v964 = vld [vmem:[%s962] ss:$16 sm:%s963]
  %s965 = scalar_lea.vmem %s0, 134
  %s966 = smov 12
  %v967 = vld [vmem:[%s965] ss:$16 sm:%s966]
  %vm968 = vcmask 1043458
  %v969 = vsel %vm968, %v967, %v964
  %s970 = scalar_lea.vmem %s0, 134
  %s971 = smov 48
  %v972 = vld [vmem:[%s970] ss:$16 sm:%s971]
  %vm973 = vcmask 1045508
  %v974 = vsel %vm973, %v972, %v969
  %s975 = scalar_lea.vmem %s0, 134
  %s976 = smov 192
  %v977 = vld [vmem:[%s975] ss:$16 sm:%s976]
  %vm978 = vcmask 1047558
  %v979 = vsel %vm978, %v977, %v974
  %980 = vrot.lane.b32.xlu0 %v979, 48
  %v981 = vpop.permute.xlu0 %980
  %vm982 = vcmask 458112
  %s983 = scalar_lea.vmem %s1, 8
  %984 = vst.msk [vmem:[%s983] sm:$0xff] %vm982, %v981
  %s985 = scalar_lea.vmem %s0, 646
  %s986 = smov 3
  %v987 = vld [vmem:[%s985] ss:$16 sm:%s986]
  %s988 = scalar_lea.vmem %s0, 646
  %s989 = smov 12
  %v990 = vld [vmem:[%s988] ss:$16 sm:%s989]
  %vm991 = vcmask 1043458
  %v992 = vsel %vm991, %v990, %v987
  %s993 = scalar_lea.vmem %s0, 646
  %s994 = smov 48
  %v995 = vld [vmem:[%s993] ss:$16 sm:%s994]
  %vm996 = vcmask 1045508
  %v997 = vsel %vm996, %v995, %v992
  %s998 = scalar_lea.vmem %s0, 646
  %s999 = smov 192
  %v1000 = vld [vmem:[%s998] ss:$16 sm:%s999]
  %vm1001 = vcmask 1047558
  %v1002 = vsel %vm1001, %v1000, %v997
  %1003 = vrot.lane.b32.xlu0 %v1002, 48
  %v1004 = vpop.permute.xlu0 %1003
  %vm1005 = vcmask 458112
  %s1006 = scalar_lea.vmem %s1, 40
  %1007 = vst.msk [vmem:[%s1006] sm:$0xff] %vm1005, %v1004
  %s1008 = scalar_lea.vmem %s0, 1158
  %s1009 = smov 3
  %v1010 = vld [vmem:[%s1008] ss:$16 sm:%s1009]
  %s1011 = scalar_lea.vmem %s0, 1158
  %s1012 = smov 12
  %v1013 = vld [vmem:[%s1011] ss:$16 sm:%s1012]
  %vm1014 = vcmask 1043458
  %v1015 = vsel %vm1014, %v1013, %v1010
  %s1016 = scalar_lea.vmem %s0, 1158
  %s1017 = smov 48
  %v1018 = vld [vmem:[%s1016] ss:$16 sm:%s1017]
  %vm1019 = vcmask 1045508
  %v1020 = vsel %vm1019, %v1018, %v1015
  %s1021 = scalar_lea.vmem %s0, 1158
  %s1022 = smov 192
  %v1023 = vld [vmem:[%s1021] ss:$16 sm:%s1022]
  %vm1024 = vcmask 1047558
  %v1025 = vsel %vm1024, %v1023, %v1020
  %1026 = vrot.lane.b32.xlu0 %v1025, 48
  %v1027 = vpop.permute.xlu0 %1026
  %vm1028 = vcmask 458112
  %s1029 = scalar_lea.vmem %s1, 72
  %1030 = vst.msk [vmem:[%s1029] sm:$0xff] %vm1028, %v1027
  %s1031 = scalar_lea.vmem %s0, 262
  %s1032 = smov 3
  %v1033 = vld [vmem:[%s1031] ss:$16 sm:%s1032]
  %s1034 = scalar_lea.vmem %s0, 262
  %s1035 = smov 12
  %v1036 = vld [vmem:[%s1034] ss:$16 sm:%s1035]
  %vm1037 = vcmask 1043458
  %v1038 = vsel %vm1037, %v1036, %v1033
  %s1039 = scalar_lea.vmem %s0, 262
  %s1040 = smov 48
  %v1041 = vld [vmem:[%s1039] ss:$16 sm:%s1040]
  %vm1042 = vcmask 1045508
  %v1043 = vsel %vm1042, %v1041, %v1038
  %s1044 = scalar_lea.vmem %s0, 262
  %s1045 = smov 192
  %v1046 = vld [vmem:[%s1044] ss:$16 sm:%s1045]
  %vm1047 = vcmask 1047558
  %v1048 = vsel %vm1047, %v1046, %v1043
  %1049 = vrot.lane.b32.xlu0 %v1048, 48
  %v1050 = vpop.permute.xlu0 %1049
  %vm1051 = vcmask 458112
  %s1052 = scalar_lea.vmem %s1, 16
  %1053 = vst.msk [vmem:[%s1052] sm:$0xff] %vm1051, %v1050
  %s1054 = scalar_lea.vmem %s0, 774
  %s1055 = smov 3
  %v1056 = vld [vmem:[%s1054] ss:$16 sm:%s1055]
  %s1057 = scalar_lea.vmem %s0, 774
  %s1058 = smov 12
  %v1059 = vld [vmem:[%s1057] ss:$16 sm:%s1058]
  %vm1060 = vcmask 1043458
  %v1061 = vsel %vm1060, %v1059, %v1056
  %s1062 = scalar_lea.vmem %s0, 774
  %s1063 = smov 48
  %v1064 = vld [vmem:[%s1062] ss:$16 sm:%s1063]
  %vm1065 = vcmask 1045508
  %v1066 = vsel %vm1065, %v1064, %v1061
  %s1067 = scalar_lea.vmem %s0, 774
  %s1068 = smov 192
  %v1069 = vld [vmem:[%s1067] ss:$16 sm:%s1068]
  %vm1070 = vcmask 1047558
  %v1071 = vsel %vm1070, %v1069, %v1066
  %1072 = vrot.lane.b32.xlu0 %v1071, 48
  %v1073 = vpop.permute.xlu0 %1072
  %vm1074 = vcmask 458112
  %s1075 = scalar_lea.vmem %s1, 48
  %1076 = vst.msk [vmem:[%s1075] sm:$0xff] %vm1074, %v1073
  %s1077 = scalar_lea.vmem %s0, 390
  %s1078 = smov 3
  %v1079 = vld [vmem:[%s1077] ss:$16 sm:%s1078]
  %s1080 = scalar_lea.vmem %s0, 390
  %s1081 = smov 12
  %v1082 = vld [vmem:[%s1080] ss:$16 sm:%s1081]
  %vm1083 = vcmask 1043458
  %v1084 = vsel %vm1083, %v1082, %v1079
  %s1085 = scalar_lea.vmem %s0, 390
  %s1086 = smov 48
  %v1087 = vld [vmem:[%s1085] ss:$16 sm:%s1086]
  %vm1088 = vcmask 1045508
  %v1089 = vsel %vm1088, %v1087, %v1084
  %s1090 = scalar_lea.vmem %s0, 390
  %s1091 = smov 192
  %v1092 = vld [vmem:[%s1090] ss:$16 sm:%s1091]
  %vm1093 = vcmask 1047558
  %v1094 = vsel %vm1093, %v1092, %v1089
  %1095 = vrot.lane.b32.xlu0 %v1094, 48
  %v1096 = vpop.permute.xlu0 %1095
  %vm1097 = vcmask 458112
  %s1098 = scalar_lea.vmem %s1, 24
  %1099 = vst.msk [vmem:[%s1098] sm:$0xff] %vm1097, %v1096
  %s1100 = scalar_lea.vmem %s0, 902
  %s1101 = smov 3
  %v1102 = vld [vmem:[%s1100] ss:$16 sm:%s1101]
  %s1103 = scalar_lea.vmem %s0, 902
  %s1104 = smov 12
  %v1105 = vld [vmem:[%s1103] ss:$16 sm:%s1104]
  %vm1106 = vcmask 1043458
  %v1107 = vsel %vm1106, %v1105, %v1102
  %s1108 = scalar_lea.vmem %s0, 902
  %s1109 = smov 48
  %v1110 = vld [vmem:[%s1108] ss:$16 sm:%s1109]
  %vm1111 = vcmask 1045508
  %v1112 = vsel %vm1111, %v1110, %v1107
  %s1113 = scalar_lea.vmem %s0, 902
  %s1114 = smov 192
  %v1115 = vld [vmem:[%s1113] ss:$16 sm:%s1114]
  %vm1116 = vcmask 1047558
  %v1117 = vsel %vm1116, %v1115, %v1112
  %1118 = vrot.lane.b32.xlu0 %v1117, 48
  %v1119 = vpop.permute.xlu0 %1118
  %vm1120 = vcmask 458112
  %s1121 = scalar_lea.vmem %s1, 56
  %1122 = vst.msk [vmem:[%s1121] sm:$0xff] %vm1120, %v1119
  %s1123 = scalar_lea.vmem %s0, 5
  %s1124 = smov 3
  %v1125 = vld [vmem:[%s1123] ss:$16 sm:%s1124]
  %s1126 = scalar_lea.vmem %s0, 5
  %s1127 = smov 12
  %v1128 = vld [vmem:[%s1126] ss:$16 sm:%s1127]
  %vm1129 = vcmask 1043458
  %v1130 = vsel %vm1129, %v1128, %v1125
  %s1131 = scalar_lea.vmem %s0, 5
  %s1132 = smov 48
  %v1133 = vld [vmem:[%s1131] ss:$16 sm:%s1132]
  %vm1134 = vcmask 1045508
  %v1135 = vsel %vm1134, %v1133, %v1130
  %s1136 = scalar_lea.vmem %s0, 5
  %s1137 = smov 192
  %v1138 = vld [vmem:[%s1136] ss:$16 sm:%s1137]
  %vm1139 = vcmask 1047558
  %v1140 = vsel %vm1139, %v1138, %v1135
  %1141 = vrot.lane.b32.xlu0 %v1140, 40
  %v1142 = vpop.permute.xlu0 %1141
  %vm1143 = vcmask 392512
  %1144 = vst.msk [vmem:[%s1] sm:$0xff] %vm1143, %v1142
  %s1145 = scalar_lea.vmem %s0, 517
  %s1146 = smov 3
  %v1147 = vld [vmem:[%s1145] ss:$16 sm:%s1146]
  %s1148 = scalar_lea.vmem %s0, 517
  %s1149 = smov 12
  %v1150 = vld [vmem:[%s1148] ss:$16 sm:%s1149]
  %vm1151 = vcmask 1043458
  %v1152 = vsel %vm1151, %v1150, %v1147
  %s1153 = scalar_lea.vmem %s0, 517
  %s1154 = smov 48
  %v1155 = vld [vmem:[%s1153] ss:$16 sm:%s1154]
  %vm1156 = vcmask 1045508
  %v1157 = vsel %vm1156, %v1155, %v1152
  %s1158 = scalar_lea.vmem %s0, 517
  %s1159 = smov 192
  %v1160 = vld [vmem:[%s1158] ss:$16 sm:%s1159]
  %vm1161 = vcmask 1047558
  %v1162 = vsel %vm1161, %v1160, %v1157
  %1163 = vrot.lane.b32.xlu0 %v1162, 40
  %v1164 = vpop.permute.xlu0 %1163
  %vm1165 = vcmask 392512
  %s1166 = scalar_lea.vmem %s1, 32
  %1167 = vst.msk [vmem:[%s1166] sm:$0xff] %vm1165, %v1164
  %s1168 = scalar_lea.vmem %s0, 1029
  %s1169 = smov 3
  %v1170 = vld [vmem:[%s1168] ss:$16 sm:%s1169]
  %s1171 = scalar_lea.vmem %s0, 1029
  %s1172 = smov 12
  %v1173 = vld [vmem:[%s1171] ss:$16 sm:%s1172]
  %vm1174 = vcmask 1043458
  %v1175 = vsel %vm1174, %v1173, %v1170
  %s1176 = scalar_lea.vmem %s0, 1029
  %s1177 = smov 48
  %v1178 = vld [vmem:[%s1176] ss:$16 sm:%s1177]
  %vm1179 = vcmask 1045508
  %v1180 = vsel %vm1179, %v1178, %v1175
  %s1181 = scalar_lea.vmem %s0, 1029
  %s1182 = smov 192
  %v1183 = vld [vmem:[%s1181] ss:$16 sm:%s1182]
  %vm1184 = vcmask 1047558
  %v1185 = vsel %vm1184, %v1183, %v1180
  %1186 = vrot.lane.b32.xlu0 %v1185, 40
  %v1187 = vpop.permute.xlu0 %1186
  %vm1188 = vcmask 392512
  %s1189 = scalar_lea.vmem %s1, 64
  %1190 = vst.msk [vmem:[%s1189] sm:$0xff] %vm1188, %v1187
  %s1191 = scalar_lea.vmem %s0, 133
  %s1192 = smov 3
  %v1193 = vld [vmem:[%s1191] ss:$16 sm:%s1192]
  %s1194 = scalar_lea.vmem %s0, 133
  %s1195 = smov 12
  %v1196 = vld [vmem:[%s1194] ss:$16 sm:%s1195]
  %vm1197 = vcmask 1043458
  %v1198 = vsel %vm1197, %v1196, %v1193
  %s1199 = scalar_lea.vmem %s0, 133
  %s1200 = smov 48
  %v1201 = vld [vmem:[%s1199] ss:$16 sm:%s1200]
  %vm1202 = vcmask 1045508
  %v1203 = vsel %vm1202, %v1201, %v1198
  %s1204 = scalar_lea.vmem %s0, 133
  %s1205 = smov 192
  %v1206 = vld [vmem:[%s1204] ss:$16 sm:%s1205]
  %vm1207 = vcmask 1047558
  %v1208 = vsel %vm1207, %v1206, %v1203
  %1209 = vrot.lane.b32.xlu0 %v1208, 40
  %v1210 = vpop.permute.xlu0 %1209
  %vm1211 = vcmask 392512
  %s1212 = scalar_lea.vmem %s1, 8
  %1213 = vst.msk [vmem:[%s1212] sm:$0xff] %vm1211, %v1210
  %s1214 = scalar_lea.vmem %s0, 645
  %s1215 = smov 3
  %v1216 = vld [vmem:[%s1214] ss:$16 sm:%s1215]
  %s1217 = scalar_lea.vmem %s0, 645
  %s1218 = smov 12
  %v1219 = vld [vmem:[%s1217] ss:$16 sm:%s1218]
  %vm1220 = vcmask 1043458
  %v1221 = vsel %vm1220, %v1219, %v1216
  %s1222 = scalar_lea.vmem %s0, 645
  %s1223 = smov 48
  %v1224 = vld [vmem:[%s1222] ss:$16 sm:%s1223]
  %vm1225 = vcmask 1045508
  %v1226 = vsel %vm1225, %v1224, %v1221
  %s1227 = scalar_lea.vmem %s0, 645
  %s1228 = smov 192
  %v1229 = vld [vmem:[%s1227] ss:$16 sm:%s1228]
  %vm1230 = vcmask 1047558
  %v1231 = vsel %vm1230, %v1229, %v1226
  %1232 = vrot.lane.b32.xlu0 %v1231, 40
  %v1233 = vpop.permute.xlu0 %1232
  %vm1234 = vcmask 392512
  %s1235 = scalar_lea.vmem %s1, 40
  %1236 = vst.msk [vmem:[%s1235] sm:$0xff] %vm1234, %v1233
  %s1237 = scalar_lea.vmem %s0, 1157
  %s1238 = smov 3
  %v1239 = vld [vmem:[%s1237] ss:$16 sm:%s1238]
  %s1240 = scalar_lea.vmem %s0, 1157
  %s1241 = smov 12
  %v1242 = vld [vmem:[%s1240] ss:$16 sm:%s1241]
  %vm1243 = vcmask 1043458
  %v1244 = vsel %vm1243, %v1242, %v1239
  %s1245 = scalar_lea.vmem %s0, 1157
  %s1246 = smov 48
  %v1247 = vld [vmem:[%s1245] ss:$16 sm:%s1246]
  %vm1248 = vcmask 1045508
  %v1249 = vsel %vm1248, %v1247, %v1244
  %s1250 = scalar_lea.vmem %s0, 1157
  %s1251 = smov 192
  %v1252 = vld [vmem:[%s1250] ss:$16 sm:%s1251]
  %vm1253 = vcmask 1047558
  %v1254 = vsel %vm1253, %v1252, %v1249
  %1255 = vrot.lane.b32.xlu0 %v1254, 40
  %v1256 = vpop.permute.xlu0 %1255
  %vm1257 = vcmask 392512
  %s1258 = scalar_lea.vmem %s1, 72
  %1259 = vst.msk [vmem:[%s1258] sm:$0xff] %vm1257, %v1256
  %s1260 = scalar_lea.vmem %s0, 261
  %s1261 = smov 3
  %v1262 = vld [vmem:[%s1260] ss:$16 sm:%s1261]
  %s1263 = scalar_lea.vmem %s0, 261
  %s1264 = smov 12
  %v1265 = vld [vmem:[%s1263] ss:$16 sm:%s1264]
  %vm1266 = vcmask 1043458
  %v1267 = vsel %vm1266, %v1265, %v1262
  %s1268 = scalar_lea.vmem %s0, 261
  %s1269 = smov 48
  %v1270 = vld [vmem:[%s1268] ss:$16 sm:%s1269]
  %vm1271 = vcmask 1045508
  %v1272 = vsel %vm1271, %v1270, %v1267
  %s1273 = scalar_lea.vmem %s0, 261
  %s1274 = smov 192
  %v1275 = vld [vmem:[%s1273] ss:$16 sm:%s1274]
  %vm1276 = vcmask 1047558
  %v1277 = vsel %vm1276, %v1275, %v1272
  %1278 = vrot.lane.b32.xlu0 %v1277, 40
  %v1279 = vpop.permute.xlu0 %1278
  %vm1280 = vcmask 392512
  %s1281 = scalar_lea.vmem %s1, 16
  %1282 = vst.msk [vmem:[%s1281] sm:$0xff] %vm1280, %v1279
  %s1283 = scalar_lea.vmem %s0, 773
  %s1284 = smov 3
  %v1285 = vld [vmem:[%s1283] ss:$16 sm:%s1284]
  %s1286 = scalar_lea.vmem %s0, 773
  %s1287 = smov 12
  %v1288 = vld [vmem:[%s1286] ss:$16 sm:%s1287]
  %vm1289 = vcmask 1043458
  %v1290 = vsel %vm1289, %v1288, %v1285
  %s1291 = scalar_lea.vmem %s0, 773
  %s1292 = smov 48
  %v1293 = vld [vmem:[%s1291] ss:$16 sm:%s1292]
  %vm1294 = vcmask 1045508
  %v1295 = vsel %vm1294, %v1293, %v1290
  %s1296 = scalar_lea.vmem %s0, 773
  %s1297 = smov 192
  %v1298 = vld [vmem:[%s1296] ss:$16 sm:%s1297]
  %vm1299 = vcmask 1047558
  %v1300 = vsel %vm1299, %v1298, %v1295
  %1301 = vrot.lane.b32.xlu0 %v1300, 40
  %v1302 = vpop.permute.xlu0 %1301
  %vm1303 = vcmask 392512
  %s1304 = scalar_lea.vmem %s1, 48
  %1305 = vst.msk [vmem:[%s1304] sm:$0xff] %vm1303, %v1302
  %s1306 = scalar_lea.vmem %s0, 389
  %s1307 = smov 3
  %v1308 = vld [vmem:[%s1306] ss:$16 sm:%s1307]
  %s1309 = scalar_lea.vmem %s0, 389
  %s1310 = smov 12
  %v1311 = vld [vmem:[%s1309] ss:$16 sm:%s1310]
  %vm1312 = vcmask 1043458
  %v1313 = vsel %vm1312, %v1311, %v1308
  %s1314 = scalar_lea.vmem %s0, 389
  %s1315 = smov 48
  %v1316 = vld [vmem:[%s1314] ss:$16 sm:%s1315]
  %vm1317 = vcmask 1045508
  %v1318 = vsel %vm1317, %v1316, %v1313
  %s1319 = scalar_lea.vmem %s0, 389
  %s1320 = smov 192
  %v1321 = vld [vmem:[%s1319] ss:$16 sm:%s1320]
  %vm1322 = vcmask 1047558
  %v1323 = vsel %vm1322, %v1321, %v1318
  %1324 = vrot.lane.b32.xlu0 %v1323, 40
  %v1325 = vpop.permute.xlu0 %1324
  %vm1326 = vcmask 392512
  %s1327 = scalar_lea.vmem %s1, 24
  %1328 = vst.msk [vmem:[%s1327] sm:$0xff] %vm1326, %v1325
  %s1329 = scalar_lea.vmem %s0, 901
  %s1330 = smov 3
  %v1331 = vld [vmem:[%s1329] ss:$16 sm:%s1330]
  %s1332 = scalar_lea.vmem %s0, 901
  %s1333 = smov 12
  %v1334 = vld [vmem:[%s1332] ss:$16 sm:%s1333]
  %vm1335 = vcmask 1043458
  %v1336 = vsel %vm1335, %v1334, %v1331
  %s1337 = scalar_lea.vmem %s0, 901
  %s1338 = smov 48
  %v1339 = vld [vmem:[%s1337] ss:$16 sm:%s1338]
  %vm1340 = vcmask 1045508
  %v1341 = vsel %vm1340, %v1339, %v1336
  %s1342 = scalar_lea.vmem %s0, 901
  %s1343 = smov 192
  %v1344 = vld [vmem:[%s1342] ss:$16 sm:%s1343]
  %vm1345 = vcmask 1047558
  %v1346 = vsel %vm1345, %v1344, %v1341
  %1347 = vrot.lane.b32.xlu0 %v1346, 40
  %v1348 = vpop.permute.xlu0 %1347
  %vm1349 = vcmask 392512
  %s1350 = scalar_lea.vmem %s1, 56
  %1351 = vst.msk [vmem:[%s1350] sm:$0xff] %vm1349, %v1348
  %s1352 = scalar_lea.vmem %s0, 4
  %s1353 = smov 3
  %v1354 = vld [vmem:[%s1352] ss:$16 sm:%s1353]
  %s1355 = scalar_lea.vmem %s0, 4
  %s1356 = smov 12
  %v1357 = vld [vmem:[%s1355] ss:$16 sm:%s1356]
  %vm1358 = vcmask 1043458
  %v1359 = vsel %vm1358, %v1357, %v1354
  %s1360 = scalar_lea.vmem %s0, 4
  %s1361 = smov 48
  %v1362 = vld [vmem:[%s1360] ss:$16 sm:%s1361]
  %vm1363 = vcmask 1045508
  %v1364 = vsel %vm1363, %v1362, %v1359
  %s1365 = scalar_lea.vmem %s0, 4
  %s1366 = smov 192
  %v1367 = vld [vmem:[%s1365] ss:$16 sm:%s1366]
  %vm1368 = vcmask 1047558
  %v1369 = vsel %vm1368, %v1367, %v1364
  %1370 = vrot.lane.b32.xlu0 %v1369, 32
  %v1371 = vpop.permute.xlu0 %1370
  %vm1372 = vcmask 326912
  %1373 = vst.msk [vmem:[%s1] sm:$0xff] %vm1372, %v1371
  %s1374 = scalar_lea.vmem %s0, 516
  %s1375 = smov 3
  %v1376 = vld [vmem:[%s1374] ss:$16 sm:%s1375]
  %s1377 = scalar_lea.vmem %s0, 516
  %s1378 = smov 12
  %v1379 = vld [vmem:[%s1377] ss:$16 sm:%s1378]
  %vm1380 = vcmask 1043458
  %v1381 = vsel %vm1380, %v1379, %v1376
  %s1382 = scalar_lea.vmem %s0, 516
  %s1383 = smov 48
  %v1384 = vld [vmem:[%s1382] ss:$16 sm:%s1383]
  %vm1385 = vcmask 1045508
  %v1386 = vsel %vm1385, %v1384, %v1381
  %s1387 = scalar_lea.vmem %s0, 516
  %s1388 = smov 192
  %v1389 = vld [vmem:[%s1387] ss:$16 sm:%s1388]
  %vm1390 = vcmask 1047558
  %v1391 = vsel %vm1390, %v1389, %v1386
  %1392 = vrot.lane.b32.xlu0 %v1391, 32
  %v1393 = vpop.permute.xlu0 %1392
  %vm1394 = vcmask 326912
  %s1395 = scalar_lea.vmem %s1, 32
  %1396 = vst.msk [vmem:[%s1395] sm:$0xff] %vm1394, %v1393
  %s1397 = scalar_lea.vmem %s0, 1028
  %s1398 = smov 3
  %v1399 = vld [vmem:[%s1397] ss:$16 sm:%s1398]
  %s1400 = scalar_lea.vmem %s0, 1028
  %s1401 = smov 12
  %v1402 = vld [vmem:[%s1400] ss:$16 sm:%s1401]
  %vm1403 = vcmask 1043458
  %v1404 = vsel %vm1403, %v1402, %v1399
  %s1405 = scalar_lea.vmem %s0, 1028
  %s1406 = smov 48
  %v1407 = vld [vmem:[%s1405] ss:$16 sm:%s1406]
  %vm1408 = vcmask 1045508
  %v1409 = vsel %vm1408, %v1407, %v1404
  %s1410 = scalar_lea.vmem %s0, 1028
  %s1411 = smov 192
  %v1412 = vld [vmem:[%s1410] ss:$16 sm:%s1411]
  %vm1413 = vcmask 1047558
  %v1414 = vsel %vm1413, %v1412, %v1409
  %1415 = vrot.lane.b32.xlu0 %v1414, 32
  %v1416 = vpop.permute.xlu0 %1415
  %vm1417 = vcmask 326912
  %s1418 = scalar_lea.vmem %s1, 64
  %1419 = vst.msk [vmem:[%s1418] sm:$0xff] %vm1417, %v1416
  %s1420 = scalar_lea.vmem %s0, 132
  %s1421 = smov 3
  %v1422 = vld [vmem:[%s1420] ss:$16 sm:%s1421]
  %s1423 = scalar_lea.vmem %s0, 132
  %s1424 = smov 12
  %v1425 = vld [vmem:[%s1423] ss:$16 sm:%s1424]
  %vm1426 = vcmask 1043458
  %v1427 = vsel %vm1426, %v1425, %v1422
  %s1428 = scalar_lea.vmem %s0, 132
  %s1429 = smov 48
  %v1430 = vld [vmem:[%s1428] ss:$16 sm:%s1429]
  %vm1431 = vcmask 1045508
  %v1432 = vsel %vm1431, %v1430, %v1427
  %s1433 = scalar_lea.vmem %s0, 132
  %s1434 = smov 192
  %v1435 = vld [vmem:[%s1433] ss:$16 sm:%s1434]
  %vm1436 = vcmask 1047558
  %v1437 = vsel %vm1436, %v1435, %v1432
  %1438 = vrot.lane.b32.xlu0 %v1437, 32
  %v1439 = vpop.permute.xlu0 %1438
  %vm1440 = vcmask 326912
  %s1441 = scalar_lea.vmem %s1, 8
  %1442 = vst.msk [vmem:[%s1441] sm:$0xff] %vm1440, %v1439
  %s1443 = scalar_lea.vmem %s0, 644
  %s1444 = smov 3
  %v1445 = vld [vmem:[%s1443] ss:$16 sm:%s1444]
  %s1446 = scalar_lea.vmem %s0, 644
  %s1447 = smov 12
  %v1448 = vld [vmem:[%s1446] ss:$16 sm:%s1447]
  %vm1449 = vcmask 1043458
  %v1450 = vsel %vm1449, %v1448, %v1445
  %s1451 = scalar_lea.vmem %s0, 644
  %s1452 = smov 48
  %v1453 = vld [vmem:[%s1451] ss:$16 sm:%s1452]
  %vm1454 = vcmask 1045508
  %v1455 = vsel %vm1454, %v1453, %v1450
  %s1456 = scalar_lea.vmem %s0, 644
  %s1457 = smov 192
  %v1458 = vld [vmem:[%s1456] ss:$16 sm:%s1457]
  %vm1459 = vcmask 1047558
  %v1460 = vsel %vm1459, %v1458, %v1455
  %1461 = vrot.lane.b32.xlu0 %v1460, 32
  %v1462 = vpop.permute.xlu0 %1461
  %vm1463 = vcmask 326912
  %s1464 = scalar_lea.vmem %s1, 40
  %1465 = vst.msk [vmem:[%s1464] sm:$0xff] %vm1463, %v1462
  %s1466 = scalar_lea.vmem %s0, 1156
  %s1467 = smov 3
  %v1468 = vld [vmem:[%s1466] ss:$16 sm:%s1467]
  %s1469 = scalar_lea.vmem %s0, 1156
  %s1470 = smov 12
  %v1471 = vld [vmem:[%s1469] ss:$16 sm:%s1470]
  %vm1472 = vcmask 1043458
  %v1473 = vsel %vm1472, %v1471, %v1468
  %s1474 = scalar_lea.vmem %s0, 1156
  %s1475 = smov 48
  %v1476 = vld [vmem:[%s1474] ss:$16 sm:%s1475]
  %vm1477 = vcmask 1045508
  %v1478 = vsel %vm1477, %v1476, %v1473
  %s1479 = scalar_lea.vmem %s0, 1156
  %s1480 = smov 192
  %v1481 = vld [vmem:[%s1479] ss:$16 sm:%s1480]
  %vm1482 = vcmask 1047558
  %v1483 = vsel %vm1482, %v1481, %v1478
  %1484 = vrot.lane.b32.xlu0 %v1483, 32
  %v1485 = vpop.permute.xlu0 %1484
  %vm1486 = vcmask 326912
  %s1487 = scalar_lea.vmem %s1, 72
  %1488 = vst.msk [vmem:[%s1487] sm:$0xff] %vm1486, %v1485
  %s1489 = scalar_lea.vmem %s0, 260
  %s1490 = smov 3
  %v1491 = vld [vmem:[%s1489] ss:$16 sm:%s1490]
  %s1492 = scalar_lea.vmem %s0, 260
  %s1493 = smov 12
  %v1494 = vld [vmem:[%s1492] ss:$16 sm:%s1493]
  %vm1495 = vcmask 1043458
  %v1496 = vsel %vm1495, %v1494, %v1491
  %s1497 = scalar_lea.vmem %s0, 260
  %s1498 = smov 48
  %v1499 = vld [vmem:[%s1497] ss:$16 sm:%s1498]
  %vm1500 = vcmask 1045508
  %v1501 = vsel %vm1500, %v1499, %v1496
  %s1502 = scalar_lea.vmem %s0, 260
  %s1503 = smov 192
  %v1504 = vld [vmem:[%s1502] ss:$16 sm:%s1503]
  %vm1505 = vcmask 1047558
  %v1506 = vsel %vm1505, %v1504, %v1501
  %1507 = vrot.lane.b32.xlu0 %v1506, 32
  %v1508 = vpop.permute.xlu0 %1507
  %vm1509 = vcmask 326912
  %s1510 = scalar_lea.vmem %s1, 16
  %1511 = vst.msk [vmem:[%s1510] sm:$0xff] %vm1509, %v1508
  %s1512 = scalar_lea.vmem %s0, 772
  %s1513 = smov 3
  %v1514 = vld [vmem:[%s1512] ss:$16 sm:%s1513]
  %s1515 = scalar_lea.vmem %s0, 772
  %s1516 = smov 12
  %v1517 = vld [vmem:[%s1515] ss:$16 sm:%s1516]
  %vm1518 = vcmask 1043458
  %v1519 = vsel %vm1518, %v1517, %v1514
  %s1520 = scalar_lea.vmem %s0, 772
  %s1521 = smov 48
  %v1522 = vld [vmem:[%s1520] ss:$16 sm:%s1521]
  %vm1523 = vcmask 1045508
  %v1524 = vsel %vm1523, %v1522, %v1519
  %s1525 = scalar_lea.vmem %s0, 772
  %s1526 = smov 192
  %v1527 = vld [vmem:[%s1525] ss:$16 sm:%s1526]
  %vm1528 = vcmask 1047558
  %v1529 = vsel %vm1528, %v1527, %v1524
  %1530 = vrot.lane.b32.xlu0 %v1529, 32
  %v1531 = vpop.permute.xlu0 %1530
  %vm1532 = vcmask 326912
  %s1533 = scalar_lea.vmem %s1, 48
  %1534 = vst.msk [vmem:[%s1533] sm:$0xff] %vm1532, %v1531
  %s1535 = scalar_lea.vmem %s0, 388
  %s1536 = smov 3
  %v1537 = vld [vmem:[%s1535] ss:$16 sm:%s1536]
  %s1538 = scalar_lea.vmem %s0, 388
  %s1539 = smov 12
  %v1540 = vld [vmem:[%s1538] ss:$16 sm:%s1539]
  %vm1541 = vcmask 1043458
  %v1542 = vsel %vm1541, %v1540, %v1537
  %s1543 = scalar_lea.vmem %s0, 388
  %s1544 = smov 48
  %v1545 = vld [vmem:[%s1543] ss:$16 sm:%s1544]
  %vm1546 = vcmask 1045508
  %v1547 = vsel %vm1546, %v1545, %v1542
  %s1548 = scalar_lea.vmem %s0, 388
  %s1549 = smov 192
  %v1550 = vld [vmem:[%s1548] ss:$16 sm:%s1549]
  %vm1551 = vcmask 1047558
  %v1552 = vsel %vm1551, %v1550, %v1547
  %1553 = vrot.lane.b32.xlu0 %v1552, 32
  %v1554 = vpop.permute.xlu0 %1553
  %vm1555 = vcmask 326912
  %s1556 = scalar_lea.vmem %s1, 24
  %1557 = vst.msk [vmem:[%s1556] sm:$0xff] %vm1555, %v1554
  %s1558 = scalar_lea.vmem %s0, 900
  %s1559 = smov 3
  %v1560 = vld [vmem:[%s1558] ss:$16 sm:%s1559]
  %s1561 = scalar_lea.vmem %s0, 900
  %s1562 = smov 12
  %v1563 = vld [vmem:[%s1561] ss:$16 sm:%s1562]
  %vm1564 = vcmask 1043458
  %v1565 = vsel %vm1564, %v1563, %v1560
  %s1566 = scalar_lea.vmem %s0, 900
  %s1567 = smov 48
  %v1568 = vld [vmem:[%s1566] ss:$16 sm:%s1567]
  %vm1569 = vcmask 1045508
  %v1570 = vsel %vm1569, %v1568, %v1565
  %s1571 = scalar_lea.vmem %s0, 900
  %s1572 = smov 192
  %v1573 = vld [vmem:[%s1571] ss:$16 sm:%s1572]
  %vm1574 = vcmask 1047558
  %v1575 = vsel %vm1574, %v1573, %v1570
  %1576 = vrot.lane.b32.xlu0 %v1575, 32
  %v1577 = vpop.permute.xlu0 %1576
  %vm1578 = vcmask 326912
  %s1579 = scalar_lea.vmem %s1, 56
  %1580 = vst.msk [vmem:[%s1579] sm:$0xff] %vm1578, %v1577
  %s1581 = scalar_lea.vmem %s0, 3
  %s1582 = smov 3
  %v1583 = vld [vmem:[%s1581] ss:$16 sm:%s1582]
  %s1584 = scalar_lea.vmem %s0, 3
  %s1585 = smov 12
  %v1586 = vld [vmem:[%s1584] ss:$16 sm:%s1585]
  %vm1587 = vcmask 1043458
  %v1588 = vsel %vm1587, %v1586, %v1583
  %s1589 = scalar_lea.vmem %s0, 3
  %s1590 = smov 48
  %v1591 = vld [vmem:[%s1589] ss:$16 sm:%s1590]
  %vm1592 = vcmask 1045508
  %v1593 = vsel %vm1592, %v1591, %v1588
  %s1594 = scalar_lea.vmem %s0, 3
  %s1595 = smov 192
  %v1596 = vld [vmem:[%s1594] ss:$16 sm:%s1595]
  %vm1597 = vcmask 1047558
  %v1598 = vsel %vm1597, %v1596, %v1593
  %1599 = vrot.lane.b32.xlu0 %v1598, 24
  %v1600 = vpop.permute.xlu0 %1599
  %vm1601 = vcmask 261312
  %1602 = vst.msk [vmem:[%s1] sm:$0xff] %vm1601, %v1600
  %s1603 = scalar_lea.vmem %s0, 515
  %s1604 = smov 3
  %v1605 = vld [vmem:[%s1603] ss:$16 sm:%s1604]
  %s1606 = scalar_lea.vmem %s0, 515
  %s1607 = smov 12
  %v1608 = vld [vmem:[%s1606] ss:$16 sm:%s1607]
  %vm1609 = vcmask 1043458
  %v1610 = vsel %vm1609, %v1608, %v1605
  %s1611 = scalar_lea.vmem %s0, 515
  %s1612 = smov 48
  %v1613 = vld [vmem:[%s1611] ss:$16 sm:%s1612]
  %vm1614 = vcmask 1045508
  %v1615 = vsel %vm1614, %v1613, %v1610
  %s1616 = scalar_lea.vmem %s0, 515
  %s1617 = smov 192
  %v1618 = vld [vmem:[%s1616] ss:$16 sm:%s1617]
  %vm1619 = vcmask 1047558
  %v1620 = vsel %vm1619, %v1618, %v1615
  %1621 = vrot.lane.b32.xlu0 %v1620, 24
  %v1622 = vpop.permute.xlu0 %1621
  %vm1623 = vcmask 261312
  %s1624 = scalar_lea.vmem %s1, 32
  %1625 = vst.msk [vmem:[%s1624] sm:$0xff] %vm1623, %v1622
  %s1626 = scalar_lea.vmem %s0, 1027
  %s1627 = smov 3
  %v1628 = vld [vmem:[%s1626] ss:$16 sm:%s1627]
  %s1629 = scalar_lea.vmem %s0, 1027
  %s1630 = smov 12
  %v1631 = vld [vmem:[%s1629] ss:$16 sm:%s1630]
  %vm1632 = vcmask 1043458
  %v1633 = vsel %vm1632, %v1631, %v1628
  %s1634 = scalar_lea.vmem %s0, 1027
  %s1635 = smov 48
  %v1636 = vld [vmem:[%s1634] ss:$16 sm:%s1635]
  %vm1637 = vcmask 1045508
  %v1638 = vsel %vm1637, %v1636, %v1633
  %s1639 = scalar_lea.vmem %s0, 1027
  %s1640 = smov 192
  %v1641 = vld [vmem:[%s1639] ss:$16 sm:%s1640]
  %vm1642 = vcmask 1047558
  %v1643 = vsel %vm1642, %v1641, %v1638
  %1644 = vrot.lane.b32.xlu0 %v1643, 24
  %v1645 = vpop.permute.xlu0 %1644
  %vm1646 = vcmask 261312
  %s1647 = scalar_lea.vmem %s1, 64
  %1648 = vst.msk [vmem:[%s1647] sm:$0xff] %vm1646, %v1645
  %s1649 = scalar_lea.vmem %s0, 131
  %s1650 = smov 3
  %v1651 = vld [vmem:[%s1649] ss:$16 sm:%s1650]
  %s1652 = scalar_lea.vmem %s0, 131
  %s1653 = smov 12
  %v1654 = vld [vmem:[%s1652] ss:$16 sm:%s1653]
  %vm1655 = vcmask 1043458
  %v1656 = vsel %vm1655, %v1654, %v1651
  %s1657 = scalar_lea.vmem %s0, 131
  %s1658 = smov 48
  %v1659 = vld [vmem:[%s1657] ss:$16 sm:%s1658]
  %vm1660 = vcmask 1045508
  %v1661 = vsel %vm1660, %v1659, %v1656
  %s1662 = scalar_lea.vmem %s0, 131
  %s1663 = smov 192
  %v1664 = vld [vmem:[%s1662] ss:$16 sm:%s1663]
  %vm1665 = vcmask 1047558
  %v1666 = vsel %vm1665, %v1664, %v1661
  %1667 = vrot.lane.b32.xlu0 %v1666, 24
  %v1668 = vpop.permute.xlu0 %1667
  %vm1669 = vcmask 261312
  %s1670 = scalar_lea.vmem %s1, 8
  %1671 = vst.msk [vmem:[%s1670] sm:$0xff] %vm1669, %v1668
  %s1672 = scalar_lea.vmem %s0, 643
  %s1673 = smov 3
  %v1674 = vld [vmem:[%s1672] ss:$16 sm:%s1673]
  %s1675 = scalar_lea.vmem %s0, 643
  %s1676 = smov 12
  %v1677 = vld [vmem:[%s1675] ss:$16 sm:%s1676]
  %vm1678 = vcmask 1043458
  %v1679 = vsel %vm1678, %v1677, %v1674
  %s1680 = scalar_lea.vmem %s0, 643
  %s1681 = smov 48
  %v1682 = vld [vmem:[%s1680] ss:$16 sm:%s1681]
  %vm1683 = vcmask 1045508
  %v1684 = vsel %vm1683, %v1682, %v1679
  %s1685 = scalar_lea.vmem %s0, 643
  %s1686 = smov 192
  %v1687 = vld [vmem:[%s1685] ss:$16 sm:%s1686]
  %vm1688 = vcmask 1047558
  %v1689 = vsel %vm1688, %v1687, %v1684
  %1690 = vrot.lane.b32.xlu0 %v1689, 24
  %v1691 = vpop.permute.xlu0 %1690
  %vm1692 = vcmask 261312
  %s1693 = scalar_lea.vmem %s1, 40
  %1694 = vst.msk [vmem:[%s1693] sm:$0xff] %vm1692, %v1691
  %s1695 = scalar_lea.vmem %s0, 1155
  %s1696 = smov 3
  %v1697 = vld [vmem:[%s1695] ss:$16 sm:%s1696]
  %s1698 = scalar_lea.vmem %s0, 1155
  %s1699 = smov 12
  %v1700 = vld [vmem:[%s1698] ss:$16 sm:%s1699]
  %vm1701 = vcmask 1043458
  %v1702 = vsel %vm1701, %v1700, %v1697
  %s1703 = scalar_lea.vmem %s0, 1155
  %s1704 = smov 48
  %v1705 = vld [vmem:[%s1703] ss:$16 sm:%s1704]
  %vm1706 = vcmask 1045508
  %v1707 = vsel %vm1706, %v1705, %v1702
  %s1708 = scalar_lea.vmem %s0, 1155
  %s1709 = smov 192
  %v1710 = vld [vmem:[%s1708] ss:$16 sm:%s1709]
  %vm1711 = vcmask 1047558
  %v1712 = vsel %vm1711, %v1710, %v1707
  %1713 = vrot.lane.b32.xlu0 %v1712, 24
  %v1714 = vpop.permute.xlu0 %1713
  %vm1715 = vcmask 261312
  %s1716 = scalar_lea.vmem %s1, 72
  %1717 = vst.msk [vmem:[%s1716] sm:$0xff] %vm1715, %v1714
  %s1718 = scalar_lea.vmem %s0, 259
  %s1719 = smov 3
  %v1720 = vld [vmem:[%s1718] ss:$16 sm:%s1719]
  %s1721 = scalar_lea.vmem %s0, 259
  %s1722 = smov 12
  %v1723 = vld [vmem:[%s1721] ss:$16 sm:%s1722]
  %vm1724 = vcmask 1043458
  %v1725 = vsel %vm1724, %v1723, %v1720
  %s1726 = scalar_lea.vmem %s0, 259
  %s1727 = smov 48
  %v1728 = vld [vmem:[%s1726] ss:$16 sm:%s1727]
  %vm1729 = vcmask 1045508
  %v1730 = vsel %vm1729, %v1728, %v1725
  %s1731 = scalar_lea.vmem %s0, 259
  %s1732 = smov 192
  %v1733 = vld [vmem:[%s1731] ss:$16 sm:%s1732]
  %vm1734 = vcmask 1047558
  %v1735 = vsel %vm1734, %v1733, %v1730
  %1736 = vrot.lane.b32.xlu0 %v1735, 24
  %v1737 = vpop.permute.xlu0 %1736
  %vm1738 = vcmask 261312
  %s1739 = scalar_lea.vmem %s1, 16
  %1740 = vst.msk [vmem:[%s1739] sm:$0xff] %vm1738, %v1737
  %s1741 = scalar_lea.vmem %s0, 771
  %s1742 = smov 3
  %v1743 = vld [vmem:[%s1741] ss:$16 sm:%s1742]
  %s1744 = scalar_lea.vmem %s0, 771
  %s1745 = smov 12
  %v1746 = vld [vmem:[%s1744] ss:$16 sm:%s1745]
  %vm1747 = vcmask 1043458
  %v1748 = vsel %vm1747, %v1746, %v1743
  %s1749 = scalar_lea.vmem %s0, 771
  %s1750 = smov 48
  %v1751 = vld [vmem:[%s1749] ss:$16 sm:%s1750]
  %vm1752 = vcmask 1045508
  %v1753 = vsel %vm1752, %v1751, %v1748
  %s1754 = scalar_lea.vmem %s0, 771
  %s1755 = smov 192
  %v1756 = vld [vmem:[%s1754] ss:$16 sm:%s1755]
  %vm1757 = vcmask 1047558
  %v1758 = vsel %vm1757, %v1756, %v1753
  %1759 = vrot.lane.b32.xlu0 %v1758, 24
  %v1760 = vpop.permute.xlu0 %1759
  %vm1761 = vcmask 261312
  %s1762 = scalar_lea.vmem %s1, 48
  %1763 = vst.msk [vmem:[%s1762] sm:$0xff] %vm1761, %v1760
  %s1764 = scalar_lea.vmem %s0, 387
  %s1765 = smov 3
  %v1766 = vld [vmem:[%s1764] ss:$16 sm:%s1765]
  %s1767 = scalar_lea.vmem %s0, 387
  %s1768 = smov 12
  %v1769 = vld [vmem:[%s1767] ss:$16 sm:%s1768]
  %vm1770 = vcmask 1043458
  %v1771 = vsel %vm1770, %v1769, %v1766
  %s1772 = scalar_lea.vmem %s0, 387
  %s1773 = smov 48
  %v1774 = vld [vmem:[%s1772] ss:$16 sm:%s1773]
  %vm1775 = vcmask 1045508
  %v1776 = vsel %vm1775, %v1774, %v1771
  %s1777 = scalar_lea.vmem %s0, 387
  %s1778 = smov 192
  %v1779 = vld [vmem:[%s1777] ss:$16 sm:%s1778]
  %vm1780 = vcmask 1047558
  %v1781 = vsel %vm1780, %v1779, %v1776
  %1782 = vrot.lane.b32.xlu0 %v1781, 24
  %v1783 = vpop.permute.xlu0 %1782
  %vm1784 = vcmask 261312
  %s1785 = scalar_lea.vmem %s1, 24
  %1786 = vst.msk [vmem:[%s1785] sm:$0xff] %vm1784, %v1783
  %s1787 = scalar_lea.vmem %s0, 899
  %s1788 = smov 3
  %v1789 = vld [vmem:[%s1787] ss:$16 sm:%s1788]
  %s1790 = scalar_lea.vmem %s0, 899
  %s1791 = smov 12
  %v1792 = vld [vmem:[%s1790] ss:$16 sm:%s1791]
  %vm1793 = vcmask 1043458
  %v1794 = vsel %vm1793, %v1792, %v1789
  %s1795 = scalar_lea.vmem %s0, 899
  %s1796 = smov 48
  %v1797 = vld [vmem:[%s1795] ss:$16 sm:%s1796]
  %vm1798 = vcmask 1045508
  %v1799 = vsel %vm1798, %v1797, %v1794
  %s1800 = scalar_lea.vmem %s0, 899
  %s1801 = smov 192
  %v1802 = vld [vmem:[%s1800] ss:$16 sm:%s1801]
  %vm1803 = vcmask 1047558
  %v1804 = vsel %vm1803, %v1802, %v1799
  %1805 = vrot.lane.b32.xlu0 %v1804, 24
  %v1806 = vpop.permute.xlu0 %1805
  %vm1807 = vcmask 261312
  %s1808 = scalar_lea.vmem %s1, 56
  %1809 = vst.msk [vmem:[%s1808] sm:$0xff] %vm1807, %v1806
  %s1810 = scalar_lea.vmem %s0, 2
  %s1811 = smov 3
  %v1812 = vld [vmem:[%s1810] ss:$16 sm:%s1811]
  %s1813 = scalar_lea.vmem %s0, 2
  %s1814 = smov 12
  %v1815 = vld [vmem:[%s1813] ss:$16 sm:%s1814]
  %vm1816 = vcmask 1043458
  %v1817 = vsel %vm1816, %v1815, %v1812
  %s1818 = scalar_lea.vmem %s0, 2
  %s1819 = smov 48
  %v1820 = vld [vmem:[%s1818] ss:$16 sm:%s1819]
  %vm1821 = vcmask 1045508
  %v1822 = vsel %vm1821, %v1820, %v1817
  %s1823 = scalar_lea.vmem %s0, 2
  %s1824 = smov 192
  %v1825 = vld [vmem:[%s1823] ss:$16 sm:%s1824]
  %vm1826 = vcmask 1047558
  %v1827 = vsel %vm1826, %v1825, %v1822
  %1828 = vrot.lane.b32.xlu0 %v1827, 16
  %v1829 = vpop.permute.xlu0 %1828
  %vm1830 = vcmask 195712
  %1831 = vst.msk [vmem:[%s1] sm:$0xff] %vm1830, %v1829
  %s1832 = scalar_lea.vmem %s0, 514
  %s1833 = smov 3
  %v1834 = vld [vmem:[%s1832] ss:$16 sm:%s1833]
  %s1835 = scalar_lea.vmem %s0, 514
  %s1836 = smov 12
  %v1837 = vld [vmem:[%s1835] ss:$16 sm:%s1836]
  %vm1838 = vcmask 1043458
  %v1839 = vsel %vm1838, %v1837, %v1834
  %s1840 = scalar_lea.vmem %s0, 514
  %s1841 = smov 48
  %v1842 = vld [vmem:[%s1840] ss:$16 sm:%s1841]
  %vm1843 = vcmask 1045508
  %v1844 = vsel %vm1843, %v1842, %v1839
  %s1845 = scalar_lea.vmem %s0, 514
  %s1846 = smov 192
  %v1847 = vld [vmem:[%s1845] ss:$16 sm:%s1846]
  %vm1848 = vcmask 1047558
  %v1849 = vsel %vm1848, %v1847, %v1844
  %1850 = vrot.lane.b32.xlu0 %v1849, 16
  %v1851 = vpop.permute.xlu0 %1850
  %vm1852 = vcmask 195712
  %s1853 = scalar_lea.vmem %s1, 32
  %1854 = vst.msk [vmem:[%s1853] sm:$0xff] %vm1852, %v1851
  %s1855 = scalar_lea.vmem %s0, 1026
  %s1856 = smov 3
  %v1857 = vld [vmem:[%s1855] ss:$16 sm:%s1856]
  %s1858 = scalar_lea.vmem %s0, 1026
  %s1859 = smov 12
  %v1860 = vld [vmem:[%s1858] ss:$16 sm:%s1859]
  %vm1861 = vcmask 1043458
  %v1862 = vsel %vm1861, %v1860, %v1857
  %s1863 = scalar_lea.vmem %s0, 1026
  %s1864 = smov 48
  %v1865 = vld [vmem:[%s1863] ss:$16 sm:%s1864]
  %vm1866 = vcmask 1045508
  %v1867 = vsel %vm1866, %v1865, %v1862
  %s1868 = scalar_lea.vmem %s0, 1026
  %s1869 = smov 192
  %v1870 = vld [vmem:[%s1868] ss:$16 sm:%s1869]
  %vm1871 = vcmask 1047558
  %v1872 = vsel %vm1871, %v1870, %v1867
  %1873 = vrot.lane.b32.xlu0 %v1872, 16
  %v1874 = vpop.permute.xlu0 %1873
  %vm1875 = vcmask 195712
  %s1876 = scalar_lea.vmem %s1, 64
  %1877 = vst.msk [vmem:[%s1876] sm:$0xff] %vm1875, %v1874
  %s1878 = scalar_lea.vmem %s0, 130
  %s1879 = smov 3
  %v1880 = vld [vmem:[%s1878] ss:$16 sm:%s1879]
  %s1881 = scalar_lea.vmem %s0, 130
  %s1882 = smov 12
  %v1883 = vld [vmem:[%s1881] ss:$16 sm:%s1882]
  %vm1884 = vcmask 1043458
  %v1885 = vsel %vm1884, %v1883, %v1880
  %s1886 = scalar_lea.vmem %s0, 130
  %s1887 = smov 48
  %v1888 = vld [vmem:[%s1886] ss:$16 sm:%s1887]
  %vm1889 = vcmask 1045508
  %v1890 = vsel %vm1889, %v1888, %v1885
  %s1891 = scalar_lea.vmem %s0, 130
  %s1892 = smov 192
  %v1893 = vld [vmem:[%s1891] ss:$16 sm:%s1892]
  %vm1894 = vcmask 1047558
  %v1895 = vsel %vm1894, %v1893, %v1890
  %1896 = vrot.lane.b32.xlu0 %v1895, 16
  %v1897 = vpop.permute.xlu0 %1896
  %vm1898 = vcmask 195712
  %s1899 = scalar_lea.vmem %s1, 8
  %1900 = vst.msk [vmem:[%s1899] sm:$0xff] %vm1898, %v1897
  %s1901 = scalar_lea.vmem %s0, 642
  %s1902 = smov 3
  %v1903 = vld [vmem:[%s1901] ss:$16 sm:%s1902]
  %s1904 = scalar_lea.vmem %s0, 642
  %s1905 = smov 12
  %v1906 = vld [vmem:[%s1904] ss:$16 sm:%s1905]
  %vm1907 = vcmask 1043458
  %v1908 = vsel %vm1907, %v1906, %v1903
  %s1909 = scalar_lea.vmem %s0, 642
  %s1910 = smov 48
  %v1911 = vld [vmem:[%s1909] ss:$16 sm:%s1910]
  %vm1912 = vcmask 1045508
  %v1913 = vsel %vm1912, %v1911, %v1908
  %s1914 = scalar_lea.vmem %s0, 642
  %s1915 = smov 192
  %v1916 = vld [vmem:[%s1914] ss:$16 sm:%s1915]
  %vm1917 = vcmask 1047558
  %v1918 = vsel %vm1917, %v1916, %v1913
  %1919 = vrot.lane.b32.xlu0 %v1918, 16
  %v1920 = vpop.permute.xlu0 %1919
  %vm1921 = vcmask 195712
  %s1922 = scalar_lea.vmem %s1, 40
  %1923 = vst.msk [vmem:[%s1922] sm:$0xff] %vm1921, %v1920
  %s1924 = scalar_lea.vmem %s0, 1154
  %s1925 = smov 3
  %v1926 = vld [vmem:[%s1924] ss:$16 sm:%s1925]
  %s1927 = scalar_lea.vmem %s0, 1154
  %s1928 = smov 12
  %v1929 = vld [vmem:[%s1927] ss:$16 sm:%s1928]
  %vm1930 = vcmask 1043458
  %v1931 = vsel %vm1930, %v1929, %v1926
  %s1932 = scalar_lea.vmem %s0, 1154
  %s1933 = smov 48
  %v1934 = vld [vmem:[%s1932] ss:$16 sm:%s1933]
  %vm1935 = vcmask 1045508
  %v1936 = vsel %vm1935, %v1934, %v1931
  %s1937 = scalar_lea.vmem %s0, 1154
  %s1938 = smov 192
  %v1939 = vld [vmem:[%s1937] ss:$16 sm:%s1938]
  %vm1940 = vcmask 1047558
  %v1941 = vsel %vm1940, %v1939, %v1936
  %1942 = vrot.lane.b32.xlu0 %v1941, 16
  %v1943 = vpop.permute.xlu0 %1942
  %vm1944 = vcmask 195712
  %s1945 = scalar_lea.vmem %s1, 72
  %1946 = vst.msk [vmem:[%s1945] sm:$0xff] %vm1944, %v1943
  %s1947 = scalar_lea.vmem %s0, 258
  %s1948 = smov 3
  %v1949 = vld [vmem:[%s1947] ss:$16 sm:%s1948]
  %s1950 = scalar_lea.vmem %s0, 258
  %s1951 = smov 12
  %v1952 = vld [vmem:[%s1950] ss:$16 sm:%s1951]
  %vm1953 = vcmask 1043458
  %v1954 = vsel %vm1953, %v1952, %v1949
  %s1955 = scalar_lea.vmem %s0, 258
  %s1956 = smov 48
  %v1957 = vld [vmem:[%s1955] ss:$16 sm:%s1956]
  %vm1958 = vcmask 1045508
  %v1959 = vsel %vm1958, %v1957, %v1954
  %s1960 = scalar_lea.vmem %s0, 258
  %s1961 = smov 192
  %v1962 = vld [vmem:[%s1960] ss:$16 sm:%s1961]
  %vm1963 = vcmask 1047558
  %v1964 = vsel %vm1963, %v1962, %v1959
  %1965 = vrot.lane.b32.xlu0 %v1964, 16
  %v1966 = vpop.permute.xlu0 %1965
  %vm1967 = vcmask 195712
  %s1968 = scalar_lea.vmem %s1, 16
  %1969 = vst.msk [vmem:[%s1968] sm:$0xff] %vm1967, %v1966
  %s1970 = scalar_lea.vmem %s0, 770
  %s1971 = smov 3
  %v1972 = vld [vmem:[%s1970] ss:$16 sm:%s1971]
  %s1973 = scalar_lea.vmem %s0, 770
  %s1974 = smov 12
  %v1975 = vld [vmem:[%s1973] ss:$16 sm:%s1974]
  %vm1976 = vcmask 1043458
  %v1977 = vsel %vm1976, %v1975, %v1972
  %s1978 = scalar_lea.vmem %s0, 770
  %s1979 = smov 48
  %v1980 = vld [vmem:[%s1978] ss:$16 sm:%s1979]
  %vm1981 = vcmask 1045508
  %v1982 = vsel %vm1981, %v1980, %v1977
  %s1983 = scalar_lea.vmem %s0, 770
  %s1984 = smov 192
  %v1985 = vld [vmem:[%s1983] ss:$16 sm:%s1984]
  %vm1986 = vcmask 1047558
  %v1987 = vsel %vm1986, %v1985, %v1982
  %1988 = vrot.lane.b32.xlu0 %v1987, 16
  %v1989 = vpop.permute.xlu0 %1988
  %vm1990 = vcmask 195712
  %s1991 = scalar_lea.vmem %s1, 48
  %1992 = vst.msk [vmem:[%s1991] sm:$0xff] %vm1990, %v1989
  %s1993 = scalar_lea.vmem %s0, 386
  %s1994 = smov 3
  %v1995 = vld [vmem:[%s1993] ss:$16 sm:%s1994]
  %s1996 = scalar_lea.vmem %s0, 386
  %s1997 = smov 12
  %v1998 = vld [vmem:[%s1996] ss:$16 sm:%s1997]
  %vm1999 = vcmask 1043458
  %v2000 = vsel %vm1999, %v1998, %v1995
  %s2001 = scalar_lea.vmem %s0, 386
  %s2002 = smov 48
  %v2003 = vld [vmem:[%s2001] ss:$16 sm:%s2002]
  %vm2004 = vcmask 1045508
  %v2005 = vsel %vm2004, %v2003, %v2000
  %s2006 = scalar_lea.vmem %s0, 386
  %s2007 = smov 192
  %v2008 = vld [vmem:[%s2006] ss:$16 sm:%s2007]
  %vm2009 = vcmask 1047558
  %v2010 = vsel %vm2009, %v2008, %v2005
  %2011 = vrot.lane.b32.xlu0 %v2010, 16
  %v2012 = vpop.permute.xlu0 %2011
  %vm2013 = vcmask 195712
  %s2014 = scalar_lea.vmem %s1, 24
  %2015 = vst.msk [vmem:[%s2014] sm:$0xff] %vm2013, %v2012
  %s2016 = scalar_lea.vmem %s0, 898
  %s2017 = smov 3
  %v2018 = vld [vmem:[%s2016] ss:$16 sm:%s2017]
  %s2019 = scalar_lea.vmem %s0, 898
  %s2020 = smov 12
  %v2021 = vld [vmem:[%s2019] ss:$16 sm:%s2020]
  %vm2022 = vcmask 1043458
  %v2023 = vsel %vm2022, %v2021, %v2018
  %s2024 = scalar_lea.vmem %s0, 898
  %s2025 = smov 48
  %v2026 = vld [vmem:[%s2024] ss:$16 sm:%s2025]
  %vm2027 = vcmask 1045508
  %v2028 = vsel %vm2027, %v2026, %v2023
  %s2029 = scalar_lea.vmem %s0, 898
  %s2030 = smov 192
  %v2031 = vld [vmem:[%s2029] ss:$16 sm:%s2030]
  %vm2032 = vcmask 1047558
  %v2033 = vsel %vm2032, %v2031, %v2028
  %2034 = vrot.lane.b32.xlu0 %v2033, 16
  %v2035 = vpop.permute.xlu0 %2034
  %vm2036 = vcmask 195712
  %s2037 = scalar_lea.vmem %s1, 56
  %2038 = vst.msk [vmem:[%s2037] sm:$0xff] %vm2036, %v2035
  %s2039 = scalar_lea.vmem %s0, 1
  %s2040 = smov 3
  %v2041 = vld [vmem:[%s2039] ss:$16 sm:%s2040]
  %s2042 = scalar_lea.vmem %s0, 1
  %s2043 = smov 12
  %v2044 = vld [vmem:[%s2042] ss:$16 sm:%s2043]
  %vm2045 = vcmask 1043458
  %v2046 = vsel %vm2045, %v2044, %v2041
  %s2047 = scalar_lea.vmem %s0, 1
  %s2048 = smov 48
  %v2049 = vld [vmem:[%s2047] ss:$16 sm:%s2048]
  %vm2050 = vcmask 1045508
  %v2051 = vsel %vm2050, %v2049, %v2046
  %s2052 = scalar_lea.vmem %s0, 1
  %s2053 = smov 192
  %v2054 = vld [vmem:[%s2052] ss:$16 sm:%s2053]
  %vm2055 = vcmask 1047558
  %v2056 = vsel %vm2055, %v2054, %v2051
  %2057 = vrot.lane.b32.xlu0 %v2056, 8
  %v2058 = vpop.permute.xlu0 %2057
  %vm2059 = vcmask 130112
  %2060 = vst.msk [vmem:[%s1] sm:$0xff] %vm2059, %v2058
  %s2061 = scalar_lea.vmem %s0, 513
  %s2062 = smov 3
  %v2063 = vld [vmem:[%s2061] ss:$16 sm:%s2062]
  %s2064 = scalar_lea.vmem %s0, 513
  %s2065 = smov 12
  %v2066 = vld [vmem:[%s2064] ss:$16 sm:%s2065]
  %vm2067 = vcmask 1043458
  %v2068 = vsel %vm2067, %v2066, %v2063
  %s2069 = scalar_lea.vmem %s0, 513
  %s2070 = smov 48
  %v2071 = vld [vmem:[%s2069] ss:$16 sm:%s2070]
  %vm2072 = vcmask 1045508
  %v2073 = vsel %vm2072, %v2071, %v2068
  %s2074 = scalar_lea.vmem %s0, 513
  %s2075 = smov 192
  %v2076 = vld [vmem:[%s2074] ss:$16 sm:%s2075]
  %vm2077 = vcmask 1047558
  %v2078 = vsel %vm2077, %v2076, %v2073
  %2079 = vrot.lane.b32.xlu0 %v2078, 8
  %v2080 = vpop.permute.xlu0 %2079
  %vm2081 = vcmask 130112
  %s2082 = scalar_lea.vmem %s1, 32
  %2083 = vst.msk [vmem:[%s2082] sm:$0xff] %vm2081, %v2080
  %s2084 = scalar_lea.vmem %s0, 1025
  %s2085 = smov 3
  %v2086 = vld [vmem:[%s2084] ss:$16 sm:%s2085]
  %s2087 = scalar_lea.vmem %s0, 1025
  %s2088 = smov 12
  %v2089 = vld [vmem:[%s2087] ss:$16 sm:%s2088]
  %vm2090 = vcmask 1043458
  %v2091 = vsel %vm2090, %v2089, %v2086
  %s2092 = scalar_lea.vmem %s0, 1025
  %s2093 = smov 48
  %v2094 = vld [vmem:[%s2092] ss:$16 sm:%s2093]
  %vm2095 = vcmask 1045508
  %v2096 = vsel %vm2095, %v2094, %v2091
  %s2097 = scalar_lea.vmem %s0, 1025
  %s2098 = smov 192
  %v2099 = vld [vmem:[%s2097] ss:$16 sm:%s2098]
  %vm2100 = vcmask 1047558
  %v2101 = vsel %vm2100, %v2099, %v2096
  %2102 = vrot.lane.b32.xlu0 %v2101, 8
  %v2103 = vpop.permute.xlu0 %2102
  %vm2104 = vcmask 130112
  %s2105 = scalar_lea.vmem %s1, 64
  %2106 = vst.msk [vmem:[%s2105] sm:$0xff] %vm2104, %v2103
  %s2107 = scalar_lea.vmem %s0, 129
  %s2108 = smov 3
  %v2109 = vld [vmem:[%s2107] ss:$16 sm:%s2108]
  %s2110 = scalar_lea.vmem %s0, 129
  %s2111 = smov 12
  %v2112 = vld [vmem:[%s2110] ss:$16 sm:%s2111]
  %vm2113 = vcmask 1043458
  %v2114 = vsel %vm2113, %v2112, %v2109
  %s2115 = scalar_lea.vmem %s0, 129
  %s2116 = smov 48
  %v2117 = vld [vmem:[%s2115] ss:$16 sm:%s2116]
  %vm2118 = vcmask 1045508
  %v2119 = vsel %vm2118, %v2117, %v2114
  %s2120 = scalar_lea.vmem %s0, 129
  %s2121 = smov 192
  %v2122 = vld [vmem:[%s2120] ss:$16 sm:%s2121]
  %vm2123 = vcmask 1047558
  %v2124 = vsel %vm2123, %v2122, %v2119
  %2125 = vrot.lane.b32.xlu0 %v2124, 8
  %v2126 = vpop.permute.xlu0 %2125
  %vm2127 = vcmask 130112
  %s2128 = scalar_lea.vmem %s1, 8
  %2129 = vst.msk [vmem:[%s2128] sm:$0xff] %vm2127, %v2126
  %s2130 = scalar_lea.vmem %s0, 641
  %s2131 = smov 3
  %v2132 = vld [vmem:[%s2130] ss:$16 sm:%s2131]
  %s2133 = scalar_lea.vmem %s0, 641
  %s2134 = smov 12
  %v2135 = vld [vmem:[%s2133] ss:$16 sm:%s2134]
  %vm2136 = vcmask 1043458
  %v2137 = vsel %vm2136, %v2135, %v2132
  %s2138 = scalar_lea.vmem %s0, 641
  %s2139 = smov 48
  %v2140 = vld [vmem:[%s2138] ss:$16 sm:%s2139]
  %vm2141 = vcmask 1045508
  %v2142 = vsel %vm2141, %v2140, %v2137
  %s2143 = scalar_lea.vmem %s0, 641
  %s2144 = smov 192
  %v2145 = vld [vmem:[%s2143] ss:$16 sm:%s2144]
  %vm2146 = vcmask 1047558
  %v2147 = vsel %vm2146, %v2145, %v2142
  %2148 = vrot.lane.b32.xlu0 %v2147, 8
  %v2149 = vpop.permute.xlu0 %2148
  %vm2150 = vcmask 130112
  %s2151 = scalar_lea.vmem %s1, 40
  %2152 = vst.msk [vmem:[%s2151] sm:$0xff] %vm2150, %v2149
  %s2153 = scalar_lea.vmem %s0, 1153
  %s2154 = smov 3
  %v2155 = vld [vmem:[%s2153] ss:$16 sm:%s2154]
  %s2156 = scalar_lea.vmem %s0, 1153
  %s2157 = smov 12
  %v2158 = vld [vmem:[%s2156] ss:$16 sm:%s2157]
  %vm2159 = vcmask 1043458
  %v2160 = vsel %vm2159, %v2158, %v2155
  %s2161 = scalar_lea.vmem %s0, 1153
  %s2162 = smov 48
  %v2163 = vld [vmem:[%s2161] ss:$16 sm:%s2162]
  %vm2164 = vcmask 1045508
  %v2165 = vsel %vm2164, %v2163, %v2160
  %s2166 = scalar_lea.vmem %s0, 1153
  %s2167 = smov 192
  %v2168 = vld [vmem:[%s2166] ss:$16 sm:%s2167]
  %vm2169 = vcmask 1047558
  %v2170 = vsel %vm2169, %v2168, %v2165
  %2171 = vrot.lane.b32.xlu0 %v2170, 8
  %v2172 = vpop.permute.xlu0 %2171
  %vm2173 = vcmask 130112
  %s2174 = scalar_lea.vmem %s1, 72
  %2175 = vst.msk [vmem:[%s2174] sm:$0xff] %vm2173, %v2172
  %s2176 = scalar_lea.vmem %s0, 257
  %s2177 = smov 3
  %v2178 = vld [vmem:[%s2176] ss:$16 sm:%s2177]
  %s2179 = scalar_lea.vmem %s0, 257
  %s2180 = smov 12
  %v2181 = vld [vmem:[%s2179] ss:$16 sm:%s2180]
  %vm2182 = vcmask 1043458
  %v2183 = vsel %vm2182, %v2181, %v2178
  %s2184 = scalar_lea.vmem %s0, 257
  %s2185 = smov 48
  %v2186 = vld [vmem:[%s2184] ss:$16 sm:%s2185]
  %vm2187 = vcmask 1045508
  %v2188 = vsel %vm2187, %v2186, %v2183
  %s2189 = scalar_lea.vmem %s0, 257
  %s2190 = smov 192
  %v2191 = vld [vmem:[%s2189] ss:$16 sm:%s2190]
  %vm2192 = vcmask 1047558
  %v2193 = vsel %vm2192, %v2191, %v2188
  %2194 = vrot.lane.b32.xlu0 %v2193, 8
  %v2195 = vpop.permute.xlu0 %2194
  %vm2196 = vcmask 130112
  %s2197 = scalar_lea.vmem %s1, 16
  %2198 = vst.msk [vmem:[%s2197] sm:$0xff] %vm2196, %v2195
  %s2199 = scalar_lea.vmem %s0, 769
  %s2200 = smov 3
  %v2201 = vld [vmem:[%s2199] ss:$16 sm:%s2200]
  %s2202 = scalar_lea.vmem %s0, 769
  %s2203 = smov 12
  %v2204 = vld [vmem:[%s2202] ss:$16 sm:%s2203]
  %vm2205 = vcmask 1043458
  %v2206 = vsel %vm2205, %v2204, %v2201
  %s2207 = scalar_lea.vmem %s0, 769
  %s2208 = smov 48
  %v2209 = vld [vmem:[%s2207] ss:$16 sm:%s2208]
  %vm2210 = vcmask 1045508
  %v2211 = vsel %vm2210, %v2209, %v2206
  %s2212 = scalar_lea.vmem %s0, 769
  %s2213 = smov 192
  %v2214 = vld [vmem:[%s2212] ss:$16 sm:%s2213]
  %vm2215 = vcmask 1047558
  %v2216 = vsel %vm2215, %v2214, %v2211
  %2217 = vrot.lane.b32.xlu0 %v2216, 8
  %v2218 = vpop.permute.xlu0 %2217
  %vm2219 = vcmask 130112
  %s2220 = scalar_lea.vmem %s1, 48
  %2221 = vst.msk [vmem:[%s2220] sm:$0xff] %vm2219, %v2218
  %s2222 = scalar_lea.vmem %s0, 385
  %s2223 = smov 3
  %v2224 = vld [vmem:[%s2222] ss:$16 sm:%s2223]
  %s2225 = scalar_lea.vmem %s0, 385
  %s2226 = smov 12
  %v2227 = vld [vmem:[%s2225] ss:$16 sm:%s2226]
  %vm2228 = vcmask 1043458
  %v2229 = vsel %vm2228, %v2227, %v2224
  %s2230 = scalar_lea.vmem %s0, 385
  %s2231 = smov 48
  %v2232 = vld [vmem:[%s2230] ss:$16 sm:%s2231]
  %vm2233 = vcmask 1045508
  %v2234 = vsel %vm2233, %v2232, %v2229
  %s2235 = scalar_lea.vmem %s0, 385
  %s2236 = smov 192
  %v2237 = vld [vmem:[%s2235] ss:$16 sm:%s2236]
  %vm2238 = vcmask 1047558
  %v2239 = vsel %vm2238, %v2237, %v2234
  %2240 = vrot.lane.b32.xlu0 %v2239, 8
  %v2241 = vpop.permute.xlu0 %2240
  %vm2242 = vcmask 130112
  %s2243 = scalar_lea.vmem %s1, 24
  %2244 = vst.msk [vmem:[%s2243] sm:$0xff] %vm2242, %v2241
  %s2245 = scalar_lea.vmem %s0, 897
  %s2246 = smov 3
  %v2247 = vld [vmem:[%s2245] ss:$16 sm:%s2246]
  %s2248 = scalar_lea.vmem %s0, 897
  %s2249 = smov 12
  %v2250 = vld [vmem:[%s2248] ss:$16 sm:%s2249]
  %vm2251 = vcmask 1043458
  %v2252 = vsel %vm2251, %v2250, %v2247
  %s2253 = scalar_lea.vmem %s0, 897
  %s2254 = smov 48
  %v2255 = vld [vmem:[%s2253] ss:$16 sm:%s2254]
  %vm2256 = vcmask 1045508
  %v2257 = vsel %vm2256, %v2255, %v2252
  %s2258 = scalar_lea.vmem %s0, 897
  %s2259 = smov 192
  %v2260 = vld [vmem:[%s2258] ss:$16 sm:%s2259]
  %vm2261 = vcmask 1047558
  %v2262 = vsel %vm2261, %v2260, %v2257
  %2263 = vrot.lane.b32.xlu0 %v2262, 8
  %v2264 = vpop.permute.xlu0 %2263
  %vm2265 = vcmask 130112
  %s2266 = scalar_lea.vmem %s1, 56
  %2267 = vst.msk [vmem:[%s2266] sm:$0xff] %vm2265, %v2264

// kernel: encoder_forward.4
$region0: #{encoder_forward.4}
  #allocation0 [shape = 'u32[]', space=smem, size = 0x4, offset = 0x4, fixed_abs, tag = 'smem constant byte address 0x4 - core index']
  #allocation1 [shape = 'u32[72,128]{1,0:T(1,128)}', space=vmem, size = 0x9000, scoped, tag = 'internal scratch']
  %s0 = inlined_call_operand.vmem [shape: f32[2,10,10,40], index: 0, kind: input, shape index: {}]
  %s1 = inlined_call_operand.vmem [shape: f32[1,40], index: 1, kind: input, shape index: {}]
  %s2 = inlined_call_operand.vmem [shape: f32[1,40], index: 2, kind: input, shape index: {}]
  %s3 = inlined_call_operand.vmem [shape: f32[1,40], index: 3, kind: input, shape index: {}]
  %s4 = inlined_call_operand.vmem [shape: f32[40,40], index: 4, kind: input, shape index: {}]
  %s5 = inlined_call_operand.vmem [shape: bf16[3,120,64], index: 5, kind: input, shape index: {}]
  %s6 = inlined_call_operand.vmem [shape: bf16[2,10,10,80], index: 6, kind: output, shape index: {}]
  %s7 = sld [smem:[#allocation0]]
  $region57: #{encoder_forward.4} parent=0
    _
  %s9 = ssub.s32 1, %s7
  %s10 = scalar_select 0, %s9, %s7
  loop: start=0, step=1, limit=4
  $region2: #{encoder_forward.4} parent=0 // loop_pre_header
    _
  $region3: #{encoder_forward.4} parent=0 // loop_header
    %s12 = sphi 0, %s16
    %p13 = scmp.ge.s32.totalorder %s12, 4
    %s22 = sphi 0, %s24
    %s25 = sphi 0, %s22
    %s26 = sphi 0, %s25
    %s42 = sphi 0, %s26
    %s46 = sphi 0, %s46
    %s48 = sphi 0, %s46
    %s49 = sphi 0, %s48
    %s63 = sphi 0, %s49
    %s67 = sphi 0, %s67
    %s69 = sphi 0, %s67
    %s70 = sphi 0, %s69
    %s84 = sphi 0, %s70
    %s88 = sphi 0, %s88
    %s90 = sphi 0, %s88
    %s91 = sphi 0, %s90
    %s105 = sphi 0, %s91
    %s109 = sphi 0, %s109
    %s111 = sphi 0, %s109
    %s112 = sphi 0, %s111
    %s126 = sphi 0, %s112
    %s130 = sphi 0, %s130
    %s132 = sphi 0, %s130
    %s133 = sphi 0, %s132
    %s147 = sphi 0, %s133
    %s153 = sphi 0, %s155
    %s156 = sphi 0, %s153
    %s157 = sphi 0, %s156
    %s173 = sphi 0, %s157
  $region4: #{encoder_forward.4} parent=0 // loop_header_branch
    %15 = sbr.rel (%p13) target = $region8
  $region5: #{encoder_forward.4} parent=0 // loop_body
    %s17 = ssub.s32 %s12, 1
    %s18 = ssub.s32 %s12, 2
    %s19 = sadd.s32 %s12, 1
    %s20 = ssub.s32 %s12, %s19
    %p21 = scmp.eq.s32.totalorder %s20, 0
    %s23 = sadd.s32 %s22, 1
    %s24 = scalar_select %p21, %s22, %s23
    %p27 = pneg %p21
    %p28 = scmp.eq.s32.totalorder %s12, 1
    %p29 = por %p27, %p28
    %p30 = scmp.ne.s32.totalorder %s22, %s25
    %p31 = scmp.eq.s32.totalorder %s12, 0
    %p32 = por %p30, %p31
    %p33 = scmp.ne.s32.totalorder %s22, %s25
    %p34 = scmp.eq.s32.totalorder %s17, 1
    %p35 = por %p33, %p34
    %p36 = scmp.ne.s32.totalorder %s25, %s26
    %p37 = scmp.eq.s32.totalorder %s17, 0
    %p38 = por %p36, %p37
    %p39 = scmp.ne.s32.totalorder %s25, %s26
    %p40 = scmp.eq.s32.totalorder %s18, 1
    %p41 = por %p39, %p40
    %p43 = scmp.ne.s32.totalorder %s26, %s42
    %p44 = scmp.eq.s32.totalorder %s18, 0
    %p45 = por %p43, %p44
    %s47 = sadd.s32 %s46, 1
    %p50 = scmp.eq.s32.totalorder %s12, 1
    %p51 = scmp.ne.s32.totalorder %s46, %s48
    %p52 = scmp.eq.s32.totalorder %s12, 0
    %p53 = por %p51, %p52
    %p54 = scmp.ne.s32.totalorder %s46, %s48
    %p55 = scmp.eq.s32.totalorder %s17, 1
    %p56 = por %p54, %p55
    %p57 = scmp.ne.s32.totalorder %s48, %s49
    %p58 = scmp.eq.s32.totalorder %s17, 0
    %p59 = por %p57, %p58
    %p60 = scmp.ne.s32.totalorder %s48, %s49
    %p61 = scmp.eq.s32.totalorder %s18, 1
    %p62 = por %p60, %p61
    %p64 = scmp.ne.s32.totalorder %s49, %s63
    %p65 = scmp.eq.s32.totalorder %s18, 0
    %p66 = por %p64, %p65
    %s68 = sadd.s32 %s67, 1
    %p71 = scmp.eq.s32.totalorder %s12, 1
    %p72 = scmp.ne.s32.totalorder %s67, %s69
    %p73 = scmp.eq.s32.totalorder %s12, 0
    %p74 = por %p72, %p73
    %p75 = scmp.ne.s32.totalorder %s67, %s69
    %p76 = scmp.eq.s32.totalorder %s17, 1
    %p77 = por %p75, %p76
    %p78 = scmp.ne.s32.totalorder %s69, %s70
    %p79 = scmp.eq.s32.totalorder %s17, 0
    %p80 = por %p78, %p79
    %p81 = scmp.ne.s32.totalorder %s69, %s70
    %p82 = scmp.eq.s32.totalorder %s18, 1
    %p83 = por %p81, %p82
    %p85 = scmp.ne.s32.totalorder %s70, %s84
    %p86 = scmp.eq.s32.totalorder %s18, 0
    %p87 = por %p85, %p86
    %s89 = sadd.s32 %s88, 1
    %p92 = scmp.eq.s32.totalorder %s12, 1
    %p93 = scmp.ne.s32.totalorder %s88, %s90
    %p94 = scmp.eq.s32.totalorder %s12, 0
    %p95 = por %p93, %p94
    %p96 = scmp.ne.s32.totalorder %s88, %s90
    %p97 = scmp.eq.s32.totalorder %s17, 1
    %p98 = por %p96, %p97
    %p99 = scmp.ne.s32.totalorder %s90, %s91
    %p100 = scmp.eq.s32.totalorder %s17, 0
    %p101 = por %p99, %p100
    %p102 = scmp.ne.s32.totalorder %s90, %s91
    %p103 = scmp.eq.s32.totalorder %s18, 1
    %p104 = por %p102, %p103
    %p106 = scmp.ne.s32.totalorder %s91, %s105
    %p107 = scmp.eq.s32.totalorder %s18, 0
    %p108 = por %p106, %p107
    %s110 = sadd.s32 %s109, 1
    %p113 = scmp.eq.s32.totalorder %s12, 1
    %p114 = scmp.ne.s32.totalorder %s109, %s111
    %p115 = scmp.eq.s32.totalorder %s12, 0
    %p116 = por %p114, %p115
    %p117 = scmp.ne.s32.totalorder %s109, %s111
    %p118 = scmp.eq.s32.totalorder %s17, 1
    %p119 = por %p117, %p118
    %p120 = scmp.ne.s32.totalorder %s111, %s112
    %p121 = scmp.eq.s32.totalorder %s17, 0
    %p122 = por %p120, %p121
    %p123 = scmp.ne.s32.totalorder %s111, %s112
    %p124 = scmp.eq.s32.totalorder %s18, 1
    %p125 = por %p123, %p124
    %p127 = scmp.ne.s32.totalorder %s112, %s126
    %p128 = scmp.eq.s32.totalorder %s18, 0
    %p129 = por %p127, %p128
    %s131 = sadd.s32 %s130, 1
    %p134 = scmp.eq.s32.totalorder %s12, 1
    %p135 = scmp.ne.s32.totalorder %s130, %s132
    %p136 = scmp.eq.s32.totalorder %s12, 0
    %p137 = por %p135, %p136
    %p138 = scmp.ne.s32.totalorder %s130, %s132
    %p139 = scmp.eq.s32.totalorder %s17, 1
    %p140 = por %p138, %p139
    %p141 = scmp.ne.s32.totalorder %s132, %s133
    %p142 = scmp.eq.s32.totalorder %s17, 0
    %p143 = por %p141, %p142
    %p144 = scmp.ne.s32.totalorder %s132, %s133
    %p145 = scmp.eq.s32.totalorder %s18, 1
    %p146 = por %p144, %p145
    %p148 = scmp.ne.s32.totalorder %s133, %s147
    %p149 = scmp.eq.s32.totalorder %s18, 0
    %p150 = por %p148, %p149
    %s151 = ssub.s32 %s12, %s19
    %p152 = scmp.eq.s32.totalorder %s151, 0
    %s154 = sadd.s32 %s153, 1
    %s155 = scalar_select %p152, %s153, %s154
    %p158 = pneg %p152
    %p159 = scmp.eq.s32.totalorder %s12, 1
    %p160 = por %p158, %p159
    %p161 = scmp.ne.s32.totalorder %s153, %s156
    %p162 = scmp.eq.s32.totalorder %s12, 0
    %p163 = por %p161, %p162
    %p164 = scmp.ne.s32.totalorder %s153, %s156
    %p165 = scmp.eq.s32.totalorder %s17, 1
    %p166 = por %p164, %p165
    %p167 = scmp.ne.s32.totalorder %s156, %s157
    %p168 = scmp.eq.s32.totalorder %s17, 0
    %p169 = por %p167, %p168
    %p170 = scmp.ne.s32.totalorder %s156, %s157
    %p171 = scmp.eq.s32.totalorder %s18, 1
    %p172 = por %p170, %p171
    %p174 = scmp.ne.s32.totalorder %s157, %s173
    %p175 = scmp.eq.s32.totalorder %s18, 0
    %p176 = por %p174, %p175
    %p177 = scmp.le.s32.totalorder 1, %s12
    %p178 = scmp.lt.s32.totalorder %s12, 3
    %p179 = pnand %p177, %p178
    %p180 = pneg %p179
    // Predicated region
    $region9: #{encoder_forward.4} parent=5 // pred_check
      _
    $region10: #{encoder_forward.4} parent=5 // pred_check_branch
      %182 = sbr.rel (%p179) target = $region12
    $region11: #{encoder_forward.4} parent=5 // pred_region
      %s183 = ssub.s32 %s12, 1
      // Predicated region
      $region13: #{encoder_forward.4} parent=11 // pred_check
        %p184 = pneg %p59
      $region14: #{encoder_forward.4} parent=11 // pred_check_branch
        %186 = sbr.rel (%p184) target = $region16
      $region15: #{encoder_forward.4} parent=11 // pred_region
        _
      $region16: #{encoder_forward.4} parent=11 // pred_fallthru
        _
      // Predicated region
      $region17: #{encoder_forward.4} parent=11 // pred_check
        %p187 = pneg %p80
      $region18: #{encoder_forward.4} parent=11 // pred_check_branch
        %189 = sbr.rel (%p187) target = $region20
      $region19: #{encoder_forward.4} parent=11 // pred_region
        _
      $region20: #{encoder_forward.4} parent=11 // pred_fallthru
        _
      // Predicated region
      $region21: #{encoder_forward.4} parent=11 // pred_check
        %p190 = pneg %p101
      $region22: #{encoder_forward.4} parent=11 // pred_check_branch
        %192 = sbr.rel (%p190) target = $region24
      $region23: #{encoder_forward.4} parent=11 // pred_region
        _
      $region24: #{encoder_forward.4} parent=11 // pred_fallthru
        _
      // Predicated region
      $region25: #{encoder_forward.4} parent=11 // pred_check
        %p193 = pneg %p122
      $region26: #{encoder_forward.4} parent=11 // pred_check_branch
        %195 = sbr.rel (%p193) target = $region28
      $region27: #{encoder_forward.4} parent=11 // pred_region
        _
      $region28: #{encoder_forward.4} parent=11 // pred_fallthru
        _
      // Predicated region
      $region29: #{encoder_forward.4} parent=11 // pred_check
        %p196 = pneg %p143
      $region30: #{encoder_forward.4} parent=11 // pred_check_branch
        %198 = sbr.rel (%p196) target = $region32
      $region31: #{encoder_forward.4} parent=11 // pred_region
        _
      $region32: #{encoder_forward.4} parent=11 // pred_fallthru
        _
    $region12: #{encoder_forward.4} parent=5 // pred_fallthru
      _
    %p199 = scmp.lt.s32.totalorder %s12, 2
    // Predicated region
    $region33: #{encoder_forward.4} parent=5 // pred_check
      %p200 = pneg %p199
    $region34: #{encoder_forward.4} parent=5 // pred_check_branch
      %202 = sbr.rel (%p200) target = $region36
    $region35: #{encoder_forward.4} parent=5 // pred_region
      // Predicated region
      $region37: #{encoder_forward.4} parent=35 // pred_check
        %p203 = pneg %p32
      $region38: #{encoder_forward.4} parent=35 // pred_check_branch
        %205 = sbr.rel (%p203) target = $region40
      $region39: #{encoder_forward.4} parent=35 // pred_region
        %p206 = scmp.lt.s32.totalorder %s12, 1
        %s207 = scalar_select %p206, %s12, 1
        %s208 = smul.addr %s207, 20
        %s209 = smul.addr %s208, 8
        %s210 = scalar_lea.vmem %s0, %s209
      $region40: #{encoder_forward.4} parent=35 // pred_fallthru
        _
    $region36: #{encoder_forward.4} parent=5 // pred_fallthru
      _
    %p211 = scmp.le.s32.totalorder 1, %s12
    %p212 = scmp.lt.s32.totalorder %s12, 3
    %p213 = pnand %p211, %p212
    %p214 = pneg %p213
    // Predicated region
    $region41: #{encoder_forward.4} parent=5 // pred_check
      _
    $region42: #{encoder_forward.4} parent=5 // pred_check_branch
      %216 = sbr.rel (%p213) target = $region44
    $region43: #{encoder_forward.4} parent=5 // pred_region
      %s217 = ssub.s32 %s12, 1
      %p218 = scmp.lt.s32.totalorder %s17, 1
      %s219 = scalar_select %p218, %s17, 1
      %s220 = smul.addr %s219, 20
      %s221 = smul.addr %s220, 8
      %s222 = scalar_lea.vmem %s0, %s221
      %p223 = pneg %p38
      %p224 = pneg %p35
      %p225 = pneg %p59
      %p226 = pneg %p56
      %p227 = pneg %p80
      %p228 = pneg %p77
      %p229 = pneg %p101
      %p230 = pneg %p98
      %p231 = pneg %p122
      %p232 = pneg %p119
      %p233 = pneg %p143
      %p234 = pneg %p140
      %p235 = pneg %p169
      %p236 = pneg %p166
      %p237 = scmp.lt.s32.totalorder %s17, 1
      %s238 = scalar_select %p237, %s17, 1
      %s239 = smul.addr %s238, 20
      %s240 = smul.addr %s239, 4
      %s241 = scalar_lea.vmem %s6, %s240
      %p242 = scmp.lt.s32.totalorder %s17, 1
      %s243 = scalar_select %p242, %s17, 1
      %s244 = smul.addr %s243, 20
      %s245 = smul.addr %s244, 8
      %s246 = scalar_lea.vmem %s0, %s245
      %p247 = scmp.lt.s32.totalorder %s17, 1
      %s248 = scalar_select %p247, %s17, 1
      %s249 = smul.addr %s248, 20
      %s250 = smul.addr %s249, 4
      %s251 = scalar_lea.vmem %s6, %s250
      %v252 = vld [vmem:[%s246] sm:$0xff]
      %v253 = vld [vmem:[%s246 + $0x8] sm:$0x3]
      %v254 = vld [vmem:[%s246 + $0x10] sm:$0xff]
      %v255 = vld [vmem:[%s246 + $0x18] sm:$0x3]
      %v256 = vld [vmem:[%s246 + $0x20] sm:$0xff]
      %v257 = vld [vmem:[%s246 + $0x28] sm:$0x3]
      %v258 = vld [vmem:[%s246 + $0x30] sm:$0xff]
      %v259 = vld [vmem:[%s246 + $0x38] sm:$0x3]
      %v260 = vld [vmem:[%s246 + $0x40] sm:$0xff]
      %v261 = vld [vmem:[%s246 + $0x48] sm:$0x3]
      %v262 = vld [vmem:[%s246 + $0x50] sm:$0xff]
      %v263 = vld [vmem:[%s246 + $0x58] sm:$0x3]
      %v264 = vld [vmem:[%s246 + $0x60] sm:$0xff]
      %v265 = vld [vmem:[%s246 + $0x68] sm:$0x3]
      %v266 = vld [vmem:[%s246 + $0x70] sm:$0xff]
      %v267 = vld [vmem:[%s246 + $0x78] sm:$0x3]
      %v268 = vld [vmem:[%s246 + $0x80] sm:$0xff]
      %v269 = vld [vmem:[%s246 + $0x88] sm:$0x3]
      %v270 = vld [vmem:[%s246 + $0x90] sm:$0xff]
      %v271 = vld [vmem:[%s246 + $0x98] sm:$0x3]
      %v272 = vlaneseq
      %v273 = vshrl.u32 %v272, 7
      %v274 = vadd.s32 %v273, 8
      %vm275 = vcmp.ge.s32.totalorder %v273, 1
      %vm276 = vcmp.ge.s32.totalorder %v274, 1
      %vm277 = vmand 0, %vm275
      %vm278 = vmand 0, %vm276
      %vm279 = vmand 1, %vm275
      %vm280 = vmand 1, %vm276
      %vm281 = vcmp.le.s32.totalorder %v273, 8
      %vm282 = vcmp.le.s32.totalorder %v274, 8
      %vm283 = vmand %vm277, %vm281
      %vm284 = vmand %vm278, %vm282
      %vm285 = vmand %vm279, %vm281
      %vm286 = vmand %vm280, %vm282
      %v287 = vsel %vm283, 1, 0
      %v288 = vsel %vm284, 1, 0
      %v289 = vsel %vm285, 1, 0
      %v290 = vsel %vm286, 1, 0
      %v291 = vcvt.s32.f32 %v287
      %v292 = vcvt.s32.f32 %v288
      %v293 = vcvt.s32.f32 %v289
      %v294 = vcvt.s32.f32 %v290
      %v295 = vld [vmem:[%s3] sm:$0x1]
      %v297 = vperm.slane %v295, 0
      %v299 = vmul.f32 %v291, %v297
      %v300 = vmul.f32 %v292, %v297
      %v301 = vmul.f32 %v293, %v297
      %v302 = vmul.f32 %v294, %v297
      %vm303 = vcmask 326656
      %v304 = vsel %vm303, %v252, 0.0
      %v305 = vsel %vm303, %v254, 0.0
      %v306 = vadd.f32 %v304, %v305
      %v307 = vsel %vm303, %v256, 0.0
      %v308 = vadd.f32 %v306, %v307
      %v309 = vsel %vm303, %v258, 0.0
      %v310 = vadd.f32 %v308, %v309
      %v311 = vsel %vm303, %v260, 0.0
      %v312 = vadd.f32 %v310, %v311
      %v313 = vsel %vm303, %v262, 0.0
      %v314 = vadd.f32 %v312, %v313
      %v315 = vsel %vm303, %v264, 0.0
      %v316 = vadd.f32 %v314, %v315
      %v317 = vsel %vm303, %v266, 0.0
      %v318 = vadd.f32 %v316, %v317
      %v319 = vsel %vm303, %v268, 0.0
      %v320 = vadd.f32 %v318, %v319
      %v321 = vsel %vm303, %v270, 0.0
      %v322 = vadd.f32 %v320, %v321
      %vm323 = vcmask 320512
      %v324 = vsel %vm323, %v253, 0.0
      %v325 = vsel %vm323, %v255, 0.0
      %v326 = vadd.f32 %v324, %v325
      %v327 = vsel %vm323, %v257, 0.0
      %v328 = vadd.f32 %v326, %v327
      %v329 = vsel %vm323, %v259, 0.0
      %v330 = vadd.f32 %v328, %v329
      %v331 = vsel %vm323, %v261, 0.0
      %v332 = vadd.f32 %v330, %v331
      %v333 = vsel %vm323, %v263, 0.0
      %v334 = vadd.f32 %v332, %v333
      %v335 = vsel %vm323, %v265, 0.0
      %v336 = vadd.f32 %v334, %v335
      %v337 = vsel %vm323, %v267, 0.0
      %v338 = vadd.f32 %v336, %v337
      %v339 = vsel %vm323, %v269, 0.0
      %v340 = vadd.f32 %v338, %v339
      %v341 = vsel %vm323, %v271, 0.0
      %v342 = vadd.f32 %v340, %v341
      %v343 = vsel %vm303, %v322, 0.0
      %v344 = vsel %vm323, %v342, 0.0
      %v345 = vadd.f32 %v343, %v344
      %v346 = vrot.slane %v345, 4
      %v347 = vadd.f32 %v345, %v346
      %v348 = vrot.slane %v347, 2
      %v349 = vadd.f32 %v347, %v348
      %v350 = vrot.slane %v349, 1
      %v351 = vadd.f32 %v349, %v350
      %v352 = vld [vmem:[%s4] sm:$0xff]
      %v353 = vld [vmem:[%s4 + $0x8] sm:$0xff]
      %v354 = vld [vmem:[%s4 + $0x10] sm:$0xff]
      %v355 = vld [vmem:[%s4 + $0x18] sm:$0xff]
      %v356 = vld [vmem:[%s4 + $0x20] sm:$0xff]
      %v358 = vsel %vm303, %v351, 0
      %360 = vmatpush.msra.mxu0 0.0
      %361 = vmatpush.msra.mxu0 0.0
      %362 = vmatpush.msra.mxu0 0.0
      %363 = vmatpush.msra.mxu0 0.0
      %364 = vmatpush.msra.mxu0 0.0
      %365 = vmatpush.msra.mxu0 0.0
      %366 = vmatpush.msra.mxu0 0.0
      %367 = vmatpush.msra.mxu0 0.0
      %368 = vmatpush.msra.mxu0 0.0
      %369 = vmatpush.msra.mxu0 0.0
      %370 = vmatpush.msra.mxu0 0.0
      %371 = vmatpush.msra.mxu0 %v356
      %372 = vmatpush.msra.mxu0 %v355
      %373 = vmatpush.msra.mxu0 %v354
      %374 = vmatpush.msra.mxu0 %v353
      %375 = vmatpush.msra.mxu0 %v352
      %376 = vmatmul.f32.gmra.mxu0 %v358
      %v377 = vpop.f32.mrf.mxu0
      %v378 = vadd.f32 0.0, %v377
      %379 = vdwg.mxu0
      %v380 = vperm.slane %v378, 0
      %v381 = vsub.f32 %v252, %v380
      %v382 = vsub.f32 %v253, %v380
      %v383 = vsub.f32 %v254, %v380
      %v384 = vsub.f32 %v255, %v380
      %v385 = vsub.f32 %v256, %v380
      %v386 = vsub.f32 %v257, %v380
      %v387 = vsub.f32 %v258, %v380
      %v388 = vsub.f32 %v259, %v380
      %v389 = vsub.f32 %v260, %v380
      %v390 = vsub.f32 %v261, %v380
      %v391 = vsub.f32 %v262, %v380
      %v392 = vsub.f32 %v263, %v380
      %v393 = vsub.f32 %v264, %v380
      %v394 = vsub.f32 %v265, %v380
      %v395 = vsub.f32 %v266, %v380
      %v396 = vsub.f32 %v267, %v380
      %v397 = vsub.f32 %v268, %v380
      %v398 = vsub.f32 %v269, %v380
      %v399 = vsub.f32 %v270, %v380
      %v400 = vsub.f32 %v271, %v380
      %v401 = vmul.f32 %v381, %v299
      %v402 = vmul.f32 %v382, %v300
      %v403 = vmul.f32 %v383, %v301
      %v404 = vmul.f32 %v384, %v302
      %v405 = vmul.f32 %v385, %v301
      %v406 = vmul.f32 %v386, %v302
      %v407 = vmul.f32 %v387, %v301
      %v408 = vmul.f32 %v388, %v302
      %v409 = vmul.f32 %v389, %v301
      %v410 = vmul.f32 %v390, %v302
      %v411 = vmul.f32 %v391, %v301
      %v412 = vmul.f32 %v392, %v302
      %v413 = vmul.f32 %v393, %v301
      %v414 = vmul.f32 %v394, %v302
      %v415 = vmul.f32 %v395, %v301
      %v416 = vmul.f32 %v396, %v302
      %v417 = vmul.f32 %v397, %v301
      %v418 = vmul.f32 %v398, %v302
      %v419 = vmul.f32 %v399, %v299
      %v420 = vmul.f32 %v400, %v300
      %v421 = vmul.f32 %v401, %v401
      %v422 = vmul.f32 %v402, %v402
      %v423 = vmul.f32 %v403, %v403
      %v424 = vmul.f32 %v404, %v404
      %v425 = vmul.f32 %v405, %v405
      %v426 = vmul.f32 %v406, %v406
      %v427 = vmul.f32 %v407, %v407
      %v428 = vmul.f32 %v408, %v408
      %v429 = vmul.f32 %v409, %v409
      %v430 = vmul.f32 %v410, %v410
      %v431 = vmul.f32 %v411, %v411
      %v432 = vmul.f32 %v412, %v412
      %v433 = vmul.f32 %v413, %v413
      %v434 = vmul.f32 %v414, %v414
      %v435 = vmul.f32 %v415, %v415
      %v436 = vmul.f32 %v416, %v416
      %v437 = vmul.f32 %v417, %v417
      %v438 = vmul.f32 %v418, %v418
      %v439 = vmul.f32 %v419, %v419
      %v440 = vmul.f32 %v420, %v420
      %v441 = vsel %vm303, %v421, 0.0
      %v442 = vsel %vm303, %v423, 0.0
      %v443 = vadd.f32 %v441, %v442
      %v444 = vsel %vm303, %v425, 0.0
      %v445 = vadd.f32 %v443, %v444
      %v446 = vsel %vm303, %v427, 0.0
      %v447 = vadd.f32 %v445, %v446
      %v448 = vsel %vm303, %v429, 0.0
      %v449 = vadd.f32 %v447, %v448
      %v450 = vsel %vm303, %v431, 0.0
      %v451 = vadd.f32 %v449, %v450
      %v452 = vsel %vm303, %v433, 0.0
      %v453 = vadd.f32 %v451, %v452
      %v454 = vsel %vm303, %v435, 0.0
      %v455 = vadd.f32 %v453, %v454
      %v456 = vsel %vm303, %v437, 0.0
      %v457 = vadd.f32 %v455, %v456
      %v458 = vsel %vm303, %v439, 0.0
      %v459 = vadd.f32 %v457, %v458
      %v460 = vsel %vm323, %v422, 0.0
      %v461 = vsel %vm323, %v424, 0.0
      %v462 = vadd.f32 %v460, %v461
      %v463 = vsel %vm323, %v426, 0.0
      %v464 = vadd.f32 %v462, %v463
      %v465 = vsel %vm323, %v428, 0.0
      %v466 = vadd.f32 %v464, %v465
      %v467 = vsel %vm323, %v430, 0.0
      %v468 = vadd.f32 %v466, %v467
      %v469 = vsel %vm323, %v432, 0.0
      %v470 = vadd.f32 %v468, %v469
      %v471 = vsel %vm323, %v434, 0.0
      %v472 = vadd.f32 %v470, %v471
      %v473 = vsel %vm323, %v436, 0.0
      %v474 = vadd.f32 %v472, %v473
      %v475 = vsel %vm323, %v438, 0.0
      %v476 = vadd.f32 %v474, %v475
      %v477 = vsel %vm323, %v440, 0.0
      %v478 = vadd.f32 %v476, %v477
      %v479 = vsel %vm303, %v459, 0.0
      %v480 = vsel %vm323, %v478, 0.0
      %v481 = vadd.f32 %v479, %v480
      %v482 = vrot.slane %v481, 4
      %v483 = vadd.f32 %v481, %v482
      %v484 = vrot.slane %v483, 2
      %v485 = vadd.f32 %v483, %v484
      %v486 = vrot.slane %v485, 1
      %v487 = vadd.f32 %v485, %v486
      %v488 = vld [vmem:[%s1] sm:$0x1]
      %v490 = vsel %vm303, %v487, 0
      %492 = vmatpush.msra.mxu0 0.0
      %493 = vmatpush.msra.mxu0 0.0
      %494 = vmatpush.msra.mxu0 0.0
      %495 = vmatpush.msra.mxu0 0.0
      %496 = vmatpush.msra.mxu0 0.0
      %497 = vmatpush.msra.mxu0 0.0
      %498 = vmatpush.msra.mxu0 0.0
      %499 = vmatpush.msra.mxu0 0.0
      %500 = vmatpush.msra.mxu0 0.0
      %501 = vmatpush.msra.mxu0 0.0
      %502 = vmatpush.msra.mxu0 0.0
      %503 = vmatpush.msra.mxu0 %v356
      %504 = vmatpush.msra.mxu0 %v355
      %505 = vmatpush.msra.mxu0 %v354
      %506 = vmatpush.msra.mxu0 %v353
      %507 = vmatpush.msra.mxu0 %v352
      %508 = vmatmul.f32.gmra.mxu0 %v490
      %v509 = vpop.f32.mrf.mxu0
      %v510 = vadd.f32 1e-05, %v509
      %511 = vdwg.mxu0
      %v512 = vrsqrt.pop %v510
      %v513 = vmul.f32 %v512, %v510
      %v514 = vmul.f32 %v513, %v512
      %v515 = vmul.f32 0.5, %v514
      %v516 = vsub.f32 1.5, %v515
      %v517 = vmul.f32 %v512, %v516
      %vm518 = vweird.f32 %v510
      %vm519 = vweird.f32 %v512
      %vm520 = vmor %vm518, %vm519
      %v521 = vsel %vm520, %v512, %v517
      %v522 = vmul.f32 %v488, %v521
      %v524 = vperm.slane %v522, 0
      %v526 = vmul.f32 %v401, %v524
      %v527 = vmul.f32 %v402, %v524
      %v528 = vmul.f32 %v403, %v524
      %v529 = vmul.f32 %v404, %v524
      %v530 = vmul.f32 %v405, %v524
      %v531 = vmul.f32 %v406, %v524
      %v532 = vmul.f32 %v407, %v524
      %v533 = vmul.f32 %v408, %v524
      %v534 = vmul.f32 %v409, %v524
      %v535 = vmul.f32 %v410, %v524
      %v536 = vmul.f32 %v411, %v524
      %v537 = vmul.f32 %v412, %v524
      %v538 = vmul.f32 %v413, %v524
      %v539 = vmul.f32 %v414, %v524
      %v540 = vmul.f32 %v415, %v524
      %v541 = vmul.f32 %v416, %v524
      %v542 = vmul.f32 %v417, %v524
      %v543 = vmul.f32 %v418, %v524
      %v544 = vmul.f32 %v419, %v524
      %v545 = vmul.f32 %v420, %v524
      %v546 = vld [vmem:[%s2] sm:$0x1]
      %v548 = vperm.slane %v546, 0
      %v550 = vmul.f32 %v548, %v299
      %v551 = vmul.f32 %v548, %v300
      %v552 = vmul.f32 %v548, %v301
      %v553 = vmul.f32 %v548, %v302
      %v554 = vadd.f32 %v526, %v550
      %v555 = vadd.f32 %v527, %v551
      %v556 = vadd.f32 %v528, %v552
      %v557 = vadd.f32 %v529, %v553
      %v558 = vadd.f32 %v530, %v552
      %v559 = vadd.f32 %v531, %v553
      %v560 = vadd.f32 %v532, %v552
      %v561 = vadd.f32 %v533, %v553
      %v562 = vadd.f32 %v534, %v552
      %v563 = vadd.f32 %v535, %v553
      %v564 = vadd.f32 %v536, %v552
      %v565 = vadd.f32 %v537, %v553
      %v566 = vadd.f32 %v538, %v552
      %v567 = vadd.f32 %v539, %v553
      %v568 = vadd.f32 %v540, %v552
      %v569 = vadd.f32 %v541, %v553
      %v570 = vadd.f32 %v542, %v552
      %v571 = vadd.f32 %v543, %v553
      %v572 = vadd.f32 %v544, %v550
      %v573 = vadd.f32 %v545, %v551
      %v574 = vpack.c.bf16 %v554, %v554
      %v575 = vpack.c.bf16 %v555, %v555
      %v576 = vpack.c.bf16 %v556, %v556
      %v577 = vpack.c.bf16 %v557, %v557
      %v578 = vpack.c.bf16 %v558, %v558
      %v579 = vpack.c.bf16 %v559, %v559
      %v580 = vpack.c.bf16 %v560, %v560
      %v581 = vpack.c.bf16 %v561, %v561
      %v582 = vpack.c.bf16 %v562, %v562
      %v583 = vpack.c.bf16 %v563, %v563
      %v584 = vpack.c.bf16 %v564, %v564
      %v585 = vpack.c.bf16 %v565, %v565
      %v586 = vpack.c.bf16 %v566, %v566
      %v587 = vpack.c.bf16 %v567, %v567
      %v588 = vpack.c.bf16 %v568, %v568
      %v589 = vpack.c.bf16 %v569, %v569
      %v590 = vpack.c.bf16 %v570, %v570
      %v591 = vpack.c.bf16 %v571, %v571
      %v592 = vpack.c.bf16 %v572, %v572
      %v593 = vpack.c.bf16 %v573, %v573
      %vm594 = vsmask.f32 3328
      %vm595 = vsmask.f32 7440
      %vm596 = vmor %vm594, %vm595
      %v598 = vshrl.u32 %v574, 16
      %v600 = vrot.slane %v598, 4
      %v601 = vshll.u32 %v574, 16
      %v603 = vrot.slane %v601, 5
      %v604 = vor.u32 %v600, %v603
      %v605 = vrot.slane %v604, 4
      %v607 = vshll.u32 %v575, 16
      %v609 = vrot.slane %v607, 5
      %v610 = vsel %vm596, %v605, %v609
      %v612 = vshrl.u32 %v576, 16
      %v614 = vrot.slane %v612, 4
      %v615 = vshll.u32 %v576, 16
      %v617 = vrot.slane %v615, 5
      %v618 = vor.u32 %v614, %v617
      %v619 = vrot.slane %v618, 4
      %v621 = vshll.u32 %v577, 16
      %v623 = vrot.slane %v621, 5
      %v624 = vsel %vm596, %v619, %v623
      %v626 = vshrl.u32 %v578, 16
      %v628 = vrot.slane %v626, 4
      %v629 = vshll.u32 %v578, 16
      %v631 = vrot.slane %v629, 5
      %v632 = vor.u32 %v628, %v631
      %v633 = vrot.slane %v632, 4
      %v635 = vshll.u32 %v579, 16
      %v637 = vrot.slane %v635, 5
      %v638 = vsel %vm596, %v633, %v637
      %v640 = vshrl.u32 %v580, 16
      %v642 = vrot.slane %v640, 4
      %v643 = vshll.u32 %v580, 16
      %v645 = vrot.slane %v643, 5
      %v646 = vor.u32 %v642, %v645
      %v647 = vrot.slane %v646, 4
      %v649 = vshll.u32 %v581, 16
      %v651 = vrot.slane %v649, 5
      %v652 = vsel %vm596, %v647, %v651
      %v654 = vshrl.u32 %v582, 16
      %v656 = vrot.slane %v654, 4
      %v657 = vshll.u32 %v582, 16
      %v659 = vrot.slane %v657, 5
      %v660 = vor.u32 %v656, %v659
      %v661 = vrot.slane %v660, 4
      %v663 = vshll.u32 %v583, 16
      %v665 = vrot.slane %v663, 5
      %v666 = vsel %vm596, %v661, %v665
      %v668 = vshrl.u32 %v584, 16
      %v670 = vrot.slane %v668, 4
      %v671 = vshll.u32 %v584, 16
      %v673 = vrot.slane %v671, 5
      %v674 = vor.u32 %v670, %v673
      %v675 = vrot.slane %v674, 4
      %v677 = vshll.u32 %v585, 16
      %v679 = vrot.slane %v677, 5
      %v680 = vsel %vm596, %v675, %v679
      %v682 = vshrl.u32 %v586, 16
      %v684 = vrot.slane %v682, 4
      %v685 = vshll.u32 %v586, 16
      %v687 = vrot.slane %v685, 5
      %v688 = vor.u32 %v684, %v687
      %v689 = vrot.slane %v688, 4
      %v691 = vshll.u32 %v587, 16
      %v693 = vrot.slane %v691, 5
      %v694 = vsel %vm596, %v689, %v693
      %v696 = vshrl.u32 %v588, 16
      %v698 = vrot.slane %v696, 4
      %v699 = vshll.u32 %v588, 16
      %v701 = vrot.slane %v699, 5
      %v702 = vor.u32 %v698, %v701
      %v703 = vrot.slane %v702, 4
      %v705 = vshll.u32 %v589, 16
      %v707 = vrot.slane %v705, 5
      %v708 = vsel %vm596, %v703, %v707
      %vm725 = vcmask 1042432
      %vm726 = vcmask 1046532
      %vm727 = vmor %vm725, %vm726
      %v728 = vrot.slane %v574, 5
      %v729 = vrot.slane %v728, 4
      %v730 = vrot.slane %v575, 5
      %v731 = vsel %vm727, %v729, %v730
      %v732 = vrot.slane %v576, 5
      %v733 = vrot.slane %v732, 4
      %v734 = vrot.slane %v577, 5
      %v735 = vsel %vm727, %v733, %v734
      %v736 = vrot.slane %v578, 5
      %v737 = vrot.slane %v736, 4
      %v738 = vrot.slane %v579, 5
      %v739 = vsel %vm727, %v737, %v738
      %v740 = vrot.slane %v580, 5
      %v741 = vrot.slane %v740, 4
      %v742 = vrot.slane %v581, 5
      %v743 = vsel %vm727, %v741, %v742
      %v744 = vrot.slane %v582, 5
      %v745 = vrot.slane %v744, 4
      %v746 = vrot.slane %v583, 5
      %v747 = vsel %vm727, %v745, %v746
      %v748 = vrot.slane %v584, 5
      %v749 = vrot.slane %v748, 4
      %v750 = vrot.slane %v585, 5
      %v751 = vsel %vm727, %v749, %v750
      %v752 = vrot.slane %v586, 5
      %v753 = vrot.slane %v752, 4
      %v754 = vrot.slane %v587, 5
      %v755 = vsel %vm727, %v753, %v754
      %v756 = vrot.slane %v588, 5
      %v757 = vrot.slane %v756, 4
      %v758 = vrot.slane %v589, 5
      %v759 = vsel %vm727, %v757, %v758
      %v760 = vunpack.c.l.b16 %v574
      %v761 = vunpack.c.l.b16 %v576
      %v762 = vunpack.c.l.b16 %v578
      %v763 = vunpack.c.l.b16 %v580
      %v764 = vunpack.c.l.b16 %v582
      %v765 = vunpack.c.l.b16 %v584
      %v766 = vunpack.c.l.b16 %v586
      %v767 = vunpack.c.l.b16 %v588
      %v768 = vpack.c.b16 %v761, %v760
      %v769 = vpack.c.b16 %v763, %v762
      %v770 = vpack.c.b16 %v765, %v764
      %v771 = vpack.c.b16 %v767, %v766
      %v772 = vunpack.c.l.b16 %v610
      %v773 = vunpack.c.l.b16 %v624
      %v774 = vunpack.c.l.b16 %v638
      %v775 = vunpack.c.l.b16 %v652
      %v776 = vunpack.c.l.b16 %v666
      %v777 = vunpack.c.l.b16 %v680
      %v778 = vunpack.c.l.b16 %v694
      %v779 = vunpack.c.l.b16 %v708
      %v780 = vpack.c.b16 %v773, %v772
      %v781 = vpack.c.b16 %v775, %v774
      %v782 = vpack.c.b16 %v777, %v776
      %v783 = vpack.c.b16 %v779, %v778
      %784 = vrot.lane.b32.xlu0 %v780, 40
      %v785 = vpop.permute.xlu0 %784
      %786 = vrot.lane.b32.xlu0 %v781, 40
      %v787 = vpop.permute.xlu0 %786
      %788 = vrot.lane.b32.xlu0 %v782, 40
      %v789 = vpop.permute.xlu0 %788
      %790 = vrot.lane.b32.xlu0 %v783, 40
      %v791 = vpop.permute.xlu0 %790
      %v792 = vunpack.c.l.b16 %v731
      %v793 = vunpack.c.l.b16 %v735
      %v794 = vunpack.c.l.b16 %v739
      %v795 = vunpack.c.l.b16 %v743
      %v796 = vunpack.c.l.b16 %v747
      %v797 = vunpack.c.l.b16 %v751
      %v798 = vunpack.c.l.b16 %v755
      %v799 = vunpack.c.l.b16 %v759
      %v800 = vpack.c.b16 %v793, %v792
      %v801 = vpack.c.b16 %v795, %v794
      %v802 = vpack.c.b16 %v797, %v796
      %v803 = vpack.c.b16 %v799, %v798
      %804 = vrot.lane.b32.xlu0 %v800, 80
      %v805 = vpop.permute.xlu0 %804
      %806 = vrot.lane.b32.xlu0 %v801, 80
      %v807 = vpop.permute.xlu0 %806
      %808 = vrot.lane.b32.xlu0 %v802, 80
      %v809 = vpop.permute.xlu0 %808
      %810 = vrot.lane.b32.xlu0 %v803, 80
      %v811 = vpop.permute.xlu0 %810
      %v814 = vsel %vm303, %v768, %v785
      %v817 = vsel %vm303, %v769, %v787
      %v820 = vsel %vm303, %v770, %v789
      %v823 = vsel %vm303, %v771, %v791
      %vm824 = vcmask 654336
      %v826 = vsel %vm824, %v814, %v805
      %v828 = vsel %vm824, %v817, %v807
      %v830 = vsel %vm824, %v820, %v809
      %v832 = vsel %vm824, %v823, %v811
      %v833 = vld [vmem:[%s5] sm:$0xf]
      %v834 = vld [vmem:[%s5 + $0x4] sm:$0xf]
      %v835 = vld [vmem:[%s5 + $0x8] sm:$0xf]
      %v836 = vld [vmem:[%s5 + $0xc] sm:$0xf]
      %v837 = vld [vmem:[%s5 + $0x10] sm:$0xf]
      %v838 = vld [vmem:[%s5 + $0x14] sm:$0xf]
      %v839 = vld [vmem:[%s5 + $0x18] sm:$0xf]
      %v840 = vld [vmem:[%s5 + $0x1c] sm:$0xf]
      %v841 = vld [vmem:[%s5 + $0x20] sm:$0xf]
      %v842 = vld [vmem:[%s5 + $0x24] sm:$0xf]
      %v843 = vld [vmem:[%s5 + $0x28] sm:$0xf]
      %v844 = vld [vmem:[%s5 + $0x2c] sm:$0xf]
      %v845 = vld [vmem:[%s5 + $0x30] sm:$0xf]
      %v846 = vld [vmem:[%s5 + $0x34] sm:$0xf]
      %v847 = vld [vmem:[%s5 + $0x38] sm:$0xf]
      %v849 = vshrl.u32 %v590, 16
      %v851 = vrot.slane %v849, 4
      %v852 = vshll.u32 %v590, 16
      %v854 = vrot.slane %v852, 5
      %v855 = vor.u32 %v851, %v854
      %v856 = vrot.slane %v855, 4
      %v858 = vshll.u32 %v591, 16
      %v860 = vrot.slane %v858, 5
      %v861 = vsel %vm596, %v856, %v860
      %v864 = vrot.slane %v590, 5
      %v865 = vrot.slane %v864, 4
      %v866 = vrot.slane %v591, 5
      %v867 = vsel %vm727, %v865, %v866
      %v868 = vunpack.c.l.b16 %v590
      %v869 = vpack.c.b16 %v762, %v761
      %v870 = vpack.c.b16 %v764, %v763
      %v871 = vpack.c.b16 %v766, %v765
      %v872 = vpack.c.b16 %v868, %v767
      %v873 = vunpack.c.l.b16 %v861
      %v874 = vpack.c.b16 %v774, %v773
      %v875 = vpack.c.b16 %v776, %v775
      %v876 = vpack.c.b16 %v778, %v777
      %v877 = vpack.c.b16 %v873, %v779
      %878 = vrot.lane.b32.xlu0 %v874, 40
      %v879 = vpop.permute.xlu0 %878
      %880 = vrot.lane.b32.xlu0 %v875, 40
      %v881 = vpop.permute.xlu0 %880
      %882 = vrot.lane.b32.xlu0 %v876, 40
      %v883 = vpop.permute.xlu0 %882
      %884 = vrot.lane.b32.xlu0 %v877, 40
      %v885 = vpop.permute.xlu0 %884
      %v886 = vunpack.c.l.b16 %v867
      %v887 = vpack.c.b16 %v794, %v793
      %v888 = vpack.c.b16 %v796, %v795
      %v889 = vpack.c.b16 %v798, %v797
      %v890 = vpack.c.b16 %v886, %v799
      %891 = vrot.lane.b32.xlu0 %v887, 80
      %v892 = vpop.permute.xlu0 %891
      %893 = vrot.lane.b32.xlu0 %v888, 80
      %v894 = vpop.permute.xlu0 %893
      %895 = vrot.lane.b32.xlu0 %v889, 80
      %v896 = vpop.permute.xlu0 %895
      %897 = vrot.lane.b32.xlu0 %v890, 80
      %v898 = vpop.permute.xlu0 %897
      %v901 = vsel %vm303, %v869, %v879
      %v904 = vsel %vm303, %v870, %v881
      %v907 = vsel %vm303, %v871, %v883
      %v910 = vsel %vm303, %v872, %v885
      %v912 = vsel %vm824, %v901, %v892
      %v914 = vsel %vm824, %v904, %v894
      %v916 = vsel %vm824, %v907, %v896
      %v918 = vsel %vm824, %v910, %v898
      %s919 = scalar_lea.vmem %s5, 60
      %v920 = vld [vmem:[%s919] sm:$0xf]
      %v921 = vld [vmem:[%s919 + $0x4] sm:$0xf]
      %v922 = vld [vmem:[%s919 + $0x8] sm:$0xf]
      %v923 = vld [vmem:[%s919 + $0xc] sm:$0xf]
      %v924 = vld [vmem:[%s919 + $0x10] sm:$0xf]
      %v925 = vld [vmem:[%s919 + $0x14] sm:$0xf]
      %v926 = vld [vmem:[%s919 + $0x18] sm:$0xf]
      %v927 = vld [vmem:[%s919 + $0x1c] sm:$0xf]
      %v928 = vld [vmem:[%s919 + $0x20] sm:$0xf]
      %v929 = vld [vmem:[%s919 + $0x24] sm:$0xf]
      %v930 = vld [vmem:[%s919 + $0x28] sm:$0xf]
      %v931 = vld [vmem:[%s919 + $0x2c] sm:$0xf]
      %v932 = vld [vmem:[%s919 + $0x30] sm:$0xf]
      %v933 = vld [vmem:[%s919 + $0x34] sm:$0xf]
      %v934 = vld [vmem:[%s919 + $0x38] sm:$0xf]
      %v950 = vunpack.c.l.b16 %v920
      %v951 = vunpack.c.l.b16 %v921
      %v952 = vunpack.c.l.b16 %v922
      %v953 = vunpack.c.l.b16 %v923
      %v954 = vunpack.c.l.b16 %v924
      %v955 = vunpack.c.l.b16 %v925
      %v956 = vunpack.c.l.b16 %v926
      %v957 = vunpack.c.l.b16 %v927
      %v958 = vunpack.c.l.b16 %v928
      %v959 = vunpack.c.l.b16 %v929
      %v960 = vunpack.c.l.b16 %v930
      %v961 = vunpack.c.l.b16 %v931
      %v962 = vunpack.c.l.b16 %v932
      %v963 = vunpack.c.l.b16 %v933
      %v964 = vunpack.c.l.b16 %v934
      %v965 = vpack.c.b16 %v951, %v950
      %v966 = vpack.c.b16 %v953, %v952
      %v967 = vpack.c.b16 %v955, %v954
      %v968 = vpack.c.b16 %v957, %v956
      %v969 = vpack.c.b16 %v959, %v958
      %v970 = vpack.c.b16 %v961, %v960
      %v971 = vpack.c.b16 %v963, %v962
      %v972 = vpack.c.b16 %v964, %v964
      %vm980 = vcmask 982016
      %v981 = vsel %vm980, %v912, 0
      %v983 = vsel %vm980, %v914, 0
      %v985 = vsel %vm980, %v916, 0
      %v987 = vsel %vm980, %v918, 0
      %vm989 = vcmask 1043456
      %v991 = vsel %vm989, %v972, 0
      %993 = vmatpush.bf16.msra.mxu0 %v991
      %994 = vmatpush.bf16.msra.mxu0 %v971
      %995 = vmatpush.bf16.msra.mxu0 %v970
      %996 = vmatpush.bf16.msra.mxu0 %v969
      %997 = vmatpush.bf16.msra.mxu0 %v968
      %998 = vmatpush.bf16.msra.mxu0 %v967
      %999 = vmatpush.bf16.msra.mxu0 %v966
      %1000 = vmatpush.bf16.msra.mxu0 %v965
      %1001 = vmatmul.bf16.gmra.mxu0 %v981
      %v1002 = vpop.f32.mrf.mxu0
      %v1003 = vadd.f32 0.0, %v1002
      %v1004 = vpop.f32.mrf.mxu0
      %v1005 = vadd.f32 0.0, %v1004
      %1006 = vmatmul.bf16.gmra.mxu0 %v983
      %v1007 = vpop.f32.mrf.mxu0
      %v1008 = vadd.f32 0.0, %v1007
      %v1009 = vpop.f32.mrf.mxu0
      %v1010 = vadd.f32 0.0, %v1009
      %1011 = vmatmul.bf16.gmra.mxu0 %v985
      %v1012 = vpop.f32.mrf.mxu0
      %v1013 = vadd.f32 0.0, %v1012
      %v1014 = vpop.f32.mrf.mxu0
      %v1015 = vadd.f32 0.0, %v1014
      %1016 = vmatmul.bf16.gmra.mxu0 %v987
      %v1017 = vpop.f32.mrf.mxu0
      %v1018 = vadd.f32 0.0, %v1017
      %v1019 = vpop.f32.mrf.mxu0
      %v1020 = vadd.f32 0.0, %v1019
      %1021 = vdwg.mxu0
      %v1037 = vunpack.c.l.b16 %v833
      %v1038 = vunpack.c.l.b16 %v834
      %v1039 = vunpack.c.l.b16 %v835
      %v1040 = vunpack.c.l.b16 %v836
      %v1041 = vunpack.c.l.b16 %v837
      %v1042 = vunpack.c.l.b16 %v838
      %v1043 = vunpack.c.l.b16 %v839
      %v1044 = vunpack.c.l.b16 %v840
      %v1045 = vunpack.c.l.b16 %v841
      %v1046 = vunpack.c.l.b16 %v842
      %v1047 = vunpack.c.l.b16 %v843
      %v1048 = vunpack.c.l.b16 %v844
      %v1049 = vunpack.c.l.b16 %v845
      %v1050 = vunpack.c.l.b16 %v846
      %v1051 = vunpack.c.l.b16 %v847
      %v1052 = vpack.c.b16 %v1038, %v1037
      %v1053 = vpack.c.b16 %v1040, %v1039
      %v1054 = vpack.c.b16 %v1042, %v1041
      %v1055 = vpack.c.b16 %v1044, %v1043
      %v1056 = vpack.c.b16 %v1046, %v1045
      %v1057 = vpack.c.b16 %v1048, %v1047
      %v1058 = vpack.c.b16 %v1050, %v1049
      %v1059 = vpack.c.b16 %v1051, %v1051
      %v1067 = vsel %vm980, %v826, 0
      %v1069 = vsel %vm980, %v828, 0
      %v1071 = vsel %vm980, %v830, 0
      %v1073 = vsel %vm980, %v832, 0
      %v1076 = vsel %vm989, %v1059, 0
      %1078 = vmatpush.bf16.msra.mxu0 %v1076
      %1079 = vmatpush.bf16.msra.mxu0 %v1058
      %1080 = vmatpush.bf16.msra.mxu0 %v1057
      %1081 = vmatpush.bf16.msra.mxu0 %v1056
      %1082 = vmatpush.bf16.msra.mxu0 %v1055
      %1083 = vmatpush.bf16.msra.mxu0 %v1054
      %1084 = vmatpush.bf16.msra.mxu0 %v1053
      %1085 = vmatpush.bf16.msra.mxu0 %v1052
      %1086 = vmatmul.bf16.gmra.mxu0 %v1067
      %v1087 = vpop.f32.mrf.mxu0
      %v1088 = vadd.f32 %v1003, %v1087
      %v1089 = vpop.f32.mrf.mxu0
      %v1090 = vadd.f32 %v1005, %v1089
      %1091 = vmatmul.bf16.gmra.mxu0 %v1069
      %v1092 = vpop.f32.mrf.mxu0
      %v1093 = vadd.f32 %v1008, %v1092
      %v1094 = vpop.f32.mrf.mxu0
      %v1095 = vadd.f32 %v1010, %v1094
      %1096 = vmatmul.bf16.gmra.mxu0 %v1071
      %v1097 = vpop.f32.mrf.mxu0
      %v1098 = vadd.f32 %v1013, %v1097
      %v1099 = vpop.f32.mrf.mxu0
      %v1100 = vadd.f32 %v1015, %v1099
      %1101 = vmatmul.bf16.gmra.mxu0 %v1073
      %v1102 = vpop.f32.mrf.mxu0
      %v1103 = vadd.f32 %v1018, %v1102
      %v1104 = vpop.f32.mrf.mxu0
      %v1105 = vadd.f32 %v1020, %v1104
      %1106 = vdwg.mxu0
      %v1108 = vshrl.u32 %v592, 16
      %v1110 = vrot.slane %v1108, 4
      %v1111 = vshll.u32 %v592, 16
      %v1113 = vrot.slane %v1111, 5
      %v1114 = vor.u32 %v1110, %v1113
      %v1115 = vrot.slane %v1114, 4
      %v1117 = vshll.u32 %v593, 16
      %v1119 = vrot.slane %v1117, 5
      %v1120 = vsel %vm596, %v1115, %v1119
      %v1123 = vrot.slane %v592, 5
      %v1124 = vrot.slane %v1123, 4
      %v1125 = vrot.slane %v593, 5
      %v1126 = vsel %vm727, %v1124, %v1125
      %v1127 = vunpack.c.l.b16 %v592
      %v1128 = vpack.c.b16 %v1127, %v868
      %v1129 = vunpack.c.l.b16 %v1120
      %v1130 = vpack.c.b16 %v1129, %v873
      %1131 = vrot.lane.b32.xlu0 %v1130, 40
      %v1132 = vpop.permute.xlu0 %1131
      %v1133 = vunpack.c.l.b16 %v1126
      %v1134 = vpack.c.b16 %v1133, %v886
      %1135 = vrot.lane.b32.xlu0 %v1134, 80
      %v1136 = vpop.permute.xlu0 %1135
      %v1139 = vsel %vm303, %v1128, %v1132
      %v1141 = vsel %vm824, %v1139, %v1136
      %s1142 = scalar_lea.vmem %s5, 120
      %v1143 = vld [vmem:[%s1142] sm:$0xf]
      %v1144 = vld [vmem:[%s1142 + $0x4] sm:$0xf]
      %v1145 = vld [vmem:[%s1142 + $0x8] sm:$0xf]
      %v1146 = vld [vmem:[%s1142 + $0xc] sm:$0xf]
      %v1147 = vld [vmem:[%s1142 + $0x10] sm:$0xf]
      %v1148 = vld [vmem:[%s1142 + $0x14] sm:$0xf]
      %v1149 = vld [vmem:[%s1142 + $0x18] sm:$0xf]
      %v1150 = vld [vmem:[%s1142 + $0x1c] sm:$0xf]
      %v1151 = vld [vmem:[%s1142 + $0x20] sm:$0xf]
      %v1152 = vld [vmem:[%s1142 + $0x24] sm:$0xf]
      %v1153 = vld [vmem:[%s1142 + $0x28] sm:$0xf]
      %v1154 = vld [vmem:[%s1142 + $0x2c] sm:$0xf]
      %v1155 = vld [vmem:[%s1142 + $0x30] sm:$0xf]
      %v1156 = vld [vmem:[%s1142 + $0x34] sm:$0xf]
      %v1157 = vld [vmem:[%s1142 + $0x38] sm:$0xf]
      %v1173 = vunpack.c.l.b16 %v1143
      %v1174 = vunpack.c.l.b16 %v1144
      %v1175 = vunpack.c.l.b16 %v1145
      %v1176 = vunpack.c.l.b16 %v1146
      %v1177 = vunpack.c.l.b16 %v1147
      %v1178 = vunpack.c.l.b16 %v1148
      %v1179 = vunpack.c.l.b16 %v1149
      %v1180 = vunpack.c.l.b16 %v1150
      %v1181 = vunpack.c.l.b16 %v1151
      %v1182 = vunpack.c.l.b16 %v1152
      %v1183 = vunpack.c.l.b16 %v1153
      %v1184 = vunpack.c.l.b16 %v1154
      %v1185 = vunpack.c.l.b16 %v1155
      %v1186 = vunpack.c.l.b16 %v1156
      %v1187 = vunpack.c.l.b16 %v1157
      %v1188 = vpack.c.b16 %v1174, %v1173
      %v1189 = vpack.c.b16 %v1176, %v1175
      %v1190 = vpack.c.b16 %v1178, %v1177
      %v1191 = vpack.c.b16 %v1180, %v1179
      %v1192 = vpack.c.b16 %v1182, %v1181
      %v1193 = vpack.c.b16 %v1184, %v1183
      %v1194 = vpack.c.b16 %v1186, %v1185
      %v1195 = vpack.c.b16 %v1187, %v1187
      %v1203 = vsel %vm980, %v1141, 0
      %v1206 = vsel %vm989, %v1195, 0
      %1208 = vmatpush.bf16.msra.mxu0 %v1206
      %1209 = vmatpush.bf16.msra.mxu0 %v1194
      %1210 = vmatpush.bf16.msra.mxu0 %v1193
      %1211 = vmatpush.bf16.msra.mxu0 %v1192
      %1212 = vmatpush.bf16.msra.mxu0 %v1191
      %1213 = vmatpush.bf16.msra.mxu0 %v1190
      %1214 = vmatpush.bf16.msra.mxu0 %v1189
      %1215 = vmatpush.bf16.msra.mxu0 %v1188
      %1216 = vmatmul.bf16.gmra.mxu0 %v1069
      %v1217 = vpop.f32.mrf.mxu0
      %v1218 = vadd.f32 0.0, %v1217
      %v1219 = vpop.f32.mrf.mxu0
      %v1220 = vadd.f32 0.0, %v1219
      %1221 = vmatmul.bf16.gmra.mxu0 %v1071
      %v1222 = vpop.f32.mrf.mxu0
      %v1223 = vadd.f32 0.0, %v1222
      %v1224 = vpop.f32.mrf.mxu0
      %v1225 = vadd.f32 0.0, %v1224
      %1226 = vmatmul.bf16.gmra.mxu0 %v1073
      %v1227 = vpop.f32.mrf.mxu0
      %v1228 = vadd.f32 0.0, %v1227
      %v1229 = vpop.f32.mrf.mxu0
      %v1230 = vadd.f32 0.0, %v1229
      %1231 = vmatmul.bf16.gmra.mxu0 %v1203
      %v1232 = vpop.f32.mrf.mxu0
      %v1233 = vadd.f32 0.0, %v1232
      %v1234 = vpop.f32.mrf.mxu0
      %v1235 = vadd.f32 0.0, %v1234
      %1236 = vdwg.mxu0
      %v1237 = vadd.f32 %v1088, %v1218
      %v1238 = vadd.f32 %v1090, %v1220
      %v1239 = vadd.f32 %v1093, %v1223
      %v1240 = vadd.f32 %v1095, %v1225
      %v1241 = vadd.f32 %v1098, %v1228
      %v1242 = vadd.f32 %v1100, %v1230
      %v1243 = vadd.f32 %v1103, %v1233
      %v1244 = vadd.f32 %v1105, %v1235
      %v1245 = vmax.f32 %v1237, 0.0
      %v1246 = vmax.f32 %v1238, 0.0
      %v1247 = vmax.f32 %v1239, 0.0
      %v1248 = vmax.f32 %v1240, 0.0
      %v1249 = vmax.f32 %v1241, 0.0
      %v1250 = vmax.f32 %v1242, 0.0
      %v1251 = vmax.f32 %v1243, 0.0
      %v1252 = vmax.f32 %v1244, 0.0
      %1261 = vrot.lane.b32.xlu0 %v1245, 8
      %v1262 = vpop.permute.xlu0 %1261
      %1263 = vrot.lane.b32.xlu0 %v1246, 8
      %v1264 = vpop.permute.xlu0 %1263
      %1265 = vrot.lane.b32.xlu0 %v1247, 8
      %v1266 = vpop.permute.xlu0 %1265
      %1267 = vrot.lane.b32.xlu0 %v1248, 8
      %v1268 = vpop.permute.xlu0 %1267
      %1269 = vrot.lane.b32.xlu0 %v1249, 8
      %v1270 = vpop.permute.xlu0 %1269
      %1271 = vrot.lane.b32.xlu0 %v1250, 8
      %v1272 = vpop.permute.xlu0 %1271
      %1273 = vrot.lane.b32.xlu0 %v1251, 8
      %v1274 = vpop.permute.xlu0 %1273
      %1275 = vrot.lane.b32.xlu0 %v1252, 8
      %v1276 = vpop.permute.xlu0 %1275
      %vm1285 = vcmask 64512
      %v1286 = vsel %vm1285, 0.0, %v1262
      %v1287 = vsel %vm1285, 0.0, %v1264
      %v1288 = vsel %vm1285, 0.0, %v1266
      %v1289 = vsel %vm1285, 0.0, %v1268
      %v1290 = vsel %vm1285, 0.0, %v1270
      %v1291 = vsel %vm1285, 0.0, %v1272
      %v1292 = vsel %vm1285, 0.0, %v1274
      %v1293 = vsel %vm1285, 0.0, %v1276
      %vm1294 = vcmask 588800
      %v1295 = vsel %vm1294, %v1286, 0.0
      %v1296 = vsel %vm1294, %v1287, 0.0
      %v1297 = vsel %vm1294, %v1288, 0.0
      %v1298 = vsel %vm1294, %v1289, 0.0
      %v1299 = vsel %vm1294, %v1290, 0.0
      %v1300 = vsel %vm1294, %v1291, 0.0
      %v1301 = vsel %vm1294, %v1292, 0.0
      %v1302 = vsel %vm1294, %v1293, 0.0
      %v1311 = vrot.slane %v1295, 7
      %v1312 = vrot.slane %v1296, 7
      %v1313 = vrot.slane %v1297, 7
      %v1314 = vrot.slane %v1298, 7
      %v1315 = vrot.slane %v1299, 7
      %v1316 = vrot.slane %v1300, 7
      %v1317 = vrot.slane %v1301, 7
      %v1318 = vrot.slane %v1302, 7
      %vm1327 = vcmask 1040384
      %v1328 = vsel %vm1327, 0.0, %v1311
      %v1329 = vsel %vm1327, 0.0, %v1312
      %v1330 = vsel %vm1327, 0.0, %v1313
      %v1331 = vsel %vm1327, 0.0, %v1314
      %v1332 = vsel %vm1327, 0.0, %v1315
      %v1333 = vsel %vm1327, 0.0, %v1316
      %v1334 = vsel %vm1327, 0.0, %v1317
      %v1335 = vsel %vm1327, 0.0, %v1318
      %v1336 = vsel %vm1327, %v1311, 0.0
      %v1337 = vsel %vm1327, %v1312, 0.0
      %v1338 = vsel %vm1327, %v1313, 0.0
      %v1339 = vsel %vm1327, %v1314, 0.0
      %v1340 = vsel %vm1327, %v1315, 0.0
      %v1341 = vsel %vm1327, %v1316, 0.0
      %v1342 = vsel %vm1327, %v1317, 0.0
      %v1343 = vsel %vm1327, %v1318, 0.0
      %v1344 = vpack.c.bf16 0.0, 0.0
      %v1345 = vpack.c.bf16 %v1328, %v1328
      %v1346 = vpack.c.bf16 %v1336, %v1336
      %v1347 = vpack.c.bf16 %v1329, %v1329
      %v1348 = vpack.c.bf16 %v1337, %v1337
      %v1349 = vpack.c.bf16 %v1330, %v1330
      %v1350 = vpack.c.bf16 %v1338, %v1338
      %v1351 = vpack.c.bf16 %v1331, %v1331
      %v1352 = vpack.c.bf16 %v1339, %v1339
      %v1353 = vpack.c.bf16 %v1332, %v1332
      %v1354 = vpack.c.bf16 %v1340, %v1340
      %v1355 = vpack.c.bf16 %v1333, %v1333
      %v1356 = vpack.c.bf16 %v1341, %v1341
      %v1357 = vpack.c.bf16 %v1334, %v1334
      %v1358 = vpack.c.bf16 %v1342, %v1342
      %v1359 = vpack.c.bf16 %v1335, %v1335
      %v1360 = vpack.c.bf16 %v1343, %v1343
      %vm1361 = vcmask 650240
      %1362 = vst.msk [vmem:[%s251] sm:$0xf] %vm1361, %v1344
      %vm1363 = vcmask 647168
      %1364 = vst.msk [vmem:[%s251 + $0x4] sm:$0x1] %vm1363, %v1344
      %1365 = vst.msk [vmem:[%s251 + $0x8] sm:$0xf] %vm1361, %v1345
      %1366 = vst.msk [vmem:[%s251 + $0xc] sm:$0x1] %vm1363, %v1346
      %1367 = vst.msk [vmem:[%s251 + $0x10] sm:$0xf] %vm1361, %v1347
      %1368 = vst.msk [vmem:[%s251 + $0x14] sm:$0x1] %vm1363, %v1348
      %1369 = vst.msk [vmem:[%s251 + $0x18] sm:$0xf] %vm1361, %v1349
      %1370 = vst.msk [vmem:[%s251 + $0x1c] sm:$0x1] %vm1363, %v1350
      %1371 = vst.msk [vmem:[%s251 + $0x20] sm:$0xf] %vm1361, %v1351
      %1372 = vst.msk [vmem:[%s251 + $0x24] sm:$0x1] %vm1363, %v1352
      %1373 = vst.msk [vmem:[%s251 + $0x28] sm:$0xf] %vm1361, %v1353
      %1374 = vst.msk [vmem:[%s251 + $0x2c] sm:$0x1] %vm1363, %v1354
      %1375 = vst.msk [vmem:[%s251 + $0x30] sm:$0xf] %vm1361, %v1355
      %1376 = vst.msk [vmem:[%s251 + $0x34] sm:$0x1] %vm1363, %v1356
      %1377 = vst.msk [vmem:[%s251 + $0x38] sm:$0xf] %vm1361, %v1357
      %1378 = vst.msk [vmem:[%s251 + $0x3c] sm:$0x1] %vm1363, %v1358
      %1379 = vst.msk [vmem:[%s251 + $0x40] sm:$0xf] %vm1361, %v1359
      %1380 = vst.msk [vmem:[%s251 + $0x44] sm:$0x1] %vm1363, %v1360
      %1381 = vst.msk [vmem:[%s251 + $0x48] sm:$0xf] %vm1361, %v1344
      %1382 = vst.msk [vmem:[%s251 + $0x4c] sm:$0x1] %vm1363, %v1344
      %p1383 = scmp.lt.s32.totalorder %s17, 1
      %s1384 = scalar_select %p1383, %s17, 1
      %s1385 = smul.addr %s1384, 20
      %s1386 = smul.addr %s1385, 4
      %s1387 = scalar_lea.vmem %s6, %s1386
      // Predicated region
      $region45: #{encoder_forward.4} parent=43 // pred_check
        %p1388 = pneg %p166
      $region46: #{encoder_forward.4} parent=43 // pred_check_branch
        %1390 = sbr.rel (%p1388) target = $region48
      $region47: #{encoder_forward.4} parent=43 // pred_region
        _
      $region48: #{encoder_forward.4} parent=43 // pred_fallthru
        _
    $region44: #{encoder_forward.4} parent=5 // pred_fallthru
      _
    %p1391 = scmp.le.s32.totalorder 2, %s12
    // Predicated region
    $region49: #{encoder_forward.4} parent=5 // pred_check
      %p1392 = pneg %p1391
    $region50: #{encoder_forward.4} parent=5 // pred_check_branch
      %1394 = sbr.rel (%p1392) target = $region52
    $region51: #{encoder_forward.4} parent=5 // pred_region
      %s1395 = ssub.s32 %s12, 2
      // Predicated region
      $region53: #{encoder_forward.4} parent=51 // pred_check
        %p1396 = pneg %p172
      $region54: #{encoder_forward.4} parent=51 // pred_check_branch
        %1398 = sbr.rel (%p1396) target = $region56
      $region55: #{encoder_forward.4} parent=51 // pred_region
        %p1399 = scmp.lt.s32.totalorder %s18, 1
        %s1400 = scalar_select %p1399, %s18, 1
        %s1401 = smul.addr %s1400, 20
        %s1402 = smul.addr %s1401, 4
        %s1403 = scalar_lea.vmem %s6, %s1402
      $region56: #{encoder_forward.4} parent=51 // pred_fallthru
        _
    $region52: #{encoder_forward.4} parent=5 // pred_fallthru
      _
  $region6: #{encoder_forward.4} parent=0 // loop_footer
    %s16 = sadd.s32 1, %s12
  $region7: #{encoder_forward.4} parent=0 // loop_footer_branch
    %11 = sbr.rel target = $region3
  $region8: #{encoder_forward.4} parent=0 // loop_exit
    _

// kernel: encoder_forward.5
$region0: #{encoder_forward.5}
  #allocation0 [shape = 'u32[]', space=smem, size = 0x4, offset = 0x4, fixed_abs, tag = 'smem constant byte address 0x4 - core index']
  #allocation1 [shape = 'u32[72,128]{1,0:T(1,128)}', space=vmem, size = 0x9000, scoped, tag = 'internal scratch']
  %s0 = inlined_call_operand.vmem [shape: bf16[2,10,10,80], index: 0, kind: input, shape index: {}]
  %s1 = inlined_call_operand.vmem [shape: f32[1,80], index: 1, kind: input, shape index: {}]
  %s2 = inlined_call_operand.vmem [shape: f32[1,80], index: 2, kind: input, shape index: {}]
  %s3 = inlined_call_operand.vmem [shape: f32[1,80], index: 3, kind: input, shape index: {}]
  %s4 = inlined_call_operand.vmem [shape: f32[80,80], index: 4, kind: input, shape index: {}]
  %s5 = inlined_call_operand.vmem [shape: bf16[3,240,128], index: 5, kind: input, shape index: {}]
  %s6 = inlined_call_operand.vmem [shape: f32[2,64,128], index: 6, kind: output, shape index: {}]
  %s7 = sld [smem:[#allocation0]]
  $region57: #{encoder_forward.5} parent=0
    _
  %s9 = ssub.s32 1, %s7
  %s10 = scalar_select 0, %s9, %s7
  loop: start=0, step=1, limit=4
  $region2: #{encoder_forward.5} parent=0 // loop_pre_header
    _
  $region3: #{encoder_forward.5} parent=0 // loop_header
    %s12 = sphi 0, %s16
    %p13 = scmp.ge.s32.totalorder %s12, 4
    %s22 = sphi 0, %s24
    %s25 = sphi 0, %s22
    %s26 = sphi 0, %s25
    %s42 = sphi 0, %s26
    %s46 = sphi 0, %s46
    %s48 = sphi 0, %s46
    %s49 = sphi 0, %s48
    %s63 = sphi 0, %s49
    %s67 = sphi 0, %s67
    %s69 = sphi 0, %s67
    %s70 = sphi 0, %s69
    %s84 = sphi 0, %s70
    %s88 = sphi 0, %s88
    %s90 = sphi 0, %s88
    %s91 = sphi 0, %s90
    %s105 = sphi 0, %s91
    %s109 = sphi 0, %s109
    %s111 = sphi 0, %s109
    %s112 = sphi 0, %s111
    %s126 = sphi 0, %s112
    %s130 = sphi 0, %s130
    %s132 = sphi 0, %s130
    %s133 = sphi 0, %s132
    %s147 = sphi 0, %s133
    %s153 = sphi 0, %s155
    %s156 = sphi 0, %s153
    %s157 = sphi 0, %s156
    %s173 = sphi 0, %s157
  $region4: #{encoder_forward.5} parent=0 // loop_header_branch
    %15 = sbr.rel (%p13) target = $region8
  $region5: #{encoder_forward.5} parent=0 // loop_body
    %s17 = ssub.s32 %s12, 1
    %s18 = ssub.s32 %s12, 2
    %s19 = sadd.s32 %s12, 1
    %s20 = ssub.s32 %s12, %s19
    %p21 = scmp.eq.s32.totalorder %s20, 0
    %s23 = sadd.s32 %s22, 1
    %s24 = scalar_select %p21, %s22, %s23
    %p27 = pneg %p21
    %p28 = scmp.eq.s32.totalorder %s12, 1
    %p29 = por %p27, %p28
    %p30 = scmp.ne.s32.totalorder %s22, %s25
    %p31 = scmp.eq.s32.totalorder %s12, 0
    %p32 = por %p30, %p31
    %p33 = scmp.ne.s32.totalorder %s22, %s25
    %p34 = scmp.eq.s32.totalorder %s17, 1
    %p35 = por %p33, %p34
    %p36 = scmp.ne.s32.totalorder %s25, %s26
    %p37 = scmp.eq.s32.totalorder %s17, 0
    %p38 = por %p36, %p37
    %p39 = scmp.ne.s32.totalorder %s25, %s26
    %p40 = scmp.eq.s32.totalorder %s18, 1
    %p41 = por %p39, %p40
    %p43 = scmp.ne.s32.totalorder %s26, %s42
    %p44 = scmp.eq.s32.totalorder %s18, 0
    %p45 = por %p43, %p44
    %s47 = sadd.s32 %s46, 1
    %p50 = scmp.eq.s32.totalorder %s12, 1
    %p51 = scmp.ne.s32.totalorder %s46, %s48
    %p52 = scmp.eq.s32.totalorder %s12, 0
    %p53 = por %p51, %p52
    %p54 = scmp.ne.s32.totalorder %s46, %s48
    %p55 = scmp.eq.s32.totalorder %s17, 1
    %p56 = por %p54, %p55
    %p57 = scmp.ne.s32.totalorder %s48, %s49
    %p58 = scmp.eq.s32.totalorder %s17, 0
    %p59 = por %p57, %p58
    %p60 = scmp.ne.s32.totalorder %s48, %s49
    %p61 = scmp.eq.s32.totalorder %s18, 1
    %p62 = por %p60, %p61
    %p64 = scmp.ne.s32.totalorder %s49, %s63
    %p65 = scmp.eq.s32.totalorder %s18, 0
    %p66 = por %p64, %p65
    %s68 = sadd.s32 %s67, 1
    %p71 = scmp.eq.s32.totalorder %s12, 1
    %p72 = scmp.ne.s32.totalorder %s67, %s69
    %p73 = scmp.eq.s32.totalorder %s12, 0
    %p74 = por %p72, %p73
    %p75 = scmp.ne.s32.totalorder %s67, %s69
    %p76 = scmp.eq.s32.totalorder %s17, 1
    %p77 = por %p75, %p76
    %p78 = scmp.ne.s32.totalorder %s69, %s70
    %p79 = scmp.eq.s32.totalorder %s17, 0
    %p80 = por %p78, %p79
    %p81 = scmp.ne.s32.totalorder %s69, %s70
    %p82 = scmp.eq.s32.totalorder %s18, 1
    %p83 = por %p81, %p82
    %p85 = scmp.ne.s32.totalorder %s70, %s84
    %p86 = scmp.eq.s32.totalorder %s18, 0
    %p87 = por %p85, %p86
    %s89 = sadd.s32 %s88, 1
    %p92 = scmp.eq.s32.totalorder %s12, 1
    %p93 = scmp.ne.s32.totalorder %s88, %s90
    %p94 = scmp.eq.s32.totalorder %s12, 0
    %p95 = por %p93, %p94
    %p96 = scmp.ne.s32.totalorder %s88, %s90
    %p97 = scmp.eq.s32.totalorder %s17, 1
    %p98 = por %p96, %p97
    %p99 = scmp.ne.s32.totalorder %s90, %s91
    %p100 = scmp.eq.s32.totalorder %s17, 0
    %p101 = por %p99, %p100
    %p102 = scmp.ne.s32.totalorder %s90, %s91
    %p103 = scmp.eq.s32.totalorder %s18, 1
    %p104 = por %p102, %p103
    %p106 = scmp.ne.s32.totalorder %s91, %s105
    %p107 = scmp.eq.s32.totalorder %s18, 0
    %p108 = por %p106, %p107
    %s110 = sadd.s32 %s109, 1
    %p113 = scmp.eq.s32.totalorder %s12, 1
    %p114 = scmp.ne.s32.totalorder %s109, %s111
    %p115 = scmp.eq.s32.totalorder %s12, 0
    %p116 = por %p114, %p115
    %p117 = scmp.ne.s32.totalorder %s109, %s111
    %p118 = scmp.eq.s32.totalorder %s17, 1
    %p119 = por %p117, %p118
    %p120 = scmp.ne.s32.totalorder %s111, %s112
    %p121 = scmp.eq.s32.totalorder %s17, 0
    %p122 = por %p120, %p121
    %p123 = scmp.ne.s32.totalorder %s111, %s112
    %p124 = scmp.eq.s32.totalorder %s18, 1
    %p125 = por %p123, %p124
    %p127 = scmp.ne.s32.totalorder %s112, %s126
    %p128 = scmp.eq.s32.totalorder %s18, 0
    %p129 = por %p127, %p128
    %s131 = sadd.s32 %s130, 1
    %p134 = scmp.eq.s32.totalorder %s12, 1
    %p135 = scmp.ne.s32.totalorder %s130, %s132
    %p136 = scmp.eq.s32.totalorder %s12, 0
    %p137 = por %p135, %p136
    %p138 = scmp.ne.s32.totalorder %s130, %s132
    %p139 = scmp.eq.s32.totalorder %s17, 1
    %p140 = por %p138, %p139
    %p141 = scmp.ne.s32.totalorder %s132, %s133
    %p142 = scmp.eq.s32.totalorder %s17, 0
    %p143 = por %p141, %p142
    %p144 = scmp.ne.s32.totalorder %s132, %s133
    %p145 = scmp.eq.s32.totalorder %s18, 1
    %p146 = por %p144, %p145
    %p148 = scmp.ne.s32.totalorder %s133, %s147
    %p149 = scmp.eq.s32.totalorder %s18, 0
    %p150 = por %p148, %p149
    %s151 = ssub.s32 %s12, %s19
    %p152 = scmp.eq.s32.totalorder %s151, 0
    %s154 = sadd.s32 %s153, 1
    %s155 = scalar_select %p152, %s153, %s154
    %p158 = pneg %p152
    %p159 = scmp.eq.s32.totalorder %s12, 1
    %p160 = por %p158, %p159
    %p161 = scmp.ne.s32.totalorder %s153, %s156
    %p162 = scmp.eq.s32.totalorder %s12, 0
    %p163 = por %p161, %p162
    %p164 = scmp.ne.s32.totalorder %s153, %s156
    %p165 = scmp.eq.s32.totalorder %s17, 1
    %p166 = por %p164, %p165
    %p167 = scmp.ne.s32.totalorder %s156, %s157
    %p168 = scmp.eq.s32.totalorder %s17, 0
    %p169 = por %p167, %p168
    %p170 = scmp.ne.s32.totalorder %s156, %s157
    %p171 = scmp.eq.s32.totalorder %s18, 1
    %p172 = por %p170, %p171
    %p174 = scmp.ne.s32.totalorder %s157, %s173
    %p175 = scmp.eq.s32.totalorder %s18, 0
    %p176 = por %p174, %p175
    %p177 = scmp.le.s32.totalorder 1, %s12
    %p178 = scmp.lt.s32.totalorder %s12, 3
    %p179 = pnand %p177, %p178
    %p180 = pneg %p179
    // Predicated region
    $region9: #{encoder_forward.5} parent=5 // pred_check
      _
    $region10: #{encoder_forward.5} parent=5 // pred_check_branch
      %182 = sbr.rel (%p179) target = $region12
    $region11: #{encoder_forward.5} parent=5 // pred_region
      %s183 = ssub.s32 %s12, 1
      // Predicated region
      $region13: #{encoder_forward.5} parent=11 // pred_check
        %p184 = pneg %p59
      $region14: #{encoder_forward.5} parent=11 // pred_check_branch
        %186 = sbr.rel (%p184) target = $region16
      $region15: #{encoder_forward.5} parent=11 // pred_region
        _
      $region16: #{encoder_forward.5} parent=11 // pred_fallthru
        _
      // Predicated region
      $region17: #{encoder_forward.5} parent=11 // pred_check
        %p187 = pneg %p80
      $region18: #{encoder_forward.5} parent=11 // pred_check_branch
        %189 = sbr.rel (%p187) target = $region20
      $region19: #{encoder_forward.5} parent=11 // pred_region
        _
      $region20: #{encoder_forward.5} parent=11 // pred_fallthru
        _
      // Predicated region
      $region21: #{encoder_forward.5} parent=11 // pred_check
        %p190 = pneg %p101
      $region22: #{encoder_forward.5} parent=11 // pred_check_branch
        %192 = sbr.rel (%p190) target = $region24
      $region23: #{encoder_forward.5} parent=11 // pred_region
        _
      $region24: #{encoder_forward.5} parent=11 // pred_fallthru
        _
      // Predicated region
      $region25: #{encoder_forward.5} parent=11 // pred_check
        %p193 = pneg %p122
      $region26: #{encoder_forward.5} parent=11 // pred_check_branch
        %195 = sbr.rel (%p193) target = $region28
      $region27: #{encoder_forward.5} parent=11 // pred_region
        _
      $region28: #{encoder_forward.5} parent=11 // pred_fallthru
        _
      // Predicated region
      $region29: #{encoder_forward.5} parent=11 // pred_check
        %p196 = pneg %p143
      $region30: #{encoder_forward.5} parent=11 // pred_check_branch
        %198 = sbr.rel (%p196) target = $region32
      $region31: #{encoder_forward.5} parent=11 // pred_region
        _
      $region32: #{encoder_forward.5} parent=11 // pred_fallthru
        _
    $region12: #{encoder_forward.5} parent=5 // pred_fallthru
      _
    %p199 = scmp.lt.s32.totalorder %s12, 2
    // Predicated region
    $region33: #{encoder_forward.5} parent=5 // pred_check
      %p200 = pneg %p199
    $region34: #{encoder_forward.5} parent=5 // pred_check_branch
      %202 = sbr.rel (%p200) target = $region36
    $region35: #{encoder_forward.5} parent=5 // pred_region
      // Predicated region
      $region37: #{encoder_forward.5} parent=35 // pred_check
        %p203 = pneg %p32
      $region38: #{encoder_forward.5} parent=35 // pred_check_branch
        %205 = sbr.rel (%p203) target = $region40
      $region39: #{encoder_forward.5} parent=35 // pred_region
        %p206 = scmp.lt.s32.totalorder %s12, 1
        %s207 = scalar_select %p206, %s12, 1
        %s208 = smul.addr %s207, 20
        %s209 = smul.addr %s208, 4
        %s210 = scalar_lea.vmem %s0, %s209
      $region40: #{encoder_forward.5} parent=35 // pred_fallthru
        _
    $region36: #{encoder_forward.5} parent=5 // pred_fallthru
      _
    %p211 = scmp.le.s32.totalorder 1, %s12
    %p212 = scmp.lt.s32.totalorder %s12, 3
    %p213 = pnand %p211, %p212
    %p214 = pneg %p213
    // Predicated region
    $region41: #{encoder_forward.5} parent=5 // pred_check
      _
    $region42: #{encoder_forward.5} parent=5 // pred_check_branch
      %216 = sbr.rel (%p213) target = $region44
    $region43: #{encoder_forward.5} parent=5 // pred_region
      %s217 = ssub.s32 %s12, 1
      %p218 = scmp.lt.s32.totalorder %s17, 1
      %s219 = scalar_select %p218, %s17, 1
      %s220 = smul.addr %s219, 20
      %s221 = smul.addr %s220, 4
      %s222 = scalar_lea.vmem %s0, %s221
      %p223 = pneg %p38
      %p224 = pneg %p35
      %p225 = pneg %p59
      %p226 = pneg %p56
      %p227 = pneg %p80
      %p228 = pneg %p77
      %p229 = pneg %p101
      %p230 = pneg %p98
      %p231 = pneg %p122
      %p232 = pneg %p119
      %p233 = pneg %p143
      %p234 = pneg %p140
      %p235 = pneg %p169
      %p236 = pneg %p166
      %p237 = scmp.lt.s32.totalorder %s17, 1
      %s238 = scalar_select %p237, %s17, 1
      %s239 = smul.addr %s238, 8
      %s240 = smul.addr %s239, 8
      %s241 = scalar_lea.vmem %s6, %s240
      %p242 = scmp.lt.s32.totalorder %s17, 1
      %s243 = scalar_select %p242, %s17, 1
      %s244 = smul.addr %s243, 20
      %s245 = smul.addr %s244, 4
      %s246 = scalar_lea.vmem %s0, %s245
      %p247 = scmp.lt.s32.totalorder %s17, 1
      %s248 = scalar_select %p247, %s17, 1
      %s249 = smul.addr %s248, 8
      %s250 = smul.addr %s249, 8
      %s251 = scalar_lea.vmem %s6, %s250
      %v253 = vld [vmem:[%s246] sm:$0xf]
      %v254 = vld [vmem:[%s246 + $0x4] sm:$0x1]
      %v255 = vld [vmem:[%s246 + $0x8] sm:$0xf]
      %v256 = vld [vmem:[%s246 + $0xc] sm:$0x1]
      %v257 = vld [vmem:[%s246 + $0x10] sm:$0xf]
      %v258 = vld [vmem:[%s246 + $0x14] sm:$0x1]
      %v259 = vld [vmem:[%s246 + $0x18] sm:$0xf]
      %v260 = vld [vmem:[%s246 + $0x1c] sm:$0x1]
      %v261 = vld [vmem:[%s246 + $0x20] sm:$0xf]
      %v262 = vld [vmem:[%s246 + $0x24] sm:$0x1]
      %v263 = vld [vmem:[%s246 + $0x28] sm:$0xf]
      %v264 = vld [vmem:[%s246 + $0x2c] sm:$0x1]
      %v265 = vld [vmem:[%s246 + $0x30] sm:$0xf]
      %v266 = vld [vmem:[%s246 + $0x34] sm:$0x1]
      %v267 = vld [vmem:[%s246 + $0x38] sm:$0xf]
      %v268 = vld [vmem:[%s246 + $0x3c] sm:$0x1]
      %v269 = vld [vmem:[%s246 + $0x40] sm:$0xf]
      %v270 = vld [vmem:[%s246 + $0x44] sm:$0x1]
      %v271 = vld [vmem:[%s246 + $0x48] sm:$0xf]
      %v272 = vld [vmem:[%s246 + $0x4c] sm:$0x1]
      %v273 = vunpack.c.l.bf16 %v253
      %v274 = vunpack.c.l.bf16 %v254
      %v275 = vunpack.c.l.bf16 %v255
      %v276 = vunpack.c.l.bf16 %v256
      %v277 = vunpack.c.l.bf16 %v257
      %v278 = vunpack.c.l.bf16 %v258
      %v279 = vunpack.c.l.bf16 %v259
      %v280 = vunpack.c.l.bf16 %v260
      %v281 = vunpack.c.l.bf16 %v261
      %v282 = vunpack.c.l.bf16 %v262
      %v283 = vunpack.c.l.bf16 %v263
      %v284 = vunpack.c.l.bf16 %v264
      %v285 = vunpack.c.l.bf16 %v265
      %v286 = vunpack.c.l.bf16 %v266
      %v287 = vunpack.c.l.bf16 %v267
      %v288 = vunpack.c.l.bf16 %v268
      %v289 = vunpack.c.l.bf16 %v269
      %v290 = vunpack.c.l.bf16 %v270
      %v291 = vunpack.c.l.bf16 %v271
      %v292 = vunpack.c.l.bf16 %v272
      %v293 = vlaneseq
      %v294 = vshrl.u32 %v293, 7
      %v295 = vadd.s32 %v294, 8
      %vm296 = vcmp.ge.s32.totalorder %v294, 1
      %vm297 = vcmp.ge.s32.totalorder %v295, 1
      %vm298 = vmand 0, %vm296
      %vm299 = vmand 0, %vm297
      %vm300 = vmand 1, %vm296
      %vm301 = vmand 1, %vm297
      %vm302 = vcmp.le.s32.totalorder %v294, 8
      %vm303 = vcmp.le.s32.totalorder %v295, 8
      %vm304 = vmand %vm298, %vm302
      %vm305 = vmand %vm299, %vm303
      %vm306 = vmand %vm300, %vm302
      %vm307 = vmand %vm301, %vm303
      %v308 = vsel %vm304, 1, 0
      %v309 = vsel %vm305, 1, 0
      %v310 = vsel %vm306, 1, 0
      %v311 = vsel %vm307, 1, 0
      %v312 = vcvt.s32.f32 %v308
      %v313 = vcvt.s32.f32 %v309
      %v314 = vcvt.s32.f32 %v310
      %v315 = vcvt.s32.f32 %v311
      %v316 = vld [vmem:[%s3] sm:$0x1]
      %v318 = vperm.slane %v316, 0
      %v320 = vmul.f32 %v312, %v318
      %v321 = vmul.f32 %v313, %v318
      %v322 = vmul.f32 %v314, %v318
      %v323 = vmul.f32 %v315, %v318
      %vm324 = vcmask 654336
      %v325 = vsel %vm324, %v273, 0.0
      %v326 = vsel %vm324, %v275, 0.0
      %v327 = vadd.f32 %v325, %v326
      %v328 = vsel %vm324, %v277, 0.0
      %v329 = vadd.f32 %v327, %v328
      %v330 = vsel %vm324, %v279, 0.0
      %v331 = vadd.f32 %v329, %v330
      %v332 = vsel %vm324, %v281, 0.0
      %v333 = vadd.f32 %v331, %v332
      %v334 = vsel %vm324, %v283, 0.0
      %v335 = vadd.f32 %v333, %v334
      %v336 = vsel %vm324, %v285, 0.0
      %v337 = vadd.f32 %v335, %v336
      %v338 = vsel %vm324, %v287, 0.0
      %v339 = vadd.f32 %v337, %v338
      %v340 = vsel %vm324, %v289, 0.0
      %v341 = vadd.f32 %v339, %v340
      %v342 = vsel %vm324, %v291, 0.0
      %v343 = vadd.f32 %v341, %v342
      %vm344 = vcmask 648192
      %v345 = vsel %vm344, %v274, 0.0
      %v346 = vsel %vm344, %v276, 0.0
      %v347 = vadd.f32 %v345, %v346
      %v348 = vsel %vm344, %v278, 0.0
      %v349 = vadd.f32 %v347, %v348
      %v350 = vsel %vm344, %v280, 0.0
      %v351 = vadd.f32 %v349, %v350
      %v352 = vsel %vm344, %v282, 0.0
      %v353 = vadd.f32 %v351, %v352
      %v354 = vsel %vm344, %v284, 0.0
      %v355 = vadd.f32 %v353, %v354
      %v356 = vsel %vm344, %v286, 0.0
      %v357 = vadd.f32 %v355, %v356
      %v358 = vsel %vm344, %v288, 0.0
      %v359 = vadd.f32 %v357, %v358
      %v360 = vsel %vm344, %v290, 0.0
      %v361 = vadd.f32 %v359, %v360
      %v362 = vsel %vm344, %v292, 0.0
      %v363 = vadd.f32 %v361, %v362
      %v364 = vsel %vm324, %v343, 0.0
      %v365 = vsel %vm344, %v363, 0.0
      %v366 = vadd.f32 %v364, %v365
      %v367 = vrot.slane %v366, 4
      %v368 = vadd.f32 %v366, %v367
      %v369 = vrot.slane %v368, 2
      %v370 = vadd.f32 %v368, %v369
      %v371 = vrot.slane %v370, 1
      %v372 = vadd.f32 %v370, %v371
      %v373 = vld [vmem:[%s4] sm:$0xff]
      %v374 = vld [vmem:[%s4 + $0x8] sm:$0xff]
      %v375 = vld [vmem:[%s4 + $0x10] sm:$0xff]
      %v376 = vld [vmem:[%s4 + $0x18] sm:$0xff]
      %v377 = vld [vmem:[%s4 + $0x20] sm:$0xff]
      %v378 = vld [vmem:[%s4 + $0x28] sm:$0xff]
      %v379 = vld [vmem:[%s4 + $0x30] sm:$0xff]
      %v380 = vld [vmem:[%s4 + $0x38] sm:$0xff]
      %v381 = vld [vmem:[%s4 + $0x40] sm:$0xff]
      %v382 = vld [vmem:[%s4 + $0x48] sm:$0xff]
      %v384 = vsel %vm324, %v372, 0
      %386 = vmatpush.msra.mxu0 0.0
      %387 = vmatpush.msra.mxu0 0.0
      %388 = vmatpush.msra.mxu0 0.0
      %389 = vmatpush.msra.mxu0 0.0
      %390 = vmatpush.msra.mxu0 0.0
      %391 = vmatpush.msra.mxu0 0.0
      %392 = vmatpush.msra.mxu0 %v382
      %393 = vmatpush.msra.mxu0 %v381
      %394 = vmatpush.msra.mxu0 %v380
      %395 = vmatpush.msra.mxu0 %v379
      %396 = vmatpush.msra.mxu0 %v378
      %397 = vmatpush.msra.mxu0 %v377
      %398 = vmatpush.msra.mxu0 %v376
      %399 = vmatpush.msra.mxu0 %v375
      %400 = vmatpush.msra.mxu0 %v374
      %401 = vmatpush.msra.mxu0 %v373
      %402 = vmatmul.f32.gmra.mxu0 %v384
      %v403 = vpop.f32.mrf.mxu0
      %v404 = vadd.f32 0.0, %v403
      %405 = vdwg.mxu0
      %v406 = vperm.slane %v404, 0
      %v407 = vsub.f32 %v273, %v406
      %v408 = vsub.f32 %v274, %v406
      %v409 = vsub.f32 %v275, %v406
      %v410 = vsub.f32 %v276, %v406
      %v411 = vsub.f32 %v277, %v406
      %v412 = vsub.f32 %v278, %v406
      %v413 = vsub.f32 %v279, %v406
      %v414 = vsub.f32 %v280, %v406
      %v415 = vsub.f32 %v281, %v406
      %v416 = vsub.f32 %v282, %v406
      %v417 = vsub.f32 %v283, %v406
      %v418 = vsub.f32 %v284, %v406
      %v419 = vsub.f32 %v285, %v406
      %v420 = vsub.f32 %v286, %v406
      %v421 = vsub.f32 %v287, %v406
      %v422 = vsub.f32 %v288, %v406
      %v423 = vsub.f32 %v289, %v406
      %v424 = vsub.f32 %v290, %v406
      %v425 = vsub.f32 %v291, %v406
      %v426 = vsub.f32 %v292, %v406
      %v427 = vmul.f32 %v407, %v320
      %v428 = vmul.f32 %v408, %v321
      %v429 = vmul.f32 %v409, %v322
      %v430 = vmul.f32 %v410, %v323
      %v431 = vmul.f32 %v411, %v322
      %v432 = vmul.f32 %v412, %v323
      %v433 = vmul.f32 %v413, %v322
      %v434 = vmul.f32 %v414, %v323
      %v435 = vmul.f32 %v415, %v322
      %v436 = vmul.f32 %v416, %v323
      %v437 = vmul.f32 %v417, %v322
      %v438 = vmul.f32 %v418, %v323
      %v439 = vmul.f32 %v419, %v322
      %v440 = vmul.f32 %v420, %v323
      %v441 = vmul.f32 %v421, %v322
      %v442 = vmul.f32 %v422, %v323
      %v443 = vmul.f32 %v423, %v322
      %v444 = vmul.f32 %v424, %v323
      %v445 = vmul.f32 %v425, %v320
      %v446 = vmul.f32 %v426, %v321
      %v447 = vmul.f32 %v427, %v427
      %v448 = vmul.f32 %v428, %v428
      %v449 = vmul.f32 %v429, %v429
      %v450 = vmul.f32 %v430, %v430
      %v451 = vmul.f32 %v431, %v431
      %v452 = vmul.f32 %v432, %v432
      %v453 = vmul.f32 %v433, %v433
      %v454 = vmul.f32 %v434, %v434
      %v455 = vmul.f32 %v435, %v435
      %v456 = vmul.f32 %v436, %v436
      %v457 = vmul.f32 %v437, %v437
      %v458 = vmul.f32 %v438, %v438
      %v459 = vmul.f32 %v439, %v439
      %v460 = vmul.f32 %v440, %v440
      %v461 = vmul.f32 %v441, %v441
      %v462 = vmul.f32 %v442, %v442
      %v463 = vmul.f32 %v443, %v443
      %v464 = vmul.f32 %v444, %v444
      %v465 = vmul.f32 %v445, %v445
      %v466 = vmul.f32 %v446, %v446
      %v467 = vsel %vm324, %v447, 0.0
      %v468 = vsel %vm324, %v449, 0.0
      %v469 = vadd.f32 %v467, %v468
      %v470 = vsel %vm324, %v451, 0.0
      %v471 = vadd.f32 %v469, %v470
      %v472 = vsel %vm324, %v453, 0.0
      %v473 = vadd.f32 %v471, %v472
      %v474 = vsel %vm324, %v455, 0.0
      %v475 = vadd.f32 %v473, %v474
      %v476 = vsel %vm324, %v457, 0.0
      %v477 = vadd.f32 %v475, %v476
      %v478 = vsel %vm324, %v459, 0.0
      %v479 = vadd.f32 %v477, %v478
      %v480 = vsel %vm324, %v461, 0.0
      %v481 = vadd.f32 %v479, %v480
      %v482 = vsel %vm324, %v463, 0.0
      %v483 = vadd.f32 %v481, %v482
      %v484 = vsel %vm324, %v465, 0.0
      %v485 = vadd.f32 %v483, %v484
      %v486 = vsel %vm344, %v448, 0.0
      %v487 = vsel %vm344, %v450, 0.0
      %v488 = vadd.f32 %v486, %v487
      %v489 = vsel %vm344, %v452, 0.0
      %v490 = vadd.f32 %v488, %v489
      %v491 = vsel %vm344, %v454, 0.0
      %v492 = vadd.f32 %v490, %v491
      %v493 = vsel %vm344, %v456, 0.0
      %v494 = vadd.f32 %v492, %v493
      %v495 = vsel %vm344, %v458, 0.0
      %v496 = vadd.f32 %v494, %v495
      %v497 = vsel %vm344, %v460, 0.0
      %v498 = vadd.f32 %v496, %v497
      %v499 = vsel %vm344, %v462, 0.0
      %v500 = vadd.f32 %v498, %v499
      %v501 = vsel %vm344, %v464, 0.0
      %v502 = vadd.f32 %v500, %v501
      %v503 = vsel %vm344, %v466, 0.0
      %v504 = vadd.f32 %v502, %v503
      %v505 = vsel %vm324, %v485, 0.0
      %v506 = vsel %vm344, %v504, 0.0
      %v507 = vadd.f32 %v505, %v506
      %v508 = vrot.slane %v507, 4
      %v509 = vadd.f32 %v507, %v508
      %v510 = vrot.slane %v509, 2
      %v511 = vadd.f32 %v509, %v510
      %v512 = vrot.slane %v511, 1
      %v513 = vadd.f32 %v511, %v512
      %v514 = vld [vmem:[%s1] sm:$0x1]
      %v516 = vsel %vm324, %v513, 0
      %518 = vmatpush.msra.mxu0 0.0
      %519 = vmatpush.msra.mxu0 0.0
      %520 = vmatpush.msra.mxu0 0.0
      %521 = vmatpush.msra.mxu0 0.0
      %522 = vmatpush.msra.mxu0 0.0
      %523 = vmatpush.msra.mxu0 0.0
      %524 = vmatpush.msra.mxu0 %v382
      %525 = vmatpush.msra.mxu0 %v381
      %526 = vmatpush.msra.mxu0 %v380
      %527 = vmatpush.msra.mxu0 %v379
      %528 = vmatpush.msra.mxu0 %v378
      %529 = vmatpush.msra.mxu0 %v377
      %530 = vmatpush.msra.mxu0 %v376
      %531 = vmatpush.msra.mxu0 %v375
      %532 = vmatpush.msra.mxu0 %v374
      %533 = vmatpush.msra.mxu0 %v373
      %534 = vmatmul.f32.gmra.mxu0 %v516
      %v535 = vpop.f32.mrf.mxu0
      %v536 = vadd.f32 1e-05, %v535
      %537 = vdwg.mxu0
      %v538 = vrsqrt.pop %v536
      %v539 = vmul.f32 %v538, %v536
      %v540 = vmul.f32 %v539, %v538
      %v541 = vmul.f32 0.5, %v540
      %v542 = vsub.f32 1.5, %v541
      %v543 = vmul.f32 %v538, %v542
      %vm544 = vweird.f32 %v536
      %vm545 = vweird.f32 %v538
      %vm546 = vmor %vm544, %vm545
      %v547 = vsel %vm546, %v538, %v543
      %v548 = vmul.f32 %v514, %v547
      %v550 = vperm.slane %v548, 0
      %v552 = vmul.f32 %v427, %v550
      %v553 = vmul.f32 %v428, %v550
      %v554 = vmul.f32 %v429, %v550
      %v555 = vmul.f32 %v430, %v550
      %v556 = vmul.f32 %v431, %v550
      %v557 = vmul.f32 %v432, %v550
      %v558 = vmul.f32 %v433, %v550
      %v559 = vmul.f32 %v434, %v550
      %v560 = vmul.f32 %v435, %v550
      %v561 = vmul.f32 %v436, %v550
      %v562 = vmul.f32 %v437, %v550
      %v563 = vmul.f32 %v438, %v550
      %v564 = vmul.f32 %v439, %v550
      %v565 = vmul.f32 %v440, %v550
      %v566 = vmul.f32 %v441, %v550
      %v567 = vmul.f32 %v442, %v550
      %v568 = vmul.f32 %v443, %v550
      %v569 = vmul.f32 %v444, %v550
      %v570 = vmul.f32 %v445, %v550
      %v571 = vmul.f32 %v446, %v550
      %v572 = vld [vmem:[%s2] sm:$0x1]
      %v574 = vperm.slane %v572, 0
      %v576 = vmul.f32 %v574, %v320
      %v577 = vmul.f32 %v574, %v321
      %v578 = vmul.f32 %v574, %v322
      %v579 = vmul.f32 %v574, %v323
      %v580 = vadd.f32 %v552, %v576
      %v581 = vadd.f32 %v553, %v577
      %v582 = vadd.f32 %v554, %v578
      %v583 = vadd.f32 %v555, %v579
      %v584 = vadd.f32 %v556, %v578
      %v585 = vadd.f32 %v557, %v579
      %v586 = vadd.f32 %v558, %v578
      %v587 = vadd.f32 %v559, %v579
      %v588 = vadd.f32 %v560, %v578
      %v589 = vadd.f32 %v561, %v579
      %v590 = vadd.f32 %v562, %v578
      %v591 = vadd.f32 %v563, %v579
      %v592 = vadd.f32 %v564, %v578
      %v593 = vadd.f32 %v565, %v579
      %v594 = vadd.f32 %v566, %v578
      %v595 = vadd.f32 %v567, %v579
      %v596 = vadd.f32 %v568, %v578
      %v597 = vadd.f32 %v569, %v579
      %v598 = vadd.f32 %v570, %v576
      %v599 = vadd.f32 %v571, %v577
      %v600 = vpack.c.bf16 %v580, %v580
      %v601 = vpack.c.bf16 %v581, %v581
      %v602 = vpack.c.bf16 %v582, %v582
      %v603 = vpack.c.bf16 %v583, %v583
      %v604 = vpack.c.bf16 %v584, %v584
      %v605 = vpack.c.bf16 %v585, %v585
      %v606 = vpack.c.bf16 %v586, %v586
      %v607 = vpack.c.bf16 %v587, %v587
      %v608 = vpack.c.bf16 %v588, %v588
      %v609 = vpack.c.bf16 %v589, %v589
      %v610 = vpack.c.bf16 %v590, %v590
      %v611 = vpack.c.bf16 %v591, %v591
      %v612 = vpack.c.bf16 %v592, %v592
      %v613 = vpack.c.bf16 %v593, %v593
      %v614 = vpack.c.bf16 %v594, %v594
      %v615 = vpack.c.bf16 %v595, %v595
      %v616 = vpack.c.bf16 %v596, %v596
      %v617 = vpack.c.bf16 %v597, %v597
      %v618 = vpack.c.bf16 %v598, %v598
      %v619 = vpack.c.bf16 %v599, %v599
      %vm620 = vsmask.f32 3328
      %vm621 = vsmask.f32 7440
      %vm622 = vmor %vm620, %vm621
      %v624 = vshrl.u32 %v600, 16
      %v626 = vrot.slane %v624, 4
      %v627 = vshll.u32 %v600, 16
      %v629 = vrot.slane %v627, 5
      %v630 = vor.u32 %v626, %v629
      %v631 = vrot.slane %v630, 4
      %v633 = vshll.u32 %v601, 16
      %v635 = vrot.slane %v633, 5
      %v636 = vsel %vm622, %v631, %v635
      %v638 = vshrl.u32 %v602, 16
      %v640 = vrot.slane %v638, 4
      %v641 = vshll.u32 %v602, 16
      %v643 = vrot.slane %v641, 5
      %v644 = vor.u32 %v640, %v643
      %v645 = vrot.slane %v644, 4
      %v647 = vshll.u32 %v603, 16
      %v649 = vrot.slane %v647, 5
      %v650 = vsel %vm622, %v645, %v649
      %v652 = vshrl.u32 %v604, 16
      %v654 = vrot.slane %v652, 4
      %v655 = vshll.u32 %v604, 16
      %v657 = vrot.slane %v655, 5
      %v658 = vor.u32 %v654, %v657
      %v659 = vrot.slane %v658, 4
      %v661 = vshll.u32 %v605, 16
      %v663 = vrot.slane %v661, 5
      %v664 = vsel %vm622, %v659, %v663
      %v666 = vshrl.u32 %v606, 16
      %v668 = vrot.slane %v666, 4
      %v669 = vshll.u32 %v606, 16
      %v671 = vrot.slane %v669, 5
      %v672 = vor.u32 %v668, %v671
      %v673 = vrot.slane %v672, 4
      %v675 = vshll.u32 %v607, 16
      %v677 = vrot.slane %v675, 5
      %v678 = vsel %vm622, %v673, %v677
      %v680 = vshrl.u32 %v608, 16
      %v682 = vrot.slane %v680, 4
      %v683 = vshll.u32 %v608, 16
      %v685 = vrot.slane %v683, 5
      %v686 = vor.u32 %v682, %v685
      %v687 = vrot.slane %v686, 4
      %v689 = vshll.u32 %v609, 16
      %v691 = vrot.slane %v689, 5
      %v692 = vsel %vm622, %v687, %v691
      %v694 = vshrl.u32 %v610, 16
      %v696 = vrot.slane %v694, 4
      %v697 = vshll.u32 %v610, 16
      %v699 = vrot.slane %v697, 5
      %v700 = vor.u32 %v696, %v699
      %v701 = vrot.slane %v700, 4
      %v703 = vshll.u32 %v611, 16
      %v705 = vrot.slane %v703, 5
      %v706 = vsel %vm622, %v701, %v705
      %v708 = vshrl.u32 %v612, 16
      %v710 = vrot.slane %v708, 4
      %v711 = vshll.u32 %v612, 16
      %v713 = vrot.slane %v711, 5
      %v714 = vor.u32 %v710, %v713
      %v715 = vrot.slane %v714, 4
      %v717 = vshll.u32 %v613, 16
      %v719 = vrot.slane %v717, 5
      %v720 = vsel %vm622, %v715, %v719
      %v722 = vshrl.u32 %v614, 16
      %v724 = vrot.slane %v722, 4
      %v725 = vshll.u32 %v614, 16
      %v727 = vrot.slane %v725, 5
      %v728 = vor.u32 %v724, %v727
      %v729 = vrot.slane %v728, 4
      %v731 = vshll.u32 %v615, 16
      %v733 = vrot.slane %v731, 5
      %v734 = vsel %vm622, %v729, %v733
      %vm751 = vcmask 1042432
      %vm752 = vcmask 1046532
      %vm753 = vmor %vm751, %vm752
      %v754 = vrot.slane %v600, 5
      %v755 = vrot.slane %v754, 4
      %v756 = vrot.slane %v601, 5
      %v757 = vsel %vm753, %v755, %v756
      %v758 = vrot.slane %v602, 5
      %v759 = vrot.slane %v758, 4
      %v760 = vrot.slane %v603, 5
      %v761 = vsel %vm753, %v759, %v760
      %v762 = vrot.slane %v604, 5
      %v763 = vrot.slane %v762, 4
      %v764 = vrot.slane %v605, 5
      %v765 = vsel %vm753, %v763, %v764
      %v766 = vrot.slane %v606, 5
      %v767 = vrot.slane %v766, 4
      %v768 = vrot.slane %v607, 5
      %v769 = vsel %vm753, %v767, %v768
      %v770 = vrot.slane %v608, 5
      %v771 = vrot.slane %v770, 4
      %v772 = vrot.slane %v609, 5
      %v773 = vsel %vm753, %v771, %v772
      %v774 = vrot.slane %v610, 5
      %v775 = vrot.slane %v774, 4
      %v776 = vrot.slane %v611, 5
      %v777 = vsel %vm753, %v775, %v776
      %v778 = vrot.slane %v612, 5
      %v779 = vrot.slane %v778, 4
      %v780 = vrot.slane %v613, 5
      %v781 = vsel %vm753, %v779, %v780
      %v782 = vrot.slane %v614, 5
      %v783 = vrot.slane %v782, 4
      %v784 = vrot.slane %v615, 5
      %v785 = vsel %vm753, %v783, %v784
      %v786 = vunpack.c.l.b16 %v600
      %v787 = vunpack.c.l.b16 %v602
      %v788 = vunpack.c.l.b16 %v604
      %v789 = vunpack.c.l.b16 %v606
      %v790 = vunpack.c.l.b16 %v608
      %v791 = vunpack.c.l.b16 %v610
      %v792 = vunpack.c.l.b16 %v612
      %v793 = vunpack.c.l.b16 %v614
      %v794 = vpack.c.b16 %v787, %v786
      %v795 = vpack.c.b16 %v789, %v788
      %v796 = vpack.c.b16 %v791, %v790
      %v797 = vpack.c.b16 %v793, %v792
      %v798 = vunpack.c.l.b16 %v636
      %v799 = vunpack.c.l.b16 %v650
      %v800 = vunpack.c.l.b16 %v664
      %v801 = vunpack.c.l.b16 %v678
      %v802 = vunpack.c.l.b16 %v692
      %v803 = vunpack.c.l.b16 %v706
      %v804 = vunpack.c.l.b16 %v720
      %v805 = vunpack.c.l.b16 %v734
      %v806 = vpack.c.b16 %v799, %v798
      %v807 = vpack.c.b16 %v801, %v800
      %v808 = vpack.c.b16 %v803, %v802
      %v809 = vpack.c.b16 %v805, %v804
      %810 = vrot.lane.b32.xlu0 %v806, 80
      %v811 = vpop.permute.xlu0 %810
      %812 = vrot.lane.b32.xlu0 %v807, 80
      %v813 = vpop.permute.xlu0 %812
      %814 = vrot.lane.b32.xlu0 %v808, 80
      %v815 = vpop.permute.xlu0 %814
      %816 = vrot.lane.b32.xlu0 %v809, 80
      %v817 = vpop.permute.xlu0 %816
      %v818 = vunpack.c.l.b16 %v757
      %v819 = vunpack.c.l.b16 %v761
      %v820 = vunpack.c.l.b16 %v765
      %v821 = vunpack.c.l.b16 %v769
      %v822 = vunpack.c.l.b16 %v773
      %v823 = vunpack.c.l.b16 %v777
      %v824 = vunpack.c.l.b16 %v781
      %v825 = vunpack.c.l.b16 %v785
      %v826 = vpack.c.b16 %v819, %v818
      %v827 = vpack.c.b16 %v821, %v820
      %v828 = vpack.c.b16 %v823, %v822
      %v829 = vpack.c.b16 %v825, %v824
      %830 = vrot.lane.b32.xlu0 %v826, 32
      %v831 = vpop.permute.xlu0 %830
      %832 = vrot.lane.b32.xlu0 %v827, 32
      %v833 = vpop.permute.xlu0 %832
      %834 = vrot.lane.b32.xlu0 %v828, 32
      %v835 = vpop.permute.xlu0 %834
      %836 = vrot.lane.b32.xlu0 %v829, 32
      %v837 = vpop.permute.xlu0 %836
      %v840 = vsel %vm324, %v794, %v811
      %v844 = vsel %vm324, %v795, %v813
      %v848 = vsel %vm324, %v796, %v815
      %v852 = vsel %vm324, %v797, %v817
      %vm854 = vcmask 261120
      %v856 = vsel %vm854, %v811, %v831
      %v858 = vsel %vm854, %v813, %v833
      %v860 = vsel %vm854, %v815, %v835
      %v862 = vsel %vm854, %v817, %v837
      %v863 = vld [vmem:[%s5] sm:$0xf]
      %v864 = vld [vmem:[%s5 + $0x4] sm:$0xf]
      %v865 = vld [vmem:[%s5 + $0x8] sm:$0xf]
      %v866 = vld [vmem:[%s5 + $0xc] sm:$0xf]
      %v867 = vld [vmem:[%s5 + $0x10] sm:$0xf]
      %v868 = vld [vmem:[%s5 + $0x14] sm:$0xf]
      %v869 = vld [vmem:[%s5 + $0x18] sm:$0xf]
      %v870 = vld [vmem:[%s5 + $0x1c] sm:$0xf]
      %v871 = vld [vmem:[%s5 + $0x20] sm:$0xf]
      %v872 = vld [vmem:[%s5 + $0x24] sm:$0xf]
      %v873 = vld [vmem:[%s5 + $0x28] sm:$0xf]
      %v874 = vld [vmem:[%s5 + $0x2c] sm:$0xf]
      %v875 = vld [vmem:[%s5 + $0x30] sm:$0xf]
      %v876 = vld [vmem:[%s5 + $0x34] sm:$0xf]
      %v877 = vld [vmem:[%s5 + $0x38] sm:$0xf]
      %v878 = vld [vmem:[%s5 + $0x3c] sm:$0xf]
      %v879 = vld [vmem:[%s5 + $0x40] sm:$0xf]
      %v880 = vld [vmem:[%s5 + $0x44] sm:$0xf]
      %v881 = vld [vmem:[%s5 + $0x48] sm:$0xf]
      %v882 = vld [vmem:[%s5 + $0x4c] sm:$0xf]
      %v883 = vld [vmem:[%s5 + $0x50] sm:$0xf]
      %v884 = vld [vmem:[%s5 + $0x54] sm:$0xf]
      %v885 = vld [vmem:[%s5 + $0x58] sm:$0xf]
      %v886 = vld [vmem:[%s5 + $0x5c] sm:$0xf]
      %v887 = vld [vmem:[%s5 + $0x60] sm:$0xf]
      %v888 = vld [vmem:[%s5 + $0x64] sm:$0xf]
      %v889 = vld [vmem:[%s5 + $0x68] sm:$0xf]
      %v890 = vld [vmem:[%s5 + $0x6c] sm:$0xf]
      %v891 = vld [vmem:[%s5 + $0x70] sm:$0xf]
      %v892 = vld [vmem:[%s5 + $0x74] sm:$0xf]
      %v894 = vshrl.u32 %v616, 16
      %v896 = vrot.slane %v894, 4
      %v897 = vshll.u32 %v616, 16
      %v899 = vrot.slane %v897, 5
      %v900 = vor.u32 %v896, %v899
      %v901 = vrot.slane %v900, 4
      %v903 = vshll.u32 %v617, 16
      %v905 = vrot.slane %v903, 5
      %v906 = vsel %vm622, %v901, %v905
      %v909 = vrot.slane %v616, 5
      %v910 = vrot.slane %v909, 4
      %v911 = vrot.slane %v617, 5
      %v912 = vsel %vm753, %v910, %v911
      %v913 = vunpack.c.l.b16 %v616
      %v914 = vpack.c.b16 %v788, %v787
      %v915 = vpack.c.b16 %v790, %v789
      %v916 = vpack.c.b16 %v792, %v791
      %v917 = vpack.c.b16 %v913, %v793
      %v918 = vunpack.c.l.b16 %v906
      %v919 = vpack.c.b16 %v800, %v799
      %v920 = vpack.c.b16 %v802, %v801
      %v921 = vpack.c.b16 %v804, %v803
      %v922 = vpack.c.b16 %v918, %v805
      %923 = vrot.lane.b32.xlu0 %v919, 80
      %v924 = vpop.permute.xlu0 %923
      %925 = vrot.lane.b32.xlu0 %v920, 80
      %v926 = vpop.permute.xlu0 %925
      %927 = vrot.lane.b32.xlu0 %v921, 80
      %v928 = vpop.permute.xlu0 %927
      %929 = vrot.lane.b32.xlu0 %v922, 80
      %v930 = vpop.permute.xlu0 %929
      %v931 = vunpack.c.l.b16 %v912
      %v932 = vpack.c.b16 %v820, %v819
      %v933 = vpack.c.b16 %v822, %v821
      %v934 = vpack.c.b16 %v824, %v823
      %v935 = vpack.c.b16 %v931, %v825
      %936 = vrot.lane.b32.xlu0 %v932, 32
      %v937 = vpop.permute.xlu0 %936
      %938 = vrot.lane.b32.xlu0 %v933, 32
      %v939 = vpop.permute.xlu0 %938
      %940 = vrot.lane.b32.xlu0 %v934, 32
      %v941 = vpop.permute.xlu0 %940
      %942 = vrot.lane.b32.xlu0 %v935, 32
      %v943 = vpop.permute.xlu0 %942
      %v946 = vsel %vm324, %v914, %v924
      %v950 = vsel %vm324, %v915, %v926
      %v954 = vsel %vm324, %v916, %v928
      %v958 = vsel %vm324, %v917, %v930
      %v961 = vsel %vm854, %v924, %v937
      %v963 = vsel %vm854, %v926, %v939
      %v965 = vsel %vm854, %v928, %v941
      %v967 = vsel %vm854, %v930, %v943
      %s968 = scalar_lea.vmem %s5, 120
      %v969 = vld [vmem:[%s968] sm:$0xf]
      %v970 = vld [vmem:[%s968 + $0x4] sm:$0xf]
      %v971 = vld [vmem:[%s968 + $0x8] sm:$0xf]
      %v972 = vld [vmem:[%s968 + $0xc] sm:$0xf]
      %v973 = vld [vmem:[%s968 + $0x10] sm:$0xf]
      %v974 = vld [vmem:[%s968 + $0x14] sm:$0xf]
      %v975 = vld [vmem:[%s968 + $0x18] sm:$0xf]
      %v976 = vld [vmem:[%s968 + $0x1c] sm:$0xf]
      %v977 = vld [vmem:[%s968 + $0x20] sm:$0xf]
      %v978 = vld [vmem:[%s968 + $0x24] sm:$0xf]
      %v979 = vld [vmem:[%s968 + $0x28] sm:$0xf]
      %v980 = vld [vmem:[%s968 + $0x2c] sm:$0xf]
      %v981 = vld [vmem:[%s968 + $0x30] sm:$0xf]
      %v982 = vld [vmem:[%s968 + $0x34] sm:$0xf]
      %v983 = vld [vmem:[%s968 + $0x38] sm:$0xf]
      %v984 = vld [vmem:[%s968 + $0x3c] sm:$0xf]
      %v985 = vld [vmem:[%s968 + $0x40] sm:$0xf]
      %v986 = vld [vmem:[%s968 + $0x44] sm:$0xf]
      %v987 = vld [vmem:[%s968 + $0x48] sm:$0xf]
      %v988 = vld [vmem:[%s968 + $0x4c] sm:$0xf]
      %v989 = vld [vmem:[%s968 + $0x50] sm:$0xf]
      %v990 = vld [vmem:[%s968 + $0x54] sm:$0xf]
      %v991 = vld [vmem:[%s968 + $0x58] sm:$0xf]
      %v992 = vld [vmem:[%s968 + $0x5c] sm:$0xf]
      %v993 = vld [vmem:[%s968 + $0x60] sm:$0xf]
      %v994 = vld [vmem:[%s968 + $0x64] sm:$0xf]
      %v995 = vld [vmem:[%s968 + $0x68] sm:$0xf]
      %v996 = vld [vmem:[%s968 + $0x6c] sm:$0xf]
      %v997 = vld [vmem:[%s968 + $0x70] sm:$0xf]
      %v998 = vld [vmem:[%s968 + $0x74] sm:$0xf]
      %v1029 = vunpack.c.l.b16 %v969
      %v1030 = vunpack.c.l.b16 %v970
      %v1031 = vunpack.c.l.b16 %v971
      %v1032 = vunpack.c.l.b16 %v972
      %v1033 = vunpack.c.l.b16 %v973
      %v1034 = vunpack.c.l.b16 %v974
      %v1035 = vunpack.c.l.b16 %v975
      %v1036 = vunpack.c.l.b16 %v976
      %v1037 = vunpack.c.l.b16 %v977
      %v1038 = vunpack.c.l.b16 %v978
      %v1039 = vunpack.c.l.b16 %v979
      %v1040 = vunpack.c.l.b16 %v980
      %v1041 = vunpack.c.l.b16 %v981
      %v1042 = vunpack.c.l.b16 %v982
      %v1043 = vunpack.c.l.b16 %v983
      %v1044 = vunpack.c.l.b16 %v984
      %v1045 = vunpack.c.l.b16 %v985
      %v1046 = vunpack.c.l.b16 %v986
      %v1047 = vunpack.c.l.b16 %v987
      %v1048 = vunpack.c.l.b16 %v988
      %v1049 = vunpack.c.l.b16 %v989
      %v1050 = vunpack.c.l.b16 %v990
      %v1051 = vunpack.c.l.b16 %v991
      %v1052 = vunpack.c.l.b16 %v992
      %v1053 = vunpack.c.l.b16 %v993
      %v1054 = vunpack.c.l.b16 %v994
      %v1055 = vunpack.c.l.b16 %v995
      %v1056 = vunpack.c.l.b16 %v996
      %v1057 = vunpack.c.l.b16 %v997
      %v1058 = vunpack.c.l.b16 %v998
      %v1059 = vpack.c.b16 %v1030, %v1029
      %v1060 = vpack.c.b16 %v1032, %v1031
      %v1061 = vpack.c.b16 %v1034, %v1033
      %v1062 = vpack.c.b16 %v1036, %v1035
      %v1063 = vpack.c.b16 %v1038, %v1037
      %v1064 = vpack.c.b16 %v1040, %v1039
      %v1065 = vpack.c.b16 %v1042, %v1041
      %v1066 = vpack.c.b16 %v1044, %v1043
      %v1067 = vpack.c.b16 %v1046, %v1045
      %v1068 = vpack.c.b16 %v1048, %v1047
      %v1069 = vpack.c.b16 %v1050, %v1049
      %v1070 = vpack.c.b16 %v1052, %v1051
      %v1071 = vpack.c.b16 %v1054, %v1053
      %v1072 = vpack.c.b16 %v1056, %v1055
      %v1073 = vpack.c.b16 %v1058, %v1057
      %vm1089 = vcmask 916480
      %v1090 = vsel %vm1089, %v961, 0
      %v1092 = vsel %vm1089, %v963, 0
      %v1094 = vsel %vm1089, %v965, 0
      %v1096 = vsel %vm1089, %v967, 0
      %1098 = vmatpush.bf16.msra.mxu0 %v1066
      %1099 = vmatpush.bf16.msra.mxu0 %v1065
      %1100 = vmatpush.bf16.msra.mxu0 %v1064
      %1101 = vmatpush.bf16.msra.mxu0 %v1063
      %1102 = vmatpush.bf16.msra.mxu0 %v1062
      %1103 = vmatpush.bf16.msra.mxu0 %v1061
      %1104 = vmatpush.bf16.msra.mxu0 %v1060
      %1105 = vmatpush.bf16.msra.mxu0 %v1059
      %1106 = vmatmul.bf16.gmra.mxu0 %v946
      %v1107 = vpop.f32.mrf.mxu0
      %v1108 = vadd.f32 0.0, %v1107
      %v1109 = vpop.f32.mrf.mxu0
      %v1110 = vadd.f32 0.0, %v1109
      %1111 = vmatmul.bf16.gmra.mxu0 %v950
      %v1112 = vpop.f32.mrf.mxu0
      %v1113 = vadd.f32 0.0, %v1112
      %v1114 = vpop.f32.mrf.mxu0
      %v1115 = vadd.f32 0.0, %v1114
      %1116 = vmatmul.bf16.gmra.mxu0 %v954
      %v1117 = vpop.f32.mrf.mxu0
      %v1118 = vadd.f32 0.0, %v1117
      %v1119 = vpop.f32.mrf.mxu0
      %v1120 = vadd.f32 0.0, %v1119
      %1121 = vmatmul.bf16.gmra.mxu0 %v958
      %v1122 = vpop.f32.mrf.mxu0
      %v1123 = vadd.f32 0.0, %v1122
      %v1124 = vpop.f32.mrf.mxu0
      %v1125 = vadd.f32 0.0, %v1124
      %1126 = vdwg.mxu0
      %1127 = vmatpush.bf16.msra.mxu0 0
      %1128 = vmatpush.bf16.msra.mxu0 %v1073
      %1129 = vmatpush.bf16.msra.mxu0 %v1072
      %1130 = vmatpush.bf16.msra.mxu0 %v1071
      %1131 = vmatpush.bf16.msra.mxu0 %v1070
      %1132 = vmatpush.bf16.msra.mxu0 %v1069
      %1133 = vmatpush.bf16.msra.mxu0 %v1068
      %1134 = vmatpush.bf16.msra.mxu0 %v1067
      %1135 = vmatmul.bf16.gmra.mxu0 %v1090
      %v1136 = vpop.f32.mrf.mxu0
      %v1137 = vadd.f32 %v1108, %v1136
      %v1138 = vpop.f32.mrf.mxu0
      %v1139 = vadd.f32 %v1110, %v1138
      %1140 = vmatmul.bf16.gmra.mxu0 %v1092
      %v1141 = vpop.f32.mrf.mxu0
      %v1142 = vadd.f32 %v1113, %v1141
      %v1143 = vpop.f32.mrf.mxu0
      %v1144 = vadd.f32 %v1115, %v1143
      %1145 = vmatmul.bf16.gmra.mxu0 %v1094
      %v1146 = vpop.f32.mrf.mxu0
      %v1147 = vadd.f32 %v1118, %v1146
      %v1148 = vpop.f32.mrf.mxu0
      %v1149 = vadd.f32 %v1120, %v1148
      %1150 = vmatmul.bf16.gmra.mxu0 %v1096
      %v1151 = vpop.f32.mrf.mxu0
      %v1152 = vadd.f32 %v1123, %v1151
      %v1153 = vpop.f32.mrf.mxu0
      %v1154 = vadd.f32 %v1125, %v1153
      %1155 = vdwg.mxu0
      %v1186 = vunpack.c.l.b16 %v863
      %v1187 = vunpack.c.l.b16 %v864
      %v1188 = vunpack.c.l.b16 %v865
      %v1189 = vunpack.c.l.b16 %v866
      %v1190 = vunpack.c.l.b16 %v867
      %v1191 = vunpack.c.l.b16 %v868
      %v1192 = vunpack.c.l.b16 %v869
      %v1193 = vunpack.c.l.b16 %v870
      %v1194 = vunpack.c.l.b16 %v871
      %v1195 = vunpack.c.l.b16 %v872
      %v1196 = vunpack.c.l.b16 %v873
      %v1197 = vunpack.c.l.b16 %v874
      %v1198 = vunpack.c.l.b16 %v875
      %v1199 = vunpack.c.l.b16 %v876
      %v1200 = vunpack.c.l.b16 %v877
      %v1201 = vunpack.c.l.b16 %v878
      %v1202 = vunpack.c.l.b16 %v879
      %v1203 = vunpack.c.l.b16 %v880
      %v1204 = vunpack.c.l.b16 %v881
      %v1205 = vunpack.c.l.b16 %v882
      %v1206 = vunpack.c.l.b16 %v883
      %v1207 = vunpack.c.l.b16 %v884
      %v1208 = vunpack.c.l.b16 %v885
      %v1209 = vunpack.c.l.b16 %v886
      %v1210 = vunpack.c.l.b16 %v887
      %v1211 = vunpack.c.l.b16 %v888
      %v1212 = vunpack.c.l.b16 %v889
      %v1213 = vunpack.c.l.b16 %v890
      %v1214 = vunpack.c.l.b16 %v891
      %v1215 = vunpack.c.l.b16 %v892
      %v1216 = vpack.c.b16 %v1187, %v1186
      %v1217 = vpack.c.b16 %v1189, %v1188
      %v1218 = vpack.c.b16 %v1191, %v1190
      %v1219 = vpack.c.b16 %v1193, %v1192
      %v1220 = vpack.c.b16 %v1195, %v1194
      %v1221 = vpack.c.b16 %v1197, %v1196
      %v1222 = vpack.c.b16 %v1199, %v1198
      %v1223 = vpack.c.b16 %v1201, %v1200
      %v1224 = vpack.c.b16 %v1203, %v1202
      %v1225 = vpack.c.b16 %v1205, %v1204
      %v1226 = vpack.c.b16 %v1207, %v1206
      %v1227 = vpack.c.b16 %v1209, %v1208
      %v1228 = vpack.c.b16 %v1211, %v1210
      %v1229 = vpack.c.b16 %v1213, %v1212
      %v1230 = vpack.c.b16 %v1215, %v1214
      %v1246 = vsel %vm1089, %v856, 0
      %v1248 = vsel %vm1089, %v858, 0
      %v1250 = vsel %vm1089, %v860, 0
      %v1252 = vsel %vm1089, %v862, 0
      %1254 = vmatpush.bf16.msra.mxu0 %v1223
      %1255 = vmatpush.bf16.msra.mxu0 %v1222
      %1256 = vmatpush.bf16.msra.mxu0 %v1221
      %1257 = vmatpush.bf16.msra.mxu0 %v1220
      %1258 = vmatpush.bf16.msra.mxu0 %v1219
      %1259 = vmatpush.bf16.msra.mxu0 %v1218
      %1260 = vmatpush.bf16.msra.mxu0 %v1217
      %1261 = vmatpush.bf16.msra.mxu0 %v1216
      %1262 = vmatmul.bf16.gmra.mxu0 %v840
      %v1263 = vpop.f32.mrf.mxu0
      %v1264 = vadd.f32 %v1137, %v1263
      %v1265 = vpop.f32.mrf.mxu0
      %v1266 = vadd.f32 %v1139, %v1265
      %1267 = vmatmul.bf16.gmra.mxu0 %v844
      %v1268 = vpop.f32.mrf.mxu0
      %v1269 = vadd.f32 %v1142, %v1268
      %v1270 = vpop.f32.mrf.mxu0
      %v1271 = vadd.f32 %v1144, %v1270
      %1272 = vmatmul.bf16.gmra.mxu0 %v848
      %v1273 = vpop.f32.mrf.mxu0
      %v1274 = vadd.f32 %v1147, %v1273
      %v1275 = vpop.f32.mrf.mxu0
      %v1276 = vadd.f32 %v1149, %v1275
      %1277 = vmatmul.bf16.gmra.mxu0 %v852
      %v1278 = vpop.f32.mrf.mxu0
      %v1279 = vadd.f32 %v1152, %v1278
      %v1280 = vpop.f32.mrf.mxu0
      %v1281 = vadd.f32 %v1154, %v1280
      %1282 = vdwg.mxu0
      %1283 = vmatpush.bf16.msra.mxu0 0
      %1284 = vmatpush.bf16.msra.mxu0 %v1230
      %1285 = vmatpush.bf16.msra.mxu0 %v1229
      %1286 = vmatpush.bf16.msra.mxu0 %v1228
      %1287 = vmatpush.bf16.msra.mxu0 %v1227
      %1288 = vmatpush.bf16.msra.mxu0 %v1226
      %1289 = vmatpush.bf16.msra.mxu0 %v1225
      %1290 = vmatpush.bf16.msra.mxu0 %v1224
      %1291 = vmatmul.bf16.gmra.mxu0 %v1246
      %v1292 = vpop.f32.mrf.mxu0
      %v1293 = vadd.f32 %v1264, %v1292
      %v1294 = vpop.f32.mrf.mxu0
      %v1295 = vadd.f32 %v1266, %v1294
      %1296 = vmatmul.bf16.gmra.mxu0 %v1248
      %v1297 = vpop.f32.mrf.mxu0
      %v1298 = vadd.f32 %v1269, %v1297
      %v1299 = vpop.f32.mrf.mxu0
      %v1300 = vadd.f32 %v1271, %v1299
      %1301 = vmatmul.bf16.gmra.mxu0 %v1250
      %v1302 = vpop.f32.mrf.mxu0
      %v1303 = vadd.f32 %v1274, %v1302
      %v1304 = vpop.f32.mrf.mxu0
      %v1305 = vadd.f32 %v1276, %v1304
      %1306 = vmatmul.bf16.gmra.mxu0 %v1252
      %v1307 = vpop.f32.mrf.mxu0
      %v1308 = vadd.f32 %v1279, %v1307
      %v1309 = vpop.f32.mrf.mxu0
      %v1310 = vadd.f32 %v1281, %v1309
      %1311 = vdwg.mxu0
      %v1313 = vshrl.u32 %v618, 16
      %v1315 = vrot.slane %v1313, 4
      %v1316 = vshll.u32 %v618, 16
      %v1318 = vrot.slane %v1316, 5
      %v1319 = vor.u32 %v1315, %v1318
      %v1320 = vrot.slane %v1319, 4
      %v1322 = vshll.u32 %v619, 16
      %v1324 = vrot.slane %v1322, 5
      %v1325 = vsel %vm622, %v1320, %v1324
      %v1328 = vrot.slane %v618, 5
      %v1329 = vrot.slane %v1328, 4
      %v1330 = vrot.slane %v619, 5
      %v1331 = vsel %vm753, %v1329, %v1330
      %v1332 = vunpack.c.l.b16 %v618
      %v1333 = vpack.c.b16 %v1332, %v913
      %v1334 = vunpack.c.l.b16 %v1325
      %v1335 = vpack.c.b16 %v1334, %v918
      %1336 = vrot.lane.b32.xlu0 %v1335, 80
      %v1337 = vpop.permute.xlu0 %1336
      %v1338 = vunpack.c.l.b16 %v1331
      %v1339 = vpack.c.b16 %v1338, %v931
      %1340 = vrot.lane.b32.xlu0 %v1339, 32
      %v1341 = vpop.permute.xlu0 %1340
      %v1344 = vsel %vm324, %v1333, %v1337
      %v1347 = vsel %vm854, %v1337, %v1341
      %s1348 = scalar_lea.vmem %s5, 240
      %v1349 = vld [vmem:[%s1348] sm:$0xf]
      %v1350 = vld [vmem:[%s1348 + $0x4] sm:$0xf]
      %v1351 = vld [vmem:[%s1348 + $0x8] sm:$0xf]
      %v1352 = vld [vmem:[%s1348 + $0xc] sm:$0xf]
      %v1353 = vld [vmem:[%s1348 + $0x10] sm:$0xf]
      %v1354 = vld [vmem:[%s1348 + $0x14] sm:$0xf]
      %v1355 = vld [vmem:[%s1348 + $0x18] sm:$0xf]
      %v1356 = vld [vmem:[%s1348 + $0x1c] sm:$0xf]
      %v1357 = vld [vmem:[%s1348 + $0x20] sm:$0xf]
      %v1358 = vld [vmem:[%s1348 + $0x24] sm:$0xf]
      %v1359 = vld [vmem:[%s1348 + $0x28] sm:$0xf]
      %v1360 = vld [vmem:[%s1348 + $0x2c] sm:$0xf]
      %v1361 = vld [vmem:[%s1348 + $0x30] sm:$0xf]
      %v1362 = vld [vmem:[%s1348 + $0x34] sm:$0xf]
      %v1363 = vld [vmem:[%s1348 + $0x38] sm:$0xf]
      %v1364 = vld [vmem:[%s1348 + $0x3c] sm:$0xf]
      %v1365 = vld [vmem:[%s1348 + $0x40] sm:$0xf]
      %v1366 = vld [vmem:[%s1348 + $0x44] sm:$0xf]
      %v1367 = vld [vmem:[%s1348 + $0x48] sm:$0xf]
      %v1368 = vld [vmem:[%s1348 + $0x4c] sm:$0xf]
      %v1369 = vld [vmem:[%s1348 + $0x50] sm:$0xf]
      %v1370 = vld [vmem:[%s1348 + $0x54] sm:$0xf]
      %v1371 = vld [vmem:[%s1348 + $0x58] sm:$0xf]
      %v1372 = vld [vmem:[%s1348 + $0x5c] sm:$0xf]
      %v1373 = vld [vmem:[%s1348 + $0x60] sm:$0xf]
      %v1374 = vld [vmem:[%s1348 + $0x64] sm:$0xf]
      %v1375 = vld [vmem:[%s1348 + $0x68] sm:$0xf]
      %v1376 = vld [vmem:[%s1348 + $0x6c] sm:$0xf]
      %v1377 = vld [vmem:[%s1348 + $0x70] sm:$0xf]
      %v1378 = vld [vmem:[%s1348 + $0x74] sm:$0xf]
      %v1409 = vunpack.c.l.b16 %v1349
      %v1410 = vunpack.c.l.b16 %v1350
      %v1411 = vunpack.c.l.b16 %v1351
      %v1412 = vunpack.c.l.b16 %v1352
      %v1413 = vunpack.c.l.b16 %v1353
      %v1414 = vunpack.c.l.b16 %v1354
      %v1415 = vunpack.c.l.b16 %v1355
      %v1416 = vunpack.c.l.b16 %v1356
      %v1417 = vunpack.c.l.b16 %v1357
      %v1418 = vunpack.c.l.b16 %v1358
      %v1419 = vunpack.c.l.b16 %v1359
      %v1420 = vunpack.c.l.b16 %v1360
      %v1421 = vunpack.c.l.b16 %v1361
      %v1422 = vunpack.c.l.b16 %v1362
      %v1423 = vunpack.c.l.b16 %v1363
      %v1424 = vunpack.c.l.b16 %v1364
      %v1425 = vunpack.c.l.b16 %v1365
      %v1426 = vunpack.c.l.b16 %v1366
      %v1427 = vunpack.c.l.b16 %v1367
      %v1428 = vunpack.c.l.b16 %v1368
      %v1429 = vunpack.c.l.b16 %v1369
      %v1430 = vunpack.c.l.b16 %v1370
      %v1431 = vunpack.c.l.b16 %v1371
      %v1432 = vunpack.c.l.b16 %v1372
      %v1433 = vunpack.c.l.b16 %v1373
      %v1434 = vunpack.c.l.b16 %v1374
      %v1435 = vunpack.c.l.b16 %v1375
      %v1436 = vunpack.c.l.b16 %v1376
      %v1437 = vunpack.c.l.b16 %v1377
      %v1438 = vunpack.c.l.b16 %v1378
      %v1439 = vpack.c.b16 %v1410, %v1409
      %v1440 = vpack.c.b16 %v1412, %v1411
      %v1441 = vpack.c.b16 %v1414, %v1413
      %v1442 = vpack.c.b16 %v1416, %v1415
      %v1443 = vpack.c.b16 %v1418, %v1417
      %v1444 = vpack.c.b16 %v1420, %v1419
      %v1445 = vpack.c.b16 %v1422, %v1421
      %v1446 = vpack.c.b16 %v1424, %v1423
      %v1447 = vpack.c.b16 %v1426, %v1425
      %v1448 = vpack.c.b16 %v1428, %v1427
      %v1449 = vpack.c.b16 %v1430, %v1429
      %v1450 = vpack.c.b16 %v1432, %v1431
      %v1451 = vpack.c.b16 %v1434, %v1433
      %v1452 = vpack.c.b16 %v1436, %v1435
      %v1453 = vpack.c.b16 %v1438, %v1437
      %v1469 = vsel %vm1089, %v1347, 0
      %1471 = vmatpush.bf16.msra.mxu0 %v1446
      %1472 = vmatpush.bf16.msra.mxu0 %v1445
      %1473 = vmatpush.bf16.msra.mxu0 %v1444
      %1474 = vmatpush.bf16.msra.mxu0 %v1443
      %1475 = vmatpush.bf16.msra.mxu0 %v1442
      %1476 = vmatpush.bf16.msra.mxu0 %v1441
      %1477 = vmatpush.bf16.msra.mxu0 %v1440
      %1478 = vmatpush.bf16.msra.mxu0 %v1439
      %1479 = vmatmul.bf16.gmra.mxu0 %v844
      %v1480 = vpop.f32.mrf.mxu0
      %v1481 = vadd.f32 0.0, %v1480
      %v1482 = vpop.f32.mrf.mxu0
      %v1483 = vadd.f32 0.0, %v1482
      %1484 = vmatmul.bf16.gmra.mxu0 %v848
      %v1485 = vpop.f32.mrf.mxu0
      %v1486 = vadd.f32 0.0, %v1485
      %v1487 = vpop.f32.mrf.mxu0
      %v1488 = vadd.f32 0.0, %v1487
      %1489 = vmatmul.bf16.gmra.mxu0 %v852
      %v1490 = vpop.f32.mrf.mxu0
      %v1491 = vadd.f32 0.0, %v1490
      %v1492 = vpop.f32.mrf.mxu0
      %v1493 = vadd.f32 0.0, %v1492
      %1494 = vmatmul.bf16.gmra.mxu0 %v1344
      %v1495 = vpop.f32.mrf.mxu0
      %v1496 = vadd.f32 0.0, %v1495
      %v1497 = vpop.f32.mrf.mxu0
      %v1498 = vadd.f32 0.0, %v1497
      %1499 = vdwg.mxu0
      %1500 = vmatpush.bf16.msra.mxu0 0
      %1501 = vmatpush.bf16.msra.mxu0 %v1453
      %1502 = vmatpush.bf16.msra.mxu0 %v1452
      %1503 = vmatpush.bf16.msra.mxu0 %v1451
      %1504 = vmatpush.bf16.msra.mxu0 %v1450
      %1505 = vmatpush.bf16.msra.mxu0 %v1449
      %1506 = vmatpush.bf16.msra.mxu0 %v1448
      %1507 = vmatpush.bf16.msra.mxu0 %v1447
      %1508 = vmatmul.bf16.gmra.mxu0 %v1248
      %v1509 = vpop.f32.mrf.mxu0
      %v1510 = vadd.f32 %v1481, %v1509
      %v1511 = vpop.f32.mrf.mxu0
      %v1512 = vadd.f32 %v1483, %v1511
      %1513 = vmatmul.bf16.gmra.mxu0 %v1250
      %v1514 = vpop.f32.mrf.mxu0
      %v1515 = vadd.f32 %v1486, %v1514
      %v1516 = vpop.f32.mrf.mxu0
      %v1517 = vadd.f32 %v1488, %v1516
      %1518 = vmatmul.bf16.gmra.mxu0 %v1252
      %v1519 = vpop.f32.mrf.mxu0
      %v1520 = vadd.f32 %v1491, %v1519
      %v1521 = vpop.f32.mrf.mxu0
      %v1522 = vadd.f32 %v1493, %v1521
      %1523 = vmatmul.bf16.gmra.mxu0 %v1469
      %v1524 = vpop.f32.mrf.mxu0
      %v1525 = vadd.f32 %v1496, %v1524
      %v1526 = vpop.f32.mrf.mxu0
      %v1527 = vadd.f32 %v1498, %v1526
      %1528 = vdwg.mxu0
      %v1529 = vadd.f32 %v1293, %v1510
      %v1530 = vadd.f32 %v1295, %v1512
      %v1531 = vadd.f32 %v1298, %v1515
      %v1532 = vadd.f32 %v1300, %v1517
      %v1533 = vadd.f32 %v1303, %v1520
      %v1534 = vadd.f32 %v1305, %v1522
      %v1535 = vadd.f32 %v1308, %v1525
      %v1536 = vadd.f32 %v1310, %v1527
      %v1537 = vmax.f32 %v1529, 0.0
      %v1538 = vmax.f32 %v1530, 0.0
      %v1539 = vmax.f32 %v1531, 0.0
      %v1540 = vmax.f32 %v1532, 0.0
      %v1541 = vmax.f32 %v1533, 0.0
      %v1542 = vmax.f32 %v1534, 0.0
      %v1543 = vmax.f32 %v1535, 0.0
      %v1544 = vmax.f32 %v1536, 0.0
      %1545 = vst [vmem:[%s251] sm:$0xff] %v1537
      %1546 = vst [vmem:[%s251 + $0x8] sm:$0xff] %v1538
      %1547 = vst [vmem:[%s251 + $0x10] sm:$0xff] %v1539
      %1548 = vst [vmem:[%s251 + $0x18] sm:$0xff] %v1540
      %1549 = vst [vmem:[%s251 + $0x20] sm:$0xff] %v1541
      %1550 = vst [vmem:[%s251 + $0x28] sm:$0xff] %v1542
      %1551 = vst [vmem:[%s251 + $0x30] sm:$0xff] %v1543
      %1552 = vst [vmem:[%s251 + $0x38] sm:$0xff] %v1544
      %p1553 = scmp.lt.s32.totalorder %s17, 1
      %s1554 = scalar_select %p1553, %s17, 1
      %s1555 = smul.addr %s1554, 8
      %s1556 = smul.addr %s1555, 8
      %s1557 = scalar_lea.vmem %s6, %s1556
      // Predicated region
      $region45: #{encoder_forward.5} parent=43 // pred_check
        %p1558 = pneg %p166
      $region46: #{encoder_forward.5} parent=43 // pred_check_branch
        %1560 = sbr.rel (%p1558) target = $region48
      $region47: #{encoder_forward.5} parent=43 // pred_region
        _
      $region48: #{encoder_forward.5} parent=43 // pred_fallthru
        _
    $region44: #{encoder_forward.5} parent=5 // pred_fallthru
      _
    %p1561 = scmp.le.s32.totalorder 2, %s12
    // Predicated region
    $region49: #{encoder_forward.5} parent=5 // pred_check
      %p1562 = pneg %p1561
    $region50: #{encoder_forward.5} parent=5 // pred_check_branch
      %1564 = sbr.rel (%p1562) target = $region52
    $region51: #{encoder_forward.5} parent=5 // pred_region
      %s1565 = ssub.s32 %s12, 2
      // Predicated region
      $region53: #{encoder_forward.5} parent=51 // pred_check
        %p1566 = pneg %p172
      $region54: #{encoder_forward.5} parent=51 // pred_check_branch
        %1568 = sbr.rel (%p1566) target = $region56
      $region55: #{encoder_forward.5} parent=51 // pred_region
        %p1569 = scmp.lt.s32.totalorder %s18, 1
        %s1570 = scalar_select %p1569, %s18, 1
        %s1571 = smul.addr %s1570, 8
        %s1572 = smul.addr %s1571, 8
        %s1573 = scalar_lea.vmem %s6, %s1572
      $region56: #{encoder_forward.5} parent=51 // pred_fallthru
        _
    $region52: #{encoder_forward.5} parent=5 // pred_fallthru
      _
  $region6: #{encoder_forward.5} parent=0 // loop_footer
    %s16 = sadd.s32 1, %s12
  $region7: #{encoder_forward.5} parent=0 // loop_footer_branch
    %11 = sbr.rel target = $region3
  $region8: #{encoder_forward.5} parent=0 // loop_exit
    _

</llo_original>
